<compile_context>
chip_gen: v6e
topology: v6e:2x2x1
jax: 0.10.0
libtpu: 0.0.40
codegen_flags: <defaults>
</compile_context>

<pallas_src>
import numpy as np
import jax
import jax.numpy as jnp
from jax.experimental import pallas as pl
from jax.experimental.pallas import tpu as pltpu

DIM = 3
NB = 2 ** DIM              # 8 wavelet sub-bands
L = 4                      # db2 filter length (module asserts evenness)
LANE = 128                 # TPU lane width

# db2 decomposition filters (pywt.Wavelet('db2').filter_bank[:2]), hardcoded so
# no pywt / checkpoint is needed (deterministic "parameter" init).
_DB2_DEC_LO = np.array([-0.12940952255092145, 0.22414386804185735,
                        0.836516303737469, 0.48296291314469025], dtype=np.float32)
_DB2_DEC_HI = np.array([-0.48296291314469025, 0.836516303737469,
                        -0.22414386804185735, -0.12940952255092145], dtype=np.float32)

# g[0] = flip(dec_lo), g[1] = flip(dec_hi): the 1-D factors of filter_fwd
_G = np.stack([_DB2_DEC_LO[::-1], _DB2_DEC_HI[::-1]], axis=0)   # (2, L)


def build_filter_fwd():
    """filter_fwd.squeeze(1) of _WaveletFilterNd(dim=3, 'db2'): (8, L, L, L) with
    filt[4a+2b+c, kd, kh, kw] = g_a[kd] * g_b[kh] * g_c[kw]."""
    filt = np.einsum('ai,bj,ck->abcijk', _G, _G, _G)
    return filt.reshape(NB, L, L, L).astype(np.float32)


def _make_kernel(td, hh, wh, ho, wo):
    """Separable 3-pass kernel for one (BC lane tile, D output tile).

    Layouts (lane axis = fused batch*channel, always last => dense vld/vst):
      xm_ref : (8, td,   hh, wh, lane)  polyphase input, main D rows
      xh_ref : (8, 1,    hh, wh, lane)  polyphase input, +1 halo D row
      o_ref  : (8, td,   ho, wo, lane)  8 sub-bands (f = 4a+2b+c)
      y1_ref : (4, td+1, hh, wo, lane)  after the W pass for the current rd
                                        (index 2*rh + c; reused for rd=0,1)
      y2_ref : (8, td+1, ho, wo, lane)  after the H pass (index 4rd+2b+c)
    Filter taps are compile-time constants.  Polyphase indices: original axis
    index = 2*i + r, tap k = 2*q + r, so every tap is a contiguous static
    slice at offset q in {0, 1} on a non-lane axis.
    """
    g = [[float(_G[f, k]) for k in range(L)] for f in range(2)]

    def kernel(xm_ref, xh_ref, o_ref, y1_ref, y2_ref):
        # ---- passes 1+2, fused per D-parity rd (halves the y1 scratch) ----
        for rd in range(2):
            # pass 1: filter along W (tap kw = 2*qw + rw) -> y1[2*rh + c]
            for rh in range(2):
                band = 4 * rd + 2 * rh
                # shared tap operands, hoisted out of the lo/hi (c) loop
                # TODO(synk): the +1-shifted operands could come from a single
                # load + pltpu.roll on the sublane axis (XLU) instead of a
                # second offset slice.
                m0 = xm_ref[band + 0, :, :, 0:wo, :]
                m1 = xm_ref[band + 1, :, :, 0:wo, :]
                m2 = xm_ref[band + 0, :, :, 1:wo + 1, :]
                m3 = xm_ref[band + 1, :, :, 1:wo + 1, :]
                h0 = xh_ref[band + 0, :, :, 0:wo, :]
                h1 = xh_ref[band + 1, :, :, 0:wo, :]
                h2 = xh_ref[band + 0, :, :, 1:wo + 1, :]
                h3 = xh_ref[band + 1, :, :, 1:wo + 1, :]
                for c in range(2):
                    y1_ref[2 * rh + c, 0:td] = (
                        g[c][0] * m0 + g[c][1] * m1
                        + g[c][2] * m2 + g[c][3] * m3)
                    y1_ref[2 * rh + c, td:td + 1] = (
                        g[c][0] * h0 + g[c][1] * h1
                        + g[c][2] * h2 + g[c][3] * h3)
            # pass 2: filter along H (tap kh = 2*qh + rh) -> y2[4rd+2b+c]
            for c in range(2):
                t0 = y1_ref[0 + c, :, 0:ho, :, :]
                t1 = y1_ref[2 + c, :, 0:ho, :, :]
                t2 = y1_ref[0 + c, :, 1:ho + 1, :, :]
                t3 = y1_ref[2 + c, :, 1:ho + 1, :, :]
                for b in range(2):
                    y2_ref[4 * rd + 2 * b + c] = (
                        g[b][0] * t0 + g[b][1] * t1
                        + g[b][2] * t2 + g[b][3] * t3)

        # ---- pass 3: filter along D (tap kd = 2*qd + rd) -------------------
        # TODO(synk): on v6e/v7x these passes could run in bf16 (f32 pass-3
        # accumulate) or via the db2 lifting factorization for fewer VALU ops.
        for b in range(2):
            for c in range(2):
                t0 = y2_ref[0 + 2 * b + c, 0:td]
                t1 = y2_ref[4 + 2 * b + c, 0:td]
                t2 = y2_ref[0 + 2 * b + c, 1:td + 1]
                t3 = y2_ref[4 + 2 * b + c, 1:td + 1]
                for a in range(2):
                    o_ref[4 * a + 2 * b + c] = (
                        g[a][0] * t0 + g[a][1] * t1
                        + g[a][2] * t2 + g[a][3] * t3)
    return kernel


def _rup(x, m):
    return ((x + m - 1) // m) * m


def _vmem_estimate(td, hh, wh, ho, wo, lane):
    """VMEM bytes, including Mosaic's (8,128) sublane/lane padding of the last
    two dims of every block / scratch buffer."""
    f32 = 4
    lane_p = _rup(lane, LANE)
    blk_in = NB * td * hh * _rup(wh, 8) * lane_p * f32
    blk_halo = NB * 1 * hh * _rup(wh, 8) * lane_p * f32
    blk_out = NB * td * ho * _rup(wo, 8) * lane_p * f32
    scratch = (4 * (td + 1) * hh * _rup(wo, 8) * lane_p * f32     # W pass (4 bands)
               + NB * (td + 1) * ho * _rup(wo, 8) * lane_p * f32)  # H pass (8 bands)
    # in/out blocks are double-buffered by the Pallas pipeline
    return 2 * (blk_in + blk_halo + blk_out) + scratch


def _tpu_memory_model():
    """(physical VMEM bytes per TensorCore, #TensorCores sharing a parallel grid)."""
    vmem_bytes = 64 << 20          # conservative default (v7x = smallest VMEM)
    num_tc = 1
    try:
        info = pltpu.get_tpu_info()
        vmem_bytes = int(getattr(info, 'vmem_capacity_bytes', vmem_bytes))
    except Exception:
        pass
    try:
        kind = jax.devices()[0].device_kind.lower()
        # 2 TensorCores behind one device: v4/v5p megacore and v7x.
        if any(tag in kind for tag in ('v4', 'v5p', 'v7', '7x')):
            num_tc = 2
    except Exception:
        pass
    return vmem_bytes, num_tc


def _pick_d_tile(do, hh, wh, ho, wo, lane, nbc, budget_bytes, num_tc):
    td = do
    while td > 1 and _vmem_estimate(td, hh, wh, ho, wo, lane) > budget_bytes:
        td -= 1
    # Only chips with 2 TensorCores benefit from >=2 steps on a parallel axis.
    if num_tc >= 2 and nbc == 1 and do > 1:
        td = min(td, (do + 1) // 2)
    return max(td, 1)


def wavelet_forward(x, *, vmem_budget_bytes=None):
    """== _WaveletFilterNd(wavelet='db2', dim=3).forward(x) == encode(x)[0].
    Returns coeffs of shape (B, C, 8, Do, Ho, Wo), float32."""
    assert x.ndim == 2 + DIM
    B, C = int(x.shape[0]), int(x.shape[1])
    D, H, W = (int(s) for s in x.shape[2:])
    BC = B * C
    p = (2 * L - 3) // 2
    is_odd = [D % 2, H % 2, W % 2]

    vmem_phys, num_tc = _tpu_memory_model()
    if vmem_budget_bytes is None:
        # ~48 MiB on v7x (64 MiB VMEM), ~96 MiB on v5e/v6e (128 MiB VMEM)
        vmem_budget_bytes = (vmem_phys * 3) // 4

    # F.pad tuple order is (W_l,W_r,H_l,H_r,D_l,D_r) while the module's is_odd
    # is ordered (D,H,W); its out[1::2] += is_odd therefore puts D's odd
    # correction on W's right pad, etc.  Reproduced exactly.
    pad_widths = [(0, 0), (0, 0),
                  (p, p + is_odd[2]),     # D (gets W's odd correction)
                  (p, p + is_odd[1]),     # H
                  (p, p + is_odd[0])]     # W (gets D's odd correction)
    x_pad = jnp.pad(x.astype(jnp.float32), pad_widths, mode='constant')

    Dp, Hp, Wp = (int(s) for s in x_pad.shape[2:])
    # TODO(synk): polyphase split needs even padded sizes; mixed-parity inputs
    # (asymmetric odd correction) are not supported by this kernel.
    assert Dp % 2 == 0 and Hp % 2 == 0 and Wp % 2 == 0, 'unsupported input parity'
    dh, hh, wh = Dp // 2, Hp // 2, Wp // 2
    do, ho, wo = dh - 1, hh - 1, wh - 1

    # lane-dense layout: fused batch*channel goes to the lane axis.
    # TODO(synk): when BC < 128, lanes are underfilled; fusing BC with Wo onto
    # the lane axis would restore lane fill for tiny batch*channel.
    if BC >= LANE:
        lane = LANE
        bcp = ((BC + LANE - 1) // LANE) * LANE
    else:
        lane = BC      # block == full dim is allowed; lanes simply underfilled
        bcp = BC
    nbc = bcp // lane

    td = _pick_d_tile(do, hh, wh, ho, wo, lane, nbc, vmem_budget_bytes, num_tc)
    nd = -(-do // td)
    do_pad = nd * td
    dh_need = do_pad + 1

    # polyphase split + channels-last:
    #   xp[4rd+2rh+rw, i, j, k, bc] = x_pad[bc, 2i+rd, 2j+rh, 2k+rw]
    # so every stride-2 conv tap inside the kernel is a contiguous static slice.
    # TODO(synk): fold the pad + this transpose into the kernel (strided
    # in-kernel reads from a channels-last HBM ref) and emit the consumer's
    # final layout from out_specs to remove the wrapper-side HBM round trips.
    xp = x_pad.reshape(BC, dh, 2, hh, 2, wh, 2)
    xp = xp.transpose(2, 4, 6, 1, 3, 5, 0).reshape(NB, dh, hh, wh, BC)
    if dh_need > dh or bcp > BC:
        xp = jnp.pad(xp, [(0, 0), (0, dh_need - dh), (0, 0), (0, 0), (0, bcp - BC)])

    kernel = _make_kernel(td, hh, wh, ho, wo)
    est = _vmem_estimate(td, hh, wh, ho, wo, lane)
    # keep a little headroom, but never promise more than physical VMEM.
    vmem_limit = int(min(max(est + (12 << 20), 32 << 20), vmem_phys - (2 << 20)))
    # TODO(synk): very large H*W planes additionally need H tiling (same
    # +1-halo trick on the Hh axis) to stay inside v7x's 64 MiB VMEM.

    out = pl.pallas_call(
        kernel,
        out_shape=jax.ShapeDtypeStruct((NB, do_pad, ho, wo, bcp), jnp.float32),
        grid_spec=pltpu.PrefetchScalarGridSpec(
            num_scalar_prefetch=0,
            grid=(nbc, nd),
            in_specs=[
                # main D rows [d*td, (d+1)*td)
                pl.BlockSpec((NB, td, hh, wh, lane),
                             lambda bc, d: (0, d, 0, 0, bc)),
                # +1 halo row at (d+1)*td (block size 1 -> block index == row)
                pl.BlockSpec((NB, 1, hh, wh, lane),
                             lambda bc, d: (0, (d + 1) * td, 0, 0, bc)),
            ],
            out_specs=pl.BlockSpec((NB, td, ho, wo, lane),
                                   lambda bc, d: (0, d, 0, 0, bc)),
            scratch_shapes=[
                pltpu.VMEM((4, td + 1, hh, wo, lane), jnp.float32),    # W pass
                pltpu.VMEM((NB, td + 1, ho, wo, lane), jnp.float32),   # H pass
            ],
        ),
        compiler_params=pltpu.CompilerParams(
            dimension_semantics=("parallel", "parallel"),
            vmem_limit_bytes=vmem_limit),
    )(xp, xp)

    # back to the PyTorch result layout (B, C, coeffs, Do, Ho, Wo)
    out = out[:, :do, :, :, :BC]
    return out.transpose(4, 0, 1, 2, 3).reshape(B, C, NB, do, ho, wo)


# TODO(synk): decode() (inverse transform / transposed conv) is not part of
# forward() and is not implemented here.

if __name__ == "__main__":
    key = jax.random.PRNGKey(0)
    # 128 fused (batch, channel) slots -> exactly one dense 128-wide lane tile
    B, C, D, H, W = 2, 64, 8, 8, 8
    x = jax.random.normal(key, (B, C, D, H, W), dtype=jnp.float32)

    coeffs = jax.block_until_ready(wavelet_forward(x))

    # Independent numpy reference of the padded, grouped, stride-2 conv3d
    # (PyTorch cross-correlation semantics).
    filt = build_filter_fwd()
    p = (2 * L - 3) // 2
    x_np = np.asarray(x)
    xpad = np.pad(x_np, [(0, 0), (0, 0), (p, p), (p, p), (p, p)], mode='constant')
    Do = (xpad.shape[2] - L) // 2 + 1
    Ho = (xpad.shape[3] - L) // 2 + 1
    Wo = (xpad.shape[4] - L) // 2 + 1
    ref = np.zeros((B, C, NB, Do, Ho, Wo), np.float32)
    for f in range(NB):
        for kd in range(L):
            for kh in range(L):
                for kw in range(L):
                    ref[:, :, f] += filt[f, kd, kh, kw] * xpad[
                        :, :, kd:kd + 2 * Do:2, kh:kh + 2 * Ho:2, kw:kw + 2 * Wo:2]

    assert coeffs.shape == (B, C, NB, Do, Ho, Wo)
    np.testing.assert_allclose(np.asarray(coeffs), ref, rtol=1e-4, atol=1e-5)
    print("KERNEL_OK")
</pallas_src>

<mosaic_0001>
module attributes {stable_mosaic.version = 11 : i64} {
  func.func @kernel(%arg0: i32, %arg1: i32, %arg2: memref<8x5x6x6x128xf32, #tpu.memory_space<vmem>>, %arg3: memref<8x1x6x6x128xf32, #tpu.memory_space<vmem>>, %arg4: memref<8x5x5x5x128xf32, #tpu.memory_space<vmem>>, %arg5: memref<4x6x6x5x128xf32, #tpu.memory_space<vmem>>, %arg6: memref<8x6x5x5x128xf32, #tpu.memory_space<vmem>>) attributes {dimension_semantics = [#tpu.dimension_semantics<parallel>, #tpu.dimension_semantics<parallel>], iteration_bounds = array<i64: 1, 1>, scalar_prefetch = 0 : i64, scratch_operands = 2 : i64, tpu.core_type = #tpu.core_type<tc>, window_params = [{transform_indices = @transform_0, window_bounds = array<i64: 8, 5, 6, 6, 128>}, {transform_indices = @transform_1, window_bounds = array<i64: 8, 1, 6, 6, 128>}, {transform_indices = @transform_2, window_bounds = array<i64: 8, 5, 5, 5, 128>}]} {
    %c0 = arith.constant 0 : index
    %c0_0 = arith.constant 0 : index
    %c0_1 = arith.constant 0 : index
    %c0_2 = arith.constant 0 : index
    %c0_3 = arith.constant 0 : index
    %0 = vector.load %arg2[%c0, %c0_0, %c0_1, %c0_2, %c0_3] : memref<8x5x6x6x128xf32, #tpu.memory_space<vmem>>, vector<1x5x6x5x128xf32>
    %1 = vector.shape_cast %0 : vector<1x5x6x5x128xf32> to vector<5x6x5x128xf32>
    %c1 = arith.constant 1 : index
    %c0_4 = arith.constant 0 : index
    %c0_5 = arith.constant 0 : index
    %c0_6 = arith.constant 0 : index
    %c0_7 = arith.constant 0 : index
    %2 = vector.load %arg2[%c1, %c0_4, %c0_5, %c0_6, %c0_7] : memref<8x5x6x6x128xf32, #tpu.memory_space<vmem>>, vector<1x5x6x5x128xf32>
    %3 = vector.shape_cast %2 : vector<1x5x6x5x128xf32> to vector<5x6x5x128xf32>
    %c0_8 = arith.constant 0 : index
    %c0_9 = arith.constant 0 : index
    %c0_10 = arith.constant 0 : index
    %c1_11 = arith.constant 1 : index
    %c0_12 = arith.constant 0 : index
    %4 = vector.load %arg2[%c0_8, %c0_9, %c0_10, %c1_11, %c0_12] : memref<8x5x6x6x128xf32, #tpu.memory_space<vmem>>, vector<1x5x6x5x128xf32>
    %5 = vector.shape_cast %4 : vector<1x5x6x5x128xf32> to vector<5x6x5x128xf32>
    %c1_13 = arith.constant 1 : index
    %c0_14 = arith.constant 0 : index
    %c0_15 = arith.constant 0 : index
    %c1_16 = arith.constant 1 : index
    %c0_17 = arith.constant 0 : index
    %6 = vector.load %arg2[%c1_13, %c0_14, %c0_15, %c1_16, %c0_17] : memref<8x5x6x6x128xf32, #tpu.memory_space<vmem>>, vector<1x5x6x5x128xf32>
    %7 = vector.shape_cast %6 : vector<1x5x6x5x128xf32> to vector<5x6x5x128xf32>
    %c0_18 = arith.constant 0 : index
    %c0_19 = arith.constant 0 : index
    %c0_20 = arith.constant 0 : index
    %c0_21 = arith.constant 0 : index
    %c0_22 = arith.constant 0 : index
    %8 = vector.load %arg3[%c0_18, %c0_19, %c0_20, %c0_21, %c0_22] : memref<8x1x6x6x128xf32, #tpu.memory_space<vmem>>, vector<1x1x6x5x128xf32>
    %9 = vector.shape_cast %8 : vector<1x1x6x5x128xf32> to vector<1x6x5x128xf32>
    %c1_23 = arith.constant 1 : index
    %c0_24 = arith.constant 0 : index
    %c0_25 = arith.constant 0 : index
    %c0_26 = arith.constant 0 : index
    %c0_27 = arith.constant 0 : index
    %10 = vector.load %arg3[%c1_23, %c0_24, %c0_25, %c0_26, %c0_27] : memref<8x1x6x6x128xf32, #tpu.memory_space<vmem>>, vector<1x1x6x5x128xf32>
    %11 = vector.shape_cast %10 : vector<1x1x6x5x128xf32> to vector<1x6x5x128xf32>
    %c0_28 = arith.constant 0 : index
    %c0_29 = arith.constant 0 : index
    %c0_30 = arith.constant 0 : index
    %c1_31 = arith.constant 1 : index
    %c0_32 = arith.constant 0 : index
    %12 = vector.load %arg3[%c0_28, %c0_29, %c0_30, %c1_31, %c0_32] : memref<8x1x6x6x128xf32, #tpu.memory_space<vmem>>, vector<1x1x6x5x128xf32>
    %13 = vector.shape_cast %12 : vector<1x1x6x5x128xf32> to vector<1x6x5x128xf32>
    %c1_33 = arith.constant 1 : index
    %c0_34 = arith.constant 0 : index
    %c0_35 = arith.constant 0 : index
    %c1_36 = arith.constant 1 : index
    %c0_37 = arith.constant 0 : index
    %14 = vector.load %arg3[%c1_33, %c0_34, %c0_35, %c1_36, %c0_37] : memref<8x1x6x6x128xf32, #tpu.memory_space<vmem>>, vector<1x1x6x5x128xf32>
    %15 = vector.shape_cast %14 : vector<1x1x6x5x128xf32> to vector<1x6x5x128xf32>
    %cst = arith.constant 0.482962906 : f32
    %16 = vector.broadcast %cst : f32 to vector<5x6x5x128xf32>
    %17 = arith.mulf %16, %1 : vector<5x6x5x128xf32>
    %cst_38 = arith.constant 0.83651632 : f32
    %18 = vector.broadcast %cst_38 : f32 to vector<5x6x5x128xf32>
    %19 = arith.mulf %18, %3 : vector<5x6x5x128xf32>
    %20 = arith.addf %17, %19 : vector<5x6x5x128xf32>
    %cst_39 = arith.constant 0.224143863 : f32
    %21 = vector.broadcast %cst_39 : f32 to vector<5x6x5x128xf32>
    %22 = arith.mulf %21, %5 : vector<5x6x5x128xf32>
    %23 = arith.addf %20, %22 : vector<5x6x5x128xf32>
    %cst_40 = arith.constant -0.129409522 : f32
    %24 = vector.broadcast %cst_40 : f32 to vector<5x6x5x128xf32>
    %25 = arith.mulf %24, %7 : vector<5x6x5x128xf32>
    %26 = arith.addf %23, %25 : vector<5x6x5x128xf32>
    %c0_41 = arith.constant 0 : index
    %c0_42 = arith.constant 0 : index
    %c0_43 = arith.constant 0 : index
    %c0_44 = arith.constant 0 : index
    %c0_45 = arith.constant 0 : index
    %27 = vector.load %arg5[%c0_41, %c0_42, %c0_43, %c0_44, %c0_45] : memref<4x6x6x5x128xf32, #tpu.memory_space<vmem>>, vector<1x5x6x5x128xf32>
    %28 = vector.shape_cast %27 : vector<1x5x6x5x128xf32> to vector<5x6x5x128xf32>
    %29 = vector.shape_cast %26 : vector<5x6x5x128xf32> to vector<1x5x6x5x128xf32>
    tpu.vector_store %arg5[%c0_41, %c0_42, %c0_43, %c0_44, %c0_45], %29 {strides = array<i32>} : memref<4x6x6x5x128xf32, #tpu.memory_space<vmem>>, vector<1x5x6x5x128xf32>,
    %cst_46 = arith.constant 0.482962906 : f32
    %30 = vector.broadcast %cst_46 : f32 to vector<1x6x5x128xf32>
    %31 = arith.mulf %30, %9 : vector<1x6x5x128xf32>
    %cst_47 = arith.constant 0.83651632 : f32
    %32 = vector.broadcast %cst_47 : f32 to vector<1x6x5x128xf32>
    %33 = arith.mulf %32, %11 : vector<1x6x5x128xf32>
    %34 = arith.addf %31, %33 : vector<1x6x5x128xf32>
    %cst_48 = arith.constant 0.224143863 : f32
    %35 = vector.broadcast %cst_48 : f32 to vector<1x6x5x128xf32>
    %36 = arith.mulf %35, %13 : vector<1x6x5x128xf32>
    %37 = arith.addf %34, %36 : vector<1x6x5x128xf32>
    %cst_49 = arith.constant -0.129409522 : f32
    %38 = vector.broadcast %cst_49 : f32 to vector<1x6x5x128xf32>
    %39 = arith.mulf %38, %15 : vector<1x6x5x128xf32>
    %40 = arith.addf %37, %39 : vector<1x6x5x128xf32>
    %c0_50 = arith.constant 0 : index
    %c5 = arith.constant 5 : index
    %c0_51 = arith.constant 0 : index
    %c0_52 = arith.constant 0 : index
    %c0_53 = arith.constant 0 : index
    %41 = vector.load %arg5[%c0_50, %c5, %c0_51, %c0_52, %c0_53] : memref<4x6x6x5x128xf32, #tpu.memory_space<vmem>>, vector<1x1x6x5x128xf32>
    %42 = vector.shape_cast %41 : vector<1x1x6x5x128xf32> to vector<1x6x5x128xf32>
    %43 = vector.shape_cast %40 : vector<1x6x5x128xf32> to vector<1x1x6x5x128xf32>
    tpu.vector_store %arg5[%c0_50, %c5, %c0_51, %c0_52, %c0_53], %43 {strides = array<i32>} : memref<4x6x6x5x128xf32, #tpu.memory_space<vmem>>, vector<1x1x6x5x128xf32>,
    %cst_54 = arith.constant -0.129409522 : f32
    %44 = vector.broadcast %cst_54 : f32 to vector<5x6x5x128xf32>
    %45 = arith.mulf %44, %1 : vector<5x6x5x128xf32>
    %cst_55 = arith.constant -0.224143863 : f32
    %46 = vector.broadcast %cst_55 : f32 to vector<5x6x5x128xf32>
    %47 = arith.mulf %46, %3 : vector<5x6x5x128xf32>
    %48 = arith.addf %45, %47 : vector<5x6x5x128xf32>
    %cst_56 = arith.constant 0.83651632 : f32
    %49 = vector.broadcast %cst_56 : f32 to vector<5x6x5x128xf32>
    %50 = arith.mulf %49, %5 : vector<5x6x5x128xf32>
    %51 = arith.addf %48, %50 : vector<5x6x5x128xf32>
    %cst_57 = arith.constant -0.482962906 : f32
    %52 = vector.broadcast %cst_57 : f32 to vector<5x6x5x128xf32>
    %53 = arith.mulf %52, %7 : vector<5x6x5x128xf32>
    %54 = arith.addf %51, %53 : vector<5x6x5x128xf32>
    %c1_58 = arith.constant 1 : index
    %c0_59 = arith.constant 0 : index
    %c0_60 = arith.constant 0 : index
    %c0_61 = arith.constant 0 : index
    %c0_62 = arith.constant 0 : index
    %55 = vector.load %arg5[%c1_58, %c0_59, %c0_60, %c0_61, %c0_62] : memref<4x6x6x5x128xf32, #tpu.memory_space<vmem>>, vector<1x5x6x5x128xf32>
    %56 = vector.shape_cast %55 : vector<1x5x6x5x128xf32> to vector<5x6x5x128xf32>
    %57 = vector.shape_cast %54 : vector<5x6x5x128xf32> to vector<1x5x6x5x128xf32>
    tpu.vector_store %arg5[%c1_58, %c0_59, %c0_60, %c0_61, %c0_62], %57 {strides = array<i32>} : memref<4x6x6x5x128xf32, #tpu.memory_space<vmem>>, vector<1x5x6x5x128xf32>,
    %cst_63 = arith.constant -0.129409522 : f32
    %58 = vector.broadcast %cst_63 : f32 to vector<1x6x5x128xf32>
    %59 = arith.mulf %58, %9 : vector<1x6x5x128xf32>
    %cst_64 = arith.constant -0.224143863 : f32
    %60 = vector.broadcast %cst_64 : f32 to vector<1x6x5x128xf32>
    %61 = arith.mulf %60, %11 : vector<1x6x5x128xf32>
    %62 = arith.addf %59, %61 : vector<1x6x5x128xf32>
    %cst_65 = arith.constant 0.83651632 : f32
    %63 = vector.broadcast %cst_65 : f32 to vector<1x6x5x128xf32>
    %64 = arith.mulf %63, %13 : vector<1x6x5x128xf32>
    %65 = arith.addf %62, %64 : vector<1x6x5x128xf32>
    %cst_66 = arith.constant -0.482962906 : f32
    %66 = vector.broadcast %cst_66 : f32 to vector<1x6x5x128xf32>
    %67 = arith.mulf %66, %15 : vector<1x6x5x128xf32>
    %68 = arith.addf %65, %67 : vector<1x6x5x128xf32>
    %c1_67 = arith.constant 1 : index
    %c5_68 = arith.constant 5 : index
    %c0_69 = arith.constant 0 : index
    %c0_70 = arith.constant 0 : index
    %c0_71 = arith.constant 0 : index
    %69 = vector.load %arg5[%c1_67, %c5_68, %c0_69, %c0_70, %c0_71] : memref<4x6x6x5x128xf32, #tpu.memory_space<vmem>>, vector<1x1x6x5x128xf32>
    %70 = vector.shape_cast %69 : vector<1x1x6x5x128xf32> to vector<1x6x5x128xf32>
    %71 = vector.shape_cast %68 : vector<1x6x5x128xf32> to vector<1x1x6x5x128xf32>
    tpu.vector_store %arg5[%c1_67, %c5_68, %c0_69, %c0_70, %c0_71], %71 {strides = array<i32>} : memref<4x6x6x5x128xf32, #tpu.memory_space<vmem>>, vector<1x1x6x5x128xf32>,
    %c2 = arith.constant 2 : index
    %c0_72 = arith.constant 0 : index
    %c0_73 = arith.constant 0 : index
    %c0_74 = arith.constant 0 : index
    %c0_75 = arith.constant 0 : index
    %72 = vector.load %arg2[%c2, %c0_72, %c0_73, %c0_74, %c0_75] : memref<8x5x6x6x128xf32, #tpu.memory_space<vmem>>, vector<1x5x6x5x128xf32>
    %73 = vector.shape_cast %72 : vector<1x5x6x5x128xf32> to vector<5x6x5x128xf32>
    %c3 = arith.constant 3 : index
    %c0_76 = arith.constant 0 : index
    %c0_77 = arith.constant 0 : index
    %c0_78 = arith.constant 0 : index
    %c0_79 = arith.constant 0 : index
    %74 = vector.load %arg2[%c3, %c0_76, %c0_77, %c0_78, %c0_79] : memref<8x5x6x6x128xf32, #tpu.memory_space<vmem>>, vector<1x5x6x5x128xf32>
    %75 = vector.shape_cast %74 : vector<1x5x6x5x128xf32> to vector<5x6x5x128xf32>
    %c2_80 = arith.constant 2 : index
    %c0_81 = arith.constant 0 : index
    %c0_82 = arith.constant 0 : index
    %c1_83 = arith.constant 1 : index
    %c0_84 = arith.constant 0 : index
    %76 = vector.load %arg2[%c2_80, %c0_81, %c0_82, %c1_83, %c0_84] : memref<8x5x6x6x128xf32, #tpu.memory_space<vmem>>, vector<1x5x6x5x128xf32>
    %77 = vector.shape_cast %76 : vector<1x5x6x5x128xf32> to vector<5x6x5x128xf32>
    %c3_85 = arith.constant 3 : index
    %c0_86 = arith.constant 0 : index
    %c0_87 = arith.constant 0 : index
    %c1_88 = arith.constant 1 : index
    %c0_89 = arith.constant 0 : index
    %78 = vector.load %arg2[%c3_85, %c0_86, %c0_87, %c1_88, %c0_89] : memref<8x5x6x6x128xf32, #tpu.memory_space<vmem>>, vector<1x5x6x5x128xf32>
    %79 = vector.shape_cast %78 : vector<1x5x6x5x128xf32> to vector<5x6x5x128xf32>
    %c2_90 = arith.constant 2 : index
    %c0_91 = arith.constant 0 : index
    %c0_92 = arith.constant 0 : index
    %c0_93 = arith.constant 0 : index
    %c0_94 = arith.constant 0 : index
    %80 = vector.load %arg3[%c2_90, %c0_91, %c0_92, %c0_93, %c0_94] : memref<8x1x6x6x128xf32, #tpu.memory_space<vmem>>, vector<1x1x6x5x128xf32>
    %81 = vector.shape_cast %80 : vector<1x1x6x5x128xf32> to vector<1x6x5x128xf32>
    %c3_95 = arith.constant 3 : index
    %c0_96 = arith.constant 0 : index
    %c0_97 = arith.constant 0 : index
    %c0_98 = arith.constant 0 : index
    %c0_99 = arith.constant 0 : index
    %82 = vector.load %arg3[%c3_95, %c0_96, %c0_97, %c0_98, %c0_99] : memref<8x1x6x6x128xf32, #tpu.memory_space<vmem>>, vector<1x1x6x5x128xf32>
    %83 = vector.shape_cast %82 : vector<1x1x6x5x128xf32> to vector<1x6x5x128xf32>
    %c2_100 = arith.constant 2 : index
    %c0_101 = arith.constant 0 : index
    %c0_102 = arith.constant 0 : index
    %c1_103 = arith.constant 1 : index
    %c0_104 = arith.constant 0 : index
    %84 = vector.load %arg3[%c2_100, %c0_101, %c0_102, %c1_103, %c0_104] : memref<8x1x6x6x128xf32, #tpu.memory_space<vmem>>, vector<1x1x6x5x128xf32>
    %85 = vector.shape_cast %84 : vector<1x1x6x5x128xf32> to vector<1x6x5x128xf32>
    %c3_105 = arith.constant 3 : index
    %c0_106 = arith.constant 0 : index
    %c0_107 = arith.constant 0 : index
    %c1_108 = arith.constant 1 : index
    %c0_109 = arith.constant 0 : index
    %86 = vector.load %arg3[%c3_105, %c0_106, %c0_107, %c1_108, %c0_109] : memref<8x1x6x6x128xf32, #tpu.memory_space<vmem>>, vector<1x1x6x5x128xf32>
    %87 = vector.shape_cast %86 : vector<1x1x6x5x128xf32> to vector<1x6x5x128xf32>
    %cst_110 = arith.constant 0.482962906 : f32
    %88 = vector.broadcast %cst_110 : f32 to vector<5x6x5x128xf32>
    %89 = arith.mulf %88, %73 : vector<5x6x5x128xf32>
    %cst_111 = arith.constant 0.83651632 : f32
    %90 = vector.broadcast %cst_111 : f32 to vector<5x6x5x128xf32>
    %91 = arith.mulf %90, %75 : vector<5x6x5x128xf32>
    %92 = arith.addf %89, %91 : vector<5x6x5x128xf32>
    %cst_112 = arith.constant 0.224143863 : f32
    %93 = vector.broadcast %cst_112 : f32 to vector<5x6x5x128xf32>
    %94 = arith.mulf %93, %77 : vector<5x6x5x128xf32>
    %95 = arith.addf %92, %94 : vector<5x6x5x128xf32>
    %cst_113 = arith.constant -0.129409522 : f32
    %96 = vector.broadcast %cst_113 : f32 to vector<5x6x5x128xf32>
    %97 = arith.mulf %96, %79 : vector<5x6x5x128xf32>
    %98 = arith.addf %95, %97 : vector<5x6x5x128xf32>
    %c2_114 = arith.constant 2 : index
    %c0_115 = arith.constant 0 : index
    %c0_116 = arith.constant 0 : index
    %c0_117 = arith.constant 0 : index
    %c0_118 = arith.constant 0 : index
    %99 = vector.load %arg5[%c2_114, %c0_115, %c0_116, %c0_117, %c0_118] : memref<4x6x6x5x128xf32, #tpu.memory_space<vmem>>, vector<1x5x6x5x128xf32>
    %100 = vector.shape_cast %99 : vector<1x5x6x5x128xf32> to vector<5x6x5x128xf32>
    %101 = vector.shape_cast %98 : vector<5x6x5x128xf32> to vector<1x5x6x5x128xf32>
    tpu.vector_store %arg5[%c2_114, %c0_115, %c0_116, %c0_117, %c0_118], %101 {strides = array<i32>} : memref<4x6x6x5x128xf32, #tpu.memory_space<vmem>>, vector<1x5x6x5x128xf32>,
    %cst_119 = arith.constant 0.482962906 : f32
    %102 = vector.broadcast %cst_119 : f32 to vector<1x6x5x128xf32>
    %103 = arith.mulf %102, %81 : vector<1x6x5x128xf32>
    %cst_120 = arith.constant 0.83651632 : f32
    %104 = vector.broadcast %cst_120 : f32 to vector<1x6x5x128xf32>
    %105 = arith.mulf %104, %83 : vector<1x6x5x128xf32>
    %106 = arith.addf %103, %105 : vector<1x6x5x128xf32>
    %cst_121 = arith.constant 0.224143863 : f32
    %107 = vector.broadcast %cst_121 : f32 to vector<1x6x5x128xf32>
    %108 = arith.mulf %107, %85 : vector<1x6x5x128xf32>
    %109 = arith.addf %106, %108 : vector<1x6x5x128xf32>
    %cst_122 = arith.constant -0.129409522 : f32
    %110 = vector.broadcast %cst_122 : f32 to vector<1x6x5x128xf32>
    %111 = arith.mulf %110, %87 : vector<1x6x5x128xf32>
    %112 = arith.addf %109, %111 : vector<1x6x5x128xf32>
    %c2_123 = arith.constant 2 : index
    %c5_124 = arith.constant 5 : index
    %c0_125 = arith.constant 0 : index
    %c0_126 = arith.constant 0 : index
    %c0_127 = arith.constant 0 : index
    %113 = vector.load %arg5[%c2_123, %c5_124, %c0_125, %c0_126, %c0_127] : memref<4x6x6x5x128xf32, #tpu.memory_space<vmem>>, vector<1x1x6x5x128xf32>
    %114 = vector.shape_cast %113 : vector<1x1x6x5x128xf32> to vector<1x6x5x128xf32>
    %115 = vector.shape_cast %112 : vector<1x6x5x128xf32> to vector<1x1x6x5x128xf32>
    tpu.vector_store %arg5[%c2_123, %c5_124, %c0_125, %c0_126, %c0_127], %115 {strides = array<i32>} : memref<4x6x6x5x128xf32, #tpu.memory_space<vmem>>, vector<1x1x6x5x128xf32>,
    %cst_128 = arith.constant -0.129409522 : f32
    %116 = vector.broadcast %cst_128 : f32 to vector<5x6x5x128xf32>
    %117 = arith.mulf %116, %73 : vector<5x6x5x128xf32>
    %cst_129 = arith.constant -0.224143863 : f32
    %118 = vector.broadcast %cst_129 : f32 to vector<5x6x5x128xf32>
    %119 = arith.mulf %118, %75 : vector<5x6x5x128xf32>
    %120 = arith.addf %117, %119 : vector<5x6x5x128xf32>
    %cst_130 = arith.constant 0.83651632 : f32
    %121 = vector.broadcast %cst_130 : f32 to vector<5x6x5x128xf32>
    %122 = arith.mulf %121, %77 : vector<5x6x5x128xf32>
    %123 = arith.addf %120, %122 : vector<5x6x5x128xf32>
    %cst_131 = arith.constant -0.482962906 : f32
    %124 = vector.broadcast %cst_131 : f32 to vector<5x6x5x128xf32>
    %125 = arith.mulf %124, %79 : vector<5x6x5x128xf32>
    %126 = arith.addf %123, %125 : vector<5x6x5x128xf32>
    %c3_132 = arith.constant 3 : index
    %c0_133 = arith.constant 0 : index
    %c0_134 = arith.constant 0 : index
    %c0_135 = arith.constant 0 : index
    %c0_136 = arith.constant 0 : index
    %127 = vector.load %arg5[%c3_132, %c0_133, %c0_134, %c0_135, %c0_136] : memref<4x6x6x5x128xf32, #tpu.memory_space<vmem>>, vector<1x5x6x5x128xf32>
    %128 = vector.shape_cast %127 : vector<1x5x6x5x128xf32> to vector<5x6x5x128xf32>
    %129 = vector.shape_cast %126 : vector<5x6x5x128xf32> to vector<1x5x6x5x128xf32>
    tpu.vector_store %arg5[%c3_132, %c0_133, %c0_134, %c0_135, %c0_136], %129 {strides = array<i32>} : memref<4x6x6x5x128xf32, #tpu.memory_space<vmem>>, vector<1x5x6x5x128xf32>,
    %cst_137 = arith.constant -0.129409522 : f32
    %130 = vector.broadcast %cst_137 : f32 to vector<1x6x5x128xf32>
    %131 = arith.mulf %130, %81 : vector<1x6x5x128xf32>
    %cst_138 = arith.constant -0.224143863 : f32
    %132 = vector.broadcast %cst_138 : f32 to vector<1x6x5x128xf32>
    %133 = arith.mulf %132, %83 : vector<1x6x5x128xf32>
    %134 = arith.addf %131, %133 : vector<1x6x5x128xf32>
    %cst_139 = arith.constant 0.83651632 : f32
    %135 = vector.broadcast %cst_139 : f32 to vector<1x6x5x128xf32>
    %136 = arith.mulf %135, %85 : vector<1x6x5x128xf32>
    %137 = arith.addf %134, %136 : vector<1x6x5x128xf32>
    %cst_140 = arith.constant -0.482962906 : f32
    %138 = vector.broadcast %cst_140 : f32 to vector<1x6x5x128xf32>
    %139 = arith.mulf %138, %87 : vector<1x6x5x128xf32>
    %140 = arith.addf %137, %139 : vector<1x6x5x128xf32>
    %c3_141 = arith.constant 3 : index
    %c5_142 = arith.constant 5 : index
    %c0_143 = arith.constant 0 : index
    %c0_144 = arith.constant 0 : index
    %c0_145 = arith.constant 0 : index
    %141 = vector.load %arg5[%c3_141, %c5_142, %c0_143, %c0_144, %c0_145] : memref<4x6x6x5x128xf32, #tpu.memory_space<vmem>>, vector<1x1x6x5x128xf32>
    %142 = vector.shape_cast %141 : vector<1x1x6x5x128xf32> to vector<1x6x5x128xf32>
    %143 = vector.shape_cast %140 : vector<1x6x5x128xf32> to vector<1x1x6x5x128xf32>
    tpu.vector_store %arg5[%c3_141, %c5_142, %c0_143, %c0_144, %c0_145], %143 {strides = array<i32>} : memref<4x6x6x5x128xf32, #tpu.memory_space<vmem>>, vector<1x1x6x5x128xf32>,
    %c0_146 = arith.constant 0 : index
    %c0_147 = arith.constant 0 : index
    %c0_148 = arith.constant 0 : index
    %c0_149 = arith.constant 0 : index
    %c0_150 = arith.constant 0 : index
    %144 = vector.load %arg5[%c0_146, %c0_147, %c0_148, %c0_149, %c0_150] : memref<4x6x6x5x128xf32, #tpu.memory_space<vmem>>, vector<1x6x5x5x128xf32>
    %145 = vector.shape_cast %144 : vector<1x6x5x5x128xf32> to vector<6x5x5x128xf32>
    %c2_151 = arith.constant 2 : index
    %c0_152 = arith.constant 0 : index
    %c0_153 = arith.constant 0 : index
    %c0_154 = arith.constant 0 : index
    %c0_155 = arith.constant 0 : index
    %146 = vector.load %arg5[%c2_151, %c0_152, %c0_153, %c0_154, %c0_155] : memref<4x6x6x5x128xf32, #tpu.memory_space<vmem>>, vector<1x6x5x5x128xf32>
    %147 = vector.shape_cast %146 : vector<1x6x5x5x128xf32> to vector<6x5x5x128xf32>
    %c0_156 = arith.constant 0 : index
    %c0_157 = arith.constant 0 : index
    %c1_158 = arith.constant 1 : index
    %c0_159 = arith.constant 0 : index
    %c0_160 = arith.constant 0 : index
    %148 = vector.load %arg5[%c0_156, %c0_157, %c1_158, %c0_159, %c0_160] : memref<4x6x6x5x128xf32, #tpu.memory_space<vmem>>, vector<1x6x5x5x128xf32>
    %149 = vector.shape_cast %148 : vector<1x6x5x5x128xf32> to vector<6x5x5x128xf32>
    %c2_161 = arith.constant 2 : index
    %c0_162 = arith.constant 0 : index
    %c1_163 = arith.constant 1 : index
    %c0_164 = arith.constant 0 : index
    %c0_165 = arith.constant 0 : index
    %150 = vector.load %arg5[%c2_161, %c0_162, %c1_163, %c0_164, %c0_165] : memref<4x6x6x5x128xf32, #tpu.memory_space<vmem>>, vector<1x6x5x5x128xf32>
    %151 = vector.shape_cast %150 : vector<1x6x5x5x128xf32> to vector<6x5x5x128xf32>
    %cst_166 = arith.constant 0.482962906 : f32
    %152 = vector.broadcast %cst_166 : f32 to vector<6x5x5x128xf32>
    %153 = arith.mulf %152, %145 : vector<6x5x5x128xf32>
    %cst_167 = arith.constant 0.83651632 : f32
    %154 = vector.broadcast %cst_167 : f32 to vector<6x5x5x128xf32>
    %155 = arith.mulf %154, %147 : vector<6x5x5x128xf32>
    %156 = arith.addf %153, %155 : vector<6x5x5x128xf32>
    %cst_168 = arith.constant 0.224143863 : f32
    %157 = vector.broadcast %cst_168 : f32 to vector<6x5x5x128xf32>
    %158 = arith.mulf %157, %149 : vector<6x5x5x128xf32>
    %159 = arith.addf %156, %158 : vector<6x5x5x128xf32>
    %cst_169 = arith.constant -0.129409522 : f32
    %160 = vector.broadcast %cst_169 : f32 to vector<6x5x5x128xf32>
    %161 = arith.mulf %160, %151 : vector<6x5x5x128xf32>
    %162 = arith.addf %159, %161 : vector<6x5x5x128xf32>
    %c0_170 = arith.constant 0 : index
    %c0_171 = arith.constant 0 : index
    %c0_172 = arith.constant 0 : index
    %c0_173 = arith.constant 0 : index
    %c0_174 = arith.constant 0 : index
    %163 = vector.load %arg6[%c0_170, %c0_171, %c0_172, %c0_173, %c0_174] : memref<8x6x5x5x128xf32, #tpu.memory_space<vmem>>, vector<1x6x5x5x128xf32>
    %164 = vector.shape_cast %163 : vector<1x6x5x5x128xf32> to vector<6x5x5x128xf32>
    %165 = vector.shape_cast %162 : vector<6x5x5x128xf32> to vector<1x6x5x5x128xf32>
    tpu.vector_store %arg6[%c0_170, %c0_171, %c0_172, %c0_173, %c0_174], %165 {strides = array<i32>} : memref<8x6x5x5x128xf32, #tpu.memory_space<vmem>>, vector<1x6x5x5x128xf32>,
    %cst_175 = arith.constant -0.129409522 : f32
    %166 = vector.broadcast %cst_175 : f32 to vector<6x5x5x128xf32>
    %167 = arith.mulf %166, %145 : vector<6x5x5x128xf32>
    %cst_176 = arith.constant -0.224143863 : f32
    %168 = vector.broadcast %cst_176 : f32 to vector<6x5x5x128xf32>
    %169 = arith.mulf %168, %147 : vector<6x5x5x128xf32>
    %170 = arith.addf %167, %169 : vector<6x5x5x128xf32>
    %cst_177 = arith.constant 0.83651632 : f32
    %171 = vector.broadcast %cst_177 : f32 to vector<6x5x5x128xf32>
    %172 = arith.mulf %171, %149 : vector<6x5x5x128xf32>
    %173 = arith.addf %170, %172 : vector<6x5x5x128xf32>
    %cst_178 = arith.constant -0.482962906 : f32
    %174 = vector.broadcast %cst_178 : f32 to vector<6x5x5x128xf32>
    %175 = arith.mulf %174, %151 : vector<6x5x5x128xf32>
    %176 = arith.addf %173, %175 : vector<6x5x5x128xf32>
    %c2_179 = arith.constant 2 : index
    %c0_180 = arith.constant 0 : index
    %c0_181 = arith.constant 0 : index
    %c0_182 = arith.constant 0 : index
    %c0_183 = arith.constant 0 : index
    %177 = vector.load %arg6[%c2_179, %c0_180, %c0_181, %c0_182, %c0_183] : memref<8x6x5x5x128xf32, #tpu.memory_space<vmem>>, vector<1x6x5x5x128xf32>
    %178 = vector.shape_cast %177 : vector<1x6x5x5x128xf32> to vector<6x5x5x128xf32>
    %179 = vector.shape_cast %176 : vector<6x5x5x128xf32> to vector<1x6x5x5x128xf32>
    tpu.vector_store %arg6[%c2_179, %c0_180, %c0_181, %c0_182, %c0_183], %179 {strides = array<i32>} : memref<8x6x5x5x128xf32, #tpu.memory_space<vmem>>, vector<1x6x5x5x128xf32>,
    %c1_184 = arith.constant 1 : index
    %c0_185 = arith.constant 0 : index
    %c0_186 = arith.constant 0 : index
    %c0_187 = arith.constant 0 : index
    %c0_188 = arith.constant 0 : index
    %180 = vector.load %arg5[%c1_184, %c0_185, %c0_186, %c0_187, %c0_188] : memref<4x6x6x5x128xf32, #tpu.memory_space<vmem>>, vector<1x6x5x5x128xf32>
    %181 = vector.shape_cast %180 : vector<1x6x5x5x128xf32> to vector<6x5x5x128xf32>
    %c3_189 = arith.constant 3 : index
    %c0_190 = arith.constant 0 : index
    %c0_191 = arith.constant 0 : index
    %c0_192 = arith.constant 0 : index
    %c0_193 = arith.constant 0 : index
    %182 = vector.load %arg5[%c3_189, %c0_190, %c0_191, %c0_192, %c0_193] : memref<4x6x6x5x128xf32, #tpu.memory_space<vmem>>, vector<1x6x5x5x128xf32>
    %183 = vector.shape_cast %182 : vector<1x6x5x5x128xf32> to vector<6x5x5x128xf32>
    %c1_194 = arith.constant 1 : index
    %c0_195 = arith.constant 0 : index
    %c1_196 = arith.constant 1 : index
    %c0_197 = arith.constant 0 : index
    %c0_198 = arith.constant 0 : index
    %184 = vector.load %arg5[%c1_194, %c0_195, %c1_196, %c0_197, %c0_198] : memref<4x6x6x5x128xf32, #tpu.memory_space<vmem>>, vector<1x6x5x5x128xf32>
    %185 = vector.shape_cast %184 : vector<1x6x5x5x128xf32> to vector<6x5x5x128xf32>
    %c3_199 = arith.constant 3 : index
    %c0_200 = arith.constant 0 : index
    %c1_201 = arith.constant 1 : index
    %c0_202 = arith.constant 0 : index
    %c0_203 = arith.constant 0 : index
    %186 = vector.load %arg5[%c3_199, %c0_200, %c1_201, %c0_202, %c0_203] : memref<4x6x6x5x128xf32, #tpu.memory_space<vmem>>, vector<1x6x5x5x128xf32>
    %187 = vector.shape_cast %186 : vector<1x6x5x5x128xf32> to vector<6x5x5x128xf32>
    %cst_204 = arith.constant 0.482962906 : f32
    %188 = vector.broadcast %cst_204 : f32 to vector<6x5x5x128xf32>
    %189 = arith.mulf %188, %181 : vector<6x5x5x128xf32>
    %cst_205 = arith.constant 0.83651632 : f32
    %190 = vector.broadcast %cst_205 : f32 to vector<6x5x5x128xf32>
    %191 = arith.mulf %190, %183 : vector<6x5x5x128xf32>
    %192 = arith.addf %189, %191 : vector<6x5x5x128xf32>
    %cst_206 = arith.constant 0.224143863 : f32
    %193 = vector.broadcast %cst_206 : f32 to vector<6x5x5x128xf32>
    %194 = arith.mulf %193, %185 : vector<6x5x5x128xf32>
    %195 = arith.addf %192, %194 : vector<6x5x5x128xf32>
    %cst_207 = arith.constant -0.129409522 : f32
    %196 = vector.broadcast %cst_207 : f32 to vector<6x5x5x128xf32>
    %197 = arith.mulf %196, %187 : vector<6x5x5x128xf32>
    %198 = arith.addf %195, %197 : vector<6x5x5x128xf32>
    %c1_208 = arith.constant 1 : index
    %c0_209 = arith.constant 0 : index
    %c0_210 = arith.constant 0 : index
    %c0_211 = arith.constant 0 : index
    %c0_212 = arith.constant 0 : index
    %199 = vector.load %arg6[%c1_208, %c0_209, %c0_210, %c0_211, %c0_212] : memref<8x6x5x5x128xf32, #tpu.memory_space<vmem>>, vector<1x6x5x5x128xf32>
    %200 = vector.shape_cast %199 : vector<1x6x5x5x128xf32> to vector<6x5x5x128xf32>
    %201 = vector.shape_cast %198 : vector<6x5x5x128xf32> to vector<1x6x5x5x128xf32>
    tpu.vector_store %arg6[%c1_208, %c0_209, %c0_210, %c0_211, %c0_212], %201 {strides = array<i32>} : memref<8x6x5x5x128xf32, #tpu.memory_space<vmem>>, vector<1x6x5x5x128xf32>,
    %cst_213 = arith.constant -0.129409522 : f32
    %202 = vector.broadcast %cst_213 : f32 to vector<6x5x5x128xf32>
    %203 = arith.mulf %202, %181 : vector<6x5x5x128xf32>
    %cst_214 = arith.constant -0.224143863 : f32
    %204 = vector.broadcast %cst_214 : f32 to vector<6x5x5x128xf32>
    %205 = arith.mulf %204, %183 : vector<6x5x5x128xf32>
    %206 = arith.addf %203, %205 : vector<6x5x5x128xf32>
    %cst_215 = arith.constant 0.83651632 : f32
    %207 = vector.broadcast %cst_215 : f32 to vector<6x5x5x128xf32>
    %208 = arith.mulf %207, %185 : vector<6x5x5x128xf32>
    %209 = arith.addf %206, %208 : vector<6x5x5x128xf32>
    %cst_216 = arith.constant -0.482962906 : f32
    %210 = vector.broadcast %cst_216 : f32 to vector<6x5x5x128xf32>
    %211 = arith.mulf %210, %187 : vector<6x5x5x128xf32>
    %212 = arith.addf %209, %211 : vector<6x5x5x128xf32>
    %c3_217 = arith.constant 3 : index
    %c0_218 = arith.constant 0 : index
    %c0_219 = arith.constant 0 : index
    %c0_220 = arith.constant 0 : index
    %c0_221 = arith.constant 0 : index
    %213 = vector.load %arg6[%c3_217, %c0_218, %c0_219, %c0_220, %c0_221] : memref<8x6x5x5x128xf32, #tpu.memory_space<vmem>>, vector<1x6x5x5x128xf32>
    %214 = vector.shape_cast %213 : vector<1x6x5x5x128xf32> to vector<6x5x5x128xf32>
    %215 = vector.shape_cast %212 : vector<6x5x5x128xf32> to vector<1x6x5x5x128xf32>
    tpu.vector_store %arg6[%c3_217, %c0_218, %c0_219, %c0_220, %c0_221], %215 {strides = array<i32>} : memref<8x6x5x5x128xf32, #tpu.memory_space<vmem>>, vector<1x6x5x5x128xf32>,
    %c4 = arith.constant 4 : index
    %c0_222 = arith.constant 0 : index
    %c0_223 = arith.constant 0 : index
    %c0_224 = arith.constant 0 : index
    %c0_225 = arith.constant 0 : index
    %216 = vector.load %arg2[%c4, %c0_222, %c0_223, %c0_224, %c0_225] : memref<8x5x6x6x128xf32, #tpu.memory_space<vmem>>, vector<1x5x6x5x128xf32>
    %217 = vector.shape_cast %216 : vector<1x5x6x5x128xf32> to vector<5x6x5x128xf32>
    %c5_226 = arith.constant 5 : index
    %c0_227 = arith.constant 0 : index
    %c0_228 = arith.constant 0 : index
    %c0_229 = arith.constant 0 : index
    %c0_230 = arith.constant 0 : index
    %218 = vector.load %arg2[%c5_226, %c0_227, %c0_228, %c0_229, %c0_230] : memref<8x5x6x6x128xf32, #tpu.memory_space<vmem>>, vector<1x5x6x5x128xf32>
    %219 = vector.shape_cast %218 : vector<1x5x6x5x128xf32> to vector<5x6x5x128xf32>
    %c4_231 = arith.constant 4 : index
    %c0_232 = arith.constant 0 : index
    %c0_233 = arith.constant 0 : index
    %c1_234 = arith.constant 1 : index
    %c0_235 = arith.constant 0 : index
    %220 = vector.load %arg2[%c4_231, %c0_232, %c0_233, %c1_234, %c0_235] : memref<8x5x6x6x128xf32, #tpu.memory_space<vmem>>, vector<1x5x6x5x128xf32>
    %221 = vector.shape_cast %220 : vector<1x5x6x5x128xf32> to vector<5x6x5x128xf32>
    %c5_236 = arith.constant 5 : index
    %c0_237 = arith.constant 0 : index
    %c0_238 = arith.constant 0 : index
    %c1_239 = arith.constant 1 : index
    %c0_240 = arith.constant 0 : index
    %222 = vector.load %arg2[%c5_236, %c0_237, %c0_238, %c1_239, %c0_240] : memref<8x5x6x6x128xf32, #tpu.memory_space<vmem>>, vector<1x5x6x5x128xf32>
    %223 = vector.shape_cast %222 : vector<1x5x6x5x128xf32> to vector<5x6x5x128xf32>
    %c4_241 = arith.constant 4 : index
    %c0_242 = arith.constant 0 : index
    %c0_243 = arith.constant 0 : index
    %c0_244 = arith.constant 0 : index
    %c0_245 = arith.constant 0 : index
    %224 = vector.load %arg3[%c4_241, %c0_242, %c0_243, %c0_244, %c0_245] : memref<8x1x6x6x128xf32, #tpu.memory_space<vmem>>, vector<1x1x6x5x128xf32>
    %225 = vector.shape_cast %224 : vector<1x1x6x5x128xf32> to vector<1x6x5x128xf32>
    %c5_246 = arith.constant 5 : index
    %c0_247 = arith.constant 0 : index
    %c0_248 = arith.constant 0 : index
    %c0_249 = arith.constant 0 : index
    %c0_250 = arith.constant 0 : index
    %226 = vector.load %arg3[%c5_246, %c0_247, %c0_248, %c0_249, %c0_250] : memref<8x1x6x6x128xf32, #tpu.memory_space<vmem>>, vector<1x1x6x5x128xf32>
    %227 = vector.shape_cast %226 : vector<1x1x6x5x128xf32> to vector<1x6x5x128xf32>
    %c4_251 = arith.constant 4 : index
    %c0_252 = arith.constant 0 : index
    %c0_253 = arith.constant 0 : index
    %c1_254 = arith.constant 1 : index
    %c0_255 = arith.constant 0 : index
    %228 = vector.load %arg3[%c4_251, %c0_252, %c0_253, %c1_254, %c0_255] : memref<8x1x6x6x128xf32, #tpu.memory_space<vmem>>, vector<1x1x6x5x128xf32>
    %229 = vector.shape_cast %228 : vector<1x1x6x5x128xf32> to vector<1x6x5x128xf32>
    %c5_256 = arith.constant 5 : index
    %c0_257 = arith.constant 0 : index
    %c0_258 = arith.constant 0 : index
    %c1_259 = arith.constant 1 : index
    %c0_260 = arith.constant 0 : index
    %230 = vector.load %arg3[%c5_256, %c0_257, %c0_258, %c1_259, %c0_260] : memref<8x1x6x6x128xf32, #tpu.memory_space<vmem>>, vector<1x1x6x5x128xf32>
    %231 = vector.shape_cast %230 : vector<1x1x6x5x128xf32> to vector<1x6x5x128xf32>
    %cst_261 = arith.constant 0.482962906 : f32
    %232 = vector.broadcast %cst_261 : f32 to vector<5x6x5x128xf32>
    %233 = arith.mulf %232, %217 : vector<5x6x5x128xf32>
    %cst_262 = arith.constant 0.83651632 : f32
    %234 = vector.broadcast %cst_262 : f32 to vector<5x6x5x128xf32>
    %235 = arith.mulf %234, %219 : vector<5x6x5x128xf32>
    %236 = arith.addf %233, %235 : vector<5x6x5x128xf32>
    %cst_263 = arith.constant 0.224143863 : f32
    %237 = vector.broadcast %cst_263 : f32 to vector<5x6x5x128xf32>
    %238 = arith.mulf %237, %221 : vector<5x6x5x128xf32>
    %239 = arith.addf %236, %238 : vector<5x6x5x128xf32>
    %cst_264 = arith.constant -0.129409522 : f32
    %240 = vector.broadcast %cst_264 : f32 to vector<5x6x5x128xf32>
    %241 = arith.mulf %240, %223 : vector<5x6x5x128xf32>
    %242 = arith.addf %239, %241 : vector<5x6x5x128xf32>
    %c0_265 = arith.constant 0 : index
    %c0_266 = arith.constant 0 : index
    %c0_267 = arith.constant 0 : index
    %c0_268 = arith.constant 0 : index
    %c0_269 = arith.constant 0 : index
    %243 = vector.load %arg5[%c0_265, %c0_266, %c0_267, %c0_268, %c0_269] : memref<4x6x6x5x128xf32, #tpu.memory_space<vmem>>, vector<1x5x6x5x128xf32>
    %244 = vector.shape_cast %243 : vector<1x5x6x5x128xf32> to vector<5x6x5x128xf32>
    %245 = vector.shape_cast %242 : vector<5x6x5x128xf32> to vector<1x5x6x5x128xf32>
    tpu.vector_store %arg5[%c0_265, %c0_266, %c0_267, %c0_268, %c0_269], %245 {strides = array<i32>} : memref<4x6x6x5x128xf32, #tpu.memory_space<vmem>>, vector<1x5x6x5x128xf32>,
    %cst_270 = arith.constant 0.482962906 : f32
    %246 = vector.broadcast %cst_270 : f32 to vector<1x6x5x128xf32>
    %247 = arith.mulf %246, %225 : vector<1x6x5x128xf32>
    %cst_271 = arith.constant 0.83651632 : f32
    %248 = vector.broadcast %cst_271 : f32 to vector<1x6x5x128xf32>
    %249 = arith.mulf %248, %227 : vector<1x6x5x128xf32>
    %250 = arith.addf %247, %249 : vector<1x6x5x128xf32>
    %cst_272 = arith.constant 0.224143863 : f32
    %251 = vector.broadcast %cst_272 : f32 to vector<1x6x5x128xf32>
    %252 = arith.mulf %251, %229 : vector<1x6x5x128xf32>
    %253 = arith.addf %250, %252 : vector<1x6x5x128xf32>
    %cst_273 = arith.constant -0.129409522 : f32
    %254 = vector.broadcast %cst_273 : f32 to vector<1x6x5x128xf32>
    %255 = arith.mulf %254, %231 : vector<1x6x5x128xf32>
    %256 = arith.addf %253, %255 : vector<1x6x5x128xf32>
    %c0_274 = arith.constant 0 : index
    %c5_275 = arith.constant 5 : index
    %c0_276 = arith.constant 0 : index
    %c0_277 = arith.constant 0 : index
    %c0_278 = arith.constant 0 : index
    %257 = vector.load %arg5[%c0_274, %c5_275, %c0_276, %c0_277, %c0_278] : memref<4x6x6x5x128xf32, #tpu.memory_space<vmem>>, vector<1x1x6x5x128xf32>
    %258 = vector.shape_cast %257 : vector<1x1x6x5x128xf32> to vector<1x6x5x128xf32>
    %259 = vector.shape_cast %256 : vector<1x6x5x128xf32> to vector<1x1x6x5x128xf32>
    tpu.vector_store %arg5[%c0_274, %c5_275, %c0_276, %c0_277, %c0_278], %259 {strides = array<i32>} : memref<4x6x6x5x128xf32, #tpu.memory_space<vmem>>, vector<1x1x6x5x128xf32>,
    %cst_279 = arith.constant -0.129409522 : f32
    %260 = vector.broadcast %cst_279 : f32 to vector<5x6x5x128xf32>
    %261 = arith.mulf %260, %217 : vector<5x6x5x128xf32>
    %cst_280 = arith.constant -0.224143863 : f32
    %262 = vector.broadcast %cst_280 : f32 to vector<5x6x5x128xf32>
    %263 = arith.mulf %262, %219 : vector<5x6x5x128xf32>
    %264 = arith.addf %261, %263 : vector<5x6x5x128xf32>
    %cst_281 = arith.constant 0.83651632 : f32
    %265 = vector.broadcast %cst_281 : f32 to vector<5x6x5x128xf32>
    %266 = arith.mulf %265, %221 : vector<5x6x5x128xf32>
    %267 = arith.addf %264, %266 : vector<5x6x5x128xf32>
    %cst_282 = arith.constant -0.482962906 : f32
    %268 = vector.broadcast %cst_282 : f32 to vector<5x6x5x128xf32>
    %269 = arith.mulf %268, %223 : vector<5x6x5x128xf32>
    %270 = arith.addf %267, %269 : vector<5x6x5x128xf32>
    %c1_283 = arith.constant 1 : index
    %c0_284 = arith.constant 0 : index
    %c0_285 = arith.constant 0 : index
    %c0_286 = arith.constant 0 : index
    %c0_287 = arith.constant 0 : index
    %271 = vector.load %arg5[%c1_283, %c0_284, %c0_285, %c0_286, %c0_287] : memref<4x6x6x5x128xf32, #tpu.memory_space<vmem>>, vector<1x5x6x5x128xf32>
    %272 = vector.shape_cast %271 : vector<1x5x6x5x128xf32> to vector<5x6x5x128xf32>
    %273 = vector.shape_cast %270 : vector<5x6x5x128xf32> to vector<1x5x6x5x128xf32>
    tpu.vector_store %arg5[%c1_283, %c0_284, %c0_285, %c0_286, %c0_287], %273 {strides = array<i32>} : memref<4x6x6x5x128xf32, #tpu.memory_space<vmem>>, vector<1x5x6x5x128xf32>,
    %cst_288 = arith.constant -0.129409522 : f32
    %274 = vector.broadcast %cst_288 : f32 to vector<1x6x5x128xf32>
    %275 = arith.mulf %274, %225 : vector<1x6x5x128xf32>
    %cst_289 = arith.constant -0.224143863 : f32
    %276 = vector.broadcast %cst_289 : f32 to vector<1x6x5x128xf32>
    %277 = arith.mulf %276, %227 : vector<1x6x5x128xf32>
    %278 = arith.addf %275, %277 : vector<1x6x5x128xf32>
    %cst_290 = arith.constant 0.83651632 : f32
    %279 = vector.broadcast %cst_290 : f32 to vector<1x6x5x128xf32>
    %280 = arith.mulf %279, %229 : vector<1x6x5x128xf32>
    %281 = arith.addf %278, %280 : vector<1x6x5x128xf32>
    %cst_291 = arith.constant -0.482962906 : f32
    %282 = vector.broadcast %cst_291 : f32 to vector<1x6x5x128xf32>
    %283 = arith.mulf %282, %231 : vector<1x6x5x128xf32>
    %284 = arith.addf %281, %283 : vector<1x6x5x128xf32>
    %c1_292 = arith.constant 1 : index
    %c5_293 = arith.constant 5 : index
    %c0_294 = arith.constant 0 : index
    %c0_295 = arith.constant 0 : index
    %c0_296 = arith.constant 0 : index
    %285 = vector.load %arg5[%c1_292, %c5_293, %c0_294, %c0_295, %c0_296] : memref<4x6x6x5x128xf32, #tpu.memory_space<vmem>>, vector<1x1x6x5x128xf32>
    %286 = vector.shape_cast %285 : vector<1x1x6x5x128xf32> to vector<1x6x5x128xf32>
    %287 = vector.shape_cast %284 : vector<1x6x5x128xf32> to vector<1x1x6x5x128xf32>
    tpu.vector_store %arg5[%c1_292, %c5_293, %c0_294, %c0_295, %c0_296], %287 {strides = array<i32>} : memref<4x6x6x5x128xf32, #tpu.memory_space<vmem>>, vector<1x1x6x5x128xf32>,
    %c6 = arith.constant 6 : index
    %c0_297 = arith.constant 0 : index
    %c0_298 = arith.constant 0 : index
    %c0_299 = arith.constant 0 : index
    %c0_300 = arith.constant 0 : index
    %288 = vector.load %arg2[%c6, %c0_297, %c0_298, %c0_299, %c0_300] : memref<8x5x6x6x128xf32, #tpu.memory_space<vmem>>, vector<1x5x6x5x128xf32>
    %289 = vector.shape_cast %288 : vector<1x5x6x5x128xf32> to vector<5x6x5x128xf32>
    %c7 = arith.constant 7 : index
    %c0_301 = arith.constant 0 : index
    %c0_302 = arith.constant 0 : index
    %c0_303 = arith.constant 0 : index
    %c0_304 = arith.constant 0 : index
    %290 = vector.load %arg2[%c7, %c0_301, %c0_302, %c0_303, %c0_304] : memref<8x5x6x6x128xf32, #tpu.memory_space<vmem>>, vector<1x5x6x5x128xf32>
    %291 = vector.shape_cast %290 : vector<1x5x6x5x128xf32> to vector<5x6x5x128xf32>
    %c6_305 = arith.constant 6 : index
    %c0_306 = arith.constant 0 : index
    %c0_307 = arith.constant 0 : index
    %c1_308 = arith.constant 1 : index
    %c0_309 = arith.constant 0 : index
    %292 = vector.load %arg2[%c6_305, %c0_306, %c0_307, %c1_308, %c0_309] : memref<8x5x6x6x128xf32, #tpu.memory_space<vmem>>, vector<1x5x6x5x128xf32>
    %293 = vector.shape_cast %292 : vector<1x5x6x5x128xf32> to vector<5x6x5x128xf32>
    %c7_310 = arith.constant 7 : index
    %c0_311 = arith.constant 0 : index
    %c0_312 = arith.constant 0 : index
    %c1_313 = arith.constant 1 : index
    %c0_314 = arith.constant 0 : index
    %294 = vector.load %arg2[%c7_310, %c0_311, %c0_312, %c1_313, %c0_314] : memref<8x5x6x6x128xf32, #tpu.memory_space<vmem>>, vector<1x5x6x5x128xf32>
    %295 = vector.shape_cast %294 : vector<1x5x6x5x128xf32> to vector<5x6x5x128xf32>
    %c6_315 = arith.constant 6 : index
    %c0_316 = arith.constant 0 : index
    %c0_317 = arith.constant 0 : index
    %c0_318 = arith.constant 0 : index
    %c0_319 = arith.constant 0 : index
    %296 = vector.load %arg3[%c6_315, %c0_316, %c0_317, %c0_318, %c0_319] : memref<8x1x6x6x128xf32, #tpu.memory_space<vmem>>, vector<1x1x6x5x128xf32>
    %297 = vector.shape_cast %296 : vector<1x1x6x5x128xf32> to vector<1x6x5x128xf32>
    %c7_320 = arith.constant 7 : index
    %c0_321 = arith.constant 0 : index
    %c0_322 = arith.constant 0 : index
    %c0_323 = arith.constant 0 : index
    %c0_324 = arith.constant 0 : index
    %298 = vector.load %arg3[%c7_320, %c0_321, %c0_322, %c0_323, %c0_324] : memref<8x1x6x6x128xf32, #tpu.memory_space<vmem>>, vector<1x1x6x5x128xf32>
    %299 = vector.shape_cast %298 : vector<1x1x6x5x128xf32> to vector<1x6x5x128xf32>
    %c6_325 = arith.constant 6 : index
    %c0_326 = arith.constant 0 : index
    %c0_327 = arith.constant 0 : index
    %c1_328 = arith.constant 1 : index
    %c0_329 = arith.constant 0 : index
    %300 = vector.load %arg3[%c6_325, %c0_326, %c0_327, %c1_328, %c0_329] : memref<8x1x6x6x128xf32, #tpu.memory_space<vmem>>, vector<1x1x6x5x128xf32>
    %301 = vector.shape_cast %300 : vector<1x1x6x5x128xf32> to vector<1x6x5x128xf32>
    %c7_330 = arith.constant 7 : index
    %c0_331 = arith.constant 0 : index
    %c0_332 = arith.constant 0 : index
    %c1_333 = arith.constant 1 : index
    %c0_334 = arith.constant 0 : index
    %302 = vector.load %arg3[%c7_330, %c0_331, %c0_332, %c1_333, %c0_334] : memref<8x1x6x6x128xf32, #tpu.memory_space<vmem>>, vector<1x1x6x5x128xf32>
    %303 = vector.shape_cast %302 : vector<1x1x6x5x128xf32> to vector<1x6x5x128xf32>
    %cst_335 = arith.constant 0.482962906 : f32
    %304 = vector.broadcast %cst_335 : f32 to vector<5x6x5x128xf32>
    %305 = arith.mulf %304, %289 : vector<5x6x5x128xf32>
    %cst_336 = arith.constant 0.83651632 : f32
    %306 = vector.broadcast %cst_336 : f32 to vector<5x6x5x128xf32>
    %307 = arith.mulf %306, %291 : vector<5x6x5x128xf32>
    %308 = arith.addf %305, %307 : vector<5x6x5x128xf32>
    %cst_337 = arith.constant 0.224143863 : f32
    %309 = vector.broadcast %cst_337 : f32 to vector<5x6x5x128xf32>
    %310 = arith.mulf %309, %293 : vector<5x6x5x128xf32>
    %311 = arith.addf %308, %310 : vector<5x6x5x128xf32>
    %cst_338 = arith.constant -0.129409522 : f32
    %312 = vector.broadcast %cst_338 : f32 to vector<5x6x5x128xf32>
    %313 = arith.mulf %312, %295 : vector<5x6x5x128xf32>
    %314 = arith.addf %311, %313 : vector<5x6x5x128xf32>
    %c2_339 = arith.constant 2 : index
    %c0_340 = arith.constant 0 : index
    %c0_341 = arith.constant 0 : index
    %c0_342 = arith.constant 0 : index
    %c0_343 = arith.constant 0 : index
    %315 = vector.load %arg5[%c2_339, %c0_340, %c0_341, %c0_342, %c0_343] : memref<4x6x6x5x128xf32, #tpu.memory_space<vmem>>, vector<1x5x6x5x128xf32>
    %316 = vector.shape_cast %315 : vector<1x5x6x5x128xf32> to vector<5x6x5x128xf32>
    %317 = vector.shape_cast %314 : vector<5x6x5x128xf32> to vector<1x5x6x5x128xf32>
    tpu.vector_store %arg5[%c2_339, %c0_340, %c0_341, %c0_342, %c0_343], %317 {strides = array<i32>} : memref<4x6x6x5x128xf32, #tpu.memory_space<vmem>>, vector<1x5x6x5x128xf32>,
    %cst_344 = arith.constant 0.482962906 : f32
    %318 = vector.broadcast %cst_344 : f32 to vector<1x6x5x128xf32>
    %319 = arith.mulf %318, %297 : vector<1x6x5x128xf32>
    %cst_345 = arith.constant 0.83651632 : f32
    %320 = vector.broadcast %cst_345 : f32 to vector<1x6x5x128xf32>
    %321 = arith.mulf %320, %299 : vector<1x6x5x128xf32>
    %322 = arith.addf %319, %321 : vector<1x6x5x128xf32>
    %cst_346 = arith.constant 0.224143863 : f32
    %323 = vector.broadcast %cst_346 : f32 to vector<1x6x5x128xf32>
    %324 = arith.mulf %323, %301 : vector<1x6x5x128xf32>
    %325 = arith.addf %322, %324 : vector<1x6x5x128xf32>
    %cst_347 = arith.constant -0.129409522 : f32
    %326 = vector.broadcast %cst_347 : f32 to vector<1x6x5x128xf32>
    %327 = arith.mulf %326, %303 : vector<1x6x5x128xf32>
    %328 = arith.addf %325, %327 : vector<1x6x5x128xf32>
    %c2_348 = arith.constant 2 : index
    %c5_349 = arith.constant 5 : index
    %c0_350 = arith.constant 0 : index
    %c0_351 = arith.constant 0 : index
    %c0_352 = arith.constant 0 : index
    %329 = vector.load %arg5[%c2_348, %c5_349, %c0_350, %c0_351, %c0_352] : memref<4x6x6x5x128xf32, #tpu.memory_space<vmem>>, vector<1x1x6x5x128xf32>
    %330 = vector.shape_cast %329 : vector<1x1x6x5x128xf32> to vector<1x6x5x128xf32>
    %331 = vector.shape_cast %328 : vector<1x6x5x128xf32> to vector<1x1x6x5x128xf32>
    tpu.vector_store %arg5[%c2_348, %c5_349, %c0_350, %c0_351, %c0_352], %331 {strides = array<i32>} : memref<4x6x6x5x128xf32, #tpu.memory_space<vmem>>, vector<1x1x6x5x128xf32>,
    %cst_353 = arith.constant -0.129409522 : f32
    %332 = vector.broadcast %cst_353 : f32 to vector<5x6x5x128xf32>
    %333 = arith.mulf %332, %289 : vector<5x6x5x128xf32>
    %cst_354 = arith.constant -0.224143863 : f32
    %334 = vector.broadcast %cst_354 : f32 to vector<5x6x5x128xf32>
    %335 = arith.mulf %334, %291 : vector<5x6x5x128xf32>
    %336 = arith.addf %333, %335 : vector<5x6x5x128xf32>
    %cst_355 = arith.constant 0.83651632 : f32
    %337 = vector.broadcast %cst_355 : f32 to vector<5x6x5x128xf32>
    %338 = arith.mulf %337, %293 : vector<5x6x5x128xf32>
    %339 = arith.addf %336, %338 : vector<5x6x5x128xf32>
    %cst_356 = arith.constant -0.482962906 : f32
    %340 = vector.broadcast %cst_356 : f32 to vector<5x6x5x128xf32>
    %341 = arith.mulf %340, %295 : vector<5x6x5x128xf32>
    %342 = arith.addf %339, %341 : vector<5x6x5x128xf32>
    %c3_357 = arith.constant 3 : index
    %c0_358 = arith.constant 0 : index
    %c0_359 = arith.constant 0 : index
    %c0_360 = arith.constant 0 : index
    %c0_361 = arith.constant 0 : index
    %343 = vector.load %arg5[%c3_357, %c0_358, %c0_359, %c0_360, %c0_361] : memref<4x6x6x5x128xf32, #tpu.memory_space<vmem>>, vector<1x5x6x5x128xf32>
    %344 = vector.shape_cast %343 : vector<1x5x6x5x128xf32> to vector<5x6x5x128xf32>
    %345 = vector.shape_cast %342 : vector<5x6x5x128xf32> to vector<1x5x6x5x128xf32>
    tpu.vector_store %arg5[%c3_357, %c0_358, %c0_359, %c0_360, %c0_361], %345 {strides = array<i32>} : memref<4x6x6x5x128xf32, #tpu.memory_space<vmem>>, vector<1x5x6x5x128xf32>,
    %cst_362 = arith.constant -0.129409522 : f32
    %346 = vector.broadcast %cst_362 : f32 to vector<1x6x5x128xf32>
    %347 = arith.mulf %346, %297 : vector<1x6x5x128xf32>
    %cst_363 = arith.constant -0.224143863 : f32
    %348 = vector.broadcast %cst_363 : f32 to vector<1x6x5x128xf32>
    %349 = arith.mulf %348, %299 : vector<1x6x5x128xf32>
    %350 = arith.addf %347, %349 : vector<1x6x5x128xf32>
    %cst_364 = arith.constant 0.83651632 : f32
    %351 = vector.broadcast %cst_364 : f32 to vector<1x6x5x128xf32>
    %352 = arith.mulf %351, %301 : vector<1x6x5x128xf32>
    %353 = arith.addf %350, %352 : vector<1x6x5x128xf32>
    %cst_365 = arith.constant -0.482962906 : f32
    %354 = vector.broadcast %cst_365 : f32 to vector<1x6x5x128xf32>
    %355 = arith.mulf %354, %303 : vector<1x6x5x128xf32>
    %356 = arith.addf %353, %355 : vector<1x6x5x128xf32>
    %c3_366 = arith.constant 3 : index
    %c5_367 = arith.constant 5 : index
    %c0_368 = arith.constant 0 : index
    %c0_369 = arith.constant 0 : index
    %c0_370 = arith.constant 0 : index
    %357 = vector.load %arg5[%c3_366, %c5_367, %c0_368, %c0_369, %c0_370] : memref<4x6x6x5x128xf32, #tpu.memory_space<vmem>>, vector<1x1x6x5x128xf32>
    %358 = vector.shape_cast %357 : vector<1x1x6x5x128xf32> to vector<1x6x5x128xf32>
    %359 = vector.shape_cast %356 : vector<1x6x5x128xf32> to vector<1x1x6x5x128xf32>
    tpu.vector_store %arg5[%c3_366, %c5_367, %c0_368, %c0_369, %c0_370], %359 {strides = array<i32>} : memref<4x6x6x5x128xf32, #tpu.memory_space<vmem>>, vector<1x1x6x5x128xf32>,
    %c0_371 = arith.constant 0 : index
    %c0_372 = arith.constant 0 : index
    %c0_373 = arith.constant 0 : index
    %c0_374 = arith.constant 0 : index
    %c0_375 = arith.constant 0 : index
    %360 = vector.load %arg5[%c0_371, %c0_372, %c0_373, %c0_374, %c0_375] : memref<4x6x6x5x128xf32, #tpu.memory_space<vmem>>, vector<1x6x5x5x128xf32>
    %361 = vector.shape_cast %360 : vector<1x6x5x5x128xf32> to vector<6x5x5x128xf32>
    %c2_376 = arith.constant 2 : index
    %c0_377 = arith.constant 0 : index
    %c0_378 = arith.constant 0 : index
    %c0_379 = arith.constant 0 : index
    %c0_380 = arith.constant 0 : index
    %362 = vector.load %arg5[%c2_376, %c0_377, %c0_378, %c0_379, %c0_380] : memref<4x6x6x5x128xf32, #tpu.memory_space<vmem>>, vector<1x6x5x5x128xf32>
    %363 = vector.shape_cast %362 : vector<1x6x5x5x128xf32> to vector<6x5x5x128xf32>
    %c0_381 = arith.constant 0 : index
    %c0_382 = arith.constant 0 : index
    %c1_383 = arith.constant 1 : index
    %c0_384 = arith.constant 0 : index
    %c0_385 = arith.constant 0 : index
    %364 = vector.load %arg5[%c0_381, %c0_382, %c1_383, %c0_384, %c0_385] : memref<4x6x6x5x128xf32, #tpu.memory_space<vmem>>, vector<1x6x5x5x128xf32>
    %365 = vector.shape_cast %364 : vector<1x6x5x5x128xf32> to vector<6x5x5x128xf32>
    %c2_386 = arith.constant 2 : index
    %c0_387 = arith.constant 0 : index
    %c1_388 = arith.constant 1 : index
    %c0_389 = arith.constant 0 : index
    %c0_390 = arith.constant 0 : index
    %366 = vector.load %arg5[%c2_386, %c0_387, %c1_388, %c0_389, %c0_390] : memref<4x6x6x5x128xf32, #tpu.memory_space<vmem>>, vector<1x6x5x5x128xf32>
    %367 = vector.shape_cast %366 : vector<1x6x5x5x128xf32> to vector<6x5x5x128xf32>
    %cst_391 = arith.constant 0.482962906 : f32
    %368 = vector.broadcast %cst_391 : f32 to vector<6x5x5x128xf32>
    %369 = arith.mulf %368, %361 : vector<6x5x5x128xf32>
    %cst_392 = arith.constant 0.83651632 : f32
    %370 = vector.broadcast %cst_392 : f32 to vector<6x5x5x128xf32>
    %371 = arith.mulf %370, %363 : vector<6x5x5x128xf32>
    %372 = arith.addf %369, %371 : vector<6x5x5x128xf32>
    %cst_393 = arith.constant 0.224143863 : f32
    %373 = vector.broadcast %cst_393 : f32 to vector<6x5x5x128xf32>
    %374 = arith.mulf %373, %365 : vector<6x5x5x128xf32>
    %375 = arith.addf %372, %374 : vector<6x5x5x128xf32>
    %cst_394 = arith.constant -0.129409522 : f32
    %376 = vector.broadcast %cst_394 : f32 to vector<6x5x5x128xf32>
    %377 = arith.mulf %376, %367 : vector<6x5x5x128xf32>
    %378 = arith.addf %375, %377 : vector<6x5x5x128xf32>
    %c4_395 = arith.constant 4 : index
    %c0_396 = arith.constant 0 : index
    %c0_397 = arith.constant 0 : index
    %c0_398 = arith.constant 0 : index
    %c0_399 = arith.constant 0 : index
    %379 = vector.load %arg6[%c4_395, %c0_396, %c0_397, %c0_398, %c0_399] : memref<8x6x5x5x128xf32, #tpu.memory_space<vmem>>, vector<1x6x5x5x128xf32>
    %380 = vector.shape_cast %379 : vector<1x6x5x5x128xf32> to vector<6x5x5x128xf32>
    %381 = vector.shape_cast %378 : vector<6x5x5x128xf32> to vector<1x6x5x5x128xf32>
    tpu.vector_store %arg6[%c4_395, %c0_396, %c0_397, %c0_398, %c0_399], %381 {strides = array<i32>} : memref<8x6x5x5x128xf32, #tpu.memory_space<vmem>>, vector<1x6x5x5x128xf32>,
    %cst_400 = arith.constant -0.129409522 : f32
    %382 = vector.broadcast %cst_400 : f32 to vector<6x5x5x128xf32>
    %383 = arith.mulf %382, %361 : vector<6x5x5x128xf32>
    %cst_401 = arith.constant -0.224143863 : f32
    %384 = vector.broadcast %cst_401 : f32 to vector<6x5x5x128xf32>
    %385 = arith.mulf %384, %363 : vector<6x5x5x128xf32>
    %386 = arith.addf %383, %385 : vector<6x5x5x128xf32>
    %cst_402 = arith.constant 0.83651632 : f32
    %387 = vector.broadcast %cst_402 : f32 to vector<6x5x5x128xf32>
    %388 = arith.mulf %387, %365 : vector<6x5x5x128xf32>
    %389 = arith.addf %386, %388 : vector<6x5x5x128xf32>
    %cst_403 = arith.constant -0.482962906 : f32
    %390 = vector.broadcast %cst_403 : f32 to vector<6x5x5x128xf32>
    %391 = arith.mulf %390, %367 : vector<6x5x5x128xf32>
    %392 = arith.addf %389, %391 : vector<6x5x5x128xf32>
    %c6_404 = arith.constant 6 : index
    %c0_405 = arith.constant 0 : index
    %c0_406 = arith.constant 0 : index
    %c0_407 = arith.constant 0 : index
    %c0_408 = arith.constant 0 : index
    %393 = vector.load %arg6[%c6_404, %c0_405, %c0_406, %c0_407, %c0_408] : memref<8x6x5x5x128xf32, #tpu.memory_space<vmem>>, vector<1x6x5x5x128xf32>
    %394 = vector.shape_cast %393 : vector<1x6x5x5x128xf32> to vector<6x5x5x128xf32>
    %395 = vector.shape_cast %392 : vector<6x5x5x128xf32> to vector<1x6x5x5x128xf32>
    tpu.vector_store %arg6[%c6_404, %c0_405, %c0_406, %c0_407, %c0_408], %395 {strides = array<i32>} : memref<8x6x5x5x128xf32, #tpu.memory_space<vmem>>, vector<1x6x5x5x128xf32>,
    %c1_409 = arith.constant 1 : index
    %c0_410 = arith.constant 0 : index
    %c0_411 = arith.constant 0 : index
    %c0_412 = arith.constant 0 : index
    %c0_413 = arith.constant 0 : index
    %396 = vector.load %arg5[%c1_409, %c0_410, %c0_411, %c0_412, %c0_413] : memref<4x6x6x5x128xf32, #tpu.memory_space<vmem>>, vector<1x6x5x5x128xf32>
    %397 = vector.shape_cast %396 : vector<1x6x5x5x128xf32> to vector<6x5x5x128xf32>
    %c3_414 = arith.constant 3 : index
    %c0_415 = arith.constant 0 : index
    %c0_416 = arith.constant 0 : index
    %c0_417 = arith.constant 0 : index
    %c0_418 = arith.constant 0 : index
    %398 = vector.load %arg5[%c3_414, %c0_415, %c0_416, %c0_417, %c0_418] : memref<4x6x6x5x128xf32, #tpu.memory_space<vmem>>, vector<1x6x5x5x128xf32>
    %399 = vector.shape_cast %398 : vector<1x6x5x5x128xf32> to vector<6x5x5x128xf32>
    %c1_419 = arith.constant 1 : index
    %c0_420 = arith.constant 0 : index
    %c1_421 = arith.constant 1 : index
    %c0_422 = arith.constant 0 : index
    %c0_423 = arith.constant 0 : index
    %400 = vector.load %arg5[%c1_419, %c0_420, %c1_421, %c0_422, %c0_423] : memref<4x6x6x5x128xf32, #tpu.memory_space<vmem>>, vector<1x6x5x5x128xf32>
    %401 = vector.shape_cast %400 : vector<1x6x5x5x128xf32> to vector<6x5x5x128xf32>
    %c3_424 = arith.constant 3 : index
    %c0_425 = arith.constant 0 : index
    %c1_426 = arith.constant 1 : index
    %c0_427 = arith.constant 0 : index
    %c0_428 = arith.constant 0 : index
    %402 = vector.load %arg5[%c3_424, %c0_425, %c1_426, %c0_427, %c0_428] : memref<4x6x6x5x128xf32, #tpu.memory_space<vmem>>, vector<1x6x5x5x128xf32>
    %403 = vector.shape_cast %402 : vector<1x6x5x5x128xf32> to vector<6x5x5x128xf32>
    %cst_429 = arith.constant 0.482962906 : f32
    %404 = vector.broadcast %cst_429 : f32 to vector<6x5x5x128xf32>
    %405 = arith.mulf %404, %397 : vector<6x5x5x128xf32>
    %cst_430 = arith.constant 0.83651632 : f32
    %406 = vector.broadcast %cst_430 : f32 to vector<6x5x5x128xf32>
    %407 = arith.mulf %406, %399 : vector<6x5x5x128xf32>
    %408 = arith.addf %405, %407 : vector<6x5x5x128xf32>
    %cst_431 = arith.constant 0.224143863 : f32
    %409 = vector.broadcast %cst_431 : f32 to vector<6x5x5x128xf32>
    %410 = arith.mulf %409, %401 : vector<6x5x5x128xf32>
    %411 = arith.addf %408, %410 : vector<6x5x5x128xf32>
    %cst_432 = arith.constant -0.129409522 : f32
    %412 = vector.broadcast %cst_432 : f32 to vector<6x5x5x128xf32>
    %413 = arith.mulf %412, %403 : vector<6x5x5x128xf32>
    %414 = arith.addf %411, %413 : vector<6x5x5x128xf32>
    %c5_433 = arith.constant 5 : index
    %c0_434 = arith.constant 0 : index
    %c0_435 = arith.constant 0 : index
    %c0_436 = arith.constant 0 : index
    %c0_437 = arith.constant 0 : index
    %415 = vector.load %arg6[%c5_433, %c0_434, %c0_435, %c0_436, %c0_437] : memref<8x6x5x5x128xf32, #tpu.memory_space<vmem>>, vector<1x6x5x5x128xf32>
    %416 = vector.shape_cast %415 : vector<1x6x5x5x128xf32> to vector<6x5x5x128xf32>
    %417 = vector.shape_cast %414 : vector<6x5x5x128xf32> to vector<1x6x5x5x128xf32>
    tpu.vector_store %arg6[%c5_433, %c0_434, %c0_435, %c0_436, %c0_437], %417 {strides = array<i32>} : memref<8x6x5x5x128xf32, #tpu.memory_space<vmem>>, vector<1x6x5x5x128xf32>,
    %cst_438 = arith.constant -0.129409522 : f32
    %418 = vector.broadcast %cst_438 : f32 to vector<6x5x5x128xf32>
    %419 = arith.mulf %418, %397 : vector<6x5x5x128xf32>
    %cst_439 = arith.constant -0.224143863 : f32
    %420 = vector.broadcast %cst_439 : f32 to vector<6x5x5x128xf32>
    %421 = arith.mulf %420, %399 : vector<6x5x5x128xf32>
    %422 = arith.addf %419, %421 : vector<6x5x5x128xf32>
    %cst_440 = arith.constant 0.83651632 : f32
    %423 = vector.broadcast %cst_440 : f32 to vector<6x5x5x128xf32>
    %424 = arith.mulf %423, %401 : vector<6x5x5x128xf32>
    %425 = arith.addf %422, %424 : vector<6x5x5x128xf32>
    %cst_441 = arith.constant -0.482962906 : f32
    %426 = vector.broadcast %cst_441 : f32 to vector<6x5x5x128xf32>
    %427 = arith.mulf %426, %403 : vector<6x5x5x128xf32>
    %428 = arith.addf %425, %427 : vector<6x5x5x128xf32>
    %c7_442 = arith.constant 7 : index
    %c0_443 = arith.constant 0 : index
    %c0_444 = arith.constant 0 : index
    %c0_445 = arith.constant 0 : index
    %c0_446 = arith.constant 0 : index
    %429 = vector.load %arg6[%c7_442, %c0_443, %c0_444, %c0_445, %c0_446] : memref<8x6x5x5x128xf32, #tpu.memory_space<vmem>>, vector<1x6x5x5x128xf32>
    %430 = vector.shape_cast %429 : vector<1x6x5x5x128xf32> to vector<6x5x5x128xf32>
    %431 = vector.shape_cast %428 : vector<6x5x5x128xf32> to vector<1x6x5x5x128xf32>
    tpu.vector_store %arg6[%c7_442, %c0_443, %c0_444, %c0_445, %c0_446], %431 {strides = array<i32>} : memref<8x6x5x5x128xf32, #tpu.memory_space<vmem>>, vector<1x6x5x5x128xf32>,
    %c0_447 = arith.constant 0 : index
    %c0_448 = arith.constant 0 : index
    %c0_449 = arith.constant 0 : index
    %c0_450 = arith.constant 0 : index
    %c0_451 = arith.constant 0 : index
    %432 = vector.load %arg6[%c0_447, %c0_448, %c0_449, %c0_450, %c0_451] : memref<8x6x5x5x128xf32, #tpu.memory_space<vmem>>, vector<1x5x5x5x128xf32>
    %433 = vector.shape_cast %432 : vector<1x5x5x5x128xf32> to vector<5x5x5x128xf32>
    %c4_452 = arith.constant 4 : index
    %c0_453 = arith.constant 0 : index
    %c0_454 = arith.constant 0 : index
    %c0_455 = arith.constant 0 : index
    %c0_456 = arith.constant 0 : index
    %434 = vector.load %arg6[%c4_452, %c0_453, %c0_454, %c0_455, %c0_456] : memref<8x6x5x5x128xf32, #tpu.memory_space<vmem>>, vector<1x5x5x5x128xf32>
    %435 = vector.shape_cast %434 : vector<1x5x5x5x128xf32> to vector<5x5x5x128xf32>
    %c0_457 = arith.constant 0 : index
    %c1_458 = arith.constant 1 : index
    %c0_459 = arith.constant 0 : index
    %c0_460 = arith.constant 0 : index
    %c0_461 = arith.constant 0 : index
    %436 = vector.load %arg6[%c0_457, %c1_458, %c0_459, %c0_460, %c0_461] : memref<8x6x5x5x128xf32, #tpu.memory_space<vmem>>, vector<1x5x5x5x128xf32>
    %437 = vector.shape_cast %436 : vector<1x5x5x5x128xf32> to vector<5x5x5x128xf32>
    %c4_462 = arith.constant 4 : index
    %c1_463 = arith.constant 1 : index
    %c0_464 = arith.constant 0 : index
    %c0_465 = arith.constant 0 : index
    %c0_466 = arith.constant 0 : index
    %438 = vector.load %arg6[%c4_462, %c1_463, %c0_464, %c0_465, %c0_466] : memref<8x6x5x5x128xf32, #tpu.memory_space<vmem>>, vector<1x5x5x5x128xf32>
    %439 = vector.shape_cast %438 : vector<1x5x5x5x128xf32> to vector<5x5x5x128xf32>
    %cst_467 = arith.constant 0.482962906 : f32
    %440 = vector.broadcast %cst_467 : f32 to vector<5x5x5x128xf32>
    %441 = arith.mulf %440, %433 : vector<5x5x5x128xf32>
    %cst_468 = arith.constant 0.83651632 : f32
    %442 = vector.broadcast %cst_468 : f32 to vector<5x5x5x128xf32>
    %443 = arith.mulf %442, %435 : vector<5x5x5x128xf32>
    %444 = arith.addf %441, %443 : vector<5x5x5x128xf32>
    %cst_469 = arith.constant 0.224143863 : f32
    %445 = vector.broadcast %cst_469 : f32 to vector<5x5x5x128xf32>
    %446 = arith.mulf %445, %437 : vector<5x5x5x128xf32>
    %447 = arith.addf %444, %446 : vector<5x5x5x128xf32>
    %cst_470 = arith.constant -0.129409522 : f32
    %448 = vector.broadcast %cst_470 : f32 to vector<5x5x5x128xf32>
    %449 = arith.mulf %448, %439 : vector<5x5x5x128xf32>
    %450 = arith.addf %447, %449 : vector<5x5x5x128xf32>
    %c0_471 = arith.constant 0 : index
    %c0_472 = arith.constant 0 : index
    %c0_473 = arith.constant 0 : index
    %c0_474 = arith.constant 0 : index
    %c0_475 = arith.constant 0 : index
    %451 = vector.load %arg4[%c0_471, %c0_472, %c0_473, %c0_474, %c0_475] : memref<8x5x5x5x128xf32, #tpu.memory_space<vmem>>, vector<1x5x5x5x128xf32>
    %452 = vector.shape_cast %451 : vector<1x5x5x5x128xf32> to vector<5x5x5x128xf32>
    %453 = vector.shape_cast %450 : vector<5x5x5x128xf32> to vector<1x5x5x5x128xf32>
    tpu.vector_store %arg4[%c0_471, %c0_472, %c0_473, %c0_474, %c0_475], %453 {strides = array<i32>} : memref<8x5x5x5x128xf32, #tpu.memory_space<vmem>>, vector<1x5x5x5x128xf32>,
    %cst_476 = arith.constant -0.129409522 : f32
    %454 = vector.broadcast %cst_476 : f32 to vector<5x5x5x128xf32>
    %455 = arith.mulf %454, %433 : vector<5x5x5x128xf32>
    %cst_477 = arith.constant -0.224143863 : f32
    %456 = vector.broadcast %cst_477 : f32 to vector<5x5x5x128xf32>
    %457 = arith.mulf %456, %435 : vector<5x5x5x128xf32>
    %458 = arith.addf %455, %457 : vector<5x5x5x128xf32>
    %cst_478 = arith.constant 0.83651632 : f32
    %459 = vector.broadcast %cst_478 : f32 to vector<5x5x5x128xf32>
    %460 = arith.mulf %459, %437 : vector<5x5x5x128xf32>
    %461 = arith.addf %458, %460 : vector<5x5x5x128xf32>
    %cst_479 = arith.constant -0.482962906 : f32
    %462 = vector.broadcast %cst_479 : f32 to vector<5x5x5x128xf32>
    %463 = arith.mulf %462, %439 : vector<5x5x5x128xf32>
    %464 = arith.addf %461, %463 : vector<5x5x5x128xf32>
    %c4_480 = arith.constant 4 : index
    %c0_481 = arith.constant 0 : index
    %c0_482 = arith.constant 0 : index
    %c0_483 = arith.constant 0 : index
    %c0_484 = arith.constant 0 : index
    %465 = vector.load %arg4[%c4_480, %c0_481, %c0_482, %c0_483, %c0_484] : memref<8x5x5x5x128xf32, #tpu.memory_space<vmem>>, vector<1x5x5x5x128xf32>
    %466 = vector.shape_cast %465 : vector<1x5x5x5x128xf32> to vector<5x5x5x128xf32>
    %467 = vector.shape_cast %464 : vector<5x5x5x128xf32> to vector<1x5x5x5x128xf32>
    tpu.vector_store %arg4[%c4_480, %c0_481, %c0_482, %c0_483, %c0_484], %467 {strides = array<i32>} : memref<8x5x5x5x128xf32, #tpu.memory_space<vmem>>, vector<1x5x5x5x128xf32>,
    %c1_485 = arith.constant 1 : index
    %c0_486 = arith.constant 0 : index
    %c0_487 = arith.constant 0 : index
    %c0_488 = arith.constant 0 : index
    %c0_489 = arith.constant 0 : index
    %468 = vector.load %arg6[%c1_485, %c0_486, %c0_487, %c0_488, %c0_489] : memref<8x6x5x5x128xf32, #tpu.memory_space<vmem>>, vector<1x5x5x5x128xf32>
    %469 = vector.shape_cast %468 : vector<1x5x5x5x128xf32> to vector<5x5x5x128xf32>
    %c5_490 = arith.constant 5 : index
    %c0_491 = arith.constant 0 : index
    %c0_492 = arith.constant 0 : index
    %c0_493 = arith.constant 0 : index
    %c0_494 = arith.constant 0 : index
    %470 = vector.load %arg6[%c5_490, %c0_491, %c0_492, %c0_493, %c0_494] : memref<8x6x5x5x128xf32, #tpu.memory_space<vmem>>, vector<1x5x5x5x128xf32>
    %471 = vector.shape_cast %470 : vector<1x5x5x5x128xf32> to vector<5x5x5x128xf32>
    %c1_495 = arith.constant 1 : index
    %c1_496 = arith.constant 1 : index
    %c0_497 = arith.constant 0 : index
    %c0_498 = arith.constant 0 : index
    %c0_499 = arith.constant 0 : index
    %472 = vector.load %arg6[%c1_495, %c1_496, %c0_497, %c0_498, %c0_499] : memref<8x6x5x5x128xf32, #tpu.memory_space<vmem>>, vector<1x5x5x5x128xf32>
    %473 = vector.shape_cast %472 : vector<1x5x5x5x128xf32> to vector<5x5x5x128xf32>
    %c5_500 = arith.constant 5 : index
    %c1_501 = arith.constant 1 : index
    %c0_502 = arith.constant 0 : index
    %c0_503 = arith.constant 0 : index
    %c0_504 = arith.constant 0 : index
    %474 = vector.load %arg6[%c5_500, %c1_501, %c0_502, %c0_503, %c0_504] : memref<8x6x5x5x128xf32, #tpu.memory_space<vmem>>, vector<1x5x5x5x128xf32>
    %475 = vector.shape_cast %474 : vector<1x5x5x5x128xf32> to vector<5x5x5x128xf32>
    %cst_505 = arith.constant 0.482962906 : f32
    %476 = vector.broadcast %cst_505 : f32 to vector<5x5x5x128xf32>
    %477 = arith.mulf %476, %469 : vector<5x5x5x128xf32>
    %cst_506 = arith.constant 0.83651632 : f32
    %478 = vector.broadcast %cst_506 : f32 to vector<5x5x5x128xf32>
    %479 = arith.mulf %478, %471 : vector<5x5x5x128xf32>
    %480 = arith.addf %477, %479 : vector<5x5x5x128xf32>
    %cst_507 = arith.constant 0.224143863 : f32
    %481 = vector.broadcast %cst_507 : f32 to vector<5x5x5x128xf32>
    %482 = arith.mulf %481, %473 : vector<5x5x5x128xf32>
    %483 = arith.addf %480, %482 : vector<5x5x5x128xf32>
    %cst_508 = arith.constant -0.129409522 : f32
    %484 = vector.broadcast %cst_508 : f32 to vector<5x5x5x128xf32>
    %485 = arith.mulf %484, %475 : vector<5x5x5x128xf32>
    %486 = arith.addf %483, %485 : vector<5x5x5x128xf32>
    %c1_509 = arith.constant 1 : index
    %c0_510 = arith.constant 0 : index
    %c0_511 = arith.constant 0 : index
    %c0_512 = arith.constant 0 : index
    %c0_513 = arith.constant 0 : index
    %487 = vector.load %arg4[%c1_509, %c0_510, %c0_511, %c0_512, %c0_513] : memref<8x5x5x5x128xf32, #tpu.memory_space<vmem>>, vector<1x5x5x5x128xf32>
    %488 = vector.shape_cast %487 : vector<1x5x5x5x128xf32> to vector<5x5x5x128xf32>
    %489 = vector.shape_cast %486 : vector<5x5x5x128xf32> to vector<1x5x5x5x128xf32>
    tpu.vector_store %arg4[%c1_509, %c0_510, %c0_511, %c0_512, %c0_513], %489 {strides = array<i32>} : memref<8x5x5x5x128xf32, #tpu.memory_space<vmem>>, vector<1x5x5x5x128xf32>,
    %cst_514 = arith.constant -0.129409522 : f32
    %490 = vector.broadcast %cst_514 : f32 to vector<5x5x5x128xf32>
    %491 = arith.mulf %490, %469 : vector<5x5x5x128xf32>
    %cst_515 = arith.constant -0.224143863 : f32
    %492 = vector.broadcast %cst_515 : f32 to vector<5x5x5x128xf32>
    %493 = arith.mulf %492, %471 : vector<5x5x5x128xf32>
    %494 = arith.addf %491, %493 : vector<5x5x5x128xf32>
    %cst_516 = arith.constant 0.83651632 : f32
    %495 = vector.broadcast %cst_516 : f32 to vector<5x5x5x128xf32>
    %496 = arith.mulf %495, %473 : vector<5x5x5x128xf32>
    %497 = arith.addf %494, %496 : vector<5x5x5x128xf32>
    %cst_517 = arith.constant -0.482962906 : f32
    %498 = vector.broadcast %cst_517 : f32 to vector<5x5x5x128xf32>
    %499 = arith.mulf %498, %475 : vector<5x5x5x128xf32>
    %500 = arith.addf %497, %499 : vector<5x5x5x128xf32>
    %c5_518 = arith.constant 5 : index
    %c0_519 = arith.constant 0 : index
    %c0_520 = arith.constant 0 : index
    %c0_521 = arith.constant 0 : index
    %c0_522 = arith.constant 0 : index
    %501 = vector.load %arg4[%c5_518, %c0_519, %c0_520, %c0_521, %c0_522] : memref<8x5x5x5x128xf32, #tpu.memory_space<vmem>>, vector<1x5x5x5x128xf32>
    %502 = vector.shape_cast %501 : vector<1x5x5x5x128xf32> to vector<5x5x5x128xf32>
    %503 = vector.shape_cast %500 : vector<5x5x5x128xf32> to vector<1x5x5x5x128xf32>
    tpu.vector_store %arg4[%c5_518, %c0_519, %c0_520, %c0_521, %c0_522], %503 {strides = array<i32>} : memref<8x5x5x5x128xf32, #tpu.memory_space<vmem>>, vector<1x5x5x5x128xf32>,
    %c2_523 = arith.constant 2 : index
    %c0_524 = arith.constant 0 : index
    %c0_525 = arith.constant 0 : index
    %c0_526 = arith.constant 0 : index
    %c0_527 = arith.constant 0 : index
    %504 = vector.load %arg6[%c2_523, %c0_524, %c0_525, %c0_526, %c0_527] : memref<8x6x5x5x128xf32, #tpu.memory_space<vmem>>, vector<1x5x5x5x128xf32>
    %505 = vector.shape_cast %504 : vector<1x5x5x5x128xf32> to vector<5x5x5x128xf32>
    %c6_528 = arith.constant 6 : index
    %c0_529 = arith.constant 0 : index
    %c0_530 = arith.constant 0 : index
    %c0_531 = arith.constant 0 : index
    %c0_532 = arith.constant 0 : index
    %506 = vector.load %arg6[%c6_528, %c0_529, %c0_530, %c0_531, %c0_532] : memref<8x6x5x5x128xf32, #tpu.memory_space<vmem>>, vector<1x5x5x5x128xf32>
    %507 = vector.shape_cast %506 : vector<1x5x5x5x128xf32> to vector<5x5x5x128xf32>
    %c2_533 = arith.constant 2 : index
    %c1_534 = arith.constant 1 : index
    %c0_535 = arith.constant 0 : index
    %c0_536 = arith.constant 0 : index
    %c0_537 = arith.constant 0 : index
    %508 = vector.load %arg6[%c2_533, %c1_534, %c0_535, %c0_536, %c0_537] : memref<8x6x5x5x128xf32, #tpu.memory_space<vmem>>, vector<1x5x5x5x128xf32>
    %509 = vector.shape_cast %508 : vector<1x5x5x5x128xf32> to vector<5x5x5x128xf32>
    %c6_538 = arith.constant 6 : index
    %c1_539 = arith.constant 1 : index
    %c0_540 = arith.constant 0 : index
    %c0_541 = arith.constant 0 : index
    %c0_542 = arith.constant 0 : index
    %510 = vector.load %arg6[%c6_538, %c1_539, %c0_540, %c0_541, %c0_542] : memref<8x6x5x5x128xf32, #tpu.memory_space<vmem>>, vector<1x5x5x5x128xf32>
    %511 = vector.shape_cast %510 : vector<1x5x5x5x128xf32> to vector<5x5x5x128xf32>
    %cst_543 = arith.constant 0.482962906 : f32
    %512 = vector.broadcast %cst_543 : f32 to vector<5x5x5x128xf32>
    %513 = arith.mulf %512, %505 : vector<5x5x5x128xf32>
    %cst_544 = arith.constant 0.83651632 : f32
    %514 = vector.broadcast %cst_544 : f32 to vector<5x5x5x128xf32>
    %515 = arith.mulf %514, %507 : vector<5x5x5x128xf32>
    %516 = arith.addf %513, %515 : vector<5x5x5x128xf32>
    %cst_545 = arith.constant 0.224143863 : f32
    %517 = vector.broadcast %cst_545 : f32 to vector<5x5x5x128xf32>
    %518 = arith.mulf %517, %509 : vector<5x5x5x128xf32>
    %519 = arith.addf %516, %518 : vector<5x5x5x128xf32>
    %cst_546 = arith.constant -0.129409522 : f32
    %520 = vector.broadcast %cst_546 : f32 to vector<5x5x5x128xf32>
    %521 = arith.mulf %520, %511 : vector<5x5x5x128xf32>
    %522 = arith.addf %519, %521 : vector<5x5x5x128xf32>
    %c2_547 = arith.constant 2 : index
    %c0_548 = arith.constant 0 : index
    %c0_549 = arith.constant 0 : index
    %c0_550 = arith.constant 0 : index
    %c0_551 = arith.constant 0 : index
    %523 = vector.load %arg4[%c2_547, %c0_548, %c0_549, %c0_550, %c0_551] : memref<8x5x5x5x128xf32, #tpu.memory_space<vmem>>, vector<1x5x5x5x128xf32>
    %524 = vector.shape_cast %523 : vector<1x5x5x5x128xf32> to vector<5x5x5x128xf32>
    %525 = vector.shape_cast %522 : vector<5x5x5x128xf32> to vector<1x5x5x5x128xf32>
    tpu.vector_store %arg4[%c2_547, %c0_548, %c0_549, %c0_550, %c0_551], %525 {strides = array<i32>} : memref<8x5x5x5x128xf32, #tpu.memory_space<vmem>>, vector<1x5x5x5x128xf32>,
    %cst_552 = arith.constant -0.129409522 : f32
    %526 = vector.broadcast %cst_552 : f32 to vector<5x5x5x128xf32>
    %527 = arith.mulf %526, %505 : vector<5x5x5x128xf32>
    %cst_553 = arith.constant -0.224143863 : f32
    %528 = vector.broadcast %cst_553 : f32 to vector<5x5x5x128xf32>
    %529 = arith.mulf %528, %507 : vector<5x5x5x128xf32>
    %530 = arith.addf %527, %529 : vector<5x5x5x128xf32>
    %cst_554 = arith.constant 0.83651632 : f32
    %531 = vector.broadcast %cst_554 : f32 to vector<5x5x5x128xf32>
    %532 = arith.mulf %531, %509 : vector<5x5x5x128xf32>
    %533 = arith.addf %530, %532 : vector<5x5x5x128xf32>
    %cst_555 = arith.constant -0.482962906 : f32
    %534 = vector.broadcast %cst_555 : f32 to vector<5x5x5x128xf32>
    %535 = arith.mulf %534, %511 : vector<5x5x5x128xf32>
    %536 = arith.addf %533, %535 : vector<5x5x5x128xf32>
    %c6_556 = arith.constant 6 : index
    %c0_557 = arith.constant 0 : index
    %c0_558 = arith.constant 0 : index
    %c0_559 = arith.constant 0 : index
    %c0_560 = arith.constant 0 : index
    %537 = vector.load %arg4[%c6_556, %c0_557, %c0_558, %c0_559, %c0_560] : memref<8x5x5x5x128xf32, #tpu.memory_space<vmem>>, vector<1x5x5x5x128xf32>
    %538 = vector.shape_cast %537 : vector<1x5x5x5x128xf32> to vector<5x5x5x128xf32>
    %539 = vector.shape_cast %536 : vector<5x5x5x128xf32> to vector<1x5x5x5x128xf32>
    tpu.vector_store %arg4[%c6_556, %c0_557, %c0_558, %c0_559, %c0_560], %539 {strides = array<i32>} : memref<8x5x5x5x128xf32, #tpu.memory_space<vmem>>, vector<1x5x5x5x128xf32>,
    %c3_561 = arith.constant 3 : index
    %c0_562 = arith.constant 0 : index
    %c0_563 = arith.constant 0 : index
    %c0_564 = arith.constant 0 : index
    %c0_565 = arith.constant 0 : index
    %540 = vector.load %arg6[%c3_561, %c0_562, %c0_563, %c0_564, %c0_565] : memref<8x6x5x5x128xf32, #tpu.memory_space<vmem>>, vector<1x5x5x5x128xf32>
    %541 = vector.shape_cast %540 : vector<1x5x5x5x128xf32> to vector<5x5x5x128xf32>
    %c7_566 = arith.constant 7 : index
    %c0_567 = arith.constant 0 : index
    %c0_568 = arith.constant 0 : index
    %c0_569 = arith.constant 0 : index
    %c0_570 = arith.constant 0 : index
    %542 = vector.load %arg6[%c7_566, %c0_567, %c0_568, %c0_569, %c0_570] : memref<8x6x5x5x128xf32, #tpu.memory_space<vmem>>, vector<1x5x5x5x128xf32>
    %543 = vector.shape_cast %542 : vector<1x5x5x5x128xf32> to vector<5x5x5x128xf32>
    %c3_571 = arith.constant 3 : index
    %c1_572 = arith.constant 1 : index
    %c0_573 = arith.constant 0 : index
    %c0_574 = arith.constant 0 : index
    %c0_575 = arith.constant 0 : index
    %544 = vector.load %arg6[%c3_571, %c1_572, %c0_573, %c0_574, %c0_575] : memref<8x6x5x5x128xf32, #tpu.memory_space<vmem>>, vector<1x5x5x5x128xf32>
    %545 = vector.shape_cast %544 : vector<1x5x5x5x128xf32> to vector<5x5x5x128xf32>
    %c7_576 = arith.constant 7 : index
    %c1_577 = arith.constant 1 : index
    %c0_578 = arith.constant 0 : index
    %c0_579 = arith.constant 0 : index
    %c0_580 = arith.constant 0 : index
    %546 = vector.load %arg6[%c7_576, %c1_577, %c0_578, %c0_579, %c0_580] : memref<8x6x5x5x128xf32, #tpu.memory_space<vmem>>, vector<1x5x5x5x128xf32>
    %547 = vector.shape_cast %546 : vector<1x5x5x5x128xf32> to vector<5x5x5x128xf32>
    %cst_581 = arith.constant 0.482962906 : f32
    %548 = vector.broadcast %cst_581 : f32 to vector<5x5x5x128xf32>
    %549 = arith.mulf %548, %541 : vector<5x5x5x128xf32>
    %cst_582 = arith.constant 0.83651632 : f32
    %550 = vector.broadcast %cst_582 : f32 to vector<5x5x5x128xf32>
    %551 = arith.mulf %550, %543 : vector<5x5x5x128xf32>
    %552 = arith.addf %549, %551 : vector<5x5x5x128xf32>
    %cst_583 = arith.constant 0.224143863 : f32
    %553 = vector.broadcast %cst_583 : f32 to vector<5x5x5x128xf32>
    %554 = arith.mulf %553, %545 : vector<5x5x5x128xf32>
    %555 = arith.addf %552, %554 : vector<5x5x5x128xf32>
    %cst_584 = arith.constant -0.129409522 : f32
    %556 = vector.broadcast %cst_584 : f32 to vector<5x5x5x128xf32>
    %557 = arith.mulf %556, %547 : vector<5x5x5x128xf32>
    %558 = arith.addf %555, %557 : vector<5x5x5x128xf32>
    %c3_585 = arith.constant 3 : index
    %c0_586 = arith.constant 0 : index
    %c0_587 = arith.constant 0 : index
    %c0_588 = arith.constant 0 : index
    %c0_589 = arith.constant 0 : index
    %559 = vector.load %arg4[%c3_585, %c0_586, %c0_587, %c0_588, %c0_589] : memref<8x5x5x5x128xf32, #tpu.memory_space<vmem>>, vector<1x5x5x5x128xf32>
    %560 = vector.shape_cast %559 : vector<1x5x5x5x128xf32> to vector<5x5x5x128xf32>
    %561 = vector.shape_cast %558 : vector<5x5x5x128xf32> to vector<1x5x5x5x128xf32>
    tpu.vector_store %arg4[%c3_585, %c0_586, %c0_587, %c0_588, %c0_589], %561 {strides = array<i32>} : memref<8x5x5x5x128xf32, #tpu.memory_space<vmem>>, vector<1x5x5x5x128xf32>,
    %cst_590 = arith.constant -0.129409522 : f32
    %562 = vector.broadcast %cst_590 : f32 to vector<5x5x5x128xf32>
    %563 = arith.mulf %562, %541 : vector<5x5x5x128xf32>
    %cst_591 = arith.constant -0.224143863 : f32
    %564 = vector.broadcast %cst_591 : f32 to vector<5x5x5x128xf32>
    %565 = arith.mulf %564, %543 : vector<5x5x5x128xf32>
    %566 = arith.addf %563, %565 : vector<5x5x5x128xf32>
    %cst_592 = arith.constant 0.83651632 : f32
    %567 = vector.broadcast %cst_592 : f32 to vector<5x5x5x128xf32>
    %568 = arith.mulf %567, %545 : vector<5x5x5x128xf32>
    %569 = arith.addf %566, %568 : vector<5x5x5x128xf32>
    %cst_593 = arith.constant -0.482962906 : f32
    %570 = vector.broadcast %cst_593 : f32 to vector<5x5x5x128xf32>
    %571 = arith.mulf %570, %547 : vector<5x5x5x128xf32>
    %572 = arith.addf %569, %571 : vector<5x5x5x128xf32>
    %c7_594 = arith.constant 7 : index
    %c0_595 = arith.constant 0 : index
    %c0_596 = arith.constant 0 : index
    %c0_597 = arith.constant 0 : index
    %c0_598 = arith.constant 0 : index
    %573 = vector.load %arg4[%c7_594, %c0_595, %c0_596, %c0_597, %c0_598] : memref<8x5x5x5x128xf32, #tpu.memory_space<vmem>>, vector<1x5x5x5x128xf32>
    %574 = vector.shape_cast %573 : vector<1x5x5x5x128xf32> to vector<5x5x5x128xf32>
    %575 = vector.shape_cast %572 : vector<5x5x5x128xf32> to vector<1x5x5x5x128xf32>
    tpu.vector_store %arg4[%c7_594, %c0_595, %c0_596, %c0_597, %c0_598], %575 {strides = array<i32>} : memref<8x5x5x5x128xf32, #tpu.memory_space<vmem>>, vector<1x5x5x5x128xf32>,
    return
  }
  func.func @transform_0(%arg0: i32, %arg1: i32) -> (i32, i32, i32, i32, i32) {
    %c0_i32 = arith.constant 0 : i32
    %c0_i32_0 = arith.constant 0 : i32
    %c0_i32_1 = arith.constant 0 : i32
    %c0_i32_2 = arith.constant 0 : i32
    return %c0_i32, %arg1, %c0_i32_0, %c0_i32_1, %arg0 : i32, i32, i32, i32, i32
  }
  func.func @transform_1(%arg0: i32, %arg1: i32) -> (i32, i32, i32, i32, i32) {
    %c1_i32 = arith.constant 1 : i32
    %0 = arith.addi %arg1, %c1_i32 : i32
    %c5_i32 = arith.constant 5 : i32
    %1 = arith.muli %0, %c5_i32 : i32
    %c0_i32 = arith.constant 0 : i32
    %c0_i32_0 = arith.constant 0 : i32
    %c0_i32_1 = arith.constant 0 : i32
    %c0_i32_2 = arith.constant 0 : i32
    return %c0_i32, %1, %c0_i32_0, %c0_i32_1, %arg0 : i32, i32, i32, i32, i32
  }
  func.func @transform_2(%arg0: i32, %arg1: i32) -> (i32, i32, i32, i32, i32) {
    %c0_i32 = arith.constant 0 : i32
    %c0_i32_0 = arith.constant 0 : i32
    %c0_i32_1 = arith.constant 0 : i32
    %c0_i32_2 = arith.constant 0 : i32
    return %c0_i32, %arg1, %c0_i32_0, %c0_i32_1, %arg0 : i32, i32, i32, i32, i32
  }
}

</mosaic_0001>

<llo_original>
// kernel: tpu_custom_call.1
$region0: #{tpu_custom_call.1}
  #allocation0 [shape = 'u32[]', space=smem, size = 0x4, offset = 0x4, fixed_abs, tag = 'smem constant byte address 0x4 - core index']
  #allocation1 [shape = 'u32[144,128]{1,0:T(1,128)}', space=vmem, size = 0x12000, scoped, tag = 'internal scratch']
  #allocation2 [shape = 'f32[4,6,6,5,128]{4,3,2,1,0:T(8,128)}', space=vmem, size = 0x90000, scoped, tag = 'scratch operand']
  #allocation3 [shape = 'f32[8,6,5,5,128]{4,3,2,1,0:T(8,128)}', space=vmem, size = 0xf0000, scoped, tag = 'scratch operand']
  %s0 = inlined_call_operand.vmem [shape: f32[8,6,6,6,128], index: 0, kind: input, shape index: {}]
  %s1 = inlined_call_operand.vmem [shape: f32[8,6,6,6,128], index: 1, kind: input, shape index: {}]
  %s2 = inlined_call_operand.vmem [shape: f32[8,5,5,5,128], index: 2, kind: output, shape index: {}]
  %s3 = sld [smem:[#allocation0]]
  $region94: #{tpu_custom_call.1} parent=0
    _
  %s5 = ssub.s32 1, %s3
  %s6 = scalar_select 0, %s5, %s3
  $region1: #{tpu_custom_call.1} parent=0
    #allocation4 [shape = 'u8[983040]{0}', space=vmem, size = 0xf0000, scoped, tag = 'input window, operand 0, single buffered']
    #allocation5 [shape = 'u8[196608]{0}', space=vmem, size = 0x30000, scoped, tag = 'input window, operand 1, single buffered']
    // Predicated region
    $region2: #{tpu_custom_call.1} parent=1 // pred_check
      _
    $region3: #{tpu_custom_call.1} parent=1 // pred_check_branch
      %8 = sbr.rel (0) target = $region5
    $region4: #{tpu_custom_call.1} parent=1 // pred_region
      // Predicated region
      $region6: #{tpu_custom_call.1} parent=4 // pred_check
        _
      $region7: #{tpu_custom_call.1} parent=4 // pred_check_branch
        %10 = sbr.rel (0) target = $region9
      $region8: #{tpu_custom_call.1} parent=4 // pred_region
        // Predicated region
        $region10: #{tpu_custom_call.1} parent=8 // pred_check
          _
        $region11: #{tpu_custom_call.1} parent=8 // pred_check_branch
          %12 = sbr.rel (0) target = $region13
        $region12: #{tpu_custom_call.1} parent=8 // pred_region
          // Predicated region
          $region25: #{tpu_custom_call.1} parent=12 // pred_check
            _
          $region26: #{tpu_custom_call.1} parent=12 // pred_check_branch
            %506 = sbr.rel (0) target = $region28
          $region27: #{tpu_custom_call.1} parent=12 // pred_region
            loop: start=0, step=1, limit=1
            $region29: #{tpu_custom_call.1} parent=27 // loop_pre_header
              _
            $region30: #{tpu_custom_call.1} parent=27 // loop_header
              %s508 = sphi 0, %s512
              %p509 = scmp.ge.s32.totalorder %s508, 1
              %s513 = sphi %s0, %s0
              %s514 = sphi [#allocation4], [#allocation4]
            $region31: #{tpu_custom_call.1} parent=27 // loop_header_branch
              %511 = sbr.rel (%p509) target = $region35
            $region32: #{tpu_custom_call.1} parent=27 // loop_body
              %v515 = vld [vmem:[%s513] sm:$0xff]
              %516 = vst [vmem:[%s514] sm:$0xff] %v515
              %v517 = vld [vmem:[%s513 + $0x8] sm:$0xff]
              %518 = vst [vmem:[%s514 + $0x8] sm:$0xff] %v517
              %v519 = vld [vmem:[%s513 + $0x10] sm:$0xff]
              %520 = vst [vmem:[%s514 + $0x10] sm:$0xff] %v519
              %v521 = vld [vmem:[%s513 + $0x18] sm:$0xff]
              %522 = vst [vmem:[%s514 + $0x18] sm:$0xff] %v521
              %v523 = vld [vmem:[%s513 + $0x20] sm:$0xff]
              %524 = vst [vmem:[%s514 + $0x20] sm:$0xff] %v523
              %v525 = vld [vmem:[%s513 + $0x28] sm:$0xff]
              %526 = vst [vmem:[%s514 + $0x28] sm:$0xff] %v525
              %v527 = vld [vmem:[%s513 + $0x30] sm:$0xff]
              %528 = vst [vmem:[%s514 + $0x30] sm:$0xff] %v527
              %v529 = vld [vmem:[%s513 + $0x38] sm:$0xff]
              %530 = vst [vmem:[%s514 + $0x38] sm:$0xff] %v529
              %v531 = vld [vmem:[%s513 + $0x40] sm:$0xff]
              %532 = vst [vmem:[%s514 + $0x40] sm:$0xff] %v531
              %v533 = vld [vmem:[%s513 + $0x48] sm:$0xff]
              %534 = vst [vmem:[%s514 + $0x48] sm:$0xff] %v533
              %v535 = vld [vmem:[%s513 + $0x50] sm:$0xff]
              %536 = vst [vmem:[%s514 + $0x50] sm:$0xff] %v535
              %v537 = vld [vmem:[%s513 + $0x58] sm:$0xff]
              %538 = vst [vmem:[%s514 + $0x58] sm:$0xff] %v537
              %v539 = vld [vmem:[%s513 + $0x60] sm:$0xff]
              %540 = vst [vmem:[%s514 + $0x60] sm:$0xff] %v539
              %v541 = vld [vmem:[%s513 + $0x68] sm:$0xff]
              %542 = vst [vmem:[%s514 + $0x68] sm:$0xff] %v541
              %v543 = vld [vmem:[%s513 + $0x70] sm:$0xff]
              %544 = vst [vmem:[%s514 + $0x70] sm:$0xff] %v543
              %v545 = vld [vmem:[%s513 + $0x78] sm:$0xff]
              %546 = vst [vmem:[%s514 + $0x78] sm:$0xff] %v545
              %v547 = vld [vmem:[%s513 + $0x80] sm:$0xff]
              %548 = vst [vmem:[%s514 + $0x80] sm:$0xff] %v547
              %v549 = vld [vmem:[%s513 + $0x88] sm:$0xff]
              %550 = vst [vmem:[%s514 + $0x88] sm:$0xff] %v549
              %v551 = vld [vmem:[%s513 + $0x90] sm:$0xff]
              %552 = vst [vmem:[%s514 + $0x90] sm:$0xff] %v551
              %v553 = vld [vmem:[%s513 + $0x98] sm:$0xff]
              %554 = vst [vmem:[%s514 + $0x98] sm:$0xff] %v553
              %v555 = vld [vmem:[%s513 + $0xa0] sm:$0xff]
              %556 = vst [vmem:[%s514 + $0xa0] sm:$0xff] %v555
              %v557 = vld [vmem:[%s513 + $0xa8] sm:$0xff]
              %558 = vst [vmem:[%s514 + $0xa8] sm:$0xff] %v557
              %v559 = vld [vmem:[%s513 + $0xb0] sm:$0xff]
              %560 = vst [vmem:[%s514 + $0xb0] sm:$0xff] %v559
              %v561 = vld [vmem:[%s513 + $0xb8] sm:$0xff]
              %562 = vst [vmem:[%s514 + $0xb8] sm:$0xff] %v561
              %v563 = vld [vmem:[%s513 + $0xc0] sm:$0xff]
              %564 = vst [vmem:[%s514 + $0xc0] sm:$0xff] %v563
              %v565 = vld [vmem:[%s513 + $0xc8] sm:$0xff]
              %566 = vst [vmem:[%s514 + $0xc8] sm:$0xff] %v565
              %v567 = vld [vmem:[%s513 + $0xd0] sm:$0xff]
              %568 = vst [vmem:[%s514 + $0xd0] sm:$0xff] %v567
              %v569 = vld [vmem:[%s513 + $0xd8] sm:$0xff]
              %570 = vst [vmem:[%s514 + $0xd8] sm:$0xff] %v569
              %v571 = vld [vmem:[%s513 + $0xe0] sm:$0xff]
              %572 = vst [vmem:[%s514 + $0xe0] sm:$0xff] %v571
              %v573 = vld [vmem:[%s513 + $0xe8] sm:$0xff]
              %574 = vst [vmem:[%s514 + $0xe8] sm:$0xff] %v573
              %v575 = vld [vmem:[%s513 + $0x120] sm:$0xff]
              %576 = vst [vmem:[%s514 + $0xf0] sm:$0xff] %v575
              %v577 = vld [vmem:[%s513 + $0x128] sm:$0xff]
              %578 = vst [vmem:[%s514 + $0xf8] sm:$0xff] %v577
              %v579 = vld [vmem:[%s513 + $0x130] sm:$0xff]
              %580 = vst [vmem:[%s514 + $0x100] sm:$0xff] %v579
              %v581 = vld [vmem:[%s513 + $0x138] sm:$0xff]
              %582 = vst [vmem:[%s514 + $0x108] sm:$0xff] %v581
              %v583 = vld [vmem:[%s513 + $0x140] sm:$0xff]
              %584 = vst [vmem:[%s514 + $0x110] sm:$0xff] %v583
              %v585 = vld [vmem:[%s513 + $0x148] sm:$0xff]
              %586 = vst [vmem:[%s514 + $0x118] sm:$0xff] %v585
              %v587 = vld [vmem:[%s513 + $0x150] sm:$0xff]
              %588 = vst [vmem:[%s514 + $0x120] sm:$0xff] %v587
              %v589 = vld [vmem:[%s513 + $0x158] sm:$0xff]
              %590 = vst [vmem:[%s514 + $0x128] sm:$0xff] %v589
              %v591 = vld [vmem:[%s513 + $0x160] sm:$0xff]
              %592 = vst [vmem:[%s514 + $0x130] sm:$0xff] %v591
              %v593 = vld [vmem:[%s513 + $0x168] sm:$0xff]
              %594 = vst [vmem:[%s514 + $0x138] sm:$0xff] %v593
              %v595 = vld [vmem:[%s513 + $0x170] sm:$0xff]
              %596 = vst [vmem:[%s514 + $0x140] sm:$0xff] %v595
              %v597 = vld [vmem:[%s513 + $0x178] sm:$0xff]
              %598 = vst [vmem:[%s514 + $0x148] sm:$0xff] %v597
              %v599 = vld [vmem:[%s513 + $0x180] sm:$0xff]
              %600 = vst [vmem:[%s514 + $0x150] sm:$0xff] %v599
              %v601 = vld [vmem:[%s513 + $0x188] sm:$0xff]
              %602 = vst [vmem:[%s514 + $0x158] sm:$0xff] %v601
              %v603 = vld [vmem:[%s513 + $0x190] sm:$0xff]
              %604 = vst [vmem:[%s514 + $0x160] sm:$0xff] %v603
              %v605 = vld [vmem:[%s513 + $0x198] sm:$0xff]
              %606 = vst [vmem:[%s514 + $0x168] sm:$0xff] %v605
              %v607 = vld [vmem:[%s513 + $0x1a0] sm:$0xff]
              %608 = vst [vmem:[%s514 + $0x170] sm:$0xff] %v607
              %v609 = vld [vmem:[%s513 + $0x1a8] sm:$0xff]
              %610 = vst [vmem:[%s514 + $0x178] sm:$0xff] %v609
              %v611 = vld [vmem:[%s513 + $0x1b0] sm:$0xff]
              %612 = vst [vmem:[%s514 + $0x180] sm:$0xff] %v611
              %v613 = vld [vmem:[%s513 + $0x1b8] sm:$0xff]
              %614 = vst [vmem:[%s514 + $0x188] sm:$0xff] %v613
              %v615 = vld [vmem:[%s513 + $0x1c0] sm:$0xff]
              %616 = vst [vmem:[%s514 + $0x190] sm:$0xff] %v615
              %v617 = vld [vmem:[%s513 + $0x1c8] sm:$0xff]
              %618 = vst [vmem:[%s514 + $0x198] sm:$0xff] %v617
              %v619 = vld [vmem:[%s513 + $0x1d0] sm:$0xff]
              %620 = vst [vmem:[%s514 + $0x1a0] sm:$0xff] %v619
              %v621 = vld [vmem:[%s513 + $0x1d8] sm:$0xff]
              %622 = vst [vmem:[%s514 + $0x1a8] sm:$0xff] %v621
              %v623 = vld [vmem:[%s513 + $0x1e0] sm:$0xff]
              %624 = vst [vmem:[%s514 + $0x1b0] sm:$0xff] %v623
              %v625 = vld [vmem:[%s513 + $0x1e8] sm:$0xff]
              %626 = vst [vmem:[%s514 + $0x1b8] sm:$0xff] %v625
              %v627 = vld [vmem:[%s513 + $0x1f0] sm:$0xff]
              %628 = vst [vmem:[%s514 + $0x1c0] sm:$0xff] %v627
              %v629 = vld [vmem:[%s513 + $0x1f8] sm:$0xff]
              %630 = vst [vmem:[%s514 + $0x1c8] sm:$0xff] %v629
              %v631 = vld [vmem:[%s513 + $0x200] sm:$0xff]
              %632 = vst [vmem:[%s514 + $0x1d0] sm:$0xff] %v631
              %v633 = vld [vmem:[%s513 + $0x208] sm:$0xff]
              %634 = vst [vmem:[%s514 + $0x1d8] sm:$0xff] %v633
              %v635 = vld [vmem:[%s513 + $0x240] sm:$0xff]
              %636 = vst [vmem:[%s514 + $0x1e0] sm:$0xff] %v635
              %v637 = vld [vmem:[%s513 + $0x248] sm:$0xff]
              %638 = vst [vmem:[%s514 + $0x1e8] sm:$0xff] %v637
              %v639 = vld [vmem:[%s513 + $0x250] sm:$0xff]
              %640 = vst [vmem:[%s514 + $0x1f0] sm:$0xff] %v639
              %v641 = vld [vmem:[%s513 + $0x258] sm:$0xff]
              %642 = vst [vmem:[%s514 + $0x1f8] sm:$0xff] %v641
              %v643 = vld [vmem:[%s513 + $0x260] sm:$0xff]
              %644 = vst [vmem:[%s514 + $0x200] sm:$0xff] %v643
              %v645 = vld [vmem:[%s513 + $0x268] sm:$0xff]
              %646 = vst [vmem:[%s514 + $0x208] sm:$0xff] %v645
              %v647 = vld [vmem:[%s513 + $0x270] sm:$0xff]
              %648 = vst [vmem:[%s514 + $0x210] sm:$0xff] %v647
              %v649 = vld [vmem:[%s513 + $0x278] sm:$0xff]
              %650 = vst [vmem:[%s514 + $0x218] sm:$0xff] %v649
              %v651 = vld [vmem:[%s513 + $0x280] sm:$0xff]
              %652 = vst [vmem:[%s514 + $0x220] sm:$0xff] %v651
              %v653 = vld [vmem:[%s513 + $0x288] sm:$0xff]
              %654 = vst [vmem:[%s514 + $0x228] sm:$0xff] %v653
              %v655 = vld [vmem:[%s513 + $0x290] sm:$0xff]
              %656 = vst [vmem:[%s514 + $0x230] sm:$0xff] %v655
              %v657 = vld [vmem:[%s513 + $0x298] sm:$0xff]
              %658 = vst [vmem:[%s514 + $0x238] sm:$0xff] %v657
              %v659 = vld [vmem:[%s513 + $0x2a0] sm:$0xff]
              %660 = vst [vmem:[%s514 + $0x240] sm:$0xff] %v659
              %v661 = vld [vmem:[%s513 + $0x2a8] sm:$0xff]
              %662 = vst [vmem:[%s514 + $0x248] sm:$0xff] %v661
              %v663 = vld [vmem:[%s513 + $0x2b0] sm:$0xff]
              %664 = vst [vmem:[%s514 + $0x250] sm:$0xff] %v663
              %v665 = vld [vmem:[%s513 + $0x2b8] sm:$0xff]
              %666 = vst [vmem:[%s514 + $0x258] sm:$0xff] %v665
              %v667 = vld [vmem:[%s513 + $0x2c0] sm:$0xff]
              %668 = vst [vmem:[%s514 + $0x260] sm:$0xff] %v667
              %v669 = vld [vmem:[%s513 + $0x2c8] sm:$0xff]
              %670 = vst [vmem:[%s514 + $0x268] sm:$0xff] %v669
              %v671 = vld [vmem:[%s513 + $0x2d0] sm:$0xff]
              %672 = vst [vmem:[%s514 + $0x270] sm:$0xff] %v671
              %v673 = vld [vmem:[%s513 + $0x2d8] sm:$0xff]
              %674 = vst [vmem:[%s514 + $0x278] sm:$0xff] %v673
              %v675 = vld [vmem:[%s513 + $0x2e0] sm:$0xff]
              %676 = vst [vmem:[%s514 + $0x280] sm:$0xff] %v675
              %v677 = vld [vmem:[%s513 + $0x2e8] sm:$0xff]
              %678 = vst [vmem:[%s514 + $0x288] sm:$0xff] %v677
              %v679 = vld [vmem:[%s513 + $0x2f0] sm:$0xff]
              %680 = vst [vmem:[%s514 + $0x290] sm:$0xff] %v679
              %v681 = vld [vmem:[%s513 + $0x2f8] sm:$0xff]
              %682 = vst [vmem:[%s514 + $0x298] sm:$0xff] %v681
              %v683 = vld [vmem:[%s513 + $0x300] sm:$0xff]
              %684 = vst [vmem:[%s514 + $0x2a0] sm:$0xff] %v683
              %v685 = vld [vmem:[%s513 + $0x308] sm:$0xff]
              %686 = vst [vmem:[%s514 + $0x2a8] sm:$0xff] %v685
              %v687 = vld [vmem:[%s513 + $0x310] sm:$0xff]
              %688 = vst [vmem:[%s514 + $0x2b0] sm:$0xff] %v687
              %v689 = vld [vmem:[%s513 + $0x318] sm:$0xff]
              %690 = vst [vmem:[%s514 + $0x2b8] sm:$0xff] %v689
              %v691 = vld [vmem:[%s513 + $0x320] sm:$0xff]
              %692 = vst [vmem:[%s514 + $0x2c0] sm:$0xff] %v691
              %v693 = vld [vmem:[%s513 + $0x328] sm:$0xff]
              %694 = vst [vmem:[%s514 + $0x2c8] sm:$0xff] %v693
              %v695 = vld [vmem:[%s513 + $0x360] sm:$0xff]
              %696 = vst [vmem:[%s514 + $0x2d0] sm:$0xff] %v695
              %v697 = vld [vmem:[%s513 + $0x368] sm:$0xff]
              %698 = vst [vmem:[%s514 + $0x2d8] sm:$0xff] %v697
              %v699 = vld [vmem:[%s513 + $0x370] sm:$0xff]
              %700 = vst [vmem:[%s514 + $0x2e0] sm:$0xff] %v699
              %v701 = vld [vmem:[%s513 + $0x378] sm:$0xff]
              %702 = vst [vmem:[%s514 + $0x2e8] sm:$0xff] %v701
              %v703 = vld [vmem:[%s513 + $0x380] sm:$0xff]
              %704 = vst [vmem:[%s514 + $0x2f0] sm:$0xff] %v703
              %v705 = vld [vmem:[%s513 + $0x388] sm:$0xff]
              %706 = vst [vmem:[%s514 + $0x2f8] sm:$0xff] %v705
              %v707 = vld [vmem:[%s513 + $0x390] sm:$0xff]
              %708 = vst [vmem:[%s514 + $0x300] sm:$0xff] %v707
              %v709 = vld [vmem:[%s513 + $0x398] sm:$0xff]
              %710 = vst [vmem:[%s514 + $0x308] sm:$0xff] %v709
              %v711 = vld [vmem:[%s513 + $0x3a0] sm:$0xff]
              %712 = vst [vmem:[%s514 + $0x310] sm:$0xff] %v711
              %v713 = vld [vmem:[%s513 + $0x3a8] sm:$0xff]
              %714 = vst [vmem:[%s514 + $0x318] sm:$0xff] %v713
              %v715 = vld [vmem:[%s513 + $0x3b0] sm:$0xff]
              %716 = vst [vmem:[%s514 + $0x320] sm:$0xff] %v715
              %v717 = vld [vmem:[%s513 + $0x3b8] sm:$0xff]
              %718 = vst [vmem:[%s514 + $0x328] sm:$0xff] %v717
              %v719 = vld [vmem:[%s513 + $0x3c0] sm:$0xff]
              %720 = vst [vmem:[%s514 + $0x330] sm:$0xff] %v719
              %v721 = vld [vmem:[%s513 + $0x3c8] sm:$0xff]
              %722 = vst [vmem:[%s514 + $0x338] sm:$0xff] %v721
              %v723 = vld [vmem:[%s513 + $0x3d0] sm:$0xff]
              %724 = vst [vmem:[%s514 + $0x340] sm:$0xff] %v723
              %v725 = vld [vmem:[%s513 + $0x3d8] sm:$0xff]
              %726 = vst [vmem:[%s514 + $0x348] sm:$0xff] %v725
              %v727 = vld [vmem:[%s513 + $0x3e0] sm:$0xff]
              %728 = vst [vmem:[%s514 + $0x350] sm:$0xff] %v727
              %v729 = vld [vmem:[%s513 + $0x3e8] sm:$0xff]
              %730 = vst [vmem:[%s514 + $0x358] sm:$0xff] %v729
              %v731 = vld [vmem:[%s513 + $0x3f0] sm:$0xff]
              %732 = vst [vmem:[%s514 + $0x360] sm:$0xff] %v731
              %v733 = vld [vmem:[%s513 + $0x3f8] sm:$0xff]
              %734 = vst [vmem:[%s514 + $0x368] sm:$0xff] %v733
              %v735 = vld [vmem:[%s513 + $0x400] sm:$0xff]
              %736 = vst [vmem:[%s514 + $0x370] sm:$0xff] %v735
              %v737 = vld [vmem:[%s513 + $0x408] sm:$0xff]
              %738 = vst [vmem:[%s514 + $0x378] sm:$0xff] %v737
              %v739 = vld [vmem:[%s513 + $0x410] sm:$0xff]
              %740 = vst [vmem:[%s514 + $0x380] sm:$0xff] %v739
              %v741 = vld [vmem:[%s513 + $0x418] sm:$0xff]
              %742 = vst [vmem:[%s514 + $0x388] sm:$0xff] %v741
              %v743 = vld [vmem:[%s513 + $0x420] sm:$0xff]
              %744 = vst [vmem:[%s514 + $0x390] sm:$0xff] %v743
              %v745 = vld [vmem:[%s513 + $0x428] sm:$0xff]
              %746 = vst [vmem:[%s514 + $0x398] sm:$0xff] %v745
              %v747 = vld [vmem:[%s513 + $0x430] sm:$0xff]
              %748 = vst [vmem:[%s514 + $0x3a0] sm:$0xff] %v747
              %v749 = vld [vmem:[%s513 + $0x438] sm:$0xff]
              %750 = vst [vmem:[%s514 + $0x3a8] sm:$0xff] %v749
              %v751 = vld [vmem:[%s513 + $0x440] sm:$0xff]
              %752 = vst [vmem:[%s514 + $0x3b0] sm:$0xff] %v751
              %v753 = vld [vmem:[%s513 + $0x448] sm:$0xff]
              %754 = vst [vmem:[%s514 + $0x3b8] sm:$0xff] %v753
              %v755 = vld [vmem:[%s513 + $0x480] sm:$0xff]
              %756 = vst [vmem:[%s514 + $0x3c0] sm:$0xff] %v755
              %v757 = vld [vmem:[%s513 + $0x488] sm:$0xff]
              %758 = vst [vmem:[%s514 + $0x3c8] sm:$0xff] %v757
              %v759 = vld [vmem:[%s513 + $0x490] sm:$0xff]
              %760 = vst [vmem:[%s514 + $0x3d0] sm:$0xff] %v759
              %v761 = vld [vmem:[%s513 + $0x498] sm:$0xff]
              %762 = vst [vmem:[%s514 + $0x3d8] sm:$0xff] %v761
              %v763 = vld [vmem:[%s513 + $0x4a0] sm:$0xff]
              %764 = vst [vmem:[%s514 + $0x3e0] sm:$0xff] %v763
              %v765 = vld [vmem:[%s513 + $0x4a8] sm:$0xff]
              %766 = vst [vmem:[%s514 + $0x3e8] sm:$0xff] %v765
              %v767 = vld [vmem:[%s513 + $0x4b0] sm:$0xff]
              %768 = vst [vmem:[%s514 + $0x3f0] sm:$0xff] %v767
              %v769 = vld [vmem:[%s513 + $0x4b8] sm:$0xff]
              %770 = vst [vmem:[%s514 + $0x3f8] sm:$0xff] %v769
              %v771 = vld [vmem:[%s513 + $0x4c0] sm:$0xff]
              %772 = vst [vmem:[%s514 + $0x400] sm:$0xff] %v771
              %v773 = vld [vmem:[%s513 + $0x4c8] sm:$0xff]
              %774 = vst [vmem:[%s514 + $0x408] sm:$0xff] %v773
              %v775 = vld [vmem:[%s513 + $0x4d0] sm:$0xff]
              %776 = vst [vmem:[%s514 + $0x410] sm:$0xff] %v775
              %v777 = vld [vmem:[%s513 + $0x4d8] sm:$0xff]
              %778 = vst [vmem:[%s514 + $0x418] sm:$0xff] %v777
              %v779 = vld [vmem:[%s513 + $0x4e0] sm:$0xff]
              %780 = vst [vmem:[%s514 + $0x420] sm:$0xff] %v779
              %v781 = vld [vmem:[%s513 + $0x4e8] sm:$0xff]
              %782 = vst [vmem:[%s514 + $0x428] sm:$0xff] %v781
              %v783 = vld [vmem:[%s513 + $0x4f0] sm:$0xff]
              %784 = vst [vmem:[%s514 + $0x430] sm:$0xff] %v783
              %v785 = vld [vmem:[%s513 + $0x4f8] sm:$0xff]
              %786 = vst [vmem:[%s514 + $0x438] sm:$0xff] %v785
              %v787 = vld [vmem:[%s513 + $0x500] sm:$0xff]
              %788 = vst [vmem:[%s514 + $0x440] sm:$0xff] %v787
              %v789 = vld [vmem:[%s513 + $0x508] sm:$0xff]
              %790 = vst [vmem:[%s514 + $0x448] sm:$0xff] %v789
              %v791 = vld [vmem:[%s513 + $0x510] sm:$0xff]
              %792 = vst [vmem:[%s514 + $0x450] sm:$0xff] %v791
              %v793 = vld [vmem:[%s513 + $0x518] sm:$0xff]
              %794 = vst [vmem:[%s514 + $0x458] sm:$0xff] %v793
              %v795 = vld [vmem:[%s513 + $0x520] sm:$0xff]
              %796 = vst [vmem:[%s514 + $0x460] sm:$0xff] %v795
              %v797 = vld [vmem:[%s513 + $0x528] sm:$0xff]
              %798 = vst [vmem:[%s514 + $0x468] sm:$0xff] %v797
              %v799 = vld [vmem:[%s513 + $0x530] sm:$0xff]
              %800 = vst [vmem:[%s514 + $0x470] sm:$0xff] %v799
              %v801 = vld [vmem:[%s513 + $0x538] sm:$0xff]
              %802 = vst [vmem:[%s514 + $0x478] sm:$0xff] %v801
              %v803 = vld [vmem:[%s513 + $0x540] sm:$0xff]
              %804 = vst [vmem:[%s514 + $0x480] sm:$0xff] %v803
              %v805 = vld [vmem:[%s513 + $0x548] sm:$0xff]
              %806 = vst [vmem:[%s514 + $0x488] sm:$0xff] %v805
              %v807 = vld [vmem:[%s513 + $0x550] sm:$0xff]
              %808 = vst [vmem:[%s514 + $0x490] sm:$0xff] %v807
              %v809 = vld [vmem:[%s513 + $0x558] sm:$0xff]
              %810 = vst [vmem:[%s514 + $0x498] sm:$0xff] %v809
              %v811 = vld [vmem:[%s513 + $0x560] sm:$0xff]
              %812 = vst [vmem:[%s514 + $0x4a0] sm:$0xff] %v811
              %v813 = vld [vmem:[%s513 + $0x568] sm:$0xff]
              %814 = vst [vmem:[%s514 + $0x4a8] sm:$0xff] %v813
              %v815 = vld [vmem:[%s513 + $0x5a0] sm:$0xff]
              %816 = vst [vmem:[%s514 + $0x4b0] sm:$0xff] %v815
              %v817 = vld [vmem:[%s513 + $0x5a8] sm:$0xff]
              %818 = vst [vmem:[%s514 + $0x4b8] sm:$0xff] %v817
              %v819 = vld [vmem:[%s513 + $0x5b0] sm:$0xff]
              %820 = vst [vmem:[%s514 + $0x4c0] sm:$0xff] %v819
              %v821 = vld [vmem:[%s513 + $0x5b8] sm:$0xff]
              %822 = vst [vmem:[%s514 + $0x4c8] sm:$0xff] %v821
              %v823 = vld [vmem:[%s513 + $0x5c0] sm:$0xff]
              %824 = vst [vmem:[%s514 + $0x4d0] sm:$0xff] %v823
              %v825 = vld [vmem:[%s513 + $0x5c8] sm:$0xff]
              %826 = vst [vmem:[%s514 + $0x4d8] sm:$0xff] %v825
              %v827 = vld [vmem:[%s513 + $0x5d0] sm:$0xff]
              %828 = vst [vmem:[%s514 + $0x4e0] sm:$0xff] %v827
              %v829 = vld [vmem:[%s513 + $0x5d8] sm:$0xff]
              %830 = vst [vmem:[%s514 + $0x4e8] sm:$0xff] %v829
              %v831 = vld [vmem:[%s513 + $0x5e0] sm:$0xff]
              %832 = vst [vmem:[%s514 + $0x4f0] sm:$0xff] %v831
              %v833 = vld [vmem:[%s513 + $0x5e8] sm:$0xff]
              %834 = vst [vmem:[%s514 + $0x4f8] sm:$0xff] %v833
              %v835 = vld [vmem:[%s513 + $0x5f0] sm:$0xff]
              %836 = vst [vmem:[%s514 + $0x500] sm:$0xff] %v835
              %v837 = vld [vmem:[%s513 + $0x5f8] sm:$0xff]
              %838 = vst [vmem:[%s514 + $0x508] sm:$0xff] %v837
              %v839 = vld [vmem:[%s513 + $0x600] sm:$0xff]
              %840 = vst [vmem:[%s514 + $0x510] sm:$0xff] %v839
              %v841 = vld [vmem:[%s513 + $0x608] sm:$0xff]
              %842 = vst [vmem:[%s514 + $0x518] sm:$0xff] %v841
              %v843 = vld [vmem:[%s513 + $0x610] sm:$0xff]
              %844 = vst [vmem:[%s514 + $0x520] sm:$0xff] %v843
              %v845 = vld [vmem:[%s513 + $0x618] sm:$0xff]
              %846 = vst [vmem:[%s514 + $0x528] sm:$0xff] %v845
              %v847 = vld [vmem:[%s513 + $0x620] sm:$0xff]
              %848 = vst [vmem:[%s514 + $0x530] sm:$0xff] %v847
              %v849 = vld [vmem:[%s513 + $0x628] sm:$0xff]
              %850 = vst [vmem:[%s514 + $0x538] sm:$0xff] %v849
              %v851 = vld [vmem:[%s513 + $0x630] sm:$0xff]
              %852 = vst [vmem:[%s514 + $0x540] sm:$0xff] %v851
              %v853 = vld [vmem:[%s513 + $0x638] sm:$0xff]
              %854 = vst [vmem:[%s514 + $0x548] sm:$0xff] %v853
              %v855 = vld [vmem:[%s513 + $0x640] sm:$0xff]
              %856 = vst [vmem:[%s514 + $0x550] sm:$0xff] %v855
              %v857 = vld [vmem:[%s513 + $0x648] sm:$0xff]
              %858 = vst [vmem:[%s514 + $0x558] sm:$0xff] %v857
              %v859 = vld [vmem:[%s513 + $0x650] sm:$0xff]
              %860 = vst [vmem:[%s514 + $0x560] sm:$0xff] %v859
              %v861 = vld [vmem:[%s513 + $0x658] sm:$0xff]
              %862 = vst [vmem:[%s514 + $0x568] sm:$0xff] %v861
              %v863 = vld [vmem:[%s513 + $0x660] sm:$0xff]
              %864 = vst [vmem:[%s514 + $0x570] sm:$0xff] %v863
              %v865 = vld [vmem:[%s513 + $0x668] sm:$0xff]
              %866 = vst [vmem:[%s514 + $0x578] sm:$0xff] %v865
              %v867 = vld [vmem:[%s513 + $0x670] sm:$0xff]
              %868 = vst [vmem:[%s514 + $0x580] sm:$0xff] %v867
              %v869 = vld [vmem:[%s513 + $0x678] sm:$0xff]
              %870 = vst [vmem:[%s514 + $0x588] sm:$0xff] %v869
              %v871 = vld [vmem:[%s513 + $0x680] sm:$0xff]
              %872 = vst [vmem:[%s514 + $0x590] sm:$0xff] %v871
              %v873 = vld [vmem:[%s513 + $0x688] sm:$0xff]
              %874 = vst [vmem:[%s514 + $0x598] sm:$0xff] %v873
              %v875 = vld [vmem:[%s513 + $0x6c0] sm:$0xff]
              %876 = vst [vmem:[%s514 + $0x5a0] sm:$0xff] %v875
              %v877 = vld [vmem:[%s513 + $0x6c8] sm:$0xff]
              %878 = vst [vmem:[%s514 + $0x5a8] sm:$0xff] %v877
              %v879 = vld [vmem:[%s513 + $0x6d0] sm:$0xff]
              %880 = vst [vmem:[%s514 + $0x5b0] sm:$0xff] %v879
              %v881 = vld [vmem:[%s513 + $0x6d8] sm:$0xff]
              %882 = vst [vmem:[%s514 + $0x5b8] sm:$0xff] %v881
              %v883 = vld [vmem:[%s513 + $0x6e0] sm:$0xff]
              %884 = vst [vmem:[%s514 + $0x5c0] sm:$0xff] %v883
              %v885 = vld [vmem:[%s513 + $0x6e8] sm:$0xff]
              %886 = vst [vmem:[%s514 + $0x5c8] sm:$0xff] %v885
              %v887 = vld [vmem:[%s513 + $0x6f0] sm:$0xff]
              %888 = vst [vmem:[%s514 + $0x5d0] sm:$0xff] %v887
              %v889 = vld [vmem:[%s513 + $0x6f8] sm:$0xff]
              %890 = vst [vmem:[%s514 + $0x5d8] sm:$0xff] %v889
              %v891 = vld [vmem:[%s513 + $0x700] sm:$0xff]
              %892 = vst [vmem:[%s514 + $0x5e0] sm:$0xff] %v891
              %v893 = vld [vmem:[%s513 + $0x708] sm:$0xff]
              %894 = vst [vmem:[%s514 + $0x5e8] sm:$0xff] %v893
              %v895 = vld [vmem:[%s513 + $0x710] sm:$0xff]
              %896 = vst [vmem:[%s514 + $0x5f0] sm:$0xff] %v895
              %v897 = vld [vmem:[%s513 + $0x718] sm:$0xff]
              %898 = vst [vmem:[%s514 + $0x5f8] sm:$0xff] %v897
              %v899 = vld [vmem:[%s513 + $0x720] sm:$0xff]
              %900 = vst [vmem:[%s514 + $0x600] sm:$0xff] %v899
              %v901 = vld [vmem:[%s513 + $0x728] sm:$0xff]
              %902 = vst [vmem:[%s514 + $0x608] sm:$0xff] %v901
              %v903 = vld [vmem:[%s513 + $0x730] sm:$0xff]
              %904 = vst [vmem:[%s514 + $0x610] sm:$0xff] %v903
              %v905 = vld [vmem:[%s513 + $0x738] sm:$0xff]
              %906 = vst [vmem:[%s514 + $0x618] sm:$0xff] %v905
              %v907 = vld [vmem:[%s513 + $0x740] sm:$0xff]
              %908 = vst [vmem:[%s514 + $0x620] sm:$0xff] %v907
              %v909 = vld [vmem:[%s513 + $0x748] sm:$0xff]
              %910 = vst [vmem:[%s514 + $0x628] sm:$0xff] %v909
              %v911 = vld [vmem:[%s513 + $0x750] sm:$0xff]
              %912 = vst [vmem:[%s514 + $0x630] sm:$0xff] %v911
              %v913 = vld [vmem:[%s513 + $0x758] sm:$0xff]
              %914 = vst [vmem:[%s514 + $0x638] sm:$0xff] %v913
              %v915 = vld [vmem:[%s513 + $0x760] sm:$0xff]
              %916 = vst [vmem:[%s514 + $0x640] sm:$0xff] %v915
              %v917 = vld [vmem:[%s513 + $0x768] sm:$0xff]
              %918 = vst [vmem:[%s514 + $0x648] sm:$0xff] %v917
              %v919 = vld [vmem:[%s513 + $0x770] sm:$0xff]
              %920 = vst [vmem:[%s514 + $0x650] sm:$0xff] %v919
              %v921 = vld [vmem:[%s513 + $0x778] sm:$0xff]
              %922 = vst [vmem:[%s514 + $0x658] sm:$0xff] %v921
              %v923 = vld [vmem:[%s513 + $0x780] sm:$0xff]
              %924 = vst [vmem:[%s514 + $0x660] sm:$0xff] %v923
              %v925 = vld [vmem:[%s513 + $0x788] sm:$0xff]
              %926 = vst [vmem:[%s514 + $0x668] sm:$0xff] %v925
              %v927 = vld [vmem:[%s513 + $0x790] sm:$0xff]
              %928 = vst [vmem:[%s514 + $0x670] sm:$0xff] %v927
              %v929 = vld [vmem:[%s513 + $0x798] sm:$0xff]
              %930 = vst [vmem:[%s514 + $0x678] sm:$0xff] %v929
              %v931 = vld [vmem:[%s513 + $0x7a0] sm:$0xff]
              %932 = vst [vmem:[%s514 + $0x680] sm:$0xff] %v931
              %v933 = vld [vmem:[%s513 + $0x7a8] sm:$0xff]
              %934 = vst [vmem:[%s514 + $0x688] sm:$0xff] %v933
              %v935 = vld [vmem:[%s513 + $0x7e0] sm:$0xff]
              %936 = vst [vmem:[%s514 + $0x690] sm:$0xff] %v935
              %v937 = vld [vmem:[%s513 + $0x7e8] sm:$0xff]
              %938 = vst [vmem:[%s514 + $0x698] sm:$0xff] %v937
              %v939 = vld [vmem:[%s513 + $0x7f0] sm:$0xff]
              %940 = vst [vmem:[%s514 + $0x6a0] sm:$0xff] %v939
              %v941 = vld [vmem:[%s513 + $0x7f8] sm:$0xff]
              %942 = vst [vmem:[%s514 + $0x6a8] sm:$0xff] %v941
              %v943 = vld [vmem:[%s513 + $0x800] sm:$0xff]
              %944 = vst [vmem:[%s514 + $0x6b0] sm:$0xff] %v943
              %v945 = vld [vmem:[%s513 + $0x808] sm:$0xff]
              %946 = vst [vmem:[%s514 + $0x6b8] sm:$0xff] %v945
              %v947 = vld [vmem:[%s513 + $0x810] sm:$0xff]
              %948 = vst [vmem:[%s514 + $0x6c0] sm:$0xff] %v947
              %v949 = vld [vmem:[%s513 + $0x818] sm:$0xff]
              %950 = vst [vmem:[%s514 + $0x6c8] sm:$0xff] %v949
              %v951 = vld [vmem:[%s513 + $0x820] sm:$0xff]
              %952 = vst [vmem:[%s514 + $0x6d0] sm:$0xff] %v951
              %v953 = vld [vmem:[%s513 + $0x828] sm:$0xff]
              %954 = vst [vmem:[%s514 + $0x6d8] sm:$0xff] %v953
              %v955 = vld [vmem:[%s513 + $0x830] sm:$0xff]
              %956 = vst [vmem:[%s514 + $0x6e0] sm:$0xff] %v955
              %v957 = vld [vmem:[%s513 + $0x838] sm:$0xff]
              %958 = vst [vmem:[%s514 + $0x6e8] sm:$0xff] %v957
              %v959 = vld [vmem:[%s513 + $0x840] sm:$0xff]
              %960 = vst [vmem:[%s514 + $0x6f0] sm:$0xff] %v959
              %v961 = vld [vmem:[%s513 + $0x848] sm:$0xff]
              %962 = vst [vmem:[%s514 + $0x6f8] sm:$0xff] %v961
              %v963 = vld [vmem:[%s513 + $0x850] sm:$0xff]
              %964 = vst [vmem:[%s514 + $0x700] sm:$0xff] %v963
              %v965 = vld [vmem:[%s513 + $0x858] sm:$0xff]
              %966 = vst [vmem:[%s514 + $0x708] sm:$0xff] %v965
              %v967 = vld [vmem:[%s513 + $0x860] sm:$0xff]
              %968 = vst [vmem:[%s514 + $0x710] sm:$0xff] %v967
              %v969 = vld [vmem:[%s513 + $0x868] sm:$0xff]
              %970 = vst [vmem:[%s514 + $0x718] sm:$0xff] %v969
              %v971 = vld [vmem:[%s513 + $0x870] sm:$0xff]
              %972 = vst [vmem:[%s514 + $0x720] sm:$0xff] %v971
              %v973 = vld [vmem:[%s513 + $0x878] sm:$0xff]
              %974 = vst [vmem:[%s514 + $0x728] sm:$0xff] %v973
              %v975 = vld [vmem:[%s513 + $0x880] sm:$0xff]
              %976 = vst [vmem:[%s514 + $0x730] sm:$0xff] %v975
              %v977 = vld [vmem:[%s513 + $0x888] sm:$0xff]
              %978 = vst [vmem:[%s514 + $0x738] sm:$0xff] %v977
              %v979 = vld [vmem:[%s513 + $0x890] sm:$0xff]
              %980 = vst [vmem:[%s514 + $0x740] sm:$0xff] %v979
              %v981 = vld [vmem:[%s513 + $0x898] sm:$0xff]
              %982 = vst [vmem:[%s514 + $0x748] sm:$0xff] %v981
              %v983 = vld [vmem:[%s513 + $0x8a0] sm:$0xff]
              %984 = vst [vmem:[%s514 + $0x750] sm:$0xff] %v983
              %v985 = vld [vmem:[%s513 + $0x8a8] sm:$0xff]
              %986 = vst [vmem:[%s514 + $0x758] sm:$0xff] %v985
              %v987 = vld [vmem:[%s513 + $0x8b0] sm:$0xff]
              %988 = vst [vmem:[%s514 + $0x760] sm:$0xff] %v987
              %v989 = vld [vmem:[%s513 + $0x8b8] sm:$0xff]
              %990 = vst [vmem:[%s514 + $0x768] sm:$0xff] %v989
              %v991 = vld [vmem:[%s513 + $0x8c0] sm:$0xff]
              %992 = vst [vmem:[%s514 + $0x770] sm:$0xff] %v991
              %v993 = vld [vmem:[%s513 + $0x8c8] sm:$0xff]
              %994 = vst [vmem:[%s514 + $0x778] sm:$0xff] %v993
            $region33: #{tpu_custom_call.1} parent=27 // loop_footer
              %s512 = sadd.s32 1, %s508
            $region34: #{tpu_custom_call.1} parent=27 // loop_footer_branch
              %507 = sbr.rel target = $region30
            $region35: #{tpu_custom_call.1} parent=27 // loop_exit
              _
          $region28: #{tpu_custom_call.1} parent=12 // pred_fallthru
            _
          // Predicated region
          $region36: #{tpu_custom_call.1} parent=12 // pred_check
            _
          $region37: #{tpu_custom_call.1} parent=12 // pred_check_branch
            %996 = sbr.rel target = $region39
          $region38: #{tpu_custom_call.1} parent=12 // pred_region
            _
          $region39: #{tpu_custom_call.1} parent=12 // pred_fallthru
            _
        $region13: #{tpu_custom_call.1} parent=8 // pred_fallthru
          _
        // Predicated region
        $region14: #{tpu_custom_call.1} parent=8 // pred_check
          _
        $region15: #{tpu_custom_call.1} parent=8 // pred_check_branch
          %14 = sbr.rel target = $region17
        $region16: #{tpu_custom_call.1} parent=8 // pred_region
          %s16 = ssub.s32 256, 1
          loop: start=0, step=1, limit=1
          $region18: #{tpu_custom_call.1} parent=16 // loop_pre_header
            _
          $region19: #{tpu_custom_call.1} parent=16 // loop_header
            %s18 = sphi 0, %s22
            %p19 = scmp.ge.s32.totalorder %s18, 1
            %s23 = sphi %s0, %s0
            %s24 = sphi [#allocation4], [#allocation4]
          $region20: #{tpu_custom_call.1} parent=16 // loop_header_branch
            %21 = sbr.rel (%p19) target = $region24
          $region21: #{tpu_custom_call.1} parent=16 // loop_body
            %v25 = vld [vmem:[%s23] sm:%s16]
            %26 = vst [vmem:[%s24] sm:%s16] %v25
            %v27 = vld [vmem:[%s23 + $0x8] sm:%s16]
            %28 = vst [vmem:[%s24 + $0x8] sm:%s16] %v27
            %v29 = vld [vmem:[%s23 + $0x10] sm:%s16]
            %30 = vst [vmem:[%s24 + $0x10] sm:%s16] %v29
            %v31 = vld [vmem:[%s23 + $0x18] sm:%s16]
            %32 = vst [vmem:[%s24 + $0x18] sm:%s16] %v31
            %v33 = vld [vmem:[%s23 + $0x20] sm:%s16]
            %34 = vst [vmem:[%s24 + $0x20] sm:%s16] %v33
            %v35 = vld [vmem:[%s23 + $0x28] sm:%s16]
            %36 = vst [vmem:[%s24 + $0x28] sm:%s16] %v35
            %v37 = vld [vmem:[%s23 + $0x30] sm:%s16]
            %38 = vst [vmem:[%s24 + $0x30] sm:%s16] %v37
            %v39 = vld [vmem:[%s23 + $0x38] sm:%s16]
            %40 = vst [vmem:[%s24 + $0x38] sm:%s16] %v39
            %v41 = vld [vmem:[%s23 + $0x40] sm:%s16]
            %42 = vst [vmem:[%s24 + $0x40] sm:%s16] %v41
            %v43 = vld [vmem:[%s23 + $0x48] sm:%s16]
            %44 = vst [vmem:[%s24 + $0x48] sm:%s16] %v43
            %v45 = vld [vmem:[%s23 + $0x50] sm:%s16]
            %46 = vst [vmem:[%s24 + $0x50] sm:%s16] %v45
            %v47 = vld [vmem:[%s23 + $0x58] sm:%s16]
            %48 = vst [vmem:[%s24 + $0x58] sm:%s16] %v47
            %v49 = vld [vmem:[%s23 + $0x60] sm:%s16]
            %50 = vst [vmem:[%s24 + $0x60] sm:%s16] %v49
            %v51 = vld [vmem:[%s23 + $0x68] sm:%s16]
            %52 = vst [vmem:[%s24 + $0x68] sm:%s16] %v51
            %v53 = vld [vmem:[%s23 + $0x70] sm:%s16]
            %54 = vst [vmem:[%s24 + $0x70] sm:%s16] %v53
            %v55 = vld [vmem:[%s23 + $0x78] sm:%s16]
            %56 = vst [vmem:[%s24 + $0x78] sm:%s16] %v55
            %v57 = vld [vmem:[%s23 + $0x80] sm:%s16]
            %58 = vst [vmem:[%s24 + $0x80] sm:%s16] %v57
            %v59 = vld [vmem:[%s23 + $0x88] sm:%s16]
            %60 = vst [vmem:[%s24 + $0x88] sm:%s16] %v59
            %v61 = vld [vmem:[%s23 + $0x90] sm:%s16]
            %62 = vst [vmem:[%s24 + $0x90] sm:%s16] %v61
            %v63 = vld [vmem:[%s23 + $0x98] sm:%s16]
            %64 = vst [vmem:[%s24 + $0x98] sm:%s16] %v63
            %v65 = vld [vmem:[%s23 + $0xa0] sm:%s16]
            %66 = vst [vmem:[%s24 + $0xa0] sm:%s16] %v65
            %v67 = vld [vmem:[%s23 + $0xa8] sm:%s16]
            %68 = vst [vmem:[%s24 + $0xa8] sm:%s16] %v67
            %v69 = vld [vmem:[%s23 + $0xb0] sm:%s16]
            %70 = vst [vmem:[%s24 + $0xb0] sm:%s16] %v69
            %v71 = vld [vmem:[%s23 + $0xb8] sm:%s16]
            %72 = vst [vmem:[%s24 + $0xb8] sm:%s16] %v71
            %v73 = vld [vmem:[%s23 + $0xc0] sm:%s16]
            %74 = vst [vmem:[%s24 + $0xc0] sm:%s16] %v73
            %v75 = vld [vmem:[%s23 + $0xc8] sm:%s16]
            %76 = vst [vmem:[%s24 + $0xc8] sm:%s16] %v75
            %v77 = vld [vmem:[%s23 + $0xd0] sm:%s16]
            %78 = vst [vmem:[%s24 + $0xd0] sm:%s16] %v77
            %v79 = vld [vmem:[%s23 + $0xd8] sm:%s16]
            %80 = vst [vmem:[%s24 + $0xd8] sm:%s16] %v79
            %v81 = vld [vmem:[%s23 + $0xe0] sm:%s16]
            %82 = vst [vmem:[%s24 + $0xe0] sm:%s16] %v81
            %v83 = vld [vmem:[%s23 + $0xe8] sm:%s16]
            %84 = vst [vmem:[%s24 + $0xe8] sm:%s16] %v83
            %v85 = vld [vmem:[%s23 + $0x120] sm:%s16]
            %86 = vst [vmem:[%s24 + $0xf0] sm:%s16] %v85
            %v87 = vld [vmem:[%s23 + $0x128] sm:%s16]
            %88 = vst [vmem:[%s24 + $0xf8] sm:%s16] %v87
            %v89 = vld [vmem:[%s23 + $0x130] sm:%s16]
            %90 = vst [vmem:[%s24 + $0x100] sm:%s16] %v89
            %v91 = vld [vmem:[%s23 + $0x138] sm:%s16]
            %92 = vst [vmem:[%s24 + $0x108] sm:%s16] %v91
            %v93 = vld [vmem:[%s23 + $0x140] sm:%s16]
            %94 = vst [vmem:[%s24 + $0x110] sm:%s16] %v93
            %v95 = vld [vmem:[%s23 + $0x148] sm:%s16]
            %96 = vst [vmem:[%s24 + $0x118] sm:%s16] %v95
            %v97 = vld [vmem:[%s23 + $0x150] sm:%s16]
            %98 = vst [vmem:[%s24 + $0x120] sm:%s16] %v97
            %v99 = vld [vmem:[%s23 + $0x158] sm:%s16]
            %100 = vst [vmem:[%s24 + $0x128] sm:%s16] %v99
            %v101 = vld [vmem:[%s23 + $0x160] sm:%s16]
            %102 = vst [vmem:[%s24 + $0x130] sm:%s16] %v101
            %v103 = vld [vmem:[%s23 + $0x168] sm:%s16]
            %104 = vst [vmem:[%s24 + $0x138] sm:%s16] %v103
            %v105 = vld [vmem:[%s23 + $0x170] sm:%s16]
            %106 = vst [vmem:[%s24 + $0x140] sm:%s16] %v105
            %v107 = vld [vmem:[%s23 + $0x178] sm:%s16]
            %108 = vst [vmem:[%s24 + $0x148] sm:%s16] %v107
            %v109 = vld [vmem:[%s23 + $0x180] sm:%s16]
            %110 = vst [vmem:[%s24 + $0x150] sm:%s16] %v109
            %v111 = vld [vmem:[%s23 + $0x188] sm:%s16]
            %112 = vst [vmem:[%s24 + $0x158] sm:%s16] %v111
            %v113 = vld [vmem:[%s23 + $0x190] sm:%s16]
            %114 = vst [vmem:[%s24 + $0x160] sm:%s16] %v113
            %v115 = vld [vmem:[%s23 + $0x198] sm:%s16]
            %116 = vst [vmem:[%s24 + $0x168] sm:%s16] %v115
            %v117 = vld [vmem:[%s23 + $0x1a0] sm:%s16]
            %118 = vst [vmem:[%s24 + $0x170] sm:%s16] %v117
            %v119 = vld [vmem:[%s23 + $0x1a8] sm:%s16]
            %120 = vst [vmem:[%s24 + $0x178] sm:%s16] %v119
            %v121 = vld [vmem:[%s23 + $0x1b0] sm:%s16]
            %122 = vst [vmem:[%s24 + $0x180] sm:%s16] %v121
            %v123 = vld [vmem:[%s23 + $0x1b8] sm:%s16]
            %124 = vst [vmem:[%s24 + $0x188] sm:%s16] %v123
            %v125 = vld [vmem:[%s23 + $0x1c0] sm:%s16]
            %126 = vst [vmem:[%s24 + $0x190] sm:%s16] %v125
            %v127 = vld [vmem:[%s23 + $0x1c8] sm:%s16]
            %128 = vst [vmem:[%s24 + $0x198] sm:%s16] %v127
            %v129 = vld [vmem:[%s23 + $0x1d0] sm:%s16]
            %130 = vst [vmem:[%s24 + $0x1a0] sm:%s16] %v129
            %v131 = vld [vmem:[%s23 + $0x1d8] sm:%s16]
            %132 = vst [vmem:[%s24 + $0x1a8] sm:%s16] %v131
            %v133 = vld [vmem:[%s23 + $0x1e0] sm:%s16]
            %134 = vst [vmem:[%s24 + $0x1b0] sm:%s16] %v133
            %v135 = vld [vmem:[%s23 + $0x1e8] sm:%s16]
            %136 = vst [vmem:[%s24 + $0x1b8] sm:%s16] %v135
            %v137 = vld [vmem:[%s23 + $0x1f0] sm:%s16]
            %138 = vst [vmem:[%s24 + $0x1c0] sm:%s16] %v137
            %v139 = vld [vmem:[%s23 + $0x1f8] sm:%s16]
            %140 = vst [vmem:[%s24 + $0x1c8] sm:%s16] %v139
            %v141 = vld [vmem:[%s23 + $0x200] sm:%s16]
            %142 = vst [vmem:[%s24 + $0x1d0] sm:%s16] %v141
            %v143 = vld [vmem:[%s23 + $0x208] sm:%s16]
            %144 = vst [vmem:[%s24 + $0x1d8] sm:%s16] %v143
            %v145 = vld [vmem:[%s23 + $0x240] sm:%s16]
            %146 = vst [vmem:[%s24 + $0x1e0] sm:%s16] %v145
            %v147 = vld [vmem:[%s23 + $0x248] sm:%s16]
            %148 = vst [vmem:[%s24 + $0x1e8] sm:%s16] %v147
            %v149 = vld [vmem:[%s23 + $0x250] sm:%s16]
            %150 = vst [vmem:[%s24 + $0x1f0] sm:%s16] %v149
            %v151 = vld [vmem:[%s23 + $0x258] sm:%s16]
            %152 = vst [vmem:[%s24 + $0x1f8] sm:%s16] %v151
            %v153 = vld [vmem:[%s23 + $0x260] sm:%s16]
            %154 = vst [vmem:[%s24 + $0x200] sm:%s16] %v153
            %v155 = vld [vmem:[%s23 + $0x268] sm:%s16]
            %156 = vst [vmem:[%s24 + $0x208] sm:%s16] %v155
            %v157 = vld [vmem:[%s23 + $0x270] sm:%s16]
            %158 = vst [vmem:[%s24 + $0x210] sm:%s16] %v157
            %v159 = vld [vmem:[%s23 + $0x278] sm:%s16]
            %160 = vst [vmem:[%s24 + $0x218] sm:%s16] %v159
            %v161 = vld [vmem:[%s23 + $0x280] sm:%s16]
            %162 = vst [vmem:[%s24 + $0x220] sm:%s16] %v161
            %v163 = vld [vmem:[%s23 + $0x288] sm:%s16]
            %164 = vst [vmem:[%s24 + $0x228] sm:%s16] %v163
            %v165 = vld [vmem:[%s23 + $0x290] sm:%s16]
            %166 = vst [vmem:[%s24 + $0x230] sm:%s16] %v165
            %v167 = vld [vmem:[%s23 + $0x298] sm:%s16]
            %168 = vst [vmem:[%s24 + $0x238] sm:%s16] %v167
            %v169 = vld [vmem:[%s23 + $0x2a0] sm:%s16]
            %170 = vst [vmem:[%s24 + $0x240] sm:%s16] %v169
            %v171 = vld [vmem:[%s23 + $0x2a8] sm:%s16]
            %172 = vst [vmem:[%s24 + $0x248] sm:%s16] %v171
            %v173 = vld [vmem:[%s23 + $0x2b0] sm:%s16]
            %174 = vst [vmem:[%s24 + $0x250] sm:%s16] %v173
            %v175 = vld [vmem:[%s23 + $0x2b8] sm:%s16]
            %176 = vst [vmem:[%s24 + $0x258] sm:%s16] %v175
            %v177 = vld [vmem:[%s23 + $0x2c0] sm:%s16]
            %178 = vst [vmem:[%s24 + $0x260] sm:%s16] %v177
            %v179 = vld [vmem:[%s23 + $0x2c8] sm:%s16]
            %180 = vst [vmem:[%s24 + $0x268] sm:%s16] %v179
            %v181 = vld [vmem:[%s23 + $0x2d0] sm:%s16]
            %182 = vst [vmem:[%s24 + $0x270] sm:%s16] %v181
            %v183 = vld [vmem:[%s23 + $0x2d8] sm:%s16]
            %184 = vst [vmem:[%s24 + $0x278] sm:%s16] %v183
            %v185 = vld [vmem:[%s23 + $0x2e0] sm:%s16]
            %186 = vst [vmem:[%s24 + $0x280] sm:%s16] %v185
            %v187 = vld [vmem:[%s23 + $0x2e8] sm:%s16]
            %188 = vst [vmem:[%s24 + $0x288] sm:%s16] %v187
            %v189 = vld [vmem:[%s23 + $0x2f0] sm:%s16]
            %190 = vst [vmem:[%s24 + $0x290] sm:%s16] %v189
            %v191 = vld [vmem:[%s23 + $0x2f8] sm:%s16]
            %192 = vst [vmem:[%s24 + $0x298] sm:%s16] %v191
            %v193 = vld [vmem:[%s23 + $0x300] sm:%s16]
            %194 = vst [vmem:[%s24 + $0x2a0] sm:%s16] %v193
            %v195 = vld [vmem:[%s23 + $0x308] sm:%s16]
            %196 = vst [vmem:[%s24 + $0x2a8] sm:%s16] %v195
            %v197 = vld [vmem:[%s23 + $0x310] sm:%s16]
            %198 = vst [vmem:[%s24 + $0x2b0] sm:%s16] %v197
            %v199 = vld [vmem:[%s23 + $0x318] sm:%s16]
            %200 = vst [vmem:[%s24 + $0x2b8] sm:%s16] %v199
            %v201 = vld [vmem:[%s23 + $0x320] sm:%s16]
            %202 = vst [vmem:[%s24 + $0x2c0] sm:%s16] %v201
            %v203 = vld [vmem:[%s23 + $0x328] sm:%s16]
            %204 = vst [vmem:[%s24 + $0x2c8] sm:%s16] %v203
            %v205 = vld [vmem:[%s23 + $0x360] sm:%s16]
            %206 = vst [vmem:[%s24 + $0x2d0] sm:%s16] %v205
            %v207 = vld [vmem:[%s23 + $0x368] sm:%s16]
            %208 = vst [vmem:[%s24 + $0x2d8] sm:%s16] %v207
            %v209 = vld [vmem:[%s23 + $0x370] sm:%s16]
            %210 = vst [vmem:[%s24 + $0x2e0] sm:%s16] %v209
            %v211 = vld [vmem:[%s23 + $0x378] sm:%s16]
            %212 = vst [vmem:[%s24 + $0x2e8] sm:%s16] %v211
            %v213 = vld [vmem:[%s23 + $0x380] sm:%s16]
            %214 = vst [vmem:[%s24 + $0x2f0] sm:%s16] %v213
            %v215 = vld [vmem:[%s23 + $0x388] sm:%s16]
            %216 = vst [vmem:[%s24 + $0x2f8] sm:%s16] %v215
            %v217 = vld [vmem:[%s23 + $0x390] sm:%s16]
            %218 = vst [vmem:[%s24 + $0x300] sm:%s16] %v217
            %v219 = vld [vmem:[%s23 + $0x398] sm:%s16]
            %220 = vst [vmem:[%s24 + $0x308] sm:%s16] %v219
            %v221 = vld [vmem:[%s23 + $0x3a0] sm:%s16]
            %222 = vst [vmem:[%s24 + $0x310] sm:%s16] %v221
            %v223 = vld [vmem:[%s23 + $0x3a8] sm:%s16]
            %224 = vst [vmem:[%s24 + $0x318] sm:%s16] %v223
            %v225 = vld [vmem:[%s23 + $0x3b0] sm:%s16]
            %226 = vst [vmem:[%s24 + $0x320] sm:%s16] %v225
            %v227 = vld [vmem:[%s23 + $0x3b8] sm:%s16]
            %228 = vst [vmem:[%s24 + $0x328] sm:%s16] %v227
            %v229 = vld [vmem:[%s23 + $0x3c0] sm:%s16]
            %230 = vst [vmem:[%s24 + $0x330] sm:%s16] %v229
            %v231 = vld [vmem:[%s23 + $0x3c8] sm:%s16]
            %232 = vst [vmem:[%s24 + $0x338] sm:%s16] %v231
            %v233 = vld [vmem:[%s23 + $0x3d0] sm:%s16]
            %234 = vst [vmem:[%s24 + $0x340] sm:%s16] %v233
            %v235 = vld [vmem:[%s23 + $0x3d8] sm:%s16]
            %236 = vst [vmem:[%s24 + $0x348] sm:%s16] %v235
            %v237 = vld [vmem:[%s23 + $0x3e0] sm:%s16]
            %238 = vst [vmem:[%s24 + $0x350] sm:%s16] %v237
            %v239 = vld [vmem:[%s23 + $0x3e8] sm:%s16]
            %240 = vst [vmem:[%s24 + $0x358] sm:%s16] %v239
            %v241 = vld [vmem:[%s23 + $0x3f0] sm:%s16]
            %242 = vst [vmem:[%s24 + $0x360] sm:%s16] %v241
            %v243 = vld [vmem:[%s23 + $0x3f8] sm:%s16]
            %244 = vst [vmem:[%s24 + $0x368] sm:%s16] %v243
            %v245 = vld [vmem:[%s23 + $0x400] sm:%s16]
            %246 = vst [vmem:[%s24 + $0x370] sm:%s16] %v245
            %v247 = vld [vmem:[%s23 + $0x408] sm:%s16]
            %248 = vst [vmem:[%s24 + $0x378] sm:%s16] %v247
            %v249 = vld [vmem:[%s23 + $0x410] sm:%s16]
            %250 = vst [vmem:[%s24 + $0x380] sm:%s16] %v249
            %v251 = vld [vmem:[%s23 + $0x418] sm:%s16]
            %252 = vst [vmem:[%s24 + $0x388] sm:%s16] %v251
            %v253 = vld [vmem:[%s23 + $0x420] sm:%s16]
            %254 = vst [vmem:[%s24 + $0x390] sm:%s16] %v253
            %v255 = vld [vmem:[%s23 + $0x428] sm:%s16]
            %256 = vst [vmem:[%s24 + $0x398] sm:%s16] %v255
            %v257 = vld [vmem:[%s23 + $0x430] sm:%s16]
            %258 = vst [vmem:[%s24 + $0x3a0] sm:%s16] %v257
            %v259 = vld [vmem:[%s23 + $0x438] sm:%s16]
            %260 = vst [vmem:[%s24 + $0x3a8] sm:%s16] %v259
            %v261 = vld [vmem:[%s23 + $0x440] sm:%s16]
            %262 = vst [vmem:[%s24 + $0x3b0] sm:%s16] %v261
            %v263 = vld [vmem:[%s23 + $0x448] sm:%s16]
            %264 = vst [vmem:[%s24 + $0x3b8] sm:%s16] %v263
            %v265 = vld [vmem:[%s23 + $0x480] sm:%s16]
            %266 = vst [vmem:[%s24 + $0x3c0] sm:%s16] %v265
            %v267 = vld [vmem:[%s23 + $0x488] sm:%s16]
            %268 = vst [vmem:[%s24 + $0x3c8] sm:%s16] %v267
            %v269 = vld [vmem:[%s23 + $0x490] sm:%s16]
            %270 = vst [vmem:[%s24 + $0x3d0] sm:%s16] %v269
            %v271 = vld [vmem:[%s23 + $0x498] sm:%s16]
            %272 = vst [vmem:[%s24 + $0x3d8] sm:%s16] %v271
            %v273 = vld [vmem:[%s23 + $0x4a0] sm:%s16]
            %274 = vst [vmem:[%s24 + $0x3e0] sm:%s16] %v273
            %v275 = vld [vmem:[%s23 + $0x4a8] sm:%s16]
            %276 = vst [vmem:[%s24 + $0x3e8] sm:%s16] %v275
            %v277 = vld [vmem:[%s23 + $0x4b0] sm:%s16]
            %278 = vst [vmem:[%s24 + $0x3f0] sm:%s16] %v277
            %v279 = vld [vmem:[%s23 + $0x4b8] sm:%s16]
            %280 = vst [vmem:[%s24 + $0x3f8] sm:%s16] %v279
            %v281 = vld [vmem:[%s23 + $0x4c0] sm:%s16]
            %282 = vst [vmem:[%s24 + $0x400] sm:%s16] %v281
            %v283 = vld [vmem:[%s23 + $0x4c8] sm:%s16]
            %284 = vst [vmem:[%s24 + $0x408] sm:%s16] %v283
            %v285 = vld [vmem:[%s23 + $0x4d0] sm:%s16]
            %286 = vst [vmem:[%s24 + $0x410] sm:%s16] %v285
            %v287 = vld [vmem:[%s23 + $0x4d8] sm:%s16]
            %288 = vst [vmem:[%s24 + $0x418] sm:%s16] %v287
            %v289 = vld [vmem:[%s23 + $0x4e0] sm:%s16]
            %290 = vst [vmem:[%s24 + $0x420] sm:%s16] %v289
            %v291 = vld [vmem:[%s23 + $0x4e8] sm:%s16]
            %292 = vst [vmem:[%s24 + $0x428] sm:%s16] %v291
            %v293 = vld [vmem:[%s23 + $0x4f0] sm:%s16]
            %294 = vst [vmem:[%s24 + $0x430] sm:%s16] %v293
            %v295 = vld [vmem:[%s23 + $0x4f8] sm:%s16]
            %296 = vst [vmem:[%s24 + $0x438] sm:%s16] %v295
            %v297 = vld [vmem:[%s23 + $0x500] sm:%s16]
            %298 = vst [vmem:[%s24 + $0x440] sm:%s16] %v297
            %v299 = vld [vmem:[%s23 + $0x508] sm:%s16]
            %300 = vst [vmem:[%s24 + $0x448] sm:%s16] %v299
            %v301 = vld [vmem:[%s23 + $0x510] sm:%s16]
            %302 = vst [vmem:[%s24 + $0x450] sm:%s16] %v301
            %v303 = vld [vmem:[%s23 + $0x518] sm:%s16]
            %304 = vst [vmem:[%s24 + $0x458] sm:%s16] %v303
            %v305 = vld [vmem:[%s23 + $0x520] sm:%s16]
            %306 = vst [vmem:[%s24 + $0x460] sm:%s16] %v305
            %v307 = vld [vmem:[%s23 + $0x528] sm:%s16]
            %308 = vst [vmem:[%s24 + $0x468] sm:%s16] %v307
            %v309 = vld [vmem:[%s23 + $0x530] sm:%s16]
            %310 = vst [vmem:[%s24 + $0x470] sm:%s16] %v309
            %v311 = vld [vmem:[%s23 + $0x538] sm:%s16]
            %312 = vst [vmem:[%s24 + $0x478] sm:%s16] %v311
            %v313 = vld [vmem:[%s23 + $0x540] sm:%s16]
            %314 = vst [vmem:[%s24 + $0x480] sm:%s16] %v313
            %v315 = vld [vmem:[%s23 + $0x548] sm:%s16]
            %316 = vst [vmem:[%s24 + $0x488] sm:%s16] %v315
            %v317 = vld [vmem:[%s23 + $0x550] sm:%s16]
            %318 = vst [vmem:[%s24 + $0x490] sm:%s16] %v317
            %v319 = vld [vmem:[%s23 + $0x558] sm:%s16]
            %320 = vst [vmem:[%s24 + $0x498] sm:%s16] %v319
            %v321 = vld [vmem:[%s23 + $0x560] sm:%s16]
            %322 = vst [vmem:[%s24 + $0x4a0] sm:%s16] %v321
            %v323 = vld [vmem:[%s23 + $0x568] sm:%s16]
            %324 = vst [vmem:[%s24 + $0x4a8] sm:%s16] %v323
            %v325 = vld [vmem:[%s23 + $0x5a0] sm:%s16]
            %326 = vst [vmem:[%s24 + $0x4b0] sm:%s16] %v325
            %v327 = vld [vmem:[%s23 + $0x5a8] sm:%s16]
            %328 = vst [vmem:[%s24 + $0x4b8] sm:%s16] %v327
            %v329 = vld [vmem:[%s23 + $0x5b0] sm:%s16]
            %330 = vst [vmem:[%s24 + $0x4c0] sm:%s16] %v329
            %v331 = vld [vmem:[%s23 + $0x5b8] sm:%s16]
            %332 = vst [vmem:[%s24 + $0x4c8] sm:%s16] %v331
            %v333 = vld [vmem:[%s23 + $0x5c0] sm:%s16]
            %334 = vst [vmem:[%s24 + $0x4d0] sm:%s16] %v333
            %v335 = vld [vmem:[%s23 + $0x5c8] sm:%s16]
            %336 = vst [vmem:[%s24 + $0x4d8] sm:%s16] %v335
            %v337 = vld [vmem:[%s23 + $0x5d0] sm:%s16]
            %338 = vst [vmem:[%s24 + $0x4e0] sm:%s16] %v337
            %v339 = vld [vmem:[%s23 + $0x5d8] sm:%s16]
            %340 = vst [vmem:[%s24 + $0x4e8] sm:%s16] %v339
            %v341 = vld [vmem:[%s23 + $0x5e0] sm:%s16]
            %342 = vst [vmem:[%s24 + $0x4f0] sm:%s16] %v341
            %v343 = vld [vmem:[%s23 + $0x5e8] sm:%s16]
            %344 = vst [vmem:[%s24 + $0x4f8] sm:%s16] %v343
            %v345 = vld [vmem:[%s23 + $0x5f0] sm:%s16]
            %346 = vst [vmem:[%s24 + $0x500] sm:%s16] %v345
            %v347 = vld [vmem:[%s23 + $0x5f8] sm:%s16]
            %348 = vst [vmem:[%s24 + $0x508] sm:%s16] %v347
            %v349 = vld [vmem:[%s23 + $0x600] sm:%s16]
            %350 = vst [vmem:[%s24 + $0x510] sm:%s16] %v349
            %v351 = vld [vmem:[%s23 + $0x608] sm:%s16]
            %352 = vst [vmem:[%s24 + $0x518] sm:%s16] %v351
            %v353 = vld [vmem:[%s23 + $0x610] sm:%s16]
            %354 = vst [vmem:[%s24 + $0x520] sm:%s16] %v353
            %v355 = vld [vmem:[%s23 + $0x618] sm:%s16]
            %356 = vst [vmem:[%s24 + $0x528] sm:%s16] %v355
            %v357 = vld [vmem:[%s23 + $0x620] sm:%s16]
            %358 = vst [vmem:[%s24 + $0x530] sm:%s16] %v357
            %v359 = vld [vmem:[%s23 + $0x628] sm:%s16]
            %360 = vst [vmem:[%s24 + $0x538] sm:%s16] %v359
            %v361 = vld [vmem:[%s23 + $0x630] sm:%s16]
            %362 = vst [vmem:[%s24 + $0x540] sm:%s16] %v361
            %v363 = vld [vmem:[%s23 + $0x638] sm:%s16]
            %364 = vst [vmem:[%s24 + $0x548] sm:%s16] %v363
            %v365 = vld [vmem:[%s23 + $0x640] sm:%s16]
            %366 = vst [vmem:[%s24 + $0x550] sm:%s16] %v365
            %v367 = vld [vmem:[%s23 + $0x648] sm:%s16]
            %368 = vst [vmem:[%s24 + $0x558] sm:%s16] %v367
            %v369 = vld [vmem:[%s23 + $0x650] sm:%s16]
            %370 = vst [vmem:[%s24 + $0x560] sm:%s16] %v369
            %v371 = vld [vmem:[%s23 + $0x658] sm:%s16]
            %372 = vst [vmem:[%s24 + $0x568] sm:%s16] %v371
            %v373 = vld [vmem:[%s23 + $0x660] sm:%s16]
            %374 = vst [vmem:[%s24 + $0x570] sm:%s16] %v373
            %v375 = vld [vmem:[%s23 + $0x668] sm:%s16]
            %376 = vst [vmem:[%s24 + $0x578] sm:%s16] %v375
            %v377 = vld [vmem:[%s23 + $0x670] sm:%s16]
            %378 = vst [vmem:[%s24 + $0x580] sm:%s16] %v377
            %v379 = vld [vmem:[%s23 + $0x678] sm:%s16]
            %380 = vst [vmem:[%s24 + $0x588] sm:%s16] %v379
            %v381 = vld [vmem:[%s23 + $0x680] sm:%s16]
            %382 = vst [vmem:[%s24 + $0x590] sm:%s16] %v381
            %v383 = vld [vmem:[%s23 + $0x688] sm:%s16]
            %384 = vst [vmem:[%s24 + $0x598] sm:%s16] %v383
            %v385 = vld [vmem:[%s23 + $0x6c0] sm:%s16]
            %386 = vst [vmem:[%s24 + $0x5a0] sm:%s16] %v385
            %v387 = vld [vmem:[%s23 + $0x6c8] sm:%s16]
            %388 = vst [vmem:[%s24 + $0x5a8] sm:%s16] %v387
            %v389 = vld [vmem:[%s23 + $0x6d0] sm:%s16]
            %390 = vst [vmem:[%s24 + $0x5b0] sm:%s16] %v389
            %v391 = vld [vmem:[%s23 + $0x6d8] sm:%s16]
            %392 = vst [vmem:[%s24 + $0x5b8] sm:%s16] %v391
            %v393 = vld [vmem:[%s23 + $0x6e0] sm:%s16]
            %394 = vst [vmem:[%s24 + $0x5c0] sm:%s16] %v393
            %v395 = vld [vmem:[%s23 + $0x6e8] sm:%s16]
            %396 = vst [vmem:[%s24 + $0x5c8] sm:%s16] %v395
            %v397 = vld [vmem:[%s23 + $0x6f0] sm:%s16]
            %398 = vst [vmem:[%s24 + $0x5d0] sm:%s16] %v397
            %v399 = vld [vmem:[%s23 + $0x6f8] sm:%s16]
            %400 = vst [vmem:[%s24 + $0x5d8] sm:%s16] %v399
            %v401 = vld [vmem:[%s23 + $0x700] sm:%s16]
            %402 = vst [vmem:[%s24 + $0x5e0] sm:%s16] %v401
            %v403 = vld [vmem:[%s23 + $0x708] sm:%s16]
            %404 = vst [vmem:[%s24 + $0x5e8] sm:%s16] %v403
            %v405 = vld [vmem:[%s23 + $0x710] sm:%s16]
            %406 = vst [vmem:[%s24 + $0x5f0] sm:%s16] %v405
            %v407 = vld [vmem:[%s23 + $0x718] sm:%s16]
            %408 = vst [vmem:[%s24 + $0x5f8] sm:%s16] %v407
            %v409 = vld [vmem:[%s23 + $0x720] sm:%s16]
            %410 = vst [vmem:[%s24 + $0x600] sm:%s16] %v409
            %v411 = vld [vmem:[%s23 + $0x728] sm:%s16]
            %412 = vst [vmem:[%s24 + $0x608] sm:%s16] %v411
            %v413 = vld [vmem:[%s23 + $0x730] sm:%s16]
            %414 = vst [vmem:[%s24 + $0x610] sm:%s16] %v413
            %v415 = vld [vmem:[%s23 + $0x738] sm:%s16]
            %416 = vst [vmem:[%s24 + $0x618] sm:%s16] %v415
            %v417 = vld [vmem:[%s23 + $0x740] sm:%s16]
            %418 = vst [vmem:[%s24 + $0x620] sm:%s16] %v417
            %v419 = vld [vmem:[%s23 + $0x748] sm:%s16]
            %420 = vst [vmem:[%s24 + $0x628] sm:%s16] %v419
            %v421 = vld [vmem:[%s23 + $0x750] sm:%s16]
            %422 = vst [vmem:[%s24 + $0x630] sm:%s16] %v421
            %v423 = vld [vmem:[%s23 + $0x758] sm:%s16]
            %424 = vst [vmem:[%s24 + $0x638] sm:%s16] %v423
            %v425 = vld [vmem:[%s23 + $0x760] sm:%s16]
            %426 = vst [vmem:[%s24 + $0x640] sm:%s16] %v425
            %v427 = vld [vmem:[%s23 + $0x768] sm:%s16]
            %428 = vst [vmem:[%s24 + $0x648] sm:%s16] %v427
            %v429 = vld [vmem:[%s23 + $0x770] sm:%s16]
            %430 = vst [vmem:[%s24 + $0x650] sm:%s16] %v429
            %v431 = vld [vmem:[%s23 + $0x778] sm:%s16]
            %432 = vst [vmem:[%s24 + $0x658] sm:%s16] %v431
            %v433 = vld [vmem:[%s23 + $0x780] sm:%s16]
            %434 = vst [vmem:[%s24 + $0x660] sm:%s16] %v433
            %v435 = vld [vmem:[%s23 + $0x788] sm:%s16]
            %436 = vst [vmem:[%s24 + $0x668] sm:%s16] %v435
            %v437 = vld [vmem:[%s23 + $0x790] sm:%s16]
            %438 = vst [vmem:[%s24 + $0x670] sm:%s16] %v437
            %v439 = vld [vmem:[%s23 + $0x798] sm:%s16]
            %440 = vst [vmem:[%s24 + $0x678] sm:%s16] %v439
            %v441 = vld [vmem:[%s23 + $0x7a0] sm:%s16]
            %442 = vst [vmem:[%s24 + $0x680] sm:%s16] %v441
            %v443 = vld [vmem:[%s23 + $0x7a8] sm:%s16]
            %444 = vst [vmem:[%s24 + $0x688] sm:%s16] %v443
            %v445 = vld [vmem:[%s23 + $0x7e0] sm:%s16]
            %446 = vst [vmem:[%s24 + $0x690] sm:%s16] %v445
            %v447 = vld [vmem:[%s23 + $0x7e8] sm:%s16]
            %448 = vst [vmem:[%s24 + $0x698] sm:%s16] %v447
            %v449 = vld [vmem:[%s23 + $0x7f0] sm:%s16]
            %450 = vst [vmem:[%s24 + $0x6a0] sm:%s16] %v449
            %v451 = vld [vmem:[%s23 + $0x7f8] sm:%s16]
            %452 = vst [vmem:[%s24 + $0x6a8] sm:%s16] %v451
            %v453 = vld [vmem:[%s23 + $0x800] sm:%s16]
            %454 = vst [vmem:[%s24 + $0x6b0] sm:%s16] %v453
            %v455 = vld [vmem:[%s23 + $0x808] sm:%s16]
            %456 = vst [vmem:[%s24 + $0x6b8] sm:%s16] %v455
            %v457 = vld [vmem:[%s23 + $0x810] sm:%s16]
            %458 = vst [vmem:[%s24 + $0x6c0] sm:%s16] %v457
            %v459 = vld [vmem:[%s23 + $0x818] sm:%s16]
            %460 = vst [vmem:[%s24 + $0x6c8] sm:%s16] %v459
            %v461 = vld [vmem:[%s23 + $0x820] sm:%s16]
            %462 = vst [vmem:[%s24 + $0x6d0] sm:%s16] %v461
            %v463 = vld [vmem:[%s23 + $0x828] sm:%s16]
            %464 = vst [vmem:[%s24 + $0x6d8] sm:%s16] %v463
            %v465 = vld [vmem:[%s23 + $0x830] sm:%s16]
            %466 = vst [vmem:[%s24 + $0x6e0] sm:%s16] %v465
            %v467 = vld [vmem:[%s23 + $0x838] sm:%s16]
            %468 = vst [vmem:[%s24 + $0x6e8] sm:%s16] %v467
            %v469 = vld [vmem:[%s23 + $0x840] sm:%s16]
            %470 = vst [vmem:[%s24 + $0x6f0] sm:%s16] %v469
            %v471 = vld [vmem:[%s23 + $0x848] sm:%s16]
            %472 = vst [vmem:[%s24 + $0x6f8] sm:%s16] %v471
            %v473 = vld [vmem:[%s23 + $0x850] sm:%s16]
            %474 = vst [vmem:[%s24 + $0x700] sm:%s16] %v473
            %v475 = vld [vmem:[%s23 + $0x858] sm:%s16]
            %476 = vst [vmem:[%s24 + $0x708] sm:%s16] %v475
            %v477 = vld [vmem:[%s23 + $0x860] sm:%s16]
            %478 = vst [vmem:[%s24 + $0x710] sm:%s16] %v477
            %v479 = vld [vmem:[%s23 + $0x868] sm:%s16]
            %480 = vst [vmem:[%s24 + $0x718] sm:%s16] %v479
            %v481 = vld [vmem:[%s23 + $0x870] sm:%s16]
            %482 = vst [vmem:[%s24 + $0x720] sm:%s16] %v481
            %v483 = vld [vmem:[%s23 + $0x878] sm:%s16]
            %484 = vst [vmem:[%s24 + $0x728] sm:%s16] %v483
            %v485 = vld [vmem:[%s23 + $0x880] sm:%s16]
            %486 = vst [vmem:[%s24 + $0x730] sm:%s16] %v485
            %v487 = vld [vmem:[%s23 + $0x888] sm:%s16]
            %488 = vst [vmem:[%s24 + $0x738] sm:%s16] %v487
            %v489 = vld [vmem:[%s23 + $0x890] sm:%s16]
            %490 = vst [vmem:[%s24 + $0x740] sm:%s16] %v489
            %v491 = vld [vmem:[%s23 + $0x898] sm:%s16]
            %492 = vst [vmem:[%s24 + $0x748] sm:%s16] %v491
            %v493 = vld [vmem:[%s23 + $0x8a0] sm:%s16]
            %494 = vst [vmem:[%s24 + $0x750] sm:%s16] %v493
            %v495 = vld [vmem:[%s23 + $0x8a8] sm:%s16]
            %496 = vst [vmem:[%s24 + $0x758] sm:%s16] %v495
            %v497 = vld [vmem:[%s23 + $0x8b0] sm:%s16]
            %498 = vst [vmem:[%s24 + $0x760] sm:%s16] %v497
            %v499 = vld [vmem:[%s23 + $0x8b8] sm:%s16]
            %500 = vst [vmem:[%s24 + $0x768] sm:%s16] %v499
            %v501 = vld [vmem:[%s23 + $0x8c0] sm:%s16]
            %502 = vst [vmem:[%s24 + $0x770] sm:%s16] %v501
            %v503 = vld [vmem:[%s23 + $0x8c8] sm:%s16]
            %504 = vst [vmem:[%s24 + $0x778] sm:%s16] %v503
          $region22: #{tpu_custom_call.1} parent=16 // loop_footer
            %s22 = sadd.s32 1, %s18
          $region23: #{tpu_custom_call.1} parent=16 // loop_footer_branch
            %17 = sbr.rel target = $region19
          $region24: #{tpu_custom_call.1} parent=16 // loop_exit
            _
        $region17: #{tpu_custom_call.1} parent=8 // pred_fallthru
          _
      $region9: #{tpu_custom_call.1} parent=4 // pred_fallthru
        _
      %997 = vnop
    $region5: #{tpu_custom_call.1} parent=1 // pred_fallthru
      _
    // Predicated region
    $region40: #{tpu_custom_call.1} parent=1 // pred_check
      _
    $region41: #{tpu_custom_call.1} parent=1 // pred_check_branch
      %999 = sbr.rel (0) target = $region43
    $region42: #{tpu_custom_call.1} parent=1 // pred_region
      %s1000 = sadd.s32 0, 1
      %s1001 = smul.u32 %s1000, 5
      %s1002 = smul.addr %s1001, 6
      %s1003 = smul.addr %s1002, 8
      %s1004 = scalar_lea.vmem %s1, %s1003
      // Predicated region
      $region44: #{tpu_custom_call.1} parent=42 // pred_check
        _
      $region45: #{tpu_custom_call.1} parent=42 // pred_check_branch
        %1006 = sbr.rel (0) target = $region47
      $region46: #{tpu_custom_call.1} parent=42 // pred_region
        // Predicated region
        $region48: #{tpu_custom_call.1} parent=46 // pred_check
          _
        $region49: #{tpu_custom_call.1} parent=46 // pred_check_branch
          %1008 = sbr.rel (0) target = $region51
        $region50: #{tpu_custom_call.1} parent=46 // pred_region
          // Predicated region
          $region63: #{tpu_custom_call.1} parent=50 // pred_check
            _
          $region64: #{tpu_custom_call.1} parent=50 // pred_check_branch
            %1118 = sbr.rel (0) target = $region66
          $region65: #{tpu_custom_call.1} parent=50 // pred_region
            loop: start=0, step=1, limit=1
            $region67: #{tpu_custom_call.1} parent=65 // loop_pre_header
              _
            $region68: #{tpu_custom_call.1} parent=65 // loop_header
              %s1120 = sphi 0, %s1124
              %p1121 = scmp.ge.s32.totalorder %s1120, 1
              %s1125 = sphi %s1004, %s1004
              %s1126 = sphi [#allocation5], [#allocation5]
            $region69: #{tpu_custom_call.1} parent=65 // loop_header_branch
              %1123 = sbr.rel (%p1121) target = $region73
            $region70: #{tpu_custom_call.1} parent=65 // loop_body
              %v1127 = vld [vmem:[%s1125] sm:$0xff]
              %1128 = vst [vmem:[%s1126] sm:$0xff] %v1127
              %v1129 = vld [vmem:[%s1125 + $0x8] sm:$0xff]
              %1130 = vst [vmem:[%s1126 + $0x8] sm:$0xff] %v1129
              %v1131 = vld [vmem:[%s1125 + $0x10] sm:$0xff]
              %1132 = vst [vmem:[%s1126 + $0x10] sm:$0xff] %v1131
              %v1133 = vld [vmem:[%s1125 + $0x18] sm:$0xff]
              %1134 = vst [vmem:[%s1126 + $0x18] sm:$0xff] %v1133
              %v1135 = vld [vmem:[%s1125 + $0x20] sm:$0xff]
              %1136 = vst [vmem:[%s1126 + $0x20] sm:$0xff] %v1135
              %v1137 = vld [vmem:[%s1125 + $0x28] sm:$0xff]
              %1138 = vst [vmem:[%s1126 + $0x28] sm:$0xff] %v1137
              %v1139 = vld [vmem:[%s1125 + $0x120] sm:$0xff]
              %1140 = vst [vmem:[%s1126 + $0x30] sm:$0xff] %v1139
              %v1141 = vld [vmem:[%s1125 + $0x128] sm:$0xff]
              %1142 = vst [vmem:[%s1126 + $0x38] sm:$0xff] %v1141
              %v1143 = vld [vmem:[%s1125 + $0x130] sm:$0xff]
              %1144 = vst [vmem:[%s1126 + $0x40] sm:$0xff] %v1143
              %v1145 = vld [vmem:[%s1125 + $0x138] sm:$0xff]
              %1146 = vst [vmem:[%s1126 + $0x48] sm:$0xff] %v1145
              %v1147 = vld [vmem:[%s1125 + $0x140] sm:$0xff]
              %1148 = vst [vmem:[%s1126 + $0x50] sm:$0xff] %v1147
              %v1149 = vld [vmem:[%s1125 + $0x148] sm:$0xff]
              %1150 = vst [vmem:[%s1126 + $0x58] sm:$0xff] %v1149
              %v1151 = vld [vmem:[%s1125 + $0x240] sm:$0xff]
              %1152 = vst [vmem:[%s1126 + $0x60] sm:$0xff] %v1151
              %v1153 = vld [vmem:[%s1125 + $0x248] sm:$0xff]
              %1154 = vst [vmem:[%s1126 + $0x68] sm:$0xff] %v1153
              %v1155 = vld [vmem:[%s1125 + $0x250] sm:$0xff]
              %1156 = vst [vmem:[%s1126 + $0x70] sm:$0xff] %v1155
              %v1157 = vld [vmem:[%s1125 + $0x258] sm:$0xff]
              %1158 = vst [vmem:[%s1126 + $0x78] sm:$0xff] %v1157
              %v1159 = vld [vmem:[%s1125 + $0x260] sm:$0xff]
              %1160 = vst [vmem:[%s1126 + $0x80] sm:$0xff] %v1159
              %v1161 = vld [vmem:[%s1125 + $0x268] sm:$0xff]
              %1162 = vst [vmem:[%s1126 + $0x88] sm:$0xff] %v1161
              %v1163 = vld [vmem:[%s1125 + $0x360] sm:$0xff]
              %1164 = vst [vmem:[%s1126 + $0x90] sm:$0xff] %v1163
              %v1165 = vld [vmem:[%s1125 + $0x368] sm:$0xff]
              %1166 = vst [vmem:[%s1126 + $0x98] sm:$0xff] %v1165
              %v1167 = vld [vmem:[%s1125 + $0x370] sm:$0xff]
              %1168 = vst [vmem:[%s1126 + $0xa0] sm:$0xff] %v1167
              %v1169 = vld [vmem:[%s1125 + $0x378] sm:$0xff]
              %1170 = vst [vmem:[%s1126 + $0xa8] sm:$0xff] %v1169
              %v1171 = vld [vmem:[%s1125 + $0x380] sm:$0xff]
              %1172 = vst [vmem:[%s1126 + $0xb0] sm:$0xff] %v1171
              %v1173 = vld [vmem:[%s1125 + $0x388] sm:$0xff]
              %1174 = vst [vmem:[%s1126 + $0xb8] sm:$0xff] %v1173
              %v1175 = vld [vmem:[%s1125 + $0x480] sm:$0xff]
              %1176 = vst [vmem:[%s1126 + $0xc0] sm:$0xff] %v1175
              %v1177 = vld [vmem:[%s1125 + $0x488] sm:$0xff]
              %1178 = vst [vmem:[%s1126 + $0xc8] sm:$0xff] %v1177
              %v1179 = vld [vmem:[%s1125 + $0x490] sm:$0xff]
              %1180 = vst [vmem:[%s1126 + $0xd0] sm:$0xff] %v1179
              %v1181 = vld [vmem:[%s1125 + $0x498] sm:$0xff]
              %1182 = vst [vmem:[%s1126 + $0xd8] sm:$0xff] %v1181
              %v1183 = vld [vmem:[%s1125 + $0x4a0] sm:$0xff]
              %1184 = vst [vmem:[%s1126 + $0xe0] sm:$0xff] %v1183
              %v1185 = vld [vmem:[%s1125 + $0x4a8] sm:$0xff]
              %1186 = vst [vmem:[%s1126 + $0xe8] sm:$0xff] %v1185
              %v1187 = vld [vmem:[%s1125 + $0x5a0] sm:$0xff]
              %1188 = vst [vmem:[%s1126 + $0xf0] sm:$0xff] %v1187
              %v1189 = vld [vmem:[%s1125 + $0x5a8] sm:$0xff]
              %1190 = vst [vmem:[%s1126 + $0xf8] sm:$0xff] %v1189
              %v1191 = vld [vmem:[%s1125 + $0x5b0] sm:$0xff]
              %1192 = vst [vmem:[%s1126 + $0x100] sm:$0xff] %v1191
              %v1193 = vld [vmem:[%s1125 + $0x5b8] sm:$0xff]
              %1194 = vst [vmem:[%s1126 + $0x108] sm:$0xff] %v1193
              %v1195 = vld [vmem:[%s1125 + $0x5c0] sm:$0xff]
              %1196 = vst [vmem:[%s1126 + $0x110] sm:$0xff] %v1195
              %v1197 = vld [vmem:[%s1125 + $0x5c8] sm:$0xff]
              %1198 = vst [vmem:[%s1126 + $0x118] sm:$0xff] %v1197
              %v1199 = vld [vmem:[%s1125 + $0x6c0] sm:$0xff]
              %1200 = vst [vmem:[%s1126 + $0x120] sm:$0xff] %v1199
              %v1201 = vld [vmem:[%s1125 + $0x6c8] sm:$0xff]
              %1202 = vst [vmem:[%s1126 + $0x128] sm:$0xff] %v1201
              %v1203 = vld [vmem:[%s1125 + $0x6d0] sm:$0xff]
              %1204 = vst [vmem:[%s1126 + $0x130] sm:$0xff] %v1203
              %v1205 = vld [vmem:[%s1125 + $0x6d8] sm:$0xff]
              %1206 = vst [vmem:[%s1126 + $0x138] sm:$0xff] %v1205
              %v1207 = vld [vmem:[%s1125 + $0x6e0] sm:$0xff]
              %1208 = vst [vmem:[%s1126 + $0x140] sm:$0xff] %v1207
              %v1209 = vld [vmem:[%s1125 + $0x6e8] sm:$0xff]
              %1210 = vst [vmem:[%s1126 + $0x148] sm:$0xff] %v1209
              %v1211 = vld [vmem:[%s1125 + $0x7e0] sm:$0xff]
              %1212 = vst [vmem:[%s1126 + $0x150] sm:$0xff] %v1211
              %v1213 = vld [vmem:[%s1125 + $0x7e8] sm:$0xff]
              %1214 = vst [vmem:[%s1126 + $0x158] sm:$0xff] %v1213
              %v1215 = vld [vmem:[%s1125 + $0x7f0] sm:$0xff]
              %1216 = vst [vmem:[%s1126 + $0x160] sm:$0xff] %v1215
              %v1217 = vld [vmem:[%s1125 + $0x7f8] sm:$0xff]
              %1218 = vst [vmem:[%s1126 + $0x168] sm:$0xff] %v1217
              %v1219 = vld [vmem:[%s1125 + $0x800] sm:$0xff]
              %1220 = vst [vmem:[%s1126 + $0x170] sm:$0xff] %v1219
              %v1221 = vld [vmem:[%s1125 + $0x808] sm:$0xff]
              %1222 = vst [vmem:[%s1126 + $0x178] sm:$0xff] %v1221
            $region71: #{tpu_custom_call.1} parent=65 // loop_footer
              %s1124 = sadd.s32 1, %s1120
            $region72: #{tpu_custom_call.1} parent=65 // loop_footer_branch
              %1119 = sbr.rel target = $region68
            $region73: #{tpu_custom_call.1} parent=65 // loop_exit
              _
          $region66: #{tpu_custom_call.1} parent=50 // pred_fallthru
            _
          // Predicated region
          $region74: #{tpu_custom_call.1} parent=50 // pred_check
            _
          $region75: #{tpu_custom_call.1} parent=50 // pred_check_branch
            %1224 = sbr.rel target = $region77
          $region76: #{tpu_custom_call.1} parent=50 // pred_region
            _
          $region77: #{tpu_custom_call.1} parent=50 // pred_fallthru
            _
        $region51: #{tpu_custom_call.1} parent=46 // pred_fallthru
          _
        // Predicated region
        $region52: #{tpu_custom_call.1} parent=46 // pred_check
          _
        $region53: #{tpu_custom_call.1} parent=46 // pred_check_branch
          %1010 = sbr.rel target = $region55
        $region54: #{tpu_custom_call.1} parent=46 // pred_region
          %s1012 = ssub.s32 256, 1
          loop: start=0, step=1, limit=1
          $region56: #{tpu_custom_call.1} parent=54 // loop_pre_header
            _
          $region57: #{tpu_custom_call.1} parent=54 // loop_header
            %s1014 = sphi 0, %s1018
            %p1015 = scmp.ge.s32.totalorder %s1014, 1
            %s1019 = sphi %s1004, %s1004
            %s1020 = sphi [#allocation5], [#allocation5]
          $region58: #{tpu_custom_call.1} parent=54 // loop_header_branch
            %1017 = sbr.rel (%p1015) target = $region62
          $region59: #{tpu_custom_call.1} parent=54 // loop_body
            %v1021 = vld [vmem:[%s1019] sm:%s1012]
            %1022 = vst [vmem:[%s1020] sm:%s1012] %v1021
            %v1023 = vld [vmem:[%s1019 + $0x8] sm:%s1012]
            %1024 = vst [vmem:[%s1020 + $0x8] sm:%s1012] %v1023
            %v1025 = vld [vmem:[%s1019 + $0x10] sm:%s1012]
            %1026 = vst [vmem:[%s1020 + $0x10] sm:%s1012] %v1025
            %v1027 = vld [vmem:[%s1019 + $0x18] sm:%s1012]
            %1028 = vst [vmem:[%s1020 + $0x18] sm:%s1012] %v1027
            %v1029 = vld [vmem:[%s1019 + $0x20] sm:%s1012]
            %1030 = vst [vmem:[%s1020 + $0x20] sm:%s1012] %v1029
            %v1031 = vld [vmem:[%s1019 + $0x28] sm:%s1012]
            %1032 = vst [vmem:[%s1020 + $0x28] sm:%s1012] %v1031
            %v1033 = vld [vmem:[%s1019 + $0x120] sm:%s1012]
            %1034 = vst [vmem:[%s1020 + $0x30] sm:%s1012] %v1033
            %v1035 = vld [vmem:[%s1019 + $0x128] sm:%s1012]
            %1036 = vst [vmem:[%s1020 + $0x38] sm:%s1012] %v1035
            %v1037 = vld [vmem:[%s1019 + $0x130] sm:%s1012]
            %1038 = vst [vmem:[%s1020 + $0x40] sm:%s1012] %v1037
            %v1039 = vld [vmem:[%s1019 + $0x138] sm:%s1012]
            %1040 = vst [vmem:[%s1020 + $0x48] sm:%s1012] %v1039
            %v1041 = vld [vmem:[%s1019 + $0x140] sm:%s1012]
            %1042 = vst [vmem:[%s1020 + $0x50] sm:%s1012] %v1041
            %v1043 = vld [vmem:[%s1019 + $0x148] sm:%s1012]
            %1044 = vst [vmem:[%s1020 + $0x58] sm:%s1012] %v1043
            %v1045 = vld [vmem:[%s1019 + $0x240] sm:%s1012]
            %1046 = vst [vmem:[%s1020 + $0x60] sm:%s1012] %v1045
            %v1047 = vld [vmem:[%s1019 + $0x248] sm:%s1012]
            %1048 = vst [vmem:[%s1020 + $0x68] sm:%s1012] %v1047
            %v1049 = vld [vmem:[%s1019 + $0x250] sm:%s1012]
            %1050 = vst [vmem:[%s1020 + $0x70] sm:%s1012] %v1049
            %v1051 = vld [vmem:[%s1019 + $0x258] sm:%s1012]
            %1052 = vst [vmem:[%s1020 + $0x78] sm:%s1012] %v1051
            %v1053 = vld [vmem:[%s1019 + $0x260] sm:%s1012]
            %1054 = vst [vmem:[%s1020 + $0x80] sm:%s1012] %v1053
            %v1055 = vld [vmem:[%s1019 + $0x268] sm:%s1012]
            %1056 = vst [vmem:[%s1020 + $0x88] sm:%s1012] %v1055
            %v1057 = vld [vmem:[%s1019 + $0x360] sm:%s1012]
            %1058 = vst [vmem:[%s1020 + $0x90] sm:%s1012] %v1057
            %v1059 = vld [vmem:[%s1019 + $0x368] sm:%s1012]
            %1060 = vst [vmem:[%s1020 + $0x98] sm:%s1012] %v1059
            %v1061 = vld [vmem:[%s1019 + $0x370] sm:%s1012]
            %1062 = vst [vmem:[%s1020 + $0xa0] sm:%s1012] %v1061
            %v1063 = vld [vmem:[%s1019 + $0x378] sm:%s1012]
            %1064 = vst [vmem:[%s1020 + $0xa8] sm:%s1012] %v1063
            %v1065 = vld [vmem:[%s1019 + $0x380] sm:%s1012]
            %1066 = vst [vmem:[%s1020 + $0xb0] sm:%s1012] %v1065
            %v1067 = vld [vmem:[%s1019 + $0x388] sm:%s1012]
            %1068 = vst [vmem:[%s1020 + $0xb8] sm:%s1012] %v1067
            %v1069 = vld [vmem:[%s1019 + $0x480] sm:%s1012]
            %1070 = vst [vmem:[%s1020 + $0xc0] sm:%s1012] %v1069
            %v1071 = vld [vmem:[%s1019 + $0x488] sm:%s1012]
            %1072 = vst [vmem:[%s1020 + $0xc8] sm:%s1012] %v1071
            %v1073 = vld [vmem:[%s1019 + $0x490] sm:%s1012]
            %1074 = vst [vmem:[%s1020 + $0xd0] sm:%s1012] %v1073
            %v1075 = vld [vmem:[%s1019 + $0x498] sm:%s1012]
            %1076 = vst [vmem:[%s1020 + $0xd8] sm:%s1012] %v1075
            %v1077 = vld [vmem:[%s1019 + $0x4a0] sm:%s1012]
            %1078 = vst [vmem:[%s1020 + $0xe0] sm:%s1012] %v1077
            %v1079 = vld [vmem:[%s1019 + $0x4a8] sm:%s1012]
            %1080 = vst [vmem:[%s1020 + $0xe8] sm:%s1012] %v1079
            %v1081 = vld [vmem:[%s1019 + $0x5a0] sm:%s1012]
            %1082 = vst [vmem:[%s1020 + $0xf0] sm:%s1012] %v1081
            %v1083 = vld [vmem:[%s1019 + $0x5a8] sm:%s1012]
            %1084 = vst [vmem:[%s1020 + $0xf8] sm:%s1012] %v1083
            %v1085 = vld [vmem:[%s1019 + $0x5b0] sm:%s1012]
            %1086 = vst [vmem:[%s1020 + $0x100] sm:%s1012] %v1085
            %v1087 = vld [vmem:[%s1019 + $0x5b8] sm:%s1012]
            %1088 = vst [vmem:[%s1020 + $0x108] sm:%s1012] %v1087
            %v1089 = vld [vmem:[%s1019 + $0x5c0] sm:%s1012]
            %1090 = vst [vmem:[%s1020 + $0x110] sm:%s1012] %v1089
            %v1091 = vld [vmem:[%s1019 + $0x5c8] sm:%s1012]
            %1092 = vst [vmem:[%s1020 + $0x118] sm:%s1012] %v1091
            %v1093 = vld [vmem:[%s1019 + $0x6c0] sm:%s1012]
            %1094 = vst [vmem:[%s1020 + $0x120] sm:%s1012] %v1093
            %v1095 = vld [vmem:[%s1019 + $0x6c8] sm:%s1012]
            %1096 = vst [vmem:[%s1020 + $0x128] sm:%s1012] %v1095
            %v1097 = vld [vmem:[%s1019 + $0x6d0] sm:%s1012]
            %1098 = vst [vmem:[%s1020 + $0x130] sm:%s1012] %v1097
            %v1099 = vld [vmem:[%s1019 + $0x6d8] sm:%s1012]
            %1100 = vst [vmem:[%s1020 + $0x138] sm:%s1012] %v1099
            %v1101 = vld [vmem:[%s1019 + $0x6e0] sm:%s1012]
            %1102 = vst [vmem:[%s1020 + $0x140] sm:%s1012] %v1101
            %v1103 = vld [vmem:[%s1019 + $0x6e8] sm:%s1012]
            %1104 = vst [vmem:[%s1020 + $0x148] sm:%s1012] %v1103
            %v1105 = vld [vmem:[%s1019 + $0x7e0] sm:%s1012]
            %1106 = vst [vmem:[%s1020 + $0x150] sm:%s1012] %v1105
            %v1107 = vld [vmem:[%s1019 + $0x7e8] sm:%s1012]
            %1108 = vst [vmem:[%s1020 + $0x158] sm:%s1012] %v1107
            %v1109 = vld [vmem:[%s1019 + $0x7f0] sm:%s1012]
            %1110 = vst [vmem:[%s1020 + $0x160] sm:%s1012] %v1109
            %v1111 = vld [vmem:[%s1019 + $0x7f8] sm:%s1012]
            %1112 = vst [vmem:[%s1020 + $0x168] sm:%s1012] %v1111
            %v1113 = vld [vmem:[%s1019 + $0x800] sm:%s1012]
            %1114 = vst [vmem:[%s1020 + $0x170] sm:%s1012] %v1113
            %v1115 = vld [vmem:[%s1019 + $0x808] sm:%s1012]
            %1116 = vst [vmem:[%s1020 + $0x178] sm:%s1012] %v1115
          $region60: #{tpu_custom_call.1} parent=54 // loop_footer
            %s1018 = sadd.s32 1, %s1014
          $region61: #{tpu_custom_call.1} parent=54 // loop_footer_branch
            %1013 = sbr.rel target = $region57
          $region62: #{tpu_custom_call.1} parent=54 // loop_exit
            _
        $region55: #{tpu_custom_call.1} parent=46 // pred_fallthru
          _
      $region47: #{tpu_custom_call.1} parent=42 // pred_fallthru
        _
      %1225 = vnop
    $region43: #{tpu_custom_call.1} parent=1 // pred_fallthru
      _
    // Predicated region
    $region78: #{tpu_custom_call.1} parent=1 // pred_check
      _
    $region79: #{tpu_custom_call.1} parent=1 // pred_check_branch
      %1227 = sbr.rel (0) target = $region81
    $region80: #{tpu_custom_call.1} parent=1 // pred_region
      _
    $region81: #{tpu_custom_call.1} parent=1 // pred_fallthru
      _
    // Predicated region
    $region82: #{tpu_custom_call.1} parent=1 // pred_check
      _
    $region83: #{tpu_custom_call.1} parent=1 // pred_check_branch
      %1229 = sbr.rel (0) target = $region85
    $region84: #{tpu_custom_call.1} parent=1 // pred_region
      _
    $region85: #{tpu_custom_call.1} parent=1 // pred_fallthru
      _
    %s1230 = sadd.s32 0, 1
    %s1231 = smul.u32 %s1230, 5
    %v1232 = vld [vmem:[#allocation4] sm:$0x1f]
    %v1233 = vld [vmem:[#allocation4 + $0x8] sm:$0x1f]
    %v1234 = vld [vmem:[#allocation4 + $0x10] sm:$0x1f]
    %v1235 = vld [vmem:[#allocation4 + $0x18] sm:$0x1f]
    %v1236 = vld [vmem:[#allocation4 + $0x20] sm:$0x1f]
    %v1237 = vld [vmem:[#allocation4 + $0x28] sm:$0x1f]
    %v1238 = vld [vmem:[#allocation4 + $0x30] sm:$0x1f]
    %v1239 = vld [vmem:[#allocation4 + $0x38] sm:$0x1f]
    %v1240 = vld [vmem:[#allocation4 + $0x40] sm:$0x1f]
    %v1241 = vld [vmem:[#allocation4 + $0x48] sm:$0x1f]
    %v1242 = vld [vmem:[#allocation4 + $0x50] sm:$0x1f]
    %v1243 = vld [vmem:[#allocation4 + $0x58] sm:$0x1f]
    %v1244 = vld [vmem:[#allocation4 + $0x60] sm:$0x1f]
    %v1245 = vld [vmem:[#allocation4 + $0x68] sm:$0x1f]
    %v1246 = vld [vmem:[#allocation4 + $0x70] sm:$0x1f]
    %v1247 = vld [vmem:[#allocation4 + $0x78] sm:$0x1f]
    %v1248 = vld [vmem:[#allocation4 + $0x80] sm:$0x1f]
    %v1249 = vld [vmem:[#allocation4 + $0x88] sm:$0x1f]
    %v1250 = vld [vmem:[#allocation4 + $0x90] sm:$0x1f]
    %v1251 = vld [vmem:[#allocation4 + $0x98] sm:$0x1f]
    %v1252 = vld [vmem:[#allocation4 + $0xa0] sm:$0x1f]
    %v1253 = vld [vmem:[#allocation4 + $0xa8] sm:$0x1f]
    %v1254 = vld [vmem:[#allocation4 + $0xb0] sm:$0x1f]
    %v1255 = vld [vmem:[#allocation4 + $0xb8] sm:$0x1f]
    %v1256 = vld [vmem:[#allocation4 + $0xc0] sm:$0x1f]
    %v1257 = vld [vmem:[#allocation4 + $0xc8] sm:$0x1f]
    %v1258 = vld [vmem:[#allocation4 + $0xd0] sm:$0x1f]
    %v1259 = vld [vmem:[#allocation4 + $0xd8] sm:$0x1f]
    %v1260 = vld [vmem:[#allocation4 + $0xe0] sm:$0x1f]
    %v1261 = vld [vmem:[#allocation4 + $0xe8] sm:$0x1f]
    %s1262 = scalar_lea.vmem [#allocation4], 240
    %v1263 = vld [vmem:[%s1262] sm:$0x1f]
    %v1264 = vld [vmem:[%s1262 + $0x8] sm:$0x1f]
    %v1265 = vld [vmem:[%s1262 + $0x10] sm:$0x1f]
    %v1266 = vld [vmem:[%s1262 + $0x18] sm:$0x1f]
    %v1267 = vld [vmem:[%s1262 + $0x20] sm:$0x1f]
    %v1268 = vld [vmem:[%s1262 + $0x28] sm:$0x1f]
    %v1269 = vld [vmem:[%s1262 + $0x30] sm:$0x1f]
    %v1270 = vld [vmem:[%s1262 + $0x38] sm:$0x1f]
    %v1271 = vld [vmem:[%s1262 + $0x40] sm:$0x1f]
    %v1272 = vld [vmem:[%s1262 + $0x48] sm:$0x1f]
    %v1273 = vld [vmem:[%s1262 + $0x50] sm:$0x1f]
    %v1274 = vld [vmem:[%s1262 + $0x58] sm:$0x1f]
    %v1275 = vld [vmem:[%s1262 + $0x60] sm:$0x1f]
    %v1276 = vld [vmem:[%s1262 + $0x68] sm:$0x1f]
    %v1277 = vld [vmem:[%s1262 + $0x70] sm:$0x1f]
    %v1278 = vld [vmem:[%s1262 + $0x78] sm:$0x1f]
    %v1279 = vld [vmem:[%s1262 + $0x80] sm:$0x1f]
    %v1280 = vld [vmem:[%s1262 + $0x88] sm:$0x1f]
    %v1281 = vld [vmem:[%s1262 + $0x90] sm:$0x1f]
    %v1282 = vld [vmem:[%s1262 + $0x98] sm:$0x1f]
    %v1283 = vld [vmem:[%s1262 + $0xa0] sm:$0x1f]
    %v1284 = vld [vmem:[%s1262 + $0xa8] sm:$0x1f]
    %v1285 = vld [vmem:[%s1262 + $0xb0] sm:$0x1f]
    %v1286 = vld [vmem:[%s1262 + $0xb8] sm:$0x1f]
    %v1287 = vld [vmem:[%s1262 + $0xc0] sm:$0x1f]
    %v1288 = vld [vmem:[%s1262 + $0xc8] sm:$0x1f]
    %v1289 = vld [vmem:[%s1262 + $0xd0] sm:$0x1f]
    %v1290 = vld [vmem:[%s1262 + $0xd8] sm:$0x1f]
    %v1291 = vld [vmem:[%s1262 + $0xe0] sm:$0x1f]
    %v1292 = vld [vmem:[%s1262 + $0xe8] sm:$0x1f]
    %v1293 = vld [vmem:[#allocation4 + $0x1] sm:$0x1f]
    %v1294 = vld [vmem:[#allocation4 + $0x9] sm:$0x1f]
    %v1295 = vld [vmem:[#allocation4 + $0x11] sm:$0x1f]
    %v1296 = vld [vmem:[#allocation4 + $0x19] sm:$0x1f]
    %v1297 = vld [vmem:[#allocation4 + $0x21] sm:$0x1f]
    %v1298 = vld [vmem:[#allocation4 + $0x29] sm:$0x1f]
    %v1299 = vld [vmem:[#allocation4 + $0x31] sm:$0x1f]
    %v1300 = vld [vmem:[#allocation4 + $0x39] sm:$0x1f]
    %v1301 = vld [vmem:[#allocation4 + $0x41] sm:$0x1f]
    %v1302 = vld [vmem:[#allocation4 + $0x49] sm:$0x1f]
    %v1303 = vld [vmem:[#allocation4 + $0x51] sm:$0x1f]
    %v1304 = vld [vmem:[#allocation4 + $0x59] sm:$0x1f]
    %v1305 = vld [vmem:[#allocation4 + $0x61] sm:$0x1f]
    %v1306 = vld [vmem:[#allocation4 + $0x69] sm:$0x1f]
    %v1307 = vld [vmem:[#allocation4 + $0x71] sm:$0x1f]
    %v1308 = vld [vmem:[#allocation4 + $0x79] sm:$0x1f]
    %v1309 = vld [vmem:[#allocation4 + $0x81] sm:$0x1f]
    %v1310 = vld [vmem:[#allocation4 + $0x89] sm:$0x1f]
    %v1311 = vld [vmem:[#allocation4 + $0x91] sm:$0x1f]
    %v1312 = vld [vmem:[#allocation4 + $0x99] sm:$0x1f]
    %v1313 = vld [vmem:[#allocation4 + $0xa1] sm:$0x1f]
    %v1314 = vld [vmem:[#allocation4 + $0xa9] sm:$0x1f]
    %v1315 = vld [vmem:[#allocation4 + $0xb1] sm:$0x1f]
    %v1316 = vld [vmem:[#allocation4 + $0xb9] sm:$0x1f]
    %v1317 = vld [vmem:[#allocation4 + $0xc1] sm:$0x1f]
    %v1318 = vld [vmem:[#allocation4 + $0xc9] sm:$0x1f]
    %v1319 = vld [vmem:[#allocation4 + $0xd1] sm:$0x1f]
    %v1320 = vld [vmem:[#allocation4 + $0xd9] sm:$0x1f]
    %v1321 = vld [vmem:[#allocation4 + $0xe1] sm:$0x1f]
    %v1322 = vld [vmem:[#allocation4 + $0xe9] sm:$0x1f]
    %v1323 = vld [vmem:[%s1262 + $0x1] sm:$0x1f]
    %v1324 = vld [vmem:[%s1262 + $0x9] sm:$0x1f]
    %v1325 = vld [vmem:[%s1262 + $0x11] sm:$0x1f]
    %v1326 = vld [vmem:[%s1262 + $0x19] sm:$0x1f]
    %v1327 = vld [vmem:[%s1262 + $0x21] sm:$0x1f]
    %v1328 = vld [vmem:[%s1262 + $0x29] sm:$0x1f]
    %v1329 = vld [vmem:[%s1262 + $0x31] sm:$0x1f]
    %v1330 = vld [vmem:[%s1262 + $0x39] sm:$0x1f]
    %v1331 = vld [vmem:[%s1262 + $0x41] sm:$0x1f]
    %v1332 = vld [vmem:[%s1262 + $0x49] sm:$0x1f]
    %v1333 = vld [vmem:[%s1262 + $0x51] sm:$0x1f]
    %v1334 = vld [vmem:[%s1262 + $0x59] sm:$0x1f]
    %v1335 = vld [vmem:[%s1262 + $0x61] sm:$0x1f]
    %v1336 = vld [vmem:[%s1262 + $0x69] sm:$0x1f]
    %v1337 = vld [vmem:[%s1262 + $0x71] sm:$0x1f]
    %v1338 = vld [vmem:[%s1262 + $0x79] sm:$0x1f]
    %v1339 = vld [vmem:[%s1262 + $0x81] sm:$0x1f]
    %v1340 = vld [vmem:[%s1262 + $0x89] sm:$0x1f]
    %v1341 = vld [vmem:[%s1262 + $0x91] sm:$0x1f]
    %v1342 = vld [vmem:[%s1262 + $0x99] sm:$0x1f]
    %v1343 = vld [vmem:[%s1262 + $0xa1] sm:$0x1f]
    %v1344 = vld [vmem:[%s1262 + $0xa9] sm:$0x1f]
    %v1345 = vld [vmem:[%s1262 + $0xb1] sm:$0x1f]
    %v1346 = vld [vmem:[%s1262 + $0xb9] sm:$0x1f]
    %v1347 = vld [vmem:[%s1262 + $0xc1] sm:$0x1f]
    %v1348 = vld [vmem:[%s1262 + $0xc9] sm:$0x1f]
    %v1349 = vld [vmem:[%s1262 + $0xd1] sm:$0x1f]
    %v1350 = vld [vmem:[%s1262 + $0xd9] sm:$0x1f]
    %v1351 = vld [vmem:[%s1262 + $0xe1] sm:$0x1f]
    %v1352 = vld [vmem:[%s1262 + $0xe9] sm:$0x1f]
    %v1353 = vld [vmem:[#allocation5] sm:$0x1f]
    %v1354 = vld [vmem:[#allocation5 + $0x8] sm:$0x1f]
    %v1355 = vld [vmem:[#allocation5 + $0x10] sm:$0x1f]
    %v1356 = vld [vmem:[#allocation5 + $0x18] sm:$0x1f]
    %v1357 = vld [vmem:[#allocation5 + $0x20] sm:$0x1f]
    %v1358 = vld [vmem:[#allocation5 + $0x28] sm:$0x1f]
    %s1359 = scalar_lea.vmem [#allocation5], 48
    %v1360 = vld [vmem:[%s1359] sm:$0x1f]
    %v1361 = vld [vmem:[%s1359 + $0x8] sm:$0x1f]
    %v1362 = vld [vmem:[%s1359 + $0x10] sm:$0x1f]
    %v1363 = vld [vmem:[%s1359 + $0x18] sm:$0x1f]
    %v1364 = vld [vmem:[%s1359 + $0x20] sm:$0x1f]
    %v1365 = vld [vmem:[%s1359 + $0x28] sm:$0x1f]
    %v1366 = vld [vmem:[#allocation5 + $0x1] sm:$0x1f]
    %v1367 = vld [vmem:[#allocation5 + $0x9] sm:$0x1f]
    %v1368 = vld [vmem:[#allocation5 + $0x11] sm:$0x1f]
    %v1369 = vld [vmem:[#allocation5 + $0x19] sm:$0x1f]
    %v1370 = vld [vmem:[#allocation5 + $0x21] sm:$0x1f]
    %v1371 = vld [vmem:[#allocation5 + $0x29] sm:$0x1f]
    %v1372 = vld [vmem:[%s1359 + $0x1] sm:$0x1f]
    %v1373 = vld [vmem:[%s1359 + $0x9] sm:$0x1f]
    %v1374 = vld [vmem:[%s1359 + $0x11] sm:$0x1f]
    %v1375 = vld [vmem:[%s1359 + $0x19] sm:$0x1f]
    %v1376 = vld [vmem:[%s1359 + $0x21] sm:$0x1f]
    %v1377 = vld [vmem:[%s1359 + $0x29] sm:$0x1f]
    %v1378 = vmul.f32 %v1232, 0.4829629
    %v1379 = vmul.f32 %v1233, 0.4829629
    %v1380 = vmul.f32 %v1234, 0.4829629
    %v1381 = vmul.f32 %v1235, 0.4829629
    %v1382 = vmul.f32 %v1236, 0.4829629
    %v1383 = vmul.f32 %v1237, 0.4829629
    %v1384 = vmul.f32 %v1238, 0.4829629
    %v1385 = vmul.f32 %v1239, 0.4829629
    %v1386 = vmul.f32 %v1240, 0.4829629
    %v1387 = vmul.f32 %v1241, 0.4829629
    %v1388 = vmul.f32 %v1242, 0.4829629
    %v1389 = vmul.f32 %v1243, 0.4829629
    %v1390 = vmul.f32 %v1244, 0.4829629
    %v1391 = vmul.f32 %v1245, 0.4829629
    %v1392 = vmul.f32 %v1246, 0.4829629
    %v1393 = vmul.f32 %v1247, 0.4829629
    %v1394 = vmul.f32 %v1248, 0.4829629
    %v1395 = vmul.f32 %v1249, 0.4829629
    %v1396 = vmul.f32 %v1250, 0.4829629
    %v1397 = vmul.f32 %v1251, 0.4829629
    %v1398 = vmul.f32 %v1252, 0.4829629
    %v1399 = vmul.f32 %v1253, 0.4829629
    %v1400 = vmul.f32 %v1254, 0.4829629
    %v1401 = vmul.f32 %v1255, 0.4829629
    %v1402 = vmul.f32 %v1256, 0.4829629
    %v1403 = vmul.f32 %v1257, 0.4829629
    %v1404 = vmul.f32 %v1258, 0.4829629
    %v1405 = vmul.f32 %v1259, 0.4829629
    %v1406 = vmul.f32 %v1260, 0.4829629
    %v1407 = vmul.f32 %v1261, 0.4829629
    %v1408 = vmul.f32 %v1263, 0.8365163
    %v1409 = vmul.f32 %v1264, 0.8365163
    %v1410 = vmul.f32 %v1265, 0.8365163
    %v1411 = vmul.f32 %v1266, 0.8365163
    %v1412 = vmul.f32 %v1267, 0.8365163
    %v1413 = vmul.f32 %v1268, 0.8365163
    %v1414 = vmul.f32 %v1269, 0.8365163
    %v1415 = vmul.f32 %v1270, 0.8365163
    %v1416 = vmul.f32 %v1271, 0.8365163
    %v1417 = vmul.f32 %v1272, 0.8365163
    %v1418 = vmul.f32 %v1273, 0.8365163
    %v1419 = vmul.f32 %v1274, 0.8365163
    %v1420 = vmul.f32 %v1275, 0.8365163
    %v1421 = vmul.f32 %v1276, 0.8365163
    %v1422 = vmul.f32 %v1277, 0.8365163
    %v1423 = vmul.f32 %v1278, 0.8365163
    %v1424 = vmul.f32 %v1279, 0.8365163
    %v1425 = vmul.f32 %v1280, 0.8365163
    %v1426 = vmul.f32 %v1281, 0.8365163
    %v1427 = vmul.f32 %v1282, 0.8365163
    %v1428 = vmul.f32 %v1283, 0.8365163
    %v1429 = vmul.f32 %v1284, 0.8365163
    %v1430 = vmul.f32 %v1285, 0.8365163
    %v1431 = vmul.f32 %v1286, 0.8365163
    %v1432 = vmul.f32 %v1287, 0.8365163
    %v1433 = vmul.f32 %v1288, 0.8365163
    %v1434 = vmul.f32 %v1289, 0.8365163
    %v1435 = vmul.f32 %v1290, 0.8365163
    %v1436 = vmul.f32 %v1291, 0.8365163
    %v1437 = vmul.f32 %v1292, 0.8365163
    %v1438 = vadd.f32 %v1378, %v1408
    %v1439 = vadd.f32 %v1379, %v1409
    %v1440 = vadd.f32 %v1380, %v1410
    %v1441 = vadd.f32 %v1381, %v1411
    %v1442 = vadd.f32 %v1382, %v1412
    %v1443 = vadd.f32 %v1383, %v1413
    %v1444 = vadd.f32 %v1384, %v1414
    %v1445 = vadd.f32 %v1385, %v1415
    %v1446 = vadd.f32 %v1386, %v1416
    %v1447 = vadd.f32 %v1387, %v1417
    %v1448 = vadd.f32 %v1388, %v1418
    %v1449 = vadd.f32 %v1389, %v1419
    %v1450 = vadd.f32 %v1390, %v1420
    %v1451 = vadd.f32 %v1391, %v1421
    %v1452 = vadd.f32 %v1392, %v1422
    %v1453 = vadd.f32 %v1393, %v1423
    %v1454 = vadd.f32 %v1394, %v1424
    %v1455 = vadd.f32 %v1395, %v1425
    %v1456 = vadd.f32 %v1396, %v1426
    %v1457 = vadd.f32 %v1397, %v1427
    %v1458 = vadd.f32 %v1398, %v1428
    %v1459 = vadd.f32 %v1399, %v1429
    %v1460 = vadd.f32 %v1400, %v1430
    %v1461 = vadd.f32 %v1401, %v1431
    %v1462 = vadd.f32 %v1402, %v1432
    %v1463 = vadd.f32 %v1403, %v1433
    %v1464 = vadd.f32 %v1404, %v1434
    %v1465 = vadd.f32 %v1405, %v1435
    %v1466 = vadd.f32 %v1406, %v1436
    %v1467 = vadd.f32 %v1407, %v1437
    %v1468 = vmul.f32 %v1293, 0.22414386
    %v1469 = vmul.f32 %v1294, 0.22414386
    %v1470 = vmul.f32 %v1295, 0.22414386
    %v1471 = vmul.f32 %v1296, 0.22414386
    %v1472 = vmul.f32 %v1297, 0.22414386
    %v1473 = vmul.f32 %v1298, 0.22414386
    %v1474 = vmul.f32 %v1299, 0.22414386
    %v1475 = vmul.f32 %v1300, 0.22414386
    %v1476 = vmul.f32 %v1301, 0.22414386
    %v1477 = vmul.f32 %v1302, 0.22414386
    %v1478 = vmul.f32 %v1303, 0.22414386
    %v1479 = vmul.f32 %v1304, 0.22414386
    %v1480 = vmul.f32 %v1305, 0.22414386
    %v1481 = vmul.f32 %v1306, 0.22414386
    %v1482 = vmul.f32 %v1307, 0.22414386
    %v1483 = vmul.f32 %v1308, 0.22414386
    %v1484 = vmul.f32 %v1309, 0.22414386
    %v1485 = vmul.f32 %v1310, 0.22414386
    %v1486 = vmul.f32 %v1311, 0.22414386
    %v1487 = vmul.f32 %v1312, 0.22414386
    %v1488 = vmul.f32 %v1313, 0.22414386
    %v1489 = vmul.f32 %v1314, 0.22414386
    %v1490 = vmul.f32 %v1315, 0.22414386
    %v1491 = vmul.f32 %v1316, 0.22414386
    %v1492 = vmul.f32 %v1317, 0.22414386
    %v1493 = vmul.f32 %v1318, 0.22414386
    %v1494 = vmul.f32 %v1319, 0.22414386
    %v1495 = vmul.f32 %v1320, 0.22414386
    %v1496 = vmul.f32 %v1321, 0.22414386
    %v1497 = vmul.f32 %v1322, 0.22414386
    %v1498 = vadd.f32 %v1438, %v1468
    %v1499 = vadd.f32 %v1439, %v1469
    %v1500 = vadd.f32 %v1440, %v1470
    %v1501 = vadd.f32 %v1441, %v1471
    %v1502 = vadd.f32 %v1442, %v1472
    %v1503 = vadd.f32 %v1443, %v1473
    %v1504 = vadd.f32 %v1444, %v1474
    %v1505 = vadd.f32 %v1445, %v1475
    %v1506 = vadd.f32 %v1446, %v1476
    %v1507 = vadd.f32 %v1447, %v1477
    %v1508 = vadd.f32 %v1448, %v1478
    %v1509 = vadd.f32 %v1449, %v1479
    %v1510 = vadd.f32 %v1450, %v1480
    %v1511 = vadd.f32 %v1451, %v1481
    %v1512 = vadd.f32 %v1452, %v1482
    %v1513 = vadd.f32 %v1453, %v1483
    %v1514 = vadd.f32 %v1454, %v1484
    %v1515 = vadd.f32 %v1455, %v1485
    %v1516 = vadd.f32 %v1456, %v1486
    %v1517 = vadd.f32 %v1457, %v1487
    %v1518 = vadd.f32 %v1458, %v1488
    %v1519 = vadd.f32 %v1459, %v1489
    %v1520 = vadd.f32 %v1460, %v1490
    %v1521 = vadd.f32 %v1461, %v1491
    %v1522 = vadd.f32 %v1462, %v1492
    %v1523 = vadd.f32 %v1463, %v1493
    %v1524 = vadd.f32 %v1464, %v1494
    %v1525 = vadd.f32 %v1465, %v1495
    %v1526 = vadd.f32 %v1466, %v1496
    %v1527 = vadd.f32 %v1467, %v1497
    %v1528 = vmul.f32 %v1323, -0.12940952
    %v1529 = vmul.f32 %v1324, -0.12940952
    %v1530 = vmul.f32 %v1325, -0.12940952
    %v1531 = vmul.f32 %v1326, -0.12940952
    %v1532 = vmul.f32 %v1327, -0.12940952
    %v1533 = vmul.f32 %v1328, -0.12940952
    %v1534 = vmul.f32 %v1329, -0.12940952
    %v1535 = vmul.f32 %v1330, -0.12940952
    %v1536 = vmul.f32 %v1331, -0.12940952
    %v1537 = vmul.f32 %v1332, -0.12940952
    %v1538 = vmul.f32 %v1333, -0.12940952
    %v1539 = vmul.f32 %v1334, -0.12940952
    %v1540 = vmul.f32 %v1335, -0.12940952
    %v1541 = vmul.f32 %v1336, -0.12940952
    %v1542 = vmul.f32 %v1337, -0.12940952
    %v1543 = vmul.f32 %v1338, -0.12940952
    %v1544 = vmul.f32 %v1339, -0.12940952
    %v1545 = vmul.f32 %v1340, -0.12940952
    %v1546 = vmul.f32 %v1341, -0.12940952
    %v1547 = vmul.f32 %v1342, -0.12940952
    %v1548 = vmul.f32 %v1343, -0.12940952
    %v1549 = vmul.f32 %v1344, -0.12940952
    %v1550 = vmul.f32 %v1345, -0.12940952
    %v1551 = vmul.f32 %v1346, -0.12940952
    %v1552 = vmul.f32 %v1347, -0.12940952
    %v1553 = vmul.f32 %v1348, -0.12940952
    %v1554 = vmul.f32 %v1349, -0.12940952
    %v1555 = vmul.f32 %v1350, -0.12940952
    %v1556 = vmul.f32 %v1351, -0.12940952
    %v1557 = vmul.f32 %v1352, -0.12940952
    %v1558 = vadd.f32 %v1498, %v1528
    %v1559 = vadd.f32 %v1499, %v1529
    %v1560 = vadd.f32 %v1500, %v1530
    %v1561 = vadd.f32 %v1501, %v1531
    %v1562 = vadd.f32 %v1502, %v1532
    %v1563 = vadd.f32 %v1503, %v1533
    %v1564 = vadd.f32 %v1504, %v1534
    %v1565 = vadd.f32 %v1505, %v1535
    %v1566 = vadd.f32 %v1506, %v1536
    %v1567 = vadd.f32 %v1507, %v1537
    %v1568 = vadd.f32 %v1508, %v1538
    %v1569 = vadd.f32 %v1509, %v1539
    %v1570 = vadd.f32 %v1510, %v1540
    %v1571 = vadd.f32 %v1511, %v1541
    %v1572 = vadd.f32 %v1512, %v1542
    %v1573 = vadd.f32 %v1513, %v1543
    %v1574 = vadd.f32 %v1514, %v1544
    %v1575 = vadd.f32 %v1515, %v1545
    %v1576 = vadd.f32 %v1516, %v1546
    %v1577 = vadd.f32 %v1517, %v1547
    %v1578 = vadd.f32 %v1518, %v1548
    %v1579 = vadd.f32 %v1519, %v1549
    %v1580 = vadd.f32 %v1520, %v1550
    %v1581 = vadd.f32 %v1521, %v1551
    %v1582 = vadd.f32 %v1522, %v1552
    %v1583 = vadd.f32 %v1523, %v1553
    %v1584 = vadd.f32 %v1524, %v1554
    %v1585 = vadd.f32 %v1525, %v1555
    %v1586 = vadd.f32 %v1526, %v1556
    %v1587 = vadd.f32 %v1527, %v1557
    %1588 = vst [vmem:[#allocation2] sm:$0x1f] %v1558
    %1589 = vst [vmem:[#allocation2 + $0x8] sm:$0x1f] %v1559
    %1590 = vst [vmem:[#allocation2 + $0x10] sm:$0x1f] %v1560
    %1591 = vst [vmem:[#allocation2 + $0x18] sm:$0x1f] %v1561
    %1592 = vst [vmem:[#allocation2 + $0x20] sm:$0x1f] %v1562
    %1593 = vst [vmem:[#allocation2 + $0x28] sm:$0x1f] %v1563
    %1594 = vst [vmem:[#allocation2 + $0x30] sm:$0x1f] %v1564
    %1595 = vst [vmem:[#allocation2 + $0x38] sm:$0x1f] %v1565
    %1596 = vst [vmem:[#allocation2 + $0x40] sm:$0x1f] %v1566
    %1597 = vst [vmem:[#allocation2 + $0x48] sm:$0x1f] %v1567
    %1598 = vst [vmem:[#allocation2 + $0x50] sm:$0x1f] %v1568
    %1599 = vst [vmem:[#allocation2 + $0x58] sm:$0x1f] %v1569
    %1600 = vst [vmem:[#allocation2 + $0x60] sm:$0x1f] %v1570
    %1601 = vst [vmem:[#allocation2 + $0x68] sm:$0x1f] %v1571
    %1602 = vst [vmem:[#allocation2 + $0x70] sm:$0x1f] %v1572
    %1603 = vst [vmem:[#allocation2 + $0x78] sm:$0x1f] %v1573
    %1604 = vst [vmem:[#allocation2 + $0x80] sm:$0x1f] %v1574
    %1605 = vst [vmem:[#allocation2 + $0x88] sm:$0x1f] %v1575
    %1606 = vst [vmem:[#allocation2 + $0x90] sm:$0x1f] %v1576
    %1607 = vst [vmem:[#allocation2 + $0x98] sm:$0x1f] %v1577
    %1608 = vst [vmem:[#allocation2 + $0xa0] sm:$0x1f] %v1578
    %1609 = vst [vmem:[#allocation2 + $0xa8] sm:$0x1f] %v1579
    %1610 = vst [vmem:[#allocation2 + $0xb0] sm:$0x1f] %v1580
    %1611 = vst [vmem:[#allocation2 + $0xb8] sm:$0x1f] %v1581
    %1612 = vst [vmem:[#allocation2 + $0xc0] sm:$0x1f] %v1582
    %1613 = vst [vmem:[#allocation2 + $0xc8] sm:$0x1f] %v1583
    %1614 = vst [vmem:[#allocation2 + $0xd0] sm:$0x1f] %v1584
    %1615 = vst [vmem:[#allocation2 + $0xd8] sm:$0x1f] %v1585
    %1616 = vst [vmem:[#allocation2 + $0xe0] sm:$0x1f] %v1586
    %1617 = vst [vmem:[#allocation2 + $0xe8] sm:$0x1f] %v1587
    %v1618 = vmul.f32 %v1353, 0.4829629
    %v1619 = vmul.f32 %v1354, 0.4829629
    %v1620 = vmul.f32 %v1355, 0.4829629
    %v1621 = vmul.f32 %v1356, 0.4829629
    %v1622 = vmul.f32 %v1357, 0.4829629
    %v1623 = vmul.f32 %v1358, 0.4829629
    %v1624 = vmul.f32 %v1360, 0.8365163
    %v1625 = vmul.f32 %v1361, 0.8365163
    %v1626 = vmul.f32 %v1362, 0.8365163
    %v1627 = vmul.f32 %v1363, 0.8365163
    %v1628 = vmul.f32 %v1364, 0.8365163
    %v1629 = vmul.f32 %v1365, 0.8365163
    %v1630 = vadd.f32 %v1618, %v1624
    %v1631 = vadd.f32 %v1619, %v1625
    %v1632 = vadd.f32 %v1620, %v1626
    %v1633 = vadd.f32 %v1621, %v1627
    %v1634 = vadd.f32 %v1622, %v1628
    %v1635 = vadd.f32 %v1623, %v1629
    %v1636 = vmul.f32 %v1366, 0.22414386
    %v1637 = vmul.f32 %v1367, 0.22414386
    %v1638 = vmul.f32 %v1368, 0.22414386
    %v1639 = vmul.f32 %v1369, 0.22414386
    %v1640 = vmul.f32 %v1370, 0.22414386
    %v1641 = vmul.f32 %v1371, 0.22414386
    %v1642 = vadd.f32 %v1630, %v1636
    %v1643 = vadd.f32 %v1631, %v1637
    %v1644 = vadd.f32 %v1632, %v1638
    %v1645 = vadd.f32 %v1633, %v1639
    %v1646 = vadd.f32 %v1634, %v1640
    %v1647 = vadd.f32 %v1635, %v1641
    %v1648 = vmul.f32 %v1372, -0.12940952
    %v1649 = vmul.f32 %v1373, -0.12940952
    %v1650 = vmul.f32 %v1374, -0.12940952
    %v1651 = vmul.f32 %v1375, -0.12940952
    %v1652 = vmul.f32 %v1376, -0.12940952
    %v1653 = vmul.f32 %v1377, -0.12940952
    %v1654 = vadd.f32 %v1642, %v1648
    %v1655 = vadd.f32 %v1643, %v1649
    %v1656 = vadd.f32 %v1644, %v1650
    %v1657 = vadd.f32 %v1645, %v1651
    %v1658 = vadd.f32 %v1646, %v1652
    %v1659 = vadd.f32 %v1647, %v1653
    %s1660 = scalar_lea.vmem [#allocation2], 240
    %1661 = vst [vmem:[%s1660] sm:$0x1f] %v1654
    %1662 = vst [vmem:[%s1660 + $0x8] sm:$0x1f] %v1655
    %1663 = vst [vmem:[%s1660 + $0x10] sm:$0x1f] %v1656
    %1664 = vst [vmem:[%s1660 + $0x18] sm:$0x1f] %v1657
    %1665 = vst [vmem:[%s1660 + $0x20] sm:$0x1f] %v1658
    %1666 = vst [vmem:[%s1660 + $0x28] sm:$0x1f] %v1659
    %v1667 = vmul.f32 %v1232, -0.12940952
    %v1668 = vmul.f32 %v1233, -0.12940952
    %v1669 = vmul.f32 %v1234, -0.12940952
    %v1670 = vmul.f32 %v1235, -0.12940952
    %v1671 = vmul.f32 %v1236, -0.12940952
    %v1672 = vmul.f32 %v1237, -0.12940952
    %v1673 = vmul.f32 %v1238, -0.12940952
    %v1674 = vmul.f32 %v1239, -0.12940952
    %v1675 = vmul.f32 %v1240, -0.12940952
    %v1676 = vmul.f32 %v1241, -0.12940952
    %v1677 = vmul.f32 %v1242, -0.12940952
    %v1678 = vmul.f32 %v1243, -0.12940952
    %v1679 = vmul.f32 %v1244, -0.12940952
    %v1680 = vmul.f32 %v1245, -0.12940952
    %v1681 = vmul.f32 %v1246, -0.12940952
    %v1682 = vmul.f32 %v1247, -0.12940952
    %v1683 = vmul.f32 %v1248, -0.12940952
    %v1684 = vmul.f32 %v1249, -0.12940952
    %v1685 = vmul.f32 %v1250, -0.12940952
    %v1686 = vmul.f32 %v1251, -0.12940952
    %v1687 = vmul.f32 %v1252, -0.12940952
    %v1688 = vmul.f32 %v1253, -0.12940952
    %v1689 = vmul.f32 %v1254, -0.12940952
    %v1690 = vmul.f32 %v1255, -0.12940952
    %v1691 = vmul.f32 %v1256, -0.12940952
    %v1692 = vmul.f32 %v1257, -0.12940952
    %v1693 = vmul.f32 %v1258, -0.12940952
    %v1694 = vmul.f32 %v1259, -0.12940952
    %v1695 = vmul.f32 %v1260, -0.12940952
    %v1696 = vmul.f32 %v1261, -0.12940952
    %v1697 = vmul.f32 %v1263, -0.22414386
    %v1698 = vmul.f32 %v1264, -0.22414386
    %v1699 = vmul.f32 %v1265, -0.22414386
    %v1700 = vmul.f32 %v1266, -0.22414386
    %v1701 = vmul.f32 %v1267, -0.22414386
    %v1702 = vmul.f32 %v1268, -0.22414386
    %v1703 = vmul.f32 %v1269, -0.22414386
    %v1704 = vmul.f32 %v1270, -0.22414386
    %v1705 = vmul.f32 %v1271, -0.22414386
    %v1706 = vmul.f32 %v1272, -0.22414386
    %v1707 = vmul.f32 %v1273, -0.22414386
    %v1708 = vmul.f32 %v1274, -0.22414386
    %v1709 = vmul.f32 %v1275, -0.22414386
    %v1710 = vmul.f32 %v1276, -0.22414386
    %v1711 = vmul.f32 %v1277, -0.22414386
    %v1712 = vmul.f32 %v1278, -0.22414386
    %v1713 = vmul.f32 %v1279, -0.22414386
    %v1714 = vmul.f32 %v1280, -0.22414386
    %v1715 = vmul.f32 %v1281, -0.22414386
    %v1716 = vmul.f32 %v1282, -0.22414386
    %v1717 = vmul.f32 %v1283, -0.22414386
    %v1718 = vmul.f32 %v1284, -0.22414386
    %v1719 = vmul.f32 %v1285, -0.22414386
    %v1720 = vmul.f32 %v1286, -0.22414386
    %v1721 = vmul.f32 %v1287, -0.22414386
    %v1722 = vmul.f32 %v1288, -0.22414386
    %v1723 = vmul.f32 %v1289, -0.22414386
    %v1724 = vmul.f32 %v1290, -0.22414386
    %v1725 = vmul.f32 %v1291, -0.22414386
    %v1726 = vmul.f32 %v1292, -0.22414386
    %v1727 = vadd.f32 %v1667, %v1697
    %v1728 = vadd.f32 %v1668, %v1698
    %v1729 = vadd.f32 %v1669, %v1699
    %v1730 = vadd.f32 %v1670, %v1700
    %v1731 = vadd.f32 %v1671, %v1701
    %v1732 = vadd.f32 %v1672, %v1702
    %v1733 = vadd.f32 %v1673, %v1703
    %v1734 = vadd.f32 %v1674, %v1704
    %v1735 = vadd.f32 %v1675, %v1705
    %v1736 = vadd.f32 %v1676, %v1706
    %v1737 = vadd.f32 %v1677, %v1707
    %v1738 = vadd.f32 %v1678, %v1708
    %v1739 = vadd.f32 %v1679, %v1709
    %v1740 = vadd.f32 %v1680, %v1710
    %v1741 = vadd.f32 %v1681, %v1711
    %v1742 = vadd.f32 %v1682, %v1712
    %v1743 = vadd.f32 %v1683, %v1713
    %v1744 = vadd.f32 %v1684, %v1714
    %v1745 = vadd.f32 %v1685, %v1715
    %v1746 = vadd.f32 %v1686, %v1716
    %v1747 = vadd.f32 %v1687, %v1717
    %v1748 = vadd.f32 %v1688, %v1718
    %v1749 = vadd.f32 %v1689, %v1719
    %v1750 = vadd.f32 %v1690, %v1720
    %v1751 = vadd.f32 %v1691, %v1721
    %v1752 = vadd.f32 %v1692, %v1722
    %v1753 = vadd.f32 %v1693, %v1723
    %v1754 = vadd.f32 %v1694, %v1724
    %v1755 = vadd.f32 %v1695, %v1725
    %v1756 = vadd.f32 %v1696, %v1726
    %v1757 = vmul.f32 %v1293, 0.8365163
    %v1758 = vmul.f32 %v1294, 0.8365163
    %v1759 = vmul.f32 %v1295, 0.8365163
    %v1760 = vmul.f32 %v1296, 0.8365163
    %v1761 = vmul.f32 %v1297, 0.8365163
    %v1762 = vmul.f32 %v1298, 0.8365163
    %v1763 = vmul.f32 %v1299, 0.8365163
    %v1764 = vmul.f32 %v1300, 0.8365163
    %v1765 = vmul.f32 %v1301, 0.8365163
    %v1766 = vmul.f32 %v1302, 0.8365163
    %v1767 = vmul.f32 %v1303, 0.8365163
    %v1768 = vmul.f32 %v1304, 0.8365163
    %v1769 = vmul.f32 %v1305, 0.8365163
    %v1770 = vmul.f32 %v1306, 0.8365163
    %v1771 = vmul.f32 %v1307, 0.8365163
    %v1772 = vmul.f32 %v1308, 0.8365163
    %v1773 = vmul.f32 %v1309, 0.8365163
    %v1774 = vmul.f32 %v1310, 0.8365163
    %v1775 = vmul.f32 %v1311, 0.8365163
    %v1776 = vmul.f32 %v1312, 0.8365163
    %v1777 = vmul.f32 %v1313, 0.8365163
    %v1778 = vmul.f32 %v1314, 0.8365163
    %v1779 = vmul.f32 %v1315, 0.8365163
    %v1780 = vmul.f32 %v1316, 0.8365163
    %v1781 = vmul.f32 %v1317, 0.8365163
    %v1782 = vmul.f32 %v1318, 0.8365163
    %v1783 = vmul.f32 %v1319, 0.8365163
    %v1784 = vmul.f32 %v1320, 0.8365163
    %v1785 = vmul.f32 %v1321, 0.8365163
    %v1786 = vmul.f32 %v1322, 0.8365163
    %v1787 = vadd.f32 %v1727, %v1757
    %v1788 = vadd.f32 %v1728, %v1758
    %v1789 = vadd.f32 %v1729, %v1759
    %v1790 = vadd.f32 %v1730, %v1760
    %v1791 = vadd.f32 %v1731, %v1761
    %v1792 = vadd.f32 %v1732, %v1762
    %v1793 = vadd.f32 %v1733, %v1763
    %v1794 = vadd.f32 %v1734, %v1764
    %v1795 = vadd.f32 %v1735, %v1765
    %v1796 = vadd.f32 %v1736, %v1766
    %v1797 = vadd.f32 %v1737, %v1767
    %v1798 = vadd.f32 %v1738, %v1768
    %v1799 = vadd.f32 %v1739, %v1769
    %v1800 = vadd.f32 %v1740, %v1770
    %v1801 = vadd.f32 %v1741, %v1771
    %v1802 = vadd.f32 %v1742, %v1772
    %v1803 = vadd.f32 %v1743, %v1773
    %v1804 = vadd.f32 %v1744, %v1774
    %v1805 = vadd.f32 %v1745, %v1775
    %v1806 = vadd.f32 %v1746, %v1776
    %v1807 = vadd.f32 %v1747, %v1777
    %v1808 = vadd.f32 %v1748, %v1778
    %v1809 = vadd.f32 %v1749, %v1779
    %v1810 = vadd.f32 %v1750, %v1780
    %v1811 = vadd.f32 %v1751, %v1781
    %v1812 = vadd.f32 %v1752, %v1782
    %v1813 = vadd.f32 %v1753, %v1783
    %v1814 = vadd.f32 %v1754, %v1784
    %v1815 = vadd.f32 %v1755, %v1785
    %v1816 = vadd.f32 %v1756, %v1786
    %v1817 = vmul.f32 %v1323, -0.4829629
    %v1818 = vmul.f32 %v1324, -0.4829629
    %v1819 = vmul.f32 %v1325, -0.4829629
    %v1820 = vmul.f32 %v1326, -0.4829629
    %v1821 = vmul.f32 %v1327, -0.4829629
    %v1822 = vmul.f32 %v1328, -0.4829629
    %v1823 = vmul.f32 %v1329, -0.4829629
    %v1824 = vmul.f32 %v1330, -0.4829629
    %v1825 = vmul.f32 %v1331, -0.4829629
    %v1826 = vmul.f32 %v1332, -0.4829629
    %v1827 = vmul.f32 %v1333, -0.4829629
    %v1828 = vmul.f32 %v1334, -0.4829629
    %v1829 = vmul.f32 %v1335, -0.4829629
    %v1830 = vmul.f32 %v1336, -0.4829629
    %v1831 = vmul.f32 %v1337, -0.4829629
    %v1832 = vmul.f32 %v1338, -0.4829629
    %v1833 = vmul.f32 %v1339, -0.4829629
    %v1834 = vmul.f32 %v1340, -0.4829629
    %v1835 = vmul.f32 %v1341, -0.4829629
    %v1836 = vmul.f32 %v1342, -0.4829629
    %v1837 = vmul.f32 %v1343, -0.4829629
    %v1838 = vmul.f32 %v1344, -0.4829629
    %v1839 = vmul.f32 %v1345, -0.4829629
    %v1840 = vmul.f32 %v1346, -0.4829629
    %v1841 = vmul.f32 %v1347, -0.4829629
    %v1842 = vmul.f32 %v1348, -0.4829629
    %v1843 = vmul.f32 %v1349, -0.4829629
    %v1844 = vmul.f32 %v1350, -0.4829629
    %v1845 = vmul.f32 %v1351, -0.4829629
    %v1846 = vmul.f32 %v1352, -0.4829629
    %v1847 = vadd.f32 %v1787, %v1817
    %v1848 = vadd.f32 %v1788, %v1818
    %v1849 = vadd.f32 %v1789, %v1819
    %v1850 = vadd.f32 %v1790, %v1820
    %v1851 = vadd.f32 %v1791, %v1821
    %v1852 = vadd.f32 %v1792, %v1822
    %v1853 = vadd.f32 %v1793, %v1823
    %v1854 = vadd.f32 %v1794, %v1824
    %v1855 = vadd.f32 %v1795, %v1825
    %v1856 = vadd.f32 %v1796, %v1826
    %v1857 = vadd.f32 %v1797, %v1827
    %v1858 = vadd.f32 %v1798, %v1828
    %v1859 = vadd.f32 %v1799, %v1829
    %v1860 = vadd.f32 %v1800, %v1830
    %v1861 = vadd.f32 %v1801, %v1831
    %v1862 = vadd.f32 %v1802, %v1832
    %v1863 = vadd.f32 %v1803, %v1833
    %v1864 = vadd.f32 %v1804, %v1834
    %v1865 = vadd.f32 %v1805, %v1835
    %v1866 = vadd.f32 %v1806, %v1836
    %v1867 = vadd.f32 %v1807, %v1837
    %v1868 = vadd.f32 %v1808, %v1838
    %v1869 = vadd.f32 %v1809, %v1839
    %v1870 = vadd.f32 %v1810, %v1840
    %v1871 = vadd.f32 %v1811, %v1841
    %v1872 = vadd.f32 %v1812, %v1842
    %v1873 = vadd.f32 %v1813, %v1843
    %v1874 = vadd.f32 %v1814, %v1844
    %v1875 = vadd.f32 %v1815, %v1845
    %v1876 = vadd.f32 %v1816, %v1846
    %s1877 = scalar_lea.vmem [#allocation2], 288
    %1878 = vst [vmem:[%s1877] sm:$0x1f] %v1847
    %1879 = vst [vmem:[%s1877 + $0x8] sm:$0x1f] %v1848
    %1880 = vst [vmem:[%s1877 + $0x10] sm:$0x1f] %v1849
    %1881 = vst [vmem:[%s1877 + $0x18] sm:$0x1f] %v1850
    %1882 = vst [vmem:[%s1877 + $0x20] sm:$0x1f] %v1851
    %1883 = vst [vmem:[%s1877 + $0x28] sm:$0x1f] %v1852
    %1884 = vst [vmem:[%s1877 + $0x30] sm:$0x1f] %v1853
    %1885 = vst [vmem:[%s1877 + $0x38] sm:$0x1f] %v1854
    %1886 = vst [vmem:[%s1877 + $0x40] sm:$0x1f] %v1855
    %1887 = vst [vmem:[%s1877 + $0x48] sm:$0x1f] %v1856
    %1888 = vst [vmem:[%s1877 + $0x50] sm:$0x1f] %v1857
    %1889 = vst [vmem:[%s1877 + $0x58] sm:$0x1f] %v1858
    %1890 = vst [vmem:[%s1877 + $0x60] sm:$0x1f] %v1859
    %1891 = vst [vmem:[%s1877 + $0x68] sm:$0x1f] %v1860
    %1892 = vst [vmem:[%s1877 + $0x70] sm:$0x1f] %v1861
    %1893 = vst [vmem:[%s1877 + $0x78] sm:$0x1f] %v1862
    %1894 = vst [vmem:[%s1877 + $0x80] sm:$0x1f] %v1863
    %1895 = vst [vmem:[%s1877 + $0x88] sm:$0x1f] %v1864
    %1896 = vst [vmem:[%s1877 + $0x90] sm:$0x1f] %v1865
    %1897 = vst [vmem:[%s1877 + $0x98] sm:$0x1f] %v1866
    %1898 = vst [vmem:[%s1877 + $0xa0] sm:$0x1f] %v1867
    %1899 = vst [vmem:[%s1877 + $0xa8] sm:$0x1f] %v1868
    %1900 = vst [vmem:[%s1877 + $0xb0] sm:$0x1f] %v1869
    %1901 = vst [vmem:[%s1877 + $0xb8] sm:$0x1f] %v1870
    %1902 = vst [vmem:[%s1877 + $0xc0] sm:$0x1f] %v1871
    %1903 = vst [vmem:[%s1877 + $0xc8] sm:$0x1f] %v1872
    %1904 = vst [vmem:[%s1877 + $0xd0] sm:$0x1f] %v1873
    %1905 = vst [vmem:[%s1877 + $0xd8] sm:$0x1f] %v1874
    %1906 = vst [vmem:[%s1877 + $0xe0] sm:$0x1f] %v1875
    %1907 = vst [vmem:[%s1877 + $0xe8] sm:$0x1f] %v1876
    %v1908 = vmul.f32 %v1353, -0.12940952
    %v1909 = vmul.f32 %v1354, -0.12940952
    %v1910 = vmul.f32 %v1355, -0.12940952
    %v1911 = vmul.f32 %v1356, -0.12940952
    %v1912 = vmul.f32 %v1357, -0.12940952
    %v1913 = vmul.f32 %v1358, -0.12940952
    %v1914 = vmul.f32 %v1360, -0.22414386
    %v1915 = vmul.f32 %v1361, -0.22414386
    %v1916 = vmul.f32 %v1362, -0.22414386
    %v1917 = vmul.f32 %v1363, -0.22414386
    %v1918 = vmul.f32 %v1364, -0.22414386
    %v1919 = vmul.f32 %v1365, -0.22414386
    %v1920 = vadd.f32 %v1908, %v1914
    %v1921 = vadd.f32 %v1909, %v1915
    %v1922 = vadd.f32 %v1910, %v1916
    %v1923 = vadd.f32 %v1911, %v1917
    %v1924 = vadd.f32 %v1912, %v1918
    %v1925 = vadd.f32 %v1913, %v1919
    %v1926 = vmul.f32 %v1366, 0.8365163
    %v1927 = vmul.f32 %v1367, 0.8365163
    %v1928 = vmul.f32 %v1368, 0.8365163
    %v1929 = vmul.f32 %v1369, 0.8365163
    %v1930 = vmul.f32 %v1370, 0.8365163
    %v1931 = vmul.f32 %v1371, 0.8365163
    %v1932 = vadd.f32 %v1920, %v1926
    %v1933 = vadd.f32 %v1921, %v1927
    %v1934 = vadd.f32 %v1922, %v1928
    %v1935 = vadd.f32 %v1923, %v1929
    %v1936 = vadd.f32 %v1924, %v1930
    %v1937 = vadd.f32 %v1925, %v1931
    %v1938 = vmul.f32 %v1372, -0.4829629
    %v1939 = vmul.f32 %v1373, -0.4829629
    %v1940 = vmul.f32 %v1374, -0.4829629
    %v1941 = vmul.f32 %v1375, -0.4829629
    %v1942 = vmul.f32 %v1376, -0.4829629
    %v1943 = vmul.f32 %v1377, -0.4829629
    %v1944 = vadd.f32 %v1932, %v1938
    %v1945 = vadd.f32 %v1933, %v1939
    %v1946 = vadd.f32 %v1934, %v1940
    %v1947 = vadd.f32 %v1935, %v1941
    %v1948 = vadd.f32 %v1936, %v1942
    %v1949 = vadd.f32 %v1937, %v1943
    %s1950 = scalar_lea.vmem [#allocation2], 528
    %1951 = vst [vmem:[%s1950] sm:$0x1f] %v1944
    %1952 = vst [vmem:[%s1950 + $0x8] sm:$0x1f] %v1945
    %1953 = vst [vmem:[%s1950 + $0x10] sm:$0x1f] %v1946
    %1954 = vst [vmem:[%s1950 + $0x18] sm:$0x1f] %v1947
    %1955 = vst [vmem:[%s1950 + $0x20] sm:$0x1f] %v1948
    %1956 = vst [vmem:[%s1950 + $0x28] sm:$0x1f] %v1949
    %s1957 = scalar_lea.vmem [#allocation4], 480
    %v1958 = vld [vmem:[%s1957] sm:$0x1f]
    %v1959 = vld [vmem:[%s1957 + $0x8] sm:$0x1f]
    %v1960 = vld [vmem:[%s1957 + $0x10] sm:$0x1f]
    %v1961 = vld [vmem:[%s1957 + $0x18] sm:$0x1f]
    %v1962 = vld [vmem:[%s1957 + $0x20] sm:$0x1f]
    %v1963 = vld [vmem:[%s1957 + $0x28] sm:$0x1f]
    %v1964 = vld [vmem:[%s1957 + $0x30] sm:$0x1f]
    %v1965 = vld [vmem:[%s1957 + $0x38] sm:$0x1f]
    %v1966 = vld [vmem:[%s1957 + $0x40] sm:$0x1f]
    %v1967 = vld [vmem:[%s1957 + $0x48] sm:$0x1f]
    %v1968 = vld [vmem:[%s1957 + $0x50] sm:$0x1f]
    %v1969 = vld [vmem:[%s1957 + $0x58] sm:$0x1f]
    %v1970 = vld [vmem:[%s1957 + $0x60] sm:$0x1f]
    %v1971 = vld [vmem:[%s1957 + $0x68] sm:$0x1f]
    %v1972 = vld [vmem:[%s1957 + $0x70] sm:$0x1f]
    %v1973 = vld [vmem:[%s1957 + $0x78] sm:$0x1f]
    %v1974 = vld [vmem:[%s1957 + $0x80] sm:$0x1f]
    %v1975 = vld [vmem:[%s1957 + $0x88] sm:$0x1f]
    %v1976 = vld [vmem:[%s1957 + $0x90] sm:$0x1f]
    %v1977 = vld [vmem:[%s1957 + $0x98] sm:$0x1f]
    %v1978 = vld [vmem:[%s1957 + $0xa0] sm:$0x1f]
    %v1979 = vld [vmem:[%s1957 + $0xa8] sm:$0x1f]
    %v1980 = vld [vmem:[%s1957 + $0xb0] sm:$0x1f]
    %v1981 = vld [vmem:[%s1957 + $0xb8] sm:$0x1f]
    %v1982 = vld [vmem:[%s1957 + $0xc0] sm:$0x1f]
    %v1983 = vld [vmem:[%s1957 + $0xc8] sm:$0x1f]
    %v1984 = vld [vmem:[%s1957 + $0xd0] sm:$0x1f]
    %v1985 = vld [vmem:[%s1957 + $0xd8] sm:$0x1f]
    %v1986 = vld [vmem:[%s1957 + $0xe0] sm:$0x1f]
    %v1987 = vld [vmem:[%s1957 + $0xe8] sm:$0x1f]
    %s1988 = scalar_lea.vmem [#allocation4], 720
    %v1989 = vld [vmem:[%s1988] sm:$0x1f]
    %v1990 = vld [vmem:[%s1988 + $0x8] sm:$0x1f]
    %v1991 = vld [vmem:[%s1988 + $0x10] sm:$0x1f]
    %v1992 = vld [vmem:[%s1988 + $0x18] sm:$0x1f]
    %v1993 = vld [vmem:[%s1988 + $0x20] sm:$0x1f]
    %v1994 = vld [vmem:[%s1988 + $0x28] sm:$0x1f]
    %v1995 = vld [vmem:[%s1988 + $0x30] sm:$0x1f]
    %v1996 = vld [vmem:[%s1988 + $0x38] sm:$0x1f]
    %v1997 = vld [vmem:[%s1988 + $0x40] sm:$0x1f]
    %v1998 = vld [vmem:[%s1988 + $0x48] sm:$0x1f]
    %v1999 = vld [vmem:[%s1988 + $0x50] sm:$0x1f]
    %v2000 = vld [vmem:[%s1988 + $0x58] sm:$0x1f]
    %v2001 = vld [vmem:[%s1988 + $0x60] sm:$0x1f]
    %v2002 = vld [vmem:[%s1988 + $0x68] sm:$0x1f]
    %v2003 = vld [vmem:[%s1988 + $0x70] sm:$0x1f]
    %v2004 = vld [vmem:[%s1988 + $0x78] sm:$0x1f]
    %v2005 = vld [vmem:[%s1988 + $0x80] sm:$0x1f]
    %v2006 = vld [vmem:[%s1988 + $0x88] sm:$0x1f]
    %v2007 = vld [vmem:[%s1988 + $0x90] sm:$0x1f]
    %v2008 = vld [vmem:[%s1988 + $0x98] sm:$0x1f]
    %v2009 = vld [vmem:[%s1988 + $0xa0] sm:$0x1f]
    %v2010 = vld [vmem:[%s1988 + $0xa8] sm:$0x1f]
    %v2011 = vld [vmem:[%s1988 + $0xb0] sm:$0x1f]
    %v2012 = vld [vmem:[%s1988 + $0xb8] sm:$0x1f]
    %v2013 = vld [vmem:[%s1988 + $0xc0] sm:$0x1f]
    %v2014 = vld [vmem:[%s1988 + $0xc8] sm:$0x1f]
    %v2015 = vld [vmem:[%s1988 + $0xd0] sm:$0x1f]
    %v2016 = vld [vmem:[%s1988 + $0xd8] sm:$0x1f]
    %v2017 = vld [vmem:[%s1988 + $0xe0] sm:$0x1f]
    %v2018 = vld [vmem:[%s1988 + $0xe8] sm:$0x1f]
    %v2019 = vld [vmem:[%s1957 + $0x1] sm:$0x1f]
    %v2020 = vld [vmem:[%s1957 + $0x9] sm:$0x1f]
    %v2021 = vld [vmem:[%s1957 + $0x11] sm:$0x1f]
    %v2022 = vld [vmem:[%s1957 + $0x19] sm:$0x1f]
    %v2023 = vld [vmem:[%s1957 + $0x21] sm:$0x1f]
    %v2024 = vld [vmem:[%s1957 + $0x29] sm:$0x1f]
    %v2025 = vld [vmem:[%s1957 + $0x31] sm:$0x1f]
    %v2026 = vld [vmem:[%s1957 + $0x39] sm:$0x1f]
    %v2027 = vld [vmem:[%s1957 + $0x41] sm:$0x1f]
    %v2028 = vld [vmem:[%s1957 + $0x49] sm:$0x1f]
    %v2029 = vld [vmem:[%s1957 + $0x51] sm:$0x1f]
    %v2030 = vld [vmem:[%s1957 + $0x59] sm:$0x1f]
    %v2031 = vld [vmem:[%s1957 + $0x61] sm:$0x1f]
    %v2032 = vld [vmem:[%s1957 + $0x69] sm:$0x1f]
    %v2033 = vld [vmem:[%s1957 + $0x71] sm:$0x1f]
    %v2034 = vld [vmem:[%s1957 + $0x79] sm:$0x1f]
    %v2035 = vld [vmem:[%s1957 + $0x81] sm:$0x1f]
    %v2036 = vld [vmem:[%s1957 + $0x89] sm:$0x1f]
    %v2037 = vld [vmem:[%s1957 + $0x91] sm:$0x1f]
    %v2038 = vld [vmem:[%s1957 + $0x99] sm:$0x1f]
    %v2039 = vld [vmem:[%s1957 + $0xa1] sm:$0x1f]
    %v2040 = vld [vmem:[%s1957 + $0xa9] sm:$0x1f]
    %v2041 = vld [vmem:[%s1957 + $0xb1] sm:$0x1f]
    %v2042 = vld [vmem:[%s1957 + $0xb9] sm:$0x1f]
    %v2043 = vld [vmem:[%s1957 + $0xc1] sm:$0x1f]
    %v2044 = vld [vmem:[%s1957 + $0xc9] sm:$0x1f]
    %v2045 = vld [vmem:[%s1957 + $0xd1] sm:$0x1f]
    %v2046 = vld [vmem:[%s1957 + $0xd9] sm:$0x1f]
    %v2047 = vld [vmem:[%s1957 + $0xe1] sm:$0x1f]
    %v2048 = vld [vmem:[%s1957 + $0xe9] sm:$0x1f]
    %v2049 = vld [vmem:[%s1988 + $0x1] sm:$0x1f]
    %v2050 = vld [vmem:[%s1988 + $0x9] sm:$0x1f]
    %v2051 = vld [vmem:[%s1988 + $0x11] sm:$0x1f]
    %v2052 = vld [vmem:[%s1988 + $0x19] sm:$0x1f]
    %v2053 = vld [vmem:[%s1988 + $0x21] sm:$0x1f]
    %v2054 = vld [vmem:[%s1988 + $0x29] sm:$0x1f]
    %v2055 = vld [vmem:[%s1988 + $0x31] sm:$0x1f]
    %v2056 = vld [vmem:[%s1988 + $0x39] sm:$0x1f]
    %v2057 = vld [vmem:[%s1988 + $0x41] sm:$0x1f]
    %v2058 = vld [vmem:[%s1988 + $0x49] sm:$0x1f]
    %v2059 = vld [vmem:[%s1988 + $0x51] sm:$0x1f]
    %v2060 = vld [vmem:[%s1988 + $0x59] sm:$0x1f]
    %v2061 = vld [vmem:[%s1988 + $0x61] sm:$0x1f]
    %v2062 = vld [vmem:[%s1988 + $0x69] sm:$0x1f]
    %v2063 = vld [vmem:[%s1988 + $0x71] sm:$0x1f]
    %v2064 = vld [vmem:[%s1988 + $0x79] sm:$0x1f]
    %v2065 = vld [vmem:[%s1988 + $0x81] sm:$0x1f]
    %v2066 = vld [vmem:[%s1988 + $0x89] sm:$0x1f]
    %v2067 = vld [vmem:[%s1988 + $0x91] sm:$0x1f]
    %v2068 = vld [vmem:[%s1988 + $0x99] sm:$0x1f]
    %v2069 = vld [vmem:[%s1988 + $0xa1] sm:$0x1f]
    %v2070 = vld [vmem:[%s1988 + $0xa9] sm:$0x1f]
    %v2071 = vld [vmem:[%s1988 + $0xb1] sm:$0x1f]
    %v2072 = vld [vmem:[%s1988 + $0xb9] sm:$0x1f]
    %v2073 = vld [vmem:[%s1988 + $0xc1] sm:$0x1f]
    %v2074 = vld [vmem:[%s1988 + $0xc9] sm:$0x1f]
    %v2075 = vld [vmem:[%s1988 + $0xd1] sm:$0x1f]
    %v2076 = vld [vmem:[%s1988 + $0xd9] sm:$0x1f]
    %v2077 = vld [vmem:[%s1988 + $0xe1] sm:$0x1f]
    %v2078 = vld [vmem:[%s1988 + $0xe9] sm:$0x1f]
    %s2079 = scalar_lea.vmem [#allocation5], 96
    %v2080 = vld [vmem:[%s2079] sm:$0x1f]
    %v2081 = vld [vmem:[%s2079 + $0x8] sm:$0x1f]
    %v2082 = vld [vmem:[%s2079 + $0x10] sm:$0x1f]
    %v2083 = vld [vmem:[%s2079 + $0x18] sm:$0x1f]
    %v2084 = vld [vmem:[%s2079 + $0x20] sm:$0x1f]
    %v2085 = vld [vmem:[%s2079 + $0x28] sm:$0x1f]
    %s2086 = scalar_lea.vmem [#allocation5], 144
    %v2087 = vld [vmem:[%s2086] sm:$0x1f]
    %v2088 = vld [vmem:[%s2086 + $0x8] sm:$0x1f]
    %v2089 = vld [vmem:[%s2086 + $0x10] sm:$0x1f]
    %v2090 = vld [vmem:[%s2086 + $0x18] sm:$0x1f]
    %v2091 = vld [vmem:[%s2086 + $0x20] sm:$0x1f]
    %v2092 = vld [vmem:[%s2086 + $0x28] sm:$0x1f]
    %v2093 = vld [vmem:[%s2079 + $0x1] sm:$0x1f]
    %v2094 = vld [vmem:[%s2079 + $0x9] sm:$0x1f]
    %v2095 = vld [vmem:[%s2079 + $0x11] sm:$0x1f]
    %v2096 = vld [vmem:[%s2079 + $0x19] sm:$0x1f]
    %v2097 = vld [vmem:[%s2079 + $0x21] sm:$0x1f]
    %v2098 = vld [vmem:[%s2079 + $0x29] sm:$0x1f]
    %v2099 = vld [vmem:[%s2086 + $0x1] sm:$0x1f]
    %v2100 = vld [vmem:[%s2086 + $0x9] sm:$0x1f]
    %v2101 = vld [vmem:[%s2086 + $0x11] sm:$0x1f]
    %v2102 = vld [vmem:[%s2086 + $0x19] sm:$0x1f]
    %v2103 = vld [vmem:[%s2086 + $0x21] sm:$0x1f]
    %v2104 = vld [vmem:[%s2086 + $0x29] sm:$0x1f]
    %v2105 = vmul.f32 %v1958, 0.4829629
    %v2106 = vmul.f32 %v1959, 0.4829629
    %v2107 = vmul.f32 %v1960, 0.4829629
    %v2108 = vmul.f32 %v1961, 0.4829629
    %v2109 = vmul.f32 %v1962, 0.4829629
    %v2110 = vmul.f32 %v1963, 0.4829629
    %v2111 = vmul.f32 %v1964, 0.4829629
    %v2112 = vmul.f32 %v1965, 0.4829629
    %v2113 = vmul.f32 %v1966, 0.4829629
    %v2114 = vmul.f32 %v1967, 0.4829629
    %v2115 = vmul.f32 %v1968, 0.4829629
    %v2116 = vmul.f32 %v1969, 0.4829629
    %v2117 = vmul.f32 %v1970, 0.4829629
    %v2118 = vmul.f32 %v1971, 0.4829629
    %v2119 = vmul.f32 %v1972, 0.4829629
    %v2120 = vmul.f32 %v1973, 0.4829629
    %v2121 = vmul.f32 %v1974, 0.4829629
    %v2122 = vmul.f32 %v1975, 0.4829629
    %v2123 = vmul.f32 %v1976, 0.4829629
    %v2124 = vmul.f32 %v1977, 0.4829629
    %v2125 = vmul.f32 %v1978, 0.4829629
    %v2126 = vmul.f32 %v1979, 0.4829629
    %v2127 = vmul.f32 %v1980, 0.4829629
    %v2128 = vmul.f32 %v1981, 0.4829629
    %v2129 = vmul.f32 %v1982, 0.4829629
    %v2130 = vmul.f32 %v1983, 0.4829629
    %v2131 = vmul.f32 %v1984, 0.4829629
    %v2132 = vmul.f32 %v1985, 0.4829629
    %v2133 = vmul.f32 %v1986, 0.4829629
    %v2134 = vmul.f32 %v1987, 0.4829629
    %v2135 = vmul.f32 %v1989, 0.8365163
    %v2136 = vmul.f32 %v1990, 0.8365163
    %v2137 = vmul.f32 %v1991, 0.8365163
    %v2138 = vmul.f32 %v1992, 0.8365163
    %v2139 = vmul.f32 %v1993, 0.8365163
    %v2140 = vmul.f32 %v1994, 0.8365163
    %v2141 = vmul.f32 %v1995, 0.8365163
    %v2142 = vmul.f32 %v1996, 0.8365163
    %v2143 = vmul.f32 %v1997, 0.8365163
    %v2144 = vmul.f32 %v1998, 0.8365163
    %v2145 = vmul.f32 %v1999, 0.8365163
    %v2146 = vmul.f32 %v2000, 0.8365163
    %v2147 = vmul.f32 %v2001, 0.8365163
    %v2148 = vmul.f32 %v2002, 0.8365163
    %v2149 = vmul.f32 %v2003, 0.8365163
    %v2150 = vmul.f32 %v2004, 0.8365163
    %v2151 = vmul.f32 %v2005, 0.8365163
    %v2152 = vmul.f32 %v2006, 0.8365163
    %v2153 = vmul.f32 %v2007, 0.8365163
    %v2154 = vmul.f32 %v2008, 0.8365163
    %v2155 = vmul.f32 %v2009, 0.8365163
    %v2156 = vmul.f32 %v2010, 0.8365163
    %v2157 = vmul.f32 %v2011, 0.8365163
    %v2158 = vmul.f32 %v2012, 0.8365163
    %v2159 = vmul.f32 %v2013, 0.8365163
    %v2160 = vmul.f32 %v2014, 0.8365163
    %v2161 = vmul.f32 %v2015, 0.8365163
    %v2162 = vmul.f32 %v2016, 0.8365163
    %v2163 = vmul.f32 %v2017, 0.8365163
    %v2164 = vmul.f32 %v2018, 0.8365163
    %v2165 = vadd.f32 %v2105, %v2135
    %v2166 = vadd.f32 %v2106, %v2136
    %v2167 = vadd.f32 %v2107, %v2137
    %v2168 = vadd.f32 %v2108, %v2138
    %v2169 = vadd.f32 %v2109, %v2139
    %v2170 = vadd.f32 %v2110, %v2140
    %v2171 = vadd.f32 %v2111, %v2141
    %v2172 = vadd.f32 %v2112, %v2142
    %v2173 = vadd.f32 %v2113, %v2143
    %v2174 = vadd.f32 %v2114, %v2144
    %v2175 = vadd.f32 %v2115, %v2145
    %v2176 = vadd.f32 %v2116, %v2146
    %v2177 = vadd.f32 %v2117, %v2147
    %v2178 = vadd.f32 %v2118, %v2148
    %v2179 = vadd.f32 %v2119, %v2149
    %v2180 = vadd.f32 %v2120, %v2150
    %v2181 = vadd.f32 %v2121, %v2151
    %v2182 = vadd.f32 %v2122, %v2152
    %v2183 = vadd.f32 %v2123, %v2153
    %v2184 = vadd.f32 %v2124, %v2154
    %v2185 = vadd.f32 %v2125, %v2155
    %v2186 = vadd.f32 %v2126, %v2156
    %v2187 = vadd.f32 %v2127, %v2157
    %v2188 = vadd.f32 %v2128, %v2158
    %v2189 = vadd.f32 %v2129, %v2159
    %v2190 = vadd.f32 %v2130, %v2160
    %v2191 = vadd.f32 %v2131, %v2161
    %v2192 = vadd.f32 %v2132, %v2162
    %v2193 = vadd.f32 %v2133, %v2163
    %v2194 = vadd.f32 %v2134, %v2164
    %v2195 = vmul.f32 %v2019, 0.22414386
    %v2196 = vmul.f32 %v2020, 0.22414386
    %v2197 = vmul.f32 %v2021, 0.22414386
    %v2198 = vmul.f32 %v2022, 0.22414386
    %v2199 = vmul.f32 %v2023, 0.22414386
    %v2200 = vmul.f32 %v2024, 0.22414386
    %v2201 = vmul.f32 %v2025, 0.22414386
    %v2202 = vmul.f32 %v2026, 0.22414386
    %v2203 = vmul.f32 %v2027, 0.22414386
    %v2204 = vmul.f32 %v2028, 0.22414386
    %v2205 = vmul.f32 %v2029, 0.22414386
    %v2206 = vmul.f32 %v2030, 0.22414386
    %v2207 = vmul.f32 %v2031, 0.22414386
    %v2208 = vmul.f32 %v2032, 0.22414386
    %v2209 = vmul.f32 %v2033, 0.22414386
    %v2210 = vmul.f32 %v2034, 0.22414386
    %v2211 = vmul.f32 %v2035, 0.22414386
    %v2212 = vmul.f32 %v2036, 0.22414386
    %v2213 = vmul.f32 %v2037, 0.22414386
    %v2214 = vmul.f32 %v2038, 0.22414386
    %v2215 = vmul.f32 %v2039, 0.22414386
    %v2216 = vmul.f32 %v2040, 0.22414386
    %v2217 = vmul.f32 %v2041, 0.22414386
    %v2218 = vmul.f32 %v2042, 0.22414386
    %v2219 = vmul.f32 %v2043, 0.22414386
    %v2220 = vmul.f32 %v2044, 0.22414386
    %v2221 = vmul.f32 %v2045, 0.22414386
    %v2222 = vmul.f32 %v2046, 0.22414386
    %v2223 = vmul.f32 %v2047, 0.22414386
    %v2224 = vmul.f32 %v2048, 0.22414386
    %v2225 = vadd.f32 %v2165, %v2195
    %v2226 = vadd.f32 %v2166, %v2196
    %v2227 = vadd.f32 %v2167, %v2197
    %v2228 = vadd.f32 %v2168, %v2198
    %v2229 = vadd.f32 %v2169, %v2199
    %v2230 = vadd.f32 %v2170, %v2200
    %v2231 = vadd.f32 %v2171, %v2201
    %v2232 = vadd.f32 %v2172, %v2202
    %v2233 = vadd.f32 %v2173, %v2203
    %v2234 = vadd.f32 %v2174, %v2204
    %v2235 = vadd.f32 %v2175, %v2205
    %v2236 = vadd.f32 %v2176, %v2206
    %v2237 = vadd.f32 %v2177, %v2207
    %v2238 = vadd.f32 %v2178, %v2208
    %v2239 = vadd.f32 %v2179, %v2209
    %v2240 = vadd.f32 %v2180, %v2210
    %v2241 = vadd.f32 %v2181, %v2211
    %v2242 = vadd.f32 %v2182, %v2212
    %v2243 = vadd.f32 %v2183, %v2213
    %v2244 = vadd.f32 %v2184, %v2214
    %v2245 = vadd.f32 %v2185, %v2215
    %v2246 = vadd.f32 %v2186, %v2216
    %v2247 = vadd.f32 %v2187, %v2217
    %v2248 = vadd.f32 %v2188, %v2218
    %v2249 = vadd.f32 %v2189, %v2219
    %v2250 = vadd.f32 %v2190, %v2220
    %v2251 = vadd.f32 %v2191, %v2221
    %v2252 = vadd.f32 %v2192, %v2222
    %v2253 = vadd.f32 %v2193, %v2223
    %v2254 = vadd.f32 %v2194, %v2224
    %v2255 = vmul.f32 %v2049, -0.12940952
    %v2256 = vmul.f32 %v2050, -0.12940952
    %v2257 = vmul.f32 %v2051, -0.12940952
    %v2258 = vmul.f32 %v2052, -0.12940952
    %v2259 = vmul.f32 %v2053, -0.12940952
    %v2260 = vmul.f32 %v2054, -0.12940952
    %v2261 = vmul.f32 %v2055, -0.12940952
    %v2262 = vmul.f32 %v2056, -0.12940952
    %v2263 = vmul.f32 %v2057, -0.12940952
    %v2264 = vmul.f32 %v2058, -0.12940952
    %v2265 = vmul.f32 %v2059, -0.12940952
    %v2266 = vmul.f32 %v2060, -0.12940952
    %v2267 = vmul.f32 %v2061, -0.12940952
    %v2268 = vmul.f32 %v2062, -0.12940952
    %v2269 = vmul.f32 %v2063, -0.12940952
    %v2270 = vmul.f32 %v2064, -0.12940952
    %v2271 = vmul.f32 %v2065, -0.12940952
    %v2272 = vmul.f32 %v2066, -0.12940952
    %v2273 = vmul.f32 %v2067, -0.12940952
    %v2274 = vmul.f32 %v2068, -0.12940952
    %v2275 = vmul.f32 %v2069, -0.12940952
    %v2276 = vmul.f32 %v2070, -0.12940952
    %v2277 = vmul.f32 %v2071, -0.12940952
    %v2278 = vmul.f32 %v2072, -0.12940952
    %v2279 = vmul.f32 %v2073, -0.12940952
    %v2280 = vmul.f32 %v2074, -0.12940952
    %v2281 = vmul.f32 %v2075, -0.12940952
    %v2282 = vmul.f32 %v2076, -0.12940952
    %v2283 = vmul.f32 %v2077, -0.12940952
    %v2284 = vmul.f32 %v2078, -0.12940952
    %v2285 = vadd.f32 %v2225, %v2255
    %v2286 = vadd.f32 %v2226, %v2256
    %v2287 = vadd.f32 %v2227, %v2257
    %v2288 = vadd.f32 %v2228, %v2258
    %v2289 = vadd.f32 %v2229, %v2259
    %v2290 = vadd.f32 %v2230, %v2260
    %v2291 = vadd.f32 %v2231, %v2261
    %v2292 = vadd.f32 %v2232, %v2262
    %v2293 = vadd.f32 %v2233, %v2263
    %v2294 = vadd.f32 %v2234, %v2264
    %v2295 = vadd.f32 %v2235, %v2265
    %v2296 = vadd.f32 %v2236, %v2266
    %v2297 = vadd.f32 %v2237, %v2267
    %v2298 = vadd.f32 %v2238, %v2268
    %v2299 = vadd.f32 %v2239, %v2269
    %v2300 = vadd.f32 %v2240, %v2270
    %v2301 = vadd.f32 %v2241, %v2271
    %v2302 = vadd.f32 %v2242, %v2272
    %v2303 = vadd.f32 %v2243, %v2273
    %v2304 = vadd.f32 %v2244, %v2274
    %v2305 = vadd.f32 %v2245, %v2275
    %v2306 = vadd.f32 %v2246, %v2276
    %v2307 = vadd.f32 %v2247, %v2277
    %v2308 = vadd.f32 %v2248, %v2278
    %v2309 = vadd.f32 %v2249, %v2279
    %v2310 = vadd.f32 %v2250, %v2280
    %v2311 = vadd.f32 %v2251, %v2281
    %v2312 = vadd.f32 %v2252, %v2282
    %v2313 = vadd.f32 %v2253, %v2283
    %v2314 = vadd.f32 %v2254, %v2284
    %s2315 = scalar_lea.vmem [#allocation2], 576
    %2316 = vst [vmem:[%s2315] sm:$0x1f] %v2285
    %2317 = vst [vmem:[%s2315 + $0x8] sm:$0x1f] %v2286
    %2318 = vst [vmem:[%s2315 + $0x10] sm:$0x1f] %v2287
    %2319 = vst [vmem:[%s2315 + $0x18] sm:$0x1f] %v2288
    %2320 = vst [vmem:[%s2315 + $0x20] sm:$0x1f] %v2289
    %2321 = vst [vmem:[%s2315 + $0x28] sm:$0x1f] %v2290
    %2322 = vst [vmem:[%s2315 + $0x30] sm:$0x1f] %v2291
    %2323 = vst [vmem:[%s2315 + $0x38] sm:$0x1f] %v2292
    %2324 = vst [vmem:[%s2315 + $0x40] sm:$0x1f] %v2293
    %2325 = vst [vmem:[%s2315 + $0x48] sm:$0x1f] %v2294
    %2326 = vst [vmem:[%s2315 + $0x50] sm:$0x1f] %v2295
    %2327 = vst [vmem:[%s2315 + $0x58] sm:$0x1f] %v2296
    %2328 = vst [vmem:[%s2315 + $0x60] sm:$0x1f] %v2297
    %2329 = vst [vmem:[%s2315 + $0x68] sm:$0x1f] %v2298
    %2330 = vst [vmem:[%s2315 + $0x70] sm:$0x1f] %v2299
    %2331 = vst [vmem:[%s2315 + $0x78] sm:$0x1f] %v2300
    %2332 = vst [vmem:[%s2315 + $0x80] sm:$0x1f] %v2301
    %2333 = vst [vmem:[%s2315 + $0x88] sm:$0x1f] %v2302
    %2334 = vst [vmem:[%s2315 + $0x90] sm:$0x1f] %v2303
    %2335 = vst [vmem:[%s2315 + $0x98] sm:$0x1f] %v2304
    %2336 = vst [vmem:[%s2315 + $0xa0] sm:$0x1f] %v2305
    %2337 = vst [vmem:[%s2315 + $0xa8] sm:$0x1f] %v2306
    %2338 = vst [vmem:[%s2315 + $0xb0] sm:$0x1f] %v2307
    %2339 = vst [vmem:[%s2315 + $0xb8] sm:$0x1f] %v2308
    %2340 = vst [vmem:[%s2315 + $0xc0] sm:$0x1f] %v2309
    %2341 = vst [vmem:[%s2315 + $0xc8] sm:$0x1f] %v2310
    %2342 = vst [vmem:[%s2315 + $0xd0] sm:$0x1f] %v2311
    %2343 = vst [vmem:[%s2315 + $0xd8] sm:$0x1f] %v2312
    %2344 = vst [vmem:[%s2315 + $0xe0] sm:$0x1f] %v2313
    %2345 = vst [vmem:[%s2315 + $0xe8] sm:$0x1f] %v2314
    %v2346 = vmul.f32 %v2080, 0.4829629
    %v2347 = vmul.f32 %v2081, 0.4829629
    %v2348 = vmul.f32 %v2082, 0.4829629
    %v2349 = vmul.f32 %v2083, 0.4829629
    %v2350 = vmul.f32 %v2084, 0.4829629
    %v2351 = vmul.f32 %v2085, 0.4829629
    %v2352 = vmul.f32 %v2087, 0.8365163
    %v2353 = vmul.f32 %v2088, 0.8365163
    %v2354 = vmul.f32 %v2089, 0.8365163
    %v2355 = vmul.f32 %v2090, 0.8365163
    %v2356 = vmul.f32 %v2091, 0.8365163
    %v2357 = vmul.f32 %v2092, 0.8365163
    %v2358 = vadd.f32 %v2346, %v2352
    %v2359 = vadd.f32 %v2347, %v2353
    %v2360 = vadd.f32 %v2348, %v2354
    %v2361 = vadd.f32 %v2349, %v2355
    %v2362 = vadd.f32 %v2350, %v2356
    %v2363 = vadd.f32 %v2351, %v2357
    %v2364 = vmul.f32 %v2093, 0.22414386
    %v2365 = vmul.f32 %v2094, 0.22414386
    %v2366 = vmul.f32 %v2095, 0.22414386
    %v2367 = vmul.f32 %v2096, 0.22414386
    %v2368 = vmul.f32 %v2097, 0.22414386
    %v2369 = vmul.f32 %v2098, 0.22414386
    %v2370 = vadd.f32 %v2358, %v2364
    %v2371 = vadd.f32 %v2359, %v2365
    %v2372 = vadd.f32 %v2360, %v2366
    %v2373 = vadd.f32 %v2361, %v2367
    %v2374 = vadd.f32 %v2362, %v2368
    %v2375 = vadd.f32 %v2363, %v2369
    %v2376 = vmul.f32 %v2099, -0.12940952
    %v2377 = vmul.f32 %v2100, -0.12940952
    %v2378 = vmul.f32 %v2101, -0.12940952
    %v2379 = vmul.f32 %v2102, -0.12940952
    %v2380 = vmul.f32 %v2103, -0.12940952
    %v2381 = vmul.f32 %v2104, -0.12940952
    %v2382 = vadd.f32 %v2370, %v2376
    %v2383 = vadd.f32 %v2371, %v2377
    %v2384 = vadd.f32 %v2372, %v2378
    %v2385 = vadd.f32 %v2373, %v2379
    %v2386 = vadd.f32 %v2374, %v2380
    %v2387 = vadd.f32 %v2375, %v2381
    %s2388 = scalar_lea.vmem [#allocation2], 816
    %2389 = vst [vmem:[%s2388] sm:$0x1f] %v2382
    %2390 = vst [vmem:[%s2388 + $0x8] sm:$0x1f] %v2383
    %2391 = vst [vmem:[%s2388 + $0x10] sm:$0x1f] %v2384
    %2392 = vst [vmem:[%s2388 + $0x18] sm:$0x1f] %v2385
    %2393 = vst [vmem:[%s2388 + $0x20] sm:$0x1f] %v2386
    %2394 = vst [vmem:[%s2388 + $0x28] sm:$0x1f] %v2387
    %v2395 = vmul.f32 %v1958, -0.12940952
    %v2396 = vmul.f32 %v1959, -0.12940952
    %v2397 = vmul.f32 %v1960, -0.12940952
    %v2398 = vmul.f32 %v1961, -0.12940952
    %v2399 = vmul.f32 %v1962, -0.12940952
    %v2400 = vmul.f32 %v1963, -0.12940952
    %v2401 = vmul.f32 %v1964, -0.12940952
    %v2402 = vmul.f32 %v1965, -0.12940952
    %v2403 = vmul.f32 %v1966, -0.12940952
    %v2404 = vmul.f32 %v1967, -0.12940952
    %v2405 = vmul.f32 %v1968, -0.12940952
    %v2406 = vmul.f32 %v1969, -0.12940952
    %v2407 = vmul.f32 %v1970, -0.12940952
    %v2408 = vmul.f32 %v1971, -0.12940952
    %v2409 = vmul.f32 %v1972, -0.12940952
    %v2410 = vmul.f32 %v1973, -0.12940952
    %v2411 = vmul.f32 %v1974, -0.12940952
    %v2412 = vmul.f32 %v1975, -0.12940952
    %v2413 = vmul.f32 %v1976, -0.12940952
    %v2414 = vmul.f32 %v1977, -0.12940952
    %v2415 = vmul.f32 %v1978, -0.12940952
    %v2416 = vmul.f32 %v1979, -0.12940952
    %v2417 = vmul.f32 %v1980, -0.12940952
    %v2418 = vmul.f32 %v1981, -0.12940952
    %v2419 = vmul.f32 %v1982, -0.12940952
    %v2420 = vmul.f32 %v1983, -0.12940952
    %v2421 = vmul.f32 %v1984, -0.12940952
    %v2422 = vmul.f32 %v1985, -0.12940952
    %v2423 = vmul.f32 %v1986, -0.12940952
    %v2424 = vmul.f32 %v1987, -0.12940952
    %v2425 = vmul.f32 %v1989, -0.22414386
    %v2426 = vmul.f32 %v1990, -0.22414386
    %v2427 = vmul.f32 %v1991, -0.22414386
    %v2428 = vmul.f32 %v1992, -0.22414386
    %v2429 = vmul.f32 %v1993, -0.22414386
    %v2430 = vmul.f32 %v1994, -0.22414386
    %v2431 = vmul.f32 %v1995, -0.22414386
    %v2432 = vmul.f32 %v1996, -0.22414386
    %v2433 = vmul.f32 %v1997, -0.22414386
    %v2434 = vmul.f32 %v1998, -0.22414386
    %v2435 = vmul.f32 %v1999, -0.22414386
    %v2436 = vmul.f32 %v2000, -0.22414386
    %v2437 = vmul.f32 %v2001, -0.22414386
    %v2438 = vmul.f32 %v2002, -0.22414386
    %v2439 = vmul.f32 %v2003, -0.22414386
    %v2440 = vmul.f32 %v2004, -0.22414386
    %v2441 = vmul.f32 %v2005, -0.22414386
    %v2442 = vmul.f32 %v2006, -0.22414386
    %v2443 = vmul.f32 %v2007, -0.22414386
    %v2444 = vmul.f32 %v2008, -0.22414386
    %v2445 = vmul.f32 %v2009, -0.22414386
    %v2446 = vmul.f32 %v2010, -0.22414386
    %v2447 = vmul.f32 %v2011, -0.22414386
    %v2448 = vmul.f32 %v2012, -0.22414386
    %v2449 = vmul.f32 %v2013, -0.22414386
    %v2450 = vmul.f32 %v2014, -0.22414386
    %v2451 = vmul.f32 %v2015, -0.22414386
    %v2452 = vmul.f32 %v2016, -0.22414386
    %v2453 = vmul.f32 %v2017, -0.22414386
    %v2454 = vmul.f32 %v2018, -0.22414386
    %v2455 = vadd.f32 %v2395, %v2425
    %v2456 = vadd.f32 %v2396, %v2426
    %v2457 = vadd.f32 %v2397, %v2427
    %v2458 = vadd.f32 %v2398, %v2428
    %v2459 = vadd.f32 %v2399, %v2429
    %v2460 = vadd.f32 %v2400, %v2430
    %v2461 = vadd.f32 %v2401, %v2431
    %v2462 = vadd.f32 %v2402, %v2432
    %v2463 = vadd.f32 %v2403, %v2433
    %v2464 = vadd.f32 %v2404, %v2434
    %v2465 = vadd.f32 %v2405, %v2435
    %v2466 = vadd.f32 %v2406, %v2436
    %v2467 = vadd.f32 %v2407, %v2437
    %v2468 = vadd.f32 %v2408, %v2438
    %v2469 = vadd.f32 %v2409, %v2439
    %v2470 = vadd.f32 %v2410, %v2440
    %v2471 = vadd.f32 %v2411, %v2441
    %v2472 = vadd.f32 %v2412, %v2442
    %v2473 = vadd.f32 %v2413, %v2443
    %v2474 = vadd.f32 %v2414, %v2444
    %v2475 = vadd.f32 %v2415, %v2445
    %v2476 = vadd.f32 %v2416, %v2446
    %v2477 = vadd.f32 %v2417, %v2447
    %v2478 = vadd.f32 %v2418, %v2448
    %v2479 = vadd.f32 %v2419, %v2449
    %v2480 = vadd.f32 %v2420, %v2450
    %v2481 = vadd.f32 %v2421, %v2451
    %v2482 = vadd.f32 %v2422, %v2452
    %v2483 = vadd.f32 %v2423, %v2453
    %v2484 = vadd.f32 %v2424, %v2454
    %v2485 = vmul.f32 %v2019, 0.8365163
    %v2486 = vmul.f32 %v2020, 0.8365163
    %v2487 = vmul.f32 %v2021, 0.8365163
    %v2488 = vmul.f32 %v2022, 0.8365163
    %v2489 = vmul.f32 %v2023, 0.8365163
    %v2490 = vmul.f32 %v2024, 0.8365163
    %v2491 = vmul.f32 %v2025, 0.8365163
    %v2492 = vmul.f32 %v2026, 0.8365163
    %v2493 = vmul.f32 %v2027, 0.8365163
    %v2494 = vmul.f32 %v2028, 0.8365163
    %v2495 = vmul.f32 %v2029, 0.8365163
    %v2496 = vmul.f32 %v2030, 0.8365163
    %v2497 = vmul.f32 %v2031, 0.8365163
    %v2498 = vmul.f32 %v2032, 0.8365163
    %v2499 = vmul.f32 %v2033, 0.8365163
    %v2500 = vmul.f32 %v2034, 0.8365163
    %v2501 = vmul.f32 %v2035, 0.8365163
    %v2502 = vmul.f32 %v2036, 0.8365163
    %v2503 = vmul.f32 %v2037, 0.8365163
    %v2504 = vmul.f32 %v2038, 0.8365163
    %v2505 = vmul.f32 %v2039, 0.8365163
    %v2506 = vmul.f32 %v2040, 0.8365163
    %v2507 = vmul.f32 %v2041, 0.8365163
    %v2508 = vmul.f32 %v2042, 0.8365163
    %v2509 = vmul.f32 %v2043, 0.8365163
    %v2510 = vmul.f32 %v2044, 0.8365163
    %v2511 = vmul.f32 %v2045, 0.8365163
    %v2512 = vmul.f32 %v2046, 0.8365163
    %v2513 = vmul.f32 %v2047, 0.8365163
    %v2514 = vmul.f32 %v2048, 0.8365163
    %v2515 = vadd.f32 %v2455, %v2485
    %v2516 = vadd.f32 %v2456, %v2486
    %v2517 = vadd.f32 %v2457, %v2487
    %v2518 = vadd.f32 %v2458, %v2488
    %v2519 = vadd.f32 %v2459, %v2489
    %v2520 = vadd.f32 %v2460, %v2490
    %v2521 = vadd.f32 %v2461, %v2491
    %v2522 = vadd.f32 %v2462, %v2492
    %v2523 = vadd.f32 %v2463, %v2493
    %v2524 = vadd.f32 %v2464, %v2494
    %v2525 = vadd.f32 %v2465, %v2495
    %v2526 = vadd.f32 %v2466, %v2496
    %v2527 = vadd.f32 %v2467, %v2497
    %v2528 = vadd.f32 %v2468, %v2498
    %v2529 = vadd.f32 %v2469, %v2499
    %v2530 = vadd.f32 %v2470, %v2500
    %v2531 = vadd.f32 %v2471, %v2501
    %v2532 = vadd.f32 %v2472, %v2502
    %v2533 = vadd.f32 %v2473, %v2503
    %v2534 = vadd.f32 %v2474, %v2504
    %v2535 = vadd.f32 %v2475, %v2505
    %v2536 = vadd.f32 %v2476, %v2506
    %v2537 = vadd.f32 %v2477, %v2507
    %v2538 = vadd.f32 %v2478, %v2508
    %v2539 = vadd.f32 %v2479, %v2509
    %v2540 = vadd.f32 %v2480, %v2510
    %v2541 = vadd.f32 %v2481, %v2511
    %v2542 = vadd.f32 %v2482, %v2512
    %v2543 = vadd.f32 %v2483, %v2513
    %v2544 = vadd.f32 %v2484, %v2514
    %v2545 = vmul.f32 %v2049, -0.4829629
    %v2546 = vmul.f32 %v2050, -0.4829629
    %v2547 = vmul.f32 %v2051, -0.4829629
    %v2548 = vmul.f32 %v2052, -0.4829629
    %v2549 = vmul.f32 %v2053, -0.4829629
    %v2550 = vmul.f32 %v2054, -0.4829629
    %v2551 = vmul.f32 %v2055, -0.4829629
    %v2552 = vmul.f32 %v2056, -0.4829629
    %v2553 = vmul.f32 %v2057, -0.4829629
    %v2554 = vmul.f32 %v2058, -0.4829629
    %v2555 = vmul.f32 %v2059, -0.4829629
    %v2556 = vmul.f32 %v2060, -0.4829629
    %v2557 = vmul.f32 %v2061, -0.4829629
    %v2558 = vmul.f32 %v2062, -0.4829629
    %v2559 = vmul.f32 %v2063, -0.4829629
    %v2560 = vmul.f32 %v2064, -0.4829629
    %v2561 = vmul.f32 %v2065, -0.4829629
    %v2562 = vmul.f32 %v2066, -0.4829629
    %v2563 = vmul.f32 %v2067, -0.4829629
    %v2564 = vmul.f32 %v2068, -0.4829629
    %v2565 = vmul.f32 %v2069, -0.4829629
    %v2566 = vmul.f32 %v2070, -0.4829629
    %v2567 = vmul.f32 %v2071, -0.4829629
    %v2568 = vmul.f32 %v2072, -0.4829629
    %v2569 = vmul.f32 %v2073, -0.4829629
    %v2570 = vmul.f32 %v2074, -0.4829629
    %v2571 = vmul.f32 %v2075, -0.4829629
    %v2572 = vmul.f32 %v2076, -0.4829629
    %v2573 = vmul.f32 %v2077, -0.4829629
    %v2574 = vmul.f32 %v2078, -0.4829629
    %v2575 = vadd.f32 %v2515, %v2545
    %v2576 = vadd.f32 %v2516, %v2546
    %v2577 = vadd.f32 %v2517, %v2547
    %v2578 = vadd.f32 %v2518, %v2548
    %v2579 = vadd.f32 %v2519, %v2549
    %v2580 = vadd.f32 %v2520, %v2550
    %v2581 = vadd.f32 %v2521, %v2551
    %v2582 = vadd.f32 %v2522, %v2552
    %v2583 = vadd.f32 %v2523, %v2553
    %v2584 = vadd.f32 %v2524, %v2554
    %v2585 = vadd.f32 %v2525, %v2555
    %v2586 = vadd.f32 %v2526, %v2556
    %v2587 = vadd.f32 %v2527, %v2557
    %v2588 = vadd.f32 %v2528, %v2558
    %v2589 = vadd.f32 %v2529, %v2559
    %v2590 = vadd.f32 %v2530, %v2560
    %v2591 = vadd.f32 %v2531, %v2561
    %v2592 = vadd.f32 %v2532, %v2562
    %v2593 = vadd.f32 %v2533, %v2563
    %v2594 = vadd.f32 %v2534, %v2564
    %v2595 = vadd.f32 %v2535, %v2565
    %v2596 = vadd.f32 %v2536, %v2566
    %v2597 = vadd.f32 %v2537, %v2567
    %v2598 = vadd.f32 %v2538, %v2568
    %v2599 = vadd.f32 %v2539, %v2569
    %v2600 = vadd.f32 %v2540, %v2570
    %v2601 = vadd.f32 %v2541, %v2571
    %v2602 = vadd.f32 %v2542, %v2572
    %v2603 = vadd.f32 %v2543, %v2573
    %v2604 = vadd.f32 %v2544, %v2574
    %s2605 = scalar_lea.vmem [#allocation2], 864
    %2606 = vst [vmem:[%s2605] sm:$0x1f] %v2575
    %2607 = vst [vmem:[%s2605 + $0x8] sm:$0x1f] %v2576
    %2608 = vst [vmem:[%s2605 + $0x10] sm:$0x1f] %v2577
    %2609 = vst [vmem:[%s2605 + $0x18] sm:$0x1f] %v2578
    %2610 = vst [vmem:[%s2605 + $0x20] sm:$0x1f] %v2579
    %2611 = vst [vmem:[%s2605 + $0x28] sm:$0x1f] %v2580
    %2612 = vst [vmem:[%s2605 + $0x30] sm:$0x1f] %v2581
    %2613 = vst [vmem:[%s2605 + $0x38] sm:$0x1f] %v2582
    %2614 = vst [vmem:[%s2605 + $0x40] sm:$0x1f] %v2583
    %2615 = vst [vmem:[%s2605 + $0x48] sm:$0x1f] %v2584
    %2616 = vst [vmem:[%s2605 + $0x50] sm:$0x1f] %v2585
    %2617 = vst [vmem:[%s2605 + $0x58] sm:$0x1f] %v2586
    %2618 = vst [vmem:[%s2605 + $0x60] sm:$0x1f] %v2587
    %2619 = vst [vmem:[%s2605 + $0x68] sm:$0x1f] %v2588
    %2620 = vst [vmem:[%s2605 + $0x70] sm:$0x1f] %v2589
    %2621 = vst [vmem:[%s2605 + $0x78] sm:$0x1f] %v2590
    %2622 = vst [vmem:[%s2605 + $0x80] sm:$0x1f] %v2591
    %2623 = vst [vmem:[%s2605 + $0x88] sm:$0x1f] %v2592
    %2624 = vst [vmem:[%s2605 + $0x90] sm:$0x1f] %v2593
    %2625 = vst [vmem:[%s2605 + $0x98] sm:$0x1f] %v2594
    %2626 = vst [vmem:[%s2605 + $0xa0] sm:$0x1f] %v2595
    %2627 = vst [vmem:[%s2605 + $0xa8] sm:$0x1f] %v2596
    %2628 = vst [vmem:[%s2605 + $0xb0] sm:$0x1f] %v2597
    %2629 = vst [vmem:[%s2605 + $0xb8] sm:$0x1f] %v2598
    %2630 = vst [vmem:[%s2605 + $0xc0] sm:$0x1f] %v2599
    %2631 = vst [vmem:[%s2605 + $0xc8] sm:$0x1f] %v2600
    %2632 = vst [vmem:[%s2605 + $0xd0] sm:$0x1f] %v2601
    %2633 = vst [vmem:[%s2605 + $0xd8] sm:$0x1f] %v2602
    %2634 = vst [vmem:[%s2605 + $0xe0] sm:$0x1f] %v2603
    %2635 = vst [vmem:[%s2605 + $0xe8] sm:$0x1f] %v2604
    %v2636 = vmul.f32 %v2080, -0.12940952
    %v2637 = vmul.f32 %v2081, -0.12940952
    %v2638 = vmul.f32 %v2082, -0.12940952
    %v2639 = vmul.f32 %v2083, -0.12940952
    %v2640 = vmul.f32 %v2084, -0.12940952
    %v2641 = vmul.f32 %v2085, -0.12940952
    %v2642 = vmul.f32 %v2087, -0.22414386
    %v2643 = vmul.f32 %v2088, -0.22414386
    %v2644 = vmul.f32 %v2089, -0.22414386
    %v2645 = vmul.f32 %v2090, -0.22414386
    %v2646 = vmul.f32 %v2091, -0.22414386
    %v2647 = vmul.f32 %v2092, -0.22414386
    %v2648 = vadd.f32 %v2636, %v2642
    %v2649 = vadd.f32 %v2637, %v2643
    %v2650 = vadd.f32 %v2638, %v2644
    %v2651 = vadd.f32 %v2639, %v2645
    %v2652 = vadd.f32 %v2640, %v2646
    %v2653 = vadd.f32 %v2641, %v2647
    %v2654 = vmul.f32 %v2093, 0.8365163
    %v2655 = vmul.f32 %v2094, 0.8365163
    %v2656 = vmul.f32 %v2095, 0.8365163
    %v2657 = vmul.f32 %v2096, 0.8365163
    %v2658 = vmul.f32 %v2097, 0.8365163
    %v2659 = vmul.f32 %v2098, 0.8365163
    %v2660 = vadd.f32 %v2648, %v2654
    %v2661 = vadd.f32 %v2649, %v2655
    %v2662 = vadd.f32 %v2650, %v2656
    %v2663 = vadd.f32 %v2651, %v2657
    %v2664 = vadd.f32 %v2652, %v2658
    %v2665 = vadd.f32 %v2653, %v2659
    %v2666 = vmul.f32 %v2099, -0.4829629
    %v2667 = vmul.f32 %v2100, -0.4829629
    %v2668 = vmul.f32 %v2101, -0.4829629
    %v2669 = vmul.f32 %v2102, -0.4829629
    %v2670 = vmul.f32 %v2103, -0.4829629
    %v2671 = vmul.f32 %v2104, -0.4829629
    %v2672 = vadd.f32 %v2660, %v2666
    %v2673 = vadd.f32 %v2661, %v2667
    %v2674 = vadd.f32 %v2662, %v2668
    %v2675 = vadd.f32 %v2663, %v2669
    %v2676 = vadd.f32 %v2664, %v2670
    %v2677 = vadd.f32 %v2665, %v2671
    %s2678 = scalar_lea.vmem [#allocation2], 1104
    %2679 = vst [vmem:[%s2678] sm:$0x1f] %v2672
    %2680 = vst [vmem:[%s2678 + $0x8] sm:$0x1f] %v2673
    %2681 = vst [vmem:[%s2678 + $0x10] sm:$0x1f] %v2674
    %2682 = vst [vmem:[%s2678 + $0x18] sm:$0x1f] %v2675
    %2683 = vst [vmem:[%s2678 + $0x20] sm:$0x1f] %v2676
    %2684 = vst [vmem:[%s2678 + $0x28] sm:$0x1f] %v2677
    %v2685 = vld [vmem:[#allocation2] sm:$0x1f]
    %v2686 = vld [vmem:[#allocation2 + $0x8] sm:$0x1f]
    %v2687 = vld [vmem:[#allocation2 + $0x10] sm:$0x1f]
    %v2688 = vld [vmem:[#allocation2 + $0x18] sm:$0x1f]
    %v2689 = vld [vmem:[#allocation2 + $0x20] sm:$0x1f]
    %v2690 = vld [vmem:[#allocation2 + $0x30] sm:$0x1f]
    %v2691 = vld [vmem:[#allocation2 + $0x38] sm:$0x1f]
    %v2692 = vld [vmem:[#allocation2 + $0x40] sm:$0x1f]
    %v2693 = vld [vmem:[#allocation2 + $0x48] sm:$0x1f]
    %v2694 = vld [vmem:[#allocation2 + $0x50] sm:$0x1f]
    %v2695 = vld [vmem:[#allocation2 + $0x60] sm:$0x1f]
    %v2696 = vld [vmem:[#allocation2 + $0x68] sm:$0x1f]
    %v2697 = vld [vmem:[#allocation2 + $0x70] sm:$0x1f]
    %v2698 = vld [vmem:[#allocation2 + $0x78] sm:$0x1f]
    %v2699 = vld [vmem:[#allocation2 + $0x80] sm:$0x1f]
    %v2700 = vld [vmem:[#allocation2 + $0x90] sm:$0x1f]
    %v2701 = vld [vmem:[#allocation2 + $0x98] sm:$0x1f]
    %v2702 = vld [vmem:[#allocation2 + $0xa0] sm:$0x1f]
    %v2703 = vld [vmem:[#allocation2 + $0xa8] sm:$0x1f]
    %v2704 = vld [vmem:[#allocation2 + $0xb0] sm:$0x1f]
    %v2705 = vld [vmem:[#allocation2 + $0xc0] sm:$0x1f]
    %v2706 = vld [vmem:[#allocation2 + $0xc8] sm:$0x1f]
    %v2707 = vld [vmem:[#allocation2 + $0xd0] sm:$0x1f]
    %v2708 = vld [vmem:[#allocation2 + $0xd8] sm:$0x1f]
    %v2709 = vld [vmem:[#allocation2 + $0xe0] sm:$0x1f]
    %v2710 = vld [vmem:[#allocation2 + $0xf0] sm:$0x1f]
    %v2711 = vld [vmem:[#allocation2 + $0xf8] sm:$0x1f]
    %v2712 = vld [vmem:[#allocation2 + $0x100] sm:$0x1f]
    %v2713 = vld [vmem:[#allocation2 + $0x108] sm:$0x1f]
    %v2714 = vld [vmem:[#allocation2 + $0x110] sm:$0x1f]
    %v2715 = vld [vmem:[%s2315] sm:$0x1f]
    %v2716 = vld [vmem:[%s2315 + $0x8] sm:$0x1f]
    %v2717 = vld [vmem:[%s2315 + $0x10] sm:$0x1f]
    %v2718 = vld [vmem:[%s2315 + $0x18] sm:$0x1f]
    %v2719 = vld [vmem:[%s2315 + $0x20] sm:$0x1f]
    %v2720 = vld [vmem:[%s2315 + $0x30] sm:$0x1f]
    %v2721 = vld [vmem:[%s2315 + $0x38] sm:$0x1f]
    %v2722 = vld [vmem:[%s2315 + $0x40] sm:$0x1f]
    %v2723 = vld [vmem:[%s2315 + $0x48] sm:$0x1f]
    %v2724 = vld [vmem:[%s2315 + $0x50] sm:$0x1f]
    %v2725 = vld [vmem:[%s2315 + $0x60] sm:$0x1f]
    %v2726 = vld [vmem:[%s2315 + $0x68] sm:$0x1f]
    %v2727 = vld [vmem:[%s2315 + $0x70] sm:$0x1f]
    %v2728 = vld [vmem:[%s2315 + $0x78] sm:$0x1f]
    %v2729 = vld [vmem:[%s2315 + $0x80] sm:$0x1f]
    %v2730 = vld [vmem:[%s2315 + $0x90] sm:$0x1f]
    %v2731 = vld [vmem:[%s2315 + $0x98] sm:$0x1f]
    %v2732 = vld [vmem:[%s2315 + $0xa0] sm:$0x1f]
    %v2733 = vld [vmem:[%s2315 + $0xa8] sm:$0x1f]
    %v2734 = vld [vmem:[%s2315 + $0xb0] sm:$0x1f]
    %v2735 = vld [vmem:[%s2315 + $0xc0] sm:$0x1f]
    %v2736 = vld [vmem:[%s2315 + $0xc8] sm:$0x1f]
    %v2737 = vld [vmem:[%s2315 + $0xd0] sm:$0x1f]
    %v2738 = vld [vmem:[%s2315 + $0xd8] sm:$0x1f]
    %v2739 = vld [vmem:[%s2315 + $0xe0] sm:$0x1f]
    %v2740 = vld [vmem:[%s2315 + $0xf0] sm:$0x1f]
    %v2741 = vld [vmem:[%s2315 + $0xf8] sm:$0x1f]
    %v2742 = vld [vmem:[%s2315 + $0x100] sm:$0x1f]
    %v2743 = vld [vmem:[%s2315 + $0x108] sm:$0x1f]
    %v2744 = vld [vmem:[%s2315 + $0x110] sm:$0x1f]
    %s2745 = scalar_lea.vmem [#allocation2], 8
    %v2746 = vld [vmem:[%s2745] sm:$0x1f]
    %v2747 = vld [vmem:[%s2745 + $0x8] sm:$0x1f]
    %v2748 = vld [vmem:[%s2745 + $0x10] sm:$0x1f]
    %v2749 = vld [vmem:[%s2745 + $0x18] sm:$0x1f]
    %v2750 = vld [vmem:[%s2745 + $0x20] sm:$0x1f]
    %v2751 = vld [vmem:[%s2745 + $0x30] sm:$0x1f]
    %v2752 = vld [vmem:[%s2745 + $0x38] sm:$0x1f]
    %v2753 = vld [vmem:[%s2745 + $0x40] sm:$0x1f]
    %v2754 = vld [vmem:[%s2745 + $0x48] sm:$0x1f]
    %v2755 = vld [vmem:[%s2745 + $0x50] sm:$0x1f]
    %v2756 = vld [vmem:[%s2745 + $0x60] sm:$0x1f]
    %v2757 = vld [vmem:[%s2745 + $0x68] sm:$0x1f]
    %v2758 = vld [vmem:[%s2745 + $0x70] sm:$0x1f]
    %v2759 = vld [vmem:[%s2745 + $0x78] sm:$0x1f]
    %v2760 = vld [vmem:[%s2745 + $0x80] sm:$0x1f]
    %v2761 = vld [vmem:[%s2745 + $0x90] sm:$0x1f]
    %v2762 = vld [vmem:[%s2745 + $0x98] sm:$0x1f]
    %v2763 = vld [vmem:[%s2745 + $0xa0] sm:$0x1f]
    %v2764 = vld [vmem:[%s2745 + $0xa8] sm:$0x1f]
    %v2765 = vld [vmem:[%s2745 + $0xb0] sm:$0x1f]
    %v2766 = vld [vmem:[%s2745 + $0xc0] sm:$0x1f]
    %v2767 = vld [vmem:[%s2745 + $0xc8] sm:$0x1f]
    %v2768 = vld [vmem:[%s2745 + $0xd0] sm:$0x1f]
    %v2769 = vld [vmem:[%s2745 + $0xd8] sm:$0x1f]
    %v2770 = vld [vmem:[%s2745 + $0xe0] sm:$0x1f]
    %v2771 = vld [vmem:[%s2745 + $0xf0] sm:$0x1f]
    %v2772 = vld [vmem:[%s2745 + $0xf8] sm:$0x1f]
    %v2773 = vld [vmem:[%s2745 + $0x100] sm:$0x1f]
    %v2774 = vld [vmem:[%s2745 + $0x108] sm:$0x1f]
    %v2775 = vld [vmem:[%s2745 + $0x110] sm:$0x1f]
    %s2776 = scalar_lea.vmem [#allocation2], 584
    %v2777 = vld [vmem:[%s2776] sm:$0x1f]
    %v2778 = vld [vmem:[%s2776 + $0x8] sm:$0x1f]
    %v2779 = vld [vmem:[%s2776 + $0x10] sm:$0x1f]
    %v2780 = vld [vmem:[%s2776 + $0x18] sm:$0x1f]
    %v2781 = vld [vmem:[%s2776 + $0x20] sm:$0x1f]
    %v2782 = vld [vmem:[%s2776 + $0x30] sm:$0x1f]
    %v2783 = vld [vmem:[%s2776 + $0x38] sm:$0x1f]
    %v2784 = vld [vmem:[%s2776 + $0x40] sm:$0x1f]
    %v2785 = vld [vmem:[%s2776 + $0x48] sm:$0x1f]
    %v2786 = vld [vmem:[%s2776 + $0x50] sm:$0x1f]
    %v2787 = vld [vmem:[%s2776 + $0x60] sm:$0x1f]
    %v2788 = vld [vmem:[%s2776 + $0x68] sm:$0x1f]
    %v2789 = vld [vmem:[%s2776 + $0x70] sm:$0x1f]
    %v2790 = vld [vmem:[%s2776 + $0x78] sm:$0x1f]
    %v2791 = vld [vmem:[%s2776 + $0x80] sm:$0x1f]
    %v2792 = vld [vmem:[%s2776 + $0x90] sm:$0x1f]
    %v2793 = vld [vmem:[%s2776 + $0x98] sm:$0x1f]
    %v2794 = vld [vmem:[%s2776 + $0xa0] sm:$0x1f]
    %v2795 = vld [vmem:[%s2776 + $0xa8] sm:$0x1f]
    %v2796 = vld [vmem:[%s2776 + $0xb0] sm:$0x1f]
    %v2797 = vld [vmem:[%s2776 + $0xc0] sm:$0x1f]
    %v2798 = vld [vmem:[%s2776 + $0xc8] sm:$0x1f]
    %v2799 = vld [vmem:[%s2776 + $0xd0] sm:$0x1f]
    %v2800 = vld [vmem:[%s2776 + $0xd8] sm:$0x1f]
    %v2801 = vld [vmem:[%s2776 + $0xe0] sm:$0x1f]
    %v2802 = vld [vmem:[%s2776 + $0xf0] sm:$0x1f]
    %v2803 = vld [vmem:[%s2776 + $0xf8] sm:$0x1f]
    %v2804 = vld [vmem:[%s2776 + $0x100] sm:$0x1f]
    %v2805 = vld [vmem:[%s2776 + $0x108] sm:$0x1f]
    %v2806 = vld [vmem:[%s2776 + $0x110] sm:$0x1f]
    %v2807 = vmul.f32 %v2685, 0.4829629
    %v2808 = vmul.f32 %v2686, 0.4829629
    %v2809 = vmul.f32 %v2687, 0.4829629
    %v2810 = vmul.f32 %v2688, 0.4829629
    %v2811 = vmul.f32 %v2689, 0.4829629
    %v2812 = vmul.f32 %v2690, 0.4829629
    %v2813 = vmul.f32 %v2691, 0.4829629
    %v2814 = vmul.f32 %v2692, 0.4829629
    %v2815 = vmul.f32 %v2693, 0.4829629
    %v2816 = vmul.f32 %v2694, 0.4829629
    %v2817 = vmul.f32 %v2695, 0.4829629
    %v2818 = vmul.f32 %v2696, 0.4829629
    %v2819 = vmul.f32 %v2697, 0.4829629
    %v2820 = vmul.f32 %v2698, 0.4829629
    %v2821 = vmul.f32 %v2699, 0.4829629
    %v2822 = vmul.f32 %v2700, 0.4829629
    %v2823 = vmul.f32 %v2701, 0.4829629
    %v2824 = vmul.f32 %v2702, 0.4829629
    %v2825 = vmul.f32 %v2703, 0.4829629
    %v2826 = vmul.f32 %v2704, 0.4829629
    %v2827 = vmul.f32 %v2705, 0.4829629
    %v2828 = vmul.f32 %v2706, 0.4829629
    %v2829 = vmul.f32 %v2707, 0.4829629
    %v2830 = vmul.f32 %v2708, 0.4829629
    %v2831 = vmul.f32 %v2709, 0.4829629
    %v2832 = vmul.f32 %v2710, 0.4829629
    %v2833 = vmul.f32 %v2711, 0.4829629
    %v2834 = vmul.f32 %v2712, 0.4829629
    %v2835 = vmul.f32 %v2713, 0.4829629
    %v2836 = vmul.f32 %v2714, 0.4829629
    %v2837 = vmul.f32 %v2715, 0.8365163
    %v2838 = vmul.f32 %v2716, 0.8365163
    %v2839 = vmul.f32 %v2717, 0.8365163
    %v2840 = vmul.f32 %v2718, 0.8365163
    %v2841 = vmul.f32 %v2719, 0.8365163
    %v2842 = vmul.f32 %v2720, 0.8365163
    %v2843 = vmul.f32 %v2721, 0.8365163
    %v2844 = vmul.f32 %v2722, 0.8365163
    %v2845 = vmul.f32 %v2723, 0.8365163
    %v2846 = vmul.f32 %v2724, 0.8365163
    %v2847 = vmul.f32 %v2725, 0.8365163
    %v2848 = vmul.f32 %v2726, 0.8365163
    %v2849 = vmul.f32 %v2727, 0.8365163
    %v2850 = vmul.f32 %v2728, 0.8365163
    %v2851 = vmul.f32 %v2729, 0.8365163
    %v2852 = vmul.f32 %v2730, 0.8365163
    %v2853 = vmul.f32 %v2731, 0.8365163
    %v2854 = vmul.f32 %v2732, 0.8365163
    %v2855 = vmul.f32 %v2733, 0.8365163
    %v2856 = vmul.f32 %v2734, 0.8365163
    %v2857 = vmul.f32 %v2735, 0.8365163
    %v2858 = vmul.f32 %v2736, 0.8365163
    %v2859 = vmul.f32 %v2737, 0.8365163
    %v2860 = vmul.f32 %v2738, 0.8365163
    %v2861 = vmul.f32 %v2739, 0.8365163
    %v2862 = vmul.f32 %v2740, 0.8365163
    %v2863 = vmul.f32 %v2741, 0.8365163
    %v2864 = vmul.f32 %v2742, 0.8365163
    %v2865 = vmul.f32 %v2743, 0.8365163
    %v2866 = vmul.f32 %v2744, 0.8365163
    %v2867 = vadd.f32 %v2807, %v2837
    %v2868 = vadd.f32 %v2808, %v2838
    %v2869 = vadd.f32 %v2809, %v2839
    %v2870 = vadd.f32 %v2810, %v2840
    %v2871 = vadd.f32 %v2811, %v2841
    %v2872 = vadd.f32 %v2812, %v2842
    %v2873 = vadd.f32 %v2813, %v2843
    %v2874 = vadd.f32 %v2814, %v2844
    %v2875 = vadd.f32 %v2815, %v2845
    %v2876 = vadd.f32 %v2816, %v2846
    %v2877 = vadd.f32 %v2817, %v2847
    %v2878 = vadd.f32 %v2818, %v2848
    %v2879 = vadd.f32 %v2819, %v2849
    %v2880 = vadd.f32 %v2820, %v2850
    %v2881 = vadd.f32 %v2821, %v2851
    %v2882 = vadd.f32 %v2822, %v2852
    %v2883 = vadd.f32 %v2823, %v2853
    %v2884 = vadd.f32 %v2824, %v2854
    %v2885 = vadd.f32 %v2825, %v2855
    %v2886 = vadd.f32 %v2826, %v2856
    %v2887 = vadd.f32 %v2827, %v2857
    %v2888 = vadd.f32 %v2828, %v2858
    %v2889 = vadd.f32 %v2829, %v2859
    %v2890 = vadd.f32 %v2830, %v2860
    %v2891 = vadd.f32 %v2831, %v2861
    %v2892 = vadd.f32 %v2832, %v2862
    %v2893 = vadd.f32 %v2833, %v2863
    %v2894 = vadd.f32 %v2834, %v2864
    %v2895 = vadd.f32 %v2835, %v2865
    %v2896 = vadd.f32 %v2836, %v2866
    %v2897 = vmul.f32 %v2746, 0.22414386
    %v2898 = vmul.f32 %v2747, 0.22414386
    %v2899 = vmul.f32 %v2748, 0.22414386
    %v2900 = vmul.f32 %v2749, 0.22414386
    %v2901 = vmul.f32 %v2750, 0.22414386
    %v2902 = vmul.f32 %v2751, 0.22414386
    %v2903 = vmul.f32 %v2752, 0.22414386
    %v2904 = vmul.f32 %v2753, 0.22414386
    %v2905 = vmul.f32 %v2754, 0.22414386
    %v2906 = vmul.f32 %v2755, 0.22414386
    %v2907 = vmul.f32 %v2756, 0.22414386
    %v2908 = vmul.f32 %v2757, 0.22414386
    %v2909 = vmul.f32 %v2758, 0.22414386
    %v2910 = vmul.f32 %v2759, 0.22414386
    %v2911 = vmul.f32 %v2760, 0.22414386
    %v2912 = vmul.f32 %v2761, 0.22414386
    %v2913 = vmul.f32 %v2762, 0.22414386
    %v2914 = vmul.f32 %v2763, 0.22414386
    %v2915 = vmul.f32 %v2764, 0.22414386
    %v2916 = vmul.f32 %v2765, 0.22414386
    %v2917 = vmul.f32 %v2766, 0.22414386
    %v2918 = vmul.f32 %v2767, 0.22414386
    %v2919 = vmul.f32 %v2768, 0.22414386
    %v2920 = vmul.f32 %v2769, 0.22414386
    %v2921 = vmul.f32 %v2770, 0.22414386
    %v2922 = vmul.f32 %v2771, 0.22414386
    %v2923 = vmul.f32 %v2772, 0.22414386
    %v2924 = vmul.f32 %v2773, 0.22414386
    %v2925 = vmul.f32 %v2774, 0.22414386
    %v2926 = vmul.f32 %v2775, 0.22414386
    %v2927 = vadd.f32 %v2867, %v2897
    %v2928 = vadd.f32 %v2868, %v2898
    %v2929 = vadd.f32 %v2869, %v2899
    %v2930 = vadd.f32 %v2870, %v2900
    %v2931 = vadd.f32 %v2871, %v2901
    %v2932 = vadd.f32 %v2872, %v2902
    %v2933 = vadd.f32 %v2873, %v2903
    %v2934 = vadd.f32 %v2874, %v2904
    %v2935 = vadd.f32 %v2875, %v2905
    %v2936 = vadd.f32 %v2876, %v2906
    %v2937 = vadd.f32 %v2877, %v2907
    %v2938 = vadd.f32 %v2878, %v2908
    %v2939 = vadd.f32 %v2879, %v2909
    %v2940 = vadd.f32 %v2880, %v2910
    %v2941 = vadd.f32 %v2881, %v2911
    %v2942 = vadd.f32 %v2882, %v2912
    %v2943 = vadd.f32 %v2883, %v2913
    %v2944 = vadd.f32 %v2884, %v2914
    %v2945 = vadd.f32 %v2885, %v2915
    %v2946 = vadd.f32 %v2886, %v2916
    %v2947 = vadd.f32 %v2887, %v2917
    %v2948 = vadd.f32 %v2888, %v2918
    %v2949 = vadd.f32 %v2889, %v2919
    %v2950 = vadd.f32 %v2890, %v2920
    %v2951 = vadd.f32 %v2891, %v2921
    %v2952 = vadd.f32 %v2892, %v2922
    %v2953 = vadd.f32 %v2893, %v2923
    %v2954 = vadd.f32 %v2894, %v2924
    %v2955 = vadd.f32 %v2895, %v2925
    %v2956 = vadd.f32 %v2896, %v2926
    %v2957 = vmul.f32 %v2777, -0.12940952
    %v2958 = vmul.f32 %v2778, -0.12940952
    %v2959 = vmul.f32 %v2779, -0.12940952
    %v2960 = vmul.f32 %v2780, -0.12940952
    %v2961 = vmul.f32 %v2781, -0.12940952
    %v2962 = vmul.f32 %v2782, -0.12940952
    %v2963 = vmul.f32 %v2783, -0.12940952
    %v2964 = vmul.f32 %v2784, -0.12940952
    %v2965 = vmul.f32 %v2785, -0.12940952
    %v2966 = vmul.f32 %v2786, -0.12940952
    %v2967 = vmul.f32 %v2787, -0.12940952
    %v2968 = vmul.f32 %v2788, -0.12940952
    %v2969 = vmul.f32 %v2789, -0.12940952
    %v2970 = vmul.f32 %v2790, -0.12940952
    %v2971 = vmul.f32 %v2791, -0.12940952
    %v2972 = vmul.f32 %v2792, -0.12940952
    %v2973 = vmul.f32 %v2793, -0.12940952
    %v2974 = vmul.f32 %v2794, -0.12940952
    %v2975 = vmul.f32 %v2795, -0.12940952
    %v2976 = vmul.f32 %v2796, -0.12940952
    %v2977 = vmul.f32 %v2797, -0.12940952
    %v2978 = vmul.f32 %v2798, -0.12940952
    %v2979 = vmul.f32 %v2799, -0.12940952
    %v2980 = vmul.f32 %v2800, -0.12940952
    %v2981 = vmul.f32 %v2801, -0.12940952
    %v2982 = vmul.f32 %v2802, -0.12940952
    %v2983 = vmul.f32 %v2803, -0.12940952
    %v2984 = vmul.f32 %v2804, -0.12940952
    %v2985 = vmul.f32 %v2805, -0.12940952
    %v2986 = vmul.f32 %v2806, -0.12940952
    %v2987 = vadd.f32 %v2927, %v2957
    %v2988 = vadd.f32 %v2928, %v2958
    %v2989 = vadd.f32 %v2929, %v2959
    %v2990 = vadd.f32 %v2930, %v2960
    %v2991 = vadd.f32 %v2931, %v2961
    %v2992 = vadd.f32 %v2932, %v2962
    %v2993 = vadd.f32 %v2933, %v2963
    %v2994 = vadd.f32 %v2934, %v2964
    %v2995 = vadd.f32 %v2935, %v2965
    %v2996 = vadd.f32 %v2936, %v2966
    %v2997 = vadd.f32 %v2937, %v2967
    %v2998 = vadd.f32 %v2938, %v2968
    %v2999 = vadd.f32 %v2939, %v2969
    %v3000 = vadd.f32 %v2940, %v2970
    %v3001 = vadd.f32 %v2941, %v2971
    %v3002 = vadd.f32 %v2942, %v2972
    %v3003 = vadd.f32 %v2943, %v2973
    %v3004 = vadd.f32 %v2944, %v2974
    %v3005 = vadd.f32 %v2945, %v2975
    %v3006 = vadd.f32 %v2946, %v2976
    %v3007 = vadd.f32 %v2947, %v2977
    %v3008 = vadd.f32 %v2948, %v2978
    %v3009 = vadd.f32 %v2949, %v2979
    %v3010 = vadd.f32 %v2950, %v2980
    %v3011 = vadd.f32 %v2951, %v2981
    %v3012 = vadd.f32 %v2952, %v2982
    %v3013 = vadd.f32 %v2953, %v2983
    %v3014 = vadd.f32 %v2954, %v2984
    %v3015 = vadd.f32 %v2955, %v2985
    %v3016 = vadd.f32 %v2956, %v2986
    %3017 = vst [vmem:[#allocation3] sm:$0x1f] %v2987
    %3018 = vst [vmem:[#allocation3 + $0x8] sm:$0x1f] %v2988
    %3019 = vst [vmem:[#allocation3 + $0x10] sm:$0x1f] %v2989
    %3020 = vst [vmem:[#allocation3 + $0x18] sm:$0x1f] %v2990
    %3021 = vst [vmem:[#allocation3 + $0x20] sm:$0x1f] %v2991
    %3022 = vst [vmem:[#allocation3 + $0x28] sm:$0x1f] %v2992
    %3023 = vst [vmem:[#allocation3 + $0x30] sm:$0x1f] %v2993
    %3024 = vst [vmem:[#allocation3 + $0x38] sm:$0x1f] %v2994
    %3025 = vst [vmem:[#allocation3 + $0x40] sm:$0x1f] %v2995
    %3026 = vst [vmem:[#allocation3 + $0x48] sm:$0x1f] %v2996
    %3027 = vst [vmem:[#allocation3 + $0x50] sm:$0x1f] %v2997
    %3028 = vst [vmem:[#allocation3 + $0x58] sm:$0x1f] %v2998
    %3029 = vst [vmem:[#allocation3 + $0x60] sm:$0x1f] %v2999
    %3030 = vst [vmem:[#allocation3 + $0x68] sm:$0x1f] %v3000
    %3031 = vst [vmem:[#allocation3 + $0x70] sm:$0x1f] %v3001
    %3032 = vst [vmem:[#allocation3 + $0x78] sm:$0x1f] %v3002
    %3033 = vst [vmem:[#allocation3 + $0x80] sm:$0x1f] %v3003
    %3034 = vst [vmem:[#allocation3 + $0x88] sm:$0x1f] %v3004
    %3035 = vst [vmem:[#allocation3 + $0x90] sm:$0x1f] %v3005
    %3036 = vst [vmem:[#allocation3 + $0x98] sm:$0x1f] %v3006
    %3037 = vst [vmem:[#allocation3 + $0xa0] sm:$0x1f] %v3007
    %3038 = vst [vmem:[#allocation3 + $0xa8] sm:$0x1f] %v3008
    %3039 = vst [vmem:[#allocation3 + $0xb0] sm:$0x1f] %v3009
    %3040 = vst [vmem:[#allocation3 + $0xb8] sm:$0x1f] %v3010
    %3041 = vst [vmem:[#allocation3 + $0xc0] sm:$0x1f] %v3011
    %3042 = vst [vmem:[#allocation3 + $0xc8] sm:$0x1f] %v3012
    %3043 = vst [vmem:[#allocation3 + $0xd0] sm:$0x1f] %v3013
    %3044 = vst [vmem:[#allocation3 + $0xd8] sm:$0x1f] %v3014
    %3045 = vst [vmem:[#allocation3 + $0xe0] sm:$0x1f] %v3015
    %3046 = vst [vmem:[#allocation3 + $0xe8] sm:$0x1f] %v3016
    %v3047 = vmul.f32 %v2685, -0.12940952
    %v3048 = vmul.f32 %v2686, -0.12940952
    %v3049 = vmul.f32 %v2687, -0.12940952
    %v3050 = vmul.f32 %v2688, -0.12940952
    %v3051 = vmul.f32 %v2689, -0.12940952
    %v3052 = vmul.f32 %v2690, -0.12940952
    %v3053 = vmul.f32 %v2691, -0.12940952
    %v3054 = vmul.f32 %v2692, -0.12940952
    %v3055 = vmul.f32 %v2693, -0.12940952
    %v3056 = vmul.f32 %v2694, -0.12940952
    %v3057 = vmul.f32 %v2695, -0.12940952
    %v3058 = vmul.f32 %v2696, -0.12940952
    %v3059 = vmul.f32 %v2697, -0.12940952
    %v3060 = vmul.f32 %v2698, -0.12940952
    %v3061 = vmul.f32 %v2699, -0.12940952
    %v3062 = vmul.f32 %v2700, -0.12940952
    %v3063 = vmul.f32 %v2701, -0.12940952
    %v3064 = vmul.f32 %v2702, -0.12940952
    %v3065 = vmul.f32 %v2703, -0.12940952
    %v3066 = vmul.f32 %v2704, -0.12940952
    %v3067 = vmul.f32 %v2705, -0.12940952
    %v3068 = vmul.f32 %v2706, -0.12940952
    %v3069 = vmul.f32 %v2707, -0.12940952
    %v3070 = vmul.f32 %v2708, -0.12940952
    %v3071 = vmul.f32 %v2709, -0.12940952
    %v3072 = vmul.f32 %v2710, -0.12940952
    %v3073 = vmul.f32 %v2711, -0.12940952
    %v3074 = vmul.f32 %v2712, -0.12940952
    %v3075 = vmul.f32 %v2713, -0.12940952
    %v3076 = vmul.f32 %v2714, -0.12940952
    %v3077 = vmul.f32 %v2715, -0.22414386
    %v3078 = vmul.f32 %v2716, -0.22414386
    %v3079 = vmul.f32 %v2717, -0.22414386
    %v3080 = vmul.f32 %v2718, -0.22414386
    %v3081 = vmul.f32 %v2719, -0.22414386
    %v3082 = vmul.f32 %v2720, -0.22414386
    %v3083 = vmul.f32 %v2721, -0.22414386
    %v3084 = vmul.f32 %v2722, -0.22414386
    %v3085 = vmul.f32 %v2723, -0.22414386
    %v3086 = vmul.f32 %v2724, -0.22414386
    %v3087 = vmul.f32 %v2725, -0.22414386
    %v3088 = vmul.f32 %v2726, -0.22414386
    %v3089 = vmul.f32 %v2727, -0.22414386
    %v3090 = vmul.f32 %v2728, -0.22414386
    %v3091 = vmul.f32 %v2729, -0.22414386
    %v3092 = vmul.f32 %v2730, -0.22414386
    %v3093 = vmul.f32 %v2731, -0.22414386
    %v3094 = vmul.f32 %v2732, -0.22414386
    %v3095 = vmul.f32 %v2733, -0.22414386
    %v3096 = vmul.f32 %v2734, -0.22414386
    %v3097 = vmul.f32 %v2735, -0.22414386
    %v3098 = vmul.f32 %v2736, -0.22414386
    %v3099 = vmul.f32 %v2737, -0.22414386
    %v3100 = vmul.f32 %v2738, -0.22414386
    %v3101 = vmul.f32 %v2739, -0.22414386
    %v3102 = vmul.f32 %v2740, -0.22414386
    %v3103 = vmul.f32 %v2741, -0.22414386
    %v3104 = vmul.f32 %v2742, -0.22414386
    %v3105 = vmul.f32 %v2743, -0.22414386
    %v3106 = vmul.f32 %v2744, -0.22414386
    %v3107 = vadd.f32 %v3047, %v3077
    %v3108 = vadd.f32 %v3048, %v3078
    %v3109 = vadd.f32 %v3049, %v3079
    %v3110 = vadd.f32 %v3050, %v3080
    %v3111 = vadd.f32 %v3051, %v3081
    %v3112 = vadd.f32 %v3052, %v3082
    %v3113 = vadd.f32 %v3053, %v3083
    %v3114 = vadd.f32 %v3054, %v3084
    %v3115 = vadd.f32 %v3055, %v3085
    %v3116 = vadd.f32 %v3056, %v3086
    %v3117 = vadd.f32 %v3057, %v3087
    %v3118 = vadd.f32 %v3058, %v3088
    %v3119 = vadd.f32 %v3059, %v3089
    %v3120 = vadd.f32 %v3060, %v3090
    %v3121 = vadd.f32 %v3061, %v3091
    %v3122 = vadd.f32 %v3062, %v3092
    %v3123 = vadd.f32 %v3063, %v3093
    %v3124 = vadd.f32 %v3064, %v3094
    %v3125 = vadd.f32 %v3065, %v3095
    %v3126 = vadd.f32 %v3066, %v3096
    %v3127 = vadd.f32 %v3067, %v3097
    %v3128 = vadd.f32 %v3068, %v3098
    %v3129 = vadd.f32 %v3069, %v3099
    %v3130 = vadd.f32 %v3070, %v3100
    %v3131 = vadd.f32 %v3071, %v3101
    %v3132 = vadd.f32 %v3072, %v3102
    %v3133 = vadd.f32 %v3073, %v3103
    %v3134 = vadd.f32 %v3074, %v3104
    %v3135 = vadd.f32 %v3075, %v3105
    %v3136 = vadd.f32 %v3076, %v3106
    %v3137 = vmul.f32 %v2746, 0.8365163
    %v3138 = vmul.f32 %v2747, 0.8365163
    %v3139 = vmul.f32 %v2748, 0.8365163
    %v3140 = vmul.f32 %v2749, 0.8365163
    %v3141 = vmul.f32 %v2750, 0.8365163
    %v3142 = vmul.f32 %v2751, 0.8365163
    %v3143 = vmul.f32 %v2752, 0.8365163
    %v3144 = vmul.f32 %v2753, 0.8365163
    %v3145 = vmul.f32 %v2754, 0.8365163
    %v3146 = vmul.f32 %v2755, 0.8365163
    %v3147 = vmul.f32 %v2756, 0.8365163
    %v3148 = vmul.f32 %v2757, 0.8365163
    %v3149 = vmul.f32 %v2758, 0.8365163
    %v3150 = vmul.f32 %v2759, 0.8365163
    %v3151 = vmul.f32 %v2760, 0.8365163
    %v3152 = vmul.f32 %v2761, 0.8365163
    %v3153 = vmul.f32 %v2762, 0.8365163
    %v3154 = vmul.f32 %v2763, 0.8365163
    %v3155 = vmul.f32 %v2764, 0.8365163
    %v3156 = vmul.f32 %v2765, 0.8365163
    %v3157 = vmul.f32 %v2766, 0.8365163
    %v3158 = vmul.f32 %v2767, 0.8365163
    %v3159 = vmul.f32 %v2768, 0.8365163
    %v3160 = vmul.f32 %v2769, 0.8365163
    %v3161 = vmul.f32 %v2770, 0.8365163
    %v3162 = vmul.f32 %v2771, 0.8365163
    %v3163 = vmul.f32 %v2772, 0.8365163
    %v3164 = vmul.f32 %v2773, 0.8365163
    %v3165 = vmul.f32 %v2774, 0.8365163
    %v3166 = vmul.f32 %v2775, 0.8365163
    %v3167 = vadd.f32 %v3107, %v3137
    %v3168 = vadd.f32 %v3108, %v3138
    %v3169 = vadd.f32 %v3109, %v3139
    %v3170 = vadd.f32 %v3110, %v3140
    %v3171 = vadd.f32 %v3111, %v3141
    %v3172 = vadd.f32 %v3112, %v3142
    %v3173 = vadd.f32 %v3113, %v3143
    %v3174 = vadd.f32 %v3114, %v3144
    %v3175 = vadd.f32 %v3115, %v3145
    %v3176 = vadd.f32 %v3116, %v3146
    %v3177 = vadd.f32 %v3117, %v3147
    %v3178 = vadd.f32 %v3118, %v3148
    %v3179 = vadd.f32 %v3119, %v3149
    %v3180 = vadd.f32 %v3120, %v3150
    %v3181 = vadd.f32 %v3121, %v3151
    %v3182 = vadd.f32 %v3122, %v3152
    %v3183 = vadd.f32 %v3123, %v3153
    %v3184 = vadd.f32 %v3124, %v3154
    %v3185 = vadd.f32 %v3125, %v3155
    %v3186 = vadd.f32 %v3126, %v3156
    %v3187 = vadd.f32 %v3127, %v3157
    %v3188 = vadd.f32 %v3128, %v3158
    %v3189 = vadd.f32 %v3129, %v3159
    %v3190 = vadd.f32 %v3130, %v3160
    %v3191 = vadd.f32 %v3131, %v3161
    %v3192 = vadd.f32 %v3132, %v3162
    %v3193 = vadd.f32 %v3133, %v3163
    %v3194 = vadd.f32 %v3134, %v3164
    %v3195 = vadd.f32 %v3135, %v3165
    %v3196 = vadd.f32 %v3136, %v3166
    %v3197 = vmul.f32 %v2777, -0.4829629
    %v3198 = vmul.f32 %v2778, -0.4829629
    %v3199 = vmul.f32 %v2779, -0.4829629
    %v3200 = vmul.f32 %v2780, -0.4829629
    %v3201 = vmul.f32 %v2781, -0.4829629
    %v3202 = vmul.f32 %v2782, -0.4829629
    %v3203 = vmul.f32 %v2783, -0.4829629
    %v3204 = vmul.f32 %v2784, -0.4829629
    %v3205 = vmul.f32 %v2785, -0.4829629
    %v3206 = vmul.f32 %v2786, -0.4829629
    %v3207 = vmul.f32 %v2787, -0.4829629
    %v3208 = vmul.f32 %v2788, -0.4829629
    %v3209 = vmul.f32 %v2789, -0.4829629
    %v3210 = vmul.f32 %v2790, -0.4829629
    %v3211 = vmul.f32 %v2791, -0.4829629
    %v3212 = vmul.f32 %v2792, -0.4829629
    %v3213 = vmul.f32 %v2793, -0.4829629
    %v3214 = vmul.f32 %v2794, -0.4829629
    %v3215 = vmul.f32 %v2795, -0.4829629
    %v3216 = vmul.f32 %v2796, -0.4829629
    %v3217 = vmul.f32 %v2797, -0.4829629
    %v3218 = vmul.f32 %v2798, -0.4829629
    %v3219 = vmul.f32 %v2799, -0.4829629
    %v3220 = vmul.f32 %v2800, -0.4829629
    %v3221 = vmul.f32 %v2801, -0.4829629
    %v3222 = vmul.f32 %v2802, -0.4829629
    %v3223 = vmul.f32 %v2803, -0.4829629
    %v3224 = vmul.f32 %v2804, -0.4829629
    %v3225 = vmul.f32 %v2805, -0.4829629
    %v3226 = vmul.f32 %v2806, -0.4829629
    %v3227 = vadd.f32 %v3167, %v3197
    %v3228 = vadd.f32 %v3168, %v3198
    %v3229 = vadd.f32 %v3169, %v3199
    %v3230 = vadd.f32 %v3170, %v3200
    %v3231 = vadd.f32 %v3171, %v3201
    %v3232 = vadd.f32 %v3172, %v3202
    %v3233 = vadd.f32 %v3173, %v3203
    %v3234 = vadd.f32 %v3174, %v3204
    %v3235 = vadd.f32 %v3175, %v3205
    %v3236 = vadd.f32 %v3176, %v3206
    %v3237 = vadd.f32 %v3177, %v3207
    %v3238 = vadd.f32 %v3178, %v3208
    %v3239 = vadd.f32 %v3179, %v3209
    %v3240 = vadd.f32 %v3180, %v3210
    %v3241 = vadd.f32 %v3181, %v3211
    %v3242 = vadd.f32 %v3182, %v3212
    %v3243 = vadd.f32 %v3183, %v3213
    %v3244 = vadd.f32 %v3184, %v3214
    %v3245 = vadd.f32 %v3185, %v3215
    %v3246 = vadd.f32 %v3186, %v3216
    %v3247 = vadd.f32 %v3187, %v3217
    %v3248 = vadd.f32 %v3188, %v3218
    %v3249 = vadd.f32 %v3189, %v3219
    %v3250 = vadd.f32 %v3190, %v3220
    %v3251 = vadd.f32 %v3191, %v3221
    %v3252 = vadd.f32 %v3192, %v3222
    %v3253 = vadd.f32 %v3193, %v3223
    %v3254 = vadd.f32 %v3194, %v3224
    %v3255 = vadd.f32 %v3195, %v3225
    %v3256 = vadd.f32 %v3196, %v3226
    %s3257 = scalar_lea.vmem [#allocation3], 480
    %3258 = vst [vmem:[%s3257] sm:$0x1f] %v3227
    %3259 = vst [vmem:[%s3257 + $0x8] sm:$0x1f] %v3228
    %3260 = vst [vmem:[%s3257 + $0x10] sm:$0x1f] %v3229
    %3261 = vst [vmem:[%s3257 + $0x18] sm:$0x1f] %v3230
    %3262 = vst [vmem:[%s3257 + $0x20] sm:$0x1f] %v3231
    %3263 = vst [vmem:[%s3257 + $0x28] sm:$0x1f] %v3232
    %3264 = vst [vmem:[%s3257 + $0x30] sm:$0x1f] %v3233
    %3265 = vst [vmem:[%s3257 + $0x38] sm:$0x1f] %v3234
    %3266 = vst [vmem:[%s3257 + $0x40] sm:$0x1f] %v3235
    %3267 = vst [vmem:[%s3257 + $0x48] sm:$0x1f] %v3236
    %3268 = vst [vmem:[%s3257 + $0x50] sm:$0x1f] %v3237
    %3269 = vst [vmem:[%s3257 + $0x58] sm:$0x1f] %v3238
    %3270 = vst [vmem:[%s3257 + $0x60] sm:$0x1f] %v3239
    %3271 = vst [vmem:[%s3257 + $0x68] sm:$0x1f] %v3240
    %3272 = vst [vmem:[%s3257 + $0x70] sm:$0x1f] %v3241
    %3273 = vst [vmem:[%s3257 + $0x78] sm:$0x1f] %v3242
    %3274 = vst [vmem:[%s3257 + $0x80] sm:$0x1f] %v3243
    %3275 = vst [vmem:[%s3257 + $0x88] sm:$0x1f] %v3244
    %3276 = vst [vmem:[%s3257 + $0x90] sm:$0x1f] %v3245
    %3277 = vst [vmem:[%s3257 + $0x98] sm:$0x1f] %v3246
    %3278 = vst [vmem:[%s3257 + $0xa0] sm:$0x1f] %v3247
    %3279 = vst [vmem:[%s3257 + $0xa8] sm:$0x1f] %v3248
    %3280 = vst [vmem:[%s3257 + $0xb0] sm:$0x1f] %v3249
    %3281 = vst [vmem:[%s3257 + $0xb8] sm:$0x1f] %v3250
    %3282 = vst [vmem:[%s3257 + $0xc0] sm:$0x1f] %v3251
    %3283 = vst [vmem:[%s3257 + $0xc8] sm:$0x1f] %v3252
    %3284 = vst [vmem:[%s3257 + $0xd0] sm:$0x1f] %v3253
    %3285 = vst [vmem:[%s3257 + $0xd8] sm:$0x1f] %v3254
    %3286 = vst [vmem:[%s3257 + $0xe0] sm:$0x1f] %v3255
    %3287 = vst [vmem:[%s3257 + $0xe8] sm:$0x1f] %v3256
    %v3288 = vld [vmem:[%s1877] sm:$0x1f]
    %v3289 = vld [vmem:[%s1877 + $0x8] sm:$0x1f]
    %v3290 = vld [vmem:[%s1877 + $0x10] sm:$0x1f]
    %v3291 = vld [vmem:[%s1877 + $0x18] sm:$0x1f]
    %v3292 = vld [vmem:[%s1877 + $0x20] sm:$0x1f]
    %v3293 = vld [vmem:[%s1877 + $0x30] sm:$0x1f]
    %v3294 = vld [vmem:[%s1877 + $0x38] sm:$0x1f]
    %v3295 = vld [vmem:[%s1877 + $0x40] sm:$0x1f]
    %v3296 = vld [vmem:[%s1877 + $0x48] sm:$0x1f]
    %v3297 = vld [vmem:[%s1877 + $0x50] sm:$0x1f]
    %v3298 = vld [vmem:[%s1877 + $0x60] sm:$0x1f]
    %v3299 = vld [vmem:[%s1877 + $0x68] sm:$0x1f]
    %v3300 = vld [vmem:[%s1877 + $0x70] sm:$0x1f]
    %v3301 = vld [vmem:[%s1877 + $0x78] sm:$0x1f]
    %v3302 = vld [vmem:[%s1877 + $0x80] sm:$0x1f]
    %v3303 = vld [vmem:[%s1877 + $0x90] sm:$0x1f]
    %v3304 = vld [vmem:[%s1877 + $0x98] sm:$0x1f]
    %v3305 = vld [vmem:[%s1877 + $0xa0] sm:$0x1f]
    %v3306 = vld [vmem:[%s1877 + $0xa8] sm:$0x1f]
    %v3307 = vld [vmem:[%s1877 + $0xb0] sm:$0x1f]
    %v3308 = vld [vmem:[%s1877 + $0xc0] sm:$0x1f]
    %v3309 = vld [vmem:[%s1877 + $0xc8] sm:$0x1f]
    %v3310 = vld [vmem:[%s1877 + $0xd0] sm:$0x1f]
    %v3311 = vld [vmem:[%s1877 + $0xd8] sm:$0x1f]
    %v3312 = vld [vmem:[%s1877 + $0xe0] sm:$0x1f]
    %v3313 = vld [vmem:[%s1877 + $0xf0] sm:$0x1f]
    %v3314 = vld [vmem:[%s1877 + $0xf8] sm:$0x1f]
    %v3315 = vld [vmem:[%s1877 + $0x100] sm:$0x1f]
    %v3316 = vld [vmem:[%s1877 + $0x108] sm:$0x1f]
    %v3317 = vld [vmem:[%s1877 + $0x110] sm:$0x1f]
    %v3318 = vld [vmem:[%s2605] sm:$0x1f]
    %v3319 = vld [vmem:[%s2605 + $0x8] sm:$0x1f]
    %v3320 = vld [vmem:[%s2605 + $0x10] sm:$0x1f]
    %v3321 = vld [vmem:[%s2605 + $0x18] sm:$0x1f]
    %v3322 = vld [vmem:[%s2605 + $0x20] sm:$0x1f]
    %v3323 = vld [vmem:[%s2605 + $0x30] sm:$0x1f]
    %v3324 = vld [vmem:[%s2605 + $0x38] sm:$0x1f]
    %v3325 = vld [vmem:[%s2605 + $0x40] sm:$0x1f]
    %v3326 = vld [vmem:[%s2605 + $0x48] sm:$0x1f]
    %v3327 = vld [vmem:[%s2605 + $0x50] sm:$0x1f]
    %v3328 = vld [vmem:[%s2605 + $0x60] sm:$0x1f]
    %v3329 = vld [vmem:[%s2605 + $0x68] sm:$0x1f]
    %v3330 = vld [vmem:[%s2605 + $0x70] sm:$0x1f]
    %v3331 = vld [vmem:[%s2605 + $0x78] sm:$0x1f]
    %v3332 = vld [vmem:[%s2605 + $0x80] sm:$0x1f]
    %v3333 = vld [vmem:[%s2605 + $0x90] sm:$0x1f]
    %v3334 = vld [vmem:[%s2605 + $0x98] sm:$0x1f]
    %v3335 = vld [vmem:[%s2605 + $0xa0] sm:$0x1f]
    %v3336 = vld [vmem:[%s2605 + $0xa8] sm:$0x1f]
    %v3337 = vld [vmem:[%s2605 + $0xb0] sm:$0x1f]
    %v3338 = vld [vmem:[%s2605 + $0xc0] sm:$0x1f]
    %v3339 = vld [vmem:[%s2605 + $0xc8] sm:$0x1f]
    %v3340 = vld [vmem:[%s2605 + $0xd0] sm:$0x1f]
    %v3341 = vld [vmem:[%s2605 + $0xd8] sm:$0x1f]
    %v3342 = vld [vmem:[%s2605 + $0xe0] sm:$0x1f]
    %v3343 = vld [vmem:[%s2605 + $0xf0] sm:$0x1f]
    %v3344 = vld [vmem:[%s2605 + $0xf8] sm:$0x1f]
    %v3345 = vld [vmem:[%s2605 + $0x100] sm:$0x1f]
    %v3346 = vld [vmem:[%s2605 + $0x108] sm:$0x1f]
    %v3347 = vld [vmem:[%s2605 + $0x110] sm:$0x1f]
    %s3348 = scalar_lea.vmem [#allocation2], 296
    %v3349 = vld [vmem:[%s3348] sm:$0x1f]
    %v3350 = vld [vmem:[%s3348 + $0x8] sm:$0x1f]
    %v3351 = vld [vmem:[%s3348 + $0x10] sm:$0x1f]
    %v3352 = vld [vmem:[%s3348 + $0x18] sm:$0x1f]
    %v3353 = vld [vmem:[%s3348 + $0x20] sm:$0x1f]
    %v3354 = vld [vmem:[%s3348 + $0x30] sm:$0x1f]
    %v3355 = vld [vmem:[%s3348 + $0x38] sm:$0x1f]
    %v3356 = vld [vmem:[%s3348 + $0x40] sm:$0x1f]
    %v3357 = vld [vmem:[%s3348 + $0x48] sm:$0x1f]
    %v3358 = vld [vmem:[%s3348 + $0x50] sm:$0x1f]
    %v3359 = vld [vmem:[%s3348 + $0x60] sm:$0x1f]
    %v3360 = vld [vmem:[%s3348 + $0x68] sm:$0x1f]
    %v3361 = vld [vmem:[%s3348 + $0x70] sm:$0x1f]
    %v3362 = vld [vmem:[%s3348 + $0x78] sm:$0x1f]
    %v3363 = vld [vmem:[%s3348 + $0x80] sm:$0x1f]
    %v3364 = vld [vmem:[%s3348 + $0x90] sm:$0x1f]
    %v3365 = vld [vmem:[%s3348 + $0x98] sm:$0x1f]
    %v3366 = vld [vmem:[%s3348 + $0xa0] sm:$0x1f]
    %v3367 = vld [vmem:[%s3348 + $0xa8] sm:$0x1f]
    %v3368 = vld [vmem:[%s3348 + $0xb0] sm:$0x1f]
    %v3369 = vld [vmem:[%s3348 + $0xc0] sm:$0x1f]
    %v3370 = vld [vmem:[%s3348 + $0xc8] sm:$0x1f]
    %v3371 = vld [vmem:[%s3348 + $0xd0] sm:$0x1f]
    %v3372 = vld [vmem:[%s3348 + $0xd8] sm:$0x1f]
    %v3373 = vld [vmem:[%s3348 + $0xe0] sm:$0x1f]
    %v3374 = vld [vmem:[%s3348 + $0xf0] sm:$0x1f]
    %v3375 = vld [vmem:[%s3348 + $0xf8] sm:$0x1f]
    %v3376 = vld [vmem:[%s3348 + $0x100] sm:$0x1f]
    %v3377 = vld [vmem:[%s3348 + $0x108] sm:$0x1f]
    %v3378 = vld [vmem:[%s3348 + $0x110] sm:$0x1f]
    %s3379 = scalar_lea.vmem [#allocation2], 872
    %v3380 = vld [vmem:[%s3379] sm:$0x1f]
    %v3381 = vld [vmem:[%s3379 + $0x8] sm:$0x1f]
    %v3382 = vld [vmem:[%s3379 + $0x10] sm:$0x1f]
    %v3383 = vld [vmem:[%s3379 + $0x18] sm:$0x1f]
    %v3384 = vld [vmem:[%s3379 + $0x20] sm:$0x1f]
    %v3385 = vld [vmem:[%s3379 + $0x30] sm:$0x1f]
    %v3386 = vld [vmem:[%s3379 + $0x38] sm:$0x1f]
    %v3387 = vld [vmem:[%s3379 + $0x40] sm:$0x1f]
    %v3388 = vld [vmem:[%s3379 + $0x48] sm:$0x1f]
    %v3389 = vld [vmem:[%s3379 + $0x50] sm:$0x1f]
    %v3390 = vld [vmem:[%s3379 + $0x60] sm:$0x1f]
    %v3391 = vld [vmem:[%s3379 + $0x68] sm:$0x1f]
    %v3392 = vld [vmem:[%s3379 + $0x70] sm:$0x1f]
    %v3393 = vld [vmem:[%s3379 + $0x78] sm:$0x1f]
    %v3394 = vld [vmem:[%s3379 + $0x80] sm:$0x1f]
    %v3395 = vld [vmem:[%s3379 + $0x90] sm:$0x1f]
    %v3396 = vld [vmem:[%s3379 + $0x98] sm:$0x1f]
    %v3397 = vld [vmem:[%s3379 + $0xa0] sm:$0x1f]
    %v3398 = vld [vmem:[%s3379 + $0xa8] sm:$0x1f]
    %v3399 = vld [vmem:[%s3379 + $0xb0] sm:$0x1f]
    %v3400 = vld [vmem:[%s3379 + $0xc0] sm:$0x1f]
    %v3401 = vld [vmem:[%s3379 + $0xc8] sm:$0x1f]
    %v3402 = vld [vmem:[%s3379 + $0xd0] sm:$0x1f]
    %v3403 = vld [vmem:[%s3379 + $0xd8] sm:$0x1f]
    %v3404 = vld [vmem:[%s3379 + $0xe0] sm:$0x1f]
    %v3405 = vld [vmem:[%s3379 + $0xf0] sm:$0x1f]
    %v3406 = vld [vmem:[%s3379 + $0xf8] sm:$0x1f]
    %v3407 = vld [vmem:[%s3379 + $0x100] sm:$0x1f]
    %v3408 = vld [vmem:[%s3379 + $0x108] sm:$0x1f]
    %v3409 = vld [vmem:[%s3379 + $0x110] sm:$0x1f]
    %v3410 = vmul.f32 %v3288, 0.4829629
    %v3411 = vmul.f32 %v3289, 0.4829629
    %v3412 = vmul.f32 %v3290, 0.4829629
    %v3413 = vmul.f32 %v3291, 0.4829629
    %v3414 = vmul.f32 %v3292, 0.4829629
    %v3415 = vmul.f32 %v3293, 0.4829629
    %v3416 = vmul.f32 %v3294, 0.4829629
    %v3417 = vmul.f32 %v3295, 0.4829629
    %v3418 = vmul.f32 %v3296, 0.4829629
    %v3419 = vmul.f32 %v3297, 0.4829629
    %v3420 = vmul.f32 %v3298, 0.4829629
    %v3421 = vmul.f32 %v3299, 0.4829629
    %v3422 = vmul.f32 %v3300, 0.4829629
    %v3423 = vmul.f32 %v3301, 0.4829629
    %v3424 = vmul.f32 %v3302, 0.4829629
    %v3425 = vmul.f32 %v3303, 0.4829629
    %v3426 = vmul.f32 %v3304, 0.4829629
    %v3427 = vmul.f32 %v3305, 0.4829629
    %v3428 = vmul.f32 %v3306, 0.4829629
    %v3429 = vmul.f32 %v3307, 0.4829629
    %v3430 = vmul.f32 %v3308, 0.4829629
    %v3431 = vmul.f32 %v3309, 0.4829629
    %v3432 = vmul.f32 %v3310, 0.4829629
    %v3433 = vmul.f32 %v3311, 0.4829629
    %v3434 = vmul.f32 %v3312, 0.4829629
    %v3435 = vmul.f32 %v3313, 0.4829629
    %v3436 = vmul.f32 %v3314, 0.4829629
    %v3437 = vmul.f32 %v3315, 0.4829629
    %v3438 = vmul.f32 %v3316, 0.4829629
    %v3439 = vmul.f32 %v3317, 0.4829629
    %v3440 = vmul.f32 %v3318, 0.8365163
    %v3441 = vmul.f32 %v3319, 0.8365163
    %v3442 = vmul.f32 %v3320, 0.8365163
    %v3443 = vmul.f32 %v3321, 0.8365163
    %v3444 = vmul.f32 %v3322, 0.8365163
    %v3445 = vmul.f32 %v3323, 0.8365163
    %v3446 = vmul.f32 %v3324, 0.8365163
    %v3447 = vmul.f32 %v3325, 0.8365163
    %v3448 = vmul.f32 %v3326, 0.8365163
    %v3449 = vmul.f32 %v3327, 0.8365163
    %v3450 = vmul.f32 %v3328, 0.8365163
    %v3451 = vmul.f32 %v3329, 0.8365163
    %v3452 = vmul.f32 %v3330, 0.8365163
    %v3453 = vmul.f32 %v3331, 0.8365163
    %v3454 = vmul.f32 %v3332, 0.8365163
    %v3455 = vmul.f32 %v3333, 0.8365163
    %v3456 = vmul.f32 %v3334, 0.8365163
    %v3457 = vmul.f32 %v3335, 0.8365163
    %v3458 = vmul.f32 %v3336, 0.8365163
    %v3459 = vmul.f32 %v3337, 0.8365163
    %v3460 = vmul.f32 %v3338, 0.8365163
    %v3461 = vmul.f32 %v3339, 0.8365163
    %v3462 = vmul.f32 %v3340, 0.8365163
    %v3463 = vmul.f32 %v3341, 0.8365163
    %v3464 = vmul.f32 %v3342, 0.8365163
    %v3465 = vmul.f32 %v3343, 0.8365163
    %v3466 = vmul.f32 %v3344, 0.8365163
    %v3467 = vmul.f32 %v3345, 0.8365163
    %v3468 = vmul.f32 %v3346, 0.8365163
    %v3469 = vmul.f32 %v3347, 0.8365163
    %v3470 = vadd.f32 %v3410, %v3440
    %v3471 = vadd.f32 %v3411, %v3441
    %v3472 = vadd.f32 %v3412, %v3442
    %v3473 = vadd.f32 %v3413, %v3443
    %v3474 = vadd.f32 %v3414, %v3444
    %v3475 = vadd.f32 %v3415, %v3445
    %v3476 = vadd.f32 %v3416, %v3446
    %v3477 = vadd.f32 %v3417, %v3447
    %v3478 = vadd.f32 %v3418, %v3448
    %v3479 = vadd.f32 %v3419, %v3449
    %v3480 = vadd.f32 %v3420, %v3450
    %v3481 = vadd.f32 %v3421, %v3451
    %v3482 = vadd.f32 %v3422, %v3452
    %v3483 = vadd.f32 %v3423, %v3453
    %v3484 = vadd.f32 %v3424, %v3454
    %v3485 = vadd.f32 %v3425, %v3455
    %v3486 = vadd.f32 %v3426, %v3456
    %v3487 = vadd.f32 %v3427, %v3457
    %v3488 = vadd.f32 %v3428, %v3458
    %v3489 = vadd.f32 %v3429, %v3459
    %v3490 = vadd.f32 %v3430, %v3460
    %v3491 = vadd.f32 %v3431, %v3461
    %v3492 = vadd.f32 %v3432, %v3462
    %v3493 = vadd.f32 %v3433, %v3463
    %v3494 = vadd.f32 %v3434, %v3464
    %v3495 = vadd.f32 %v3435, %v3465
    %v3496 = vadd.f32 %v3436, %v3466
    %v3497 = vadd.f32 %v3437, %v3467
    %v3498 = vadd.f32 %v3438, %v3468
    %v3499 = vadd.f32 %v3439, %v3469
    %v3500 = vmul.f32 %v3349, 0.22414386
    %v3501 = vmul.f32 %v3350, 0.22414386
    %v3502 = vmul.f32 %v3351, 0.22414386
    %v3503 = vmul.f32 %v3352, 0.22414386
    %v3504 = vmul.f32 %v3353, 0.22414386
    %v3505 = vmul.f32 %v3354, 0.22414386
    %v3506 = vmul.f32 %v3355, 0.22414386
    %v3507 = vmul.f32 %v3356, 0.22414386
    %v3508 = vmul.f32 %v3357, 0.22414386
    %v3509 = vmul.f32 %v3358, 0.22414386
    %v3510 = vmul.f32 %v3359, 0.22414386
    %v3511 = vmul.f32 %v3360, 0.22414386
    %v3512 = vmul.f32 %v3361, 0.22414386
    %v3513 = vmul.f32 %v3362, 0.22414386
    %v3514 = vmul.f32 %v3363, 0.22414386
    %v3515 = vmul.f32 %v3364, 0.22414386
    %v3516 = vmul.f32 %v3365, 0.22414386
    %v3517 = vmul.f32 %v3366, 0.22414386
    %v3518 = vmul.f32 %v3367, 0.22414386
    %v3519 = vmul.f32 %v3368, 0.22414386
    %v3520 = vmul.f32 %v3369, 0.22414386
    %v3521 = vmul.f32 %v3370, 0.22414386
    %v3522 = vmul.f32 %v3371, 0.22414386
    %v3523 = vmul.f32 %v3372, 0.22414386
    %v3524 = vmul.f32 %v3373, 0.22414386
    %v3525 = vmul.f32 %v3374, 0.22414386
    %v3526 = vmul.f32 %v3375, 0.22414386
    %v3527 = vmul.f32 %v3376, 0.22414386
    %v3528 = vmul.f32 %v3377, 0.22414386
    %v3529 = vmul.f32 %v3378, 0.22414386
    %v3530 = vadd.f32 %v3470, %v3500
    %v3531 = vadd.f32 %v3471, %v3501
    %v3532 = vadd.f32 %v3472, %v3502
    %v3533 = vadd.f32 %v3473, %v3503
    %v3534 = vadd.f32 %v3474, %v3504
    %v3535 = vadd.f32 %v3475, %v3505
    %v3536 = vadd.f32 %v3476, %v3506
    %v3537 = vadd.f32 %v3477, %v3507
    %v3538 = vadd.f32 %v3478, %v3508
    %v3539 = vadd.f32 %v3479, %v3509
    %v3540 = vadd.f32 %v3480, %v3510
    %v3541 = vadd.f32 %v3481, %v3511
    %v3542 = vadd.f32 %v3482, %v3512
    %v3543 = vadd.f32 %v3483, %v3513
    %v3544 = vadd.f32 %v3484, %v3514
    %v3545 = vadd.f32 %v3485, %v3515
    %v3546 = vadd.f32 %v3486, %v3516
    %v3547 = vadd.f32 %v3487, %v3517
    %v3548 = vadd.f32 %v3488, %v3518
    %v3549 = vadd.f32 %v3489, %v3519
    %v3550 = vadd.f32 %v3490, %v3520
    %v3551 = vadd.f32 %v3491, %v3521
    %v3552 = vadd.f32 %v3492, %v3522
    %v3553 = vadd.f32 %v3493, %v3523
    %v3554 = vadd.f32 %v3494, %v3524
    %v3555 = vadd.f32 %v3495, %v3525
    %v3556 = vadd.f32 %v3496, %v3526
    %v3557 = vadd.f32 %v3497, %v3527
    %v3558 = vadd.f32 %v3498, %v3528
    %v3559 = vadd.f32 %v3499, %v3529
    %v3560 = vmul.f32 %v3380, -0.12940952
    %v3561 = vmul.f32 %v3381, -0.12940952
    %v3562 = vmul.f32 %v3382, -0.12940952
    %v3563 = vmul.f32 %v3383, -0.12940952
    %v3564 = vmul.f32 %v3384, -0.12940952
    %v3565 = vmul.f32 %v3385, -0.12940952
    %v3566 = vmul.f32 %v3386, -0.12940952
    %v3567 = vmul.f32 %v3387, -0.12940952
    %v3568 = vmul.f32 %v3388, -0.12940952
    %v3569 = vmul.f32 %v3389, -0.12940952
    %v3570 = vmul.f32 %v3390, -0.12940952
    %v3571 = vmul.f32 %v3391, -0.12940952
    %v3572 = vmul.f32 %v3392, -0.12940952
    %v3573 = vmul.f32 %v3393, -0.12940952
    %v3574 = vmul.f32 %v3394, -0.12940952
    %v3575 = vmul.f32 %v3395, -0.12940952
    %v3576 = vmul.f32 %v3396, -0.12940952
    %v3577 = vmul.f32 %v3397, -0.12940952
    %v3578 = vmul.f32 %v3398, -0.12940952
    %v3579 = vmul.f32 %v3399, -0.12940952
    %v3580 = vmul.f32 %v3400, -0.12940952
    %v3581 = vmul.f32 %v3401, -0.12940952
    %v3582 = vmul.f32 %v3402, -0.12940952
    %v3583 = vmul.f32 %v3403, -0.12940952
    %v3584 = vmul.f32 %v3404, -0.12940952
    %v3585 = vmul.f32 %v3405, -0.12940952
    %v3586 = vmul.f32 %v3406, -0.12940952
    %v3587 = vmul.f32 %v3407, -0.12940952
    %v3588 = vmul.f32 %v3408, -0.12940952
    %v3589 = vmul.f32 %v3409, -0.12940952
    %v3590 = vadd.f32 %v3530, %v3560
    %v3591 = vadd.f32 %v3531, %v3561
    %v3592 = vadd.f32 %v3532, %v3562
    %v3593 = vadd.f32 %v3533, %v3563
    %v3594 = vadd.f32 %v3534, %v3564
    %v3595 = vadd.f32 %v3535, %v3565
    %v3596 = vadd.f32 %v3536, %v3566
    %v3597 = vadd.f32 %v3537, %v3567
    %v3598 = vadd.f32 %v3538, %v3568
    %v3599 = vadd.f32 %v3539, %v3569
    %v3600 = vadd.f32 %v3540, %v3570
    %v3601 = vadd.f32 %v3541, %v3571
    %v3602 = vadd.f32 %v3542, %v3572
    %v3603 = vadd.f32 %v3543, %v3573
    %v3604 = vadd.f32 %v3544, %v3574
    %v3605 = vadd.f32 %v3545, %v3575
    %v3606 = vadd.f32 %v3546, %v3576
    %v3607 = vadd.f32 %v3547, %v3577
    %v3608 = vadd.f32 %v3548, %v3578
    %v3609 = vadd.f32 %v3549, %v3579
    %v3610 = vadd.f32 %v3550, %v3580
    %v3611 = vadd.f32 %v3551, %v3581
    %v3612 = vadd.f32 %v3552, %v3582
    %v3613 = vadd.f32 %v3553, %v3583
    %v3614 = vadd.f32 %v3554, %v3584
    %v3615 = vadd.f32 %v3555, %v3585
    %v3616 = vadd.f32 %v3556, %v3586
    %v3617 = vadd.f32 %v3557, %v3587
    %v3618 = vadd.f32 %v3558, %v3588
    %v3619 = vadd.f32 %v3559, %v3589
    %s3620 = scalar_lea.vmem [#allocation3], 240
    %3621 = vst [vmem:[%s3620] sm:$0x1f] %v3590
    %3622 = vst [vmem:[%s3620 + $0x8] sm:$0x1f] %v3591
    %3623 = vst [vmem:[%s3620 + $0x10] sm:$0x1f] %v3592
    %3624 = vst [vmem:[%s3620 + $0x18] sm:$0x1f] %v3593
    %3625 = vst [vmem:[%s3620 + $0x20] sm:$0x1f] %v3594
    %3626 = vst [vmem:[%s3620 + $0x28] sm:$0x1f] %v3595
    %3627 = vst [vmem:[%s3620 + $0x30] sm:$0x1f] %v3596
    %3628 = vst [vmem:[%s3620 + $0x38] sm:$0x1f] %v3597
    %3629 = vst [vmem:[%s3620 + $0x40] sm:$0x1f] %v3598
    %3630 = vst [vmem:[%s3620 + $0x48] sm:$0x1f] %v3599
    %3631 = vst [vmem:[%s3620 + $0x50] sm:$0x1f] %v3600
    %3632 = vst [vmem:[%s3620 + $0x58] sm:$0x1f] %v3601
    %3633 = vst [vmem:[%s3620 + $0x60] sm:$0x1f] %v3602
    %3634 = vst [vmem:[%s3620 + $0x68] sm:$0x1f] %v3603
    %3635 = vst [vmem:[%s3620 + $0x70] sm:$0x1f] %v3604
    %3636 = vst [vmem:[%s3620 + $0x78] sm:$0x1f] %v3605
    %3637 = vst [vmem:[%s3620 + $0x80] sm:$0x1f] %v3606
    %3638 = vst [vmem:[%s3620 + $0x88] sm:$0x1f] %v3607
    %3639 = vst [vmem:[%s3620 + $0x90] sm:$0x1f] %v3608
    %3640 = vst [vmem:[%s3620 + $0x98] sm:$0x1f] %v3609
    %3641 = vst [vmem:[%s3620 + $0xa0] sm:$0x1f] %v3610
    %3642 = vst [vmem:[%s3620 + $0xa8] sm:$0x1f] %v3611
    %3643 = vst [vmem:[%s3620 + $0xb0] sm:$0x1f] %v3612
    %3644 = vst [vmem:[%s3620 + $0xb8] sm:$0x1f] %v3613
    %3645 = vst [vmem:[%s3620 + $0xc0] sm:$0x1f] %v3614
    %3646 = vst [vmem:[%s3620 + $0xc8] sm:$0x1f] %v3615
    %3647 = vst [vmem:[%s3620 + $0xd0] sm:$0x1f] %v3616
    %3648 = vst [vmem:[%s3620 + $0xd8] sm:$0x1f] %v3617
    %3649 = vst [vmem:[%s3620 + $0xe0] sm:$0x1f] %v3618
    %3650 = vst [vmem:[%s3620 + $0xe8] sm:$0x1f] %v3619
    %v3651 = vmul.f32 %v3288, -0.12940952
    %v3652 = vmul.f32 %v3289, -0.12940952
    %v3653 = vmul.f32 %v3290, -0.12940952
    %v3654 = vmul.f32 %v3291, -0.12940952
    %v3655 = vmul.f32 %v3292, -0.12940952
    %v3656 = vmul.f32 %v3293, -0.12940952
    %v3657 = vmul.f32 %v3294, -0.12940952
    %v3658 = vmul.f32 %v3295, -0.12940952
    %v3659 = vmul.f32 %v3296, -0.12940952
    %v3660 = vmul.f32 %v3297, -0.12940952
    %v3661 = vmul.f32 %v3298, -0.12940952
    %v3662 = vmul.f32 %v3299, -0.12940952
    %v3663 = vmul.f32 %v3300, -0.12940952
    %v3664 = vmul.f32 %v3301, -0.12940952
    %v3665 = vmul.f32 %v3302, -0.12940952
    %v3666 = vmul.f32 %v3303, -0.12940952
    %v3667 = vmul.f32 %v3304, -0.12940952
    %v3668 = vmul.f32 %v3305, -0.12940952
    %v3669 = vmul.f32 %v3306, -0.12940952
    %v3670 = vmul.f32 %v3307, -0.12940952
    %v3671 = vmul.f32 %v3308, -0.12940952
    %v3672 = vmul.f32 %v3309, -0.12940952
    %v3673 = vmul.f32 %v3310, -0.12940952
    %v3674 = vmul.f32 %v3311, -0.12940952
    %v3675 = vmul.f32 %v3312, -0.12940952
    %v3676 = vmul.f32 %v3313, -0.12940952
    %v3677 = vmul.f32 %v3314, -0.12940952
    %v3678 = vmul.f32 %v3315, -0.12940952
    %v3679 = vmul.f32 %v3316, -0.12940952
    %v3680 = vmul.f32 %v3317, -0.12940952
    %v3681 = vmul.f32 %v3318, -0.22414386
    %v3682 = vmul.f32 %v3319, -0.22414386
    %v3683 = vmul.f32 %v3320, -0.22414386
    %v3684 = vmul.f32 %v3321, -0.22414386
    %v3685 = vmul.f32 %v3322, -0.22414386
    %v3686 = vmul.f32 %v3323, -0.22414386
    %v3687 = vmul.f32 %v3324, -0.22414386
    %v3688 = vmul.f32 %v3325, -0.22414386
    %v3689 = vmul.f32 %v3326, -0.22414386
    %v3690 = vmul.f32 %v3327, -0.22414386
    %v3691 = vmul.f32 %v3328, -0.22414386
    %v3692 = vmul.f32 %v3329, -0.22414386
    %v3693 = vmul.f32 %v3330, -0.22414386
    %v3694 = vmul.f32 %v3331, -0.22414386
    %v3695 = vmul.f32 %v3332, -0.22414386
    %v3696 = vmul.f32 %v3333, -0.22414386
    %v3697 = vmul.f32 %v3334, -0.22414386
    %v3698 = vmul.f32 %v3335, -0.22414386
    %v3699 = vmul.f32 %v3336, -0.22414386
    %v3700 = vmul.f32 %v3337, -0.22414386
    %v3701 = vmul.f32 %v3338, -0.22414386
    %v3702 = vmul.f32 %v3339, -0.22414386
    %v3703 = vmul.f32 %v3340, -0.22414386
    %v3704 = vmul.f32 %v3341, -0.22414386
    %v3705 = vmul.f32 %v3342, -0.22414386
    %v3706 = vmul.f32 %v3343, -0.22414386
    %v3707 = vmul.f32 %v3344, -0.22414386
    %v3708 = vmul.f32 %v3345, -0.22414386
    %v3709 = vmul.f32 %v3346, -0.22414386
    %v3710 = vmul.f32 %v3347, -0.22414386
    %v3711 = vadd.f32 %v3651, %v3681
    %v3712 = vadd.f32 %v3652, %v3682
    %v3713 = vadd.f32 %v3653, %v3683
    %v3714 = vadd.f32 %v3654, %v3684
    %v3715 = vadd.f32 %v3655, %v3685
    %v3716 = vadd.f32 %v3656, %v3686
    %v3717 = vadd.f32 %v3657, %v3687
    %v3718 = vadd.f32 %v3658, %v3688
    %v3719 = vadd.f32 %v3659, %v3689
    %v3720 = vadd.f32 %v3660, %v3690
    %v3721 = vadd.f32 %v3661, %v3691
    %v3722 = vadd.f32 %v3662, %v3692
    %v3723 = vadd.f32 %v3663, %v3693
    %v3724 = vadd.f32 %v3664, %v3694
    %v3725 = vadd.f32 %v3665, %v3695
    %v3726 = vadd.f32 %v3666, %v3696
    %v3727 = vadd.f32 %v3667, %v3697
    %v3728 = vadd.f32 %v3668, %v3698
    %v3729 = vadd.f32 %v3669, %v3699
    %v3730 = vadd.f32 %v3670, %v3700
    %v3731 = vadd.f32 %v3671, %v3701
    %v3732 = vadd.f32 %v3672, %v3702
    %v3733 = vadd.f32 %v3673, %v3703
    %v3734 = vadd.f32 %v3674, %v3704
    %v3735 = vadd.f32 %v3675, %v3705
    %v3736 = vadd.f32 %v3676, %v3706
    %v3737 = vadd.f32 %v3677, %v3707
    %v3738 = vadd.f32 %v3678, %v3708
    %v3739 = vadd.f32 %v3679, %v3709
    %v3740 = vadd.f32 %v3680, %v3710
    %v3741 = vmul.f32 %v3349, 0.8365163
    %v3742 = vmul.f32 %v3350, 0.8365163
    %v3743 = vmul.f32 %v3351, 0.8365163
    %v3744 = vmul.f32 %v3352, 0.8365163
    %v3745 = vmul.f32 %v3353, 0.8365163
    %v3746 = vmul.f32 %v3354, 0.8365163
    %v3747 = vmul.f32 %v3355, 0.8365163
    %v3748 = vmul.f32 %v3356, 0.8365163
    %v3749 = vmul.f32 %v3357, 0.8365163
    %v3750 = vmul.f32 %v3358, 0.8365163
    %v3751 = vmul.f32 %v3359, 0.8365163
    %v3752 = vmul.f32 %v3360, 0.8365163
    %v3753 = vmul.f32 %v3361, 0.8365163
    %v3754 = vmul.f32 %v3362, 0.8365163
    %v3755 = vmul.f32 %v3363, 0.8365163
    %v3756 = vmul.f32 %v3364, 0.8365163
    %v3757 = vmul.f32 %v3365, 0.8365163
    %v3758 = vmul.f32 %v3366, 0.8365163
    %v3759 = vmul.f32 %v3367, 0.8365163
    %v3760 = vmul.f32 %v3368, 0.8365163
    %v3761 = vmul.f32 %v3369, 0.8365163
    %v3762 = vmul.f32 %v3370, 0.8365163
    %v3763 = vmul.f32 %v3371, 0.8365163
    %v3764 = vmul.f32 %v3372, 0.8365163
    %v3765 = vmul.f32 %v3373, 0.8365163
    %v3766 = vmul.f32 %v3374, 0.8365163
    %v3767 = vmul.f32 %v3375, 0.8365163
    %v3768 = vmul.f32 %v3376, 0.8365163
    %v3769 = vmul.f32 %v3377, 0.8365163
    %v3770 = vmul.f32 %v3378, 0.8365163
    %v3771 = vadd.f32 %v3711, %v3741
    %v3772 = vadd.f32 %v3712, %v3742
    %v3773 = vadd.f32 %v3713, %v3743
    %v3774 = vadd.f32 %v3714, %v3744
    %v3775 = vadd.f32 %v3715, %v3745
    %v3776 = vadd.f32 %v3716, %v3746
    %v3777 = vadd.f32 %v3717, %v3747
    %v3778 = vadd.f32 %v3718, %v3748
    %v3779 = vadd.f32 %v3719, %v3749
    %v3780 = vadd.f32 %v3720, %v3750
    %v3781 = vadd.f32 %v3721, %v3751
    %v3782 = vadd.f32 %v3722, %v3752
    %v3783 = vadd.f32 %v3723, %v3753
    %v3784 = vadd.f32 %v3724, %v3754
    %v3785 = vadd.f32 %v3725, %v3755
    %v3786 = vadd.f32 %v3726, %v3756
    %v3787 = vadd.f32 %v3727, %v3757
    %v3788 = vadd.f32 %v3728, %v3758
    %v3789 = vadd.f32 %v3729, %v3759
    %v3790 = vadd.f32 %v3730, %v3760
    %v3791 = vadd.f32 %v3731, %v3761
    %v3792 = vadd.f32 %v3732, %v3762
    %v3793 = vadd.f32 %v3733, %v3763
    %v3794 = vadd.f32 %v3734, %v3764
    %v3795 = vadd.f32 %v3735, %v3765
    %v3796 = vadd.f32 %v3736, %v3766
    %v3797 = vadd.f32 %v3737, %v3767
    %v3798 = vadd.f32 %v3738, %v3768
    %v3799 = vadd.f32 %v3739, %v3769
    %v3800 = vadd.f32 %v3740, %v3770
    %v3801 = vmul.f32 %v3380, -0.4829629
    %v3802 = vmul.f32 %v3381, -0.4829629
    %v3803 = vmul.f32 %v3382, -0.4829629
    %v3804 = vmul.f32 %v3383, -0.4829629
    %v3805 = vmul.f32 %v3384, -0.4829629
    %v3806 = vmul.f32 %v3385, -0.4829629
    %v3807 = vmul.f32 %v3386, -0.4829629
    %v3808 = vmul.f32 %v3387, -0.4829629
    %v3809 = vmul.f32 %v3388, -0.4829629
    %v3810 = vmul.f32 %v3389, -0.4829629
    %v3811 = vmul.f32 %v3390, -0.4829629
    %v3812 = vmul.f32 %v3391, -0.4829629
    %v3813 = vmul.f32 %v3392, -0.4829629
    %v3814 = vmul.f32 %v3393, -0.4829629
    %v3815 = vmul.f32 %v3394, -0.4829629
    %v3816 = vmul.f32 %v3395, -0.4829629
    %v3817 = vmul.f32 %v3396, -0.4829629
    %v3818 = vmul.f32 %v3397, -0.4829629
    %v3819 = vmul.f32 %v3398, -0.4829629
    %v3820 = vmul.f32 %v3399, -0.4829629
    %v3821 = vmul.f32 %v3400, -0.4829629
    %v3822 = vmul.f32 %v3401, -0.4829629
    %v3823 = vmul.f32 %v3402, -0.4829629
    %v3824 = vmul.f32 %v3403, -0.4829629
    %v3825 = vmul.f32 %v3404, -0.4829629
    %v3826 = vmul.f32 %v3405, -0.4829629
    %v3827 = vmul.f32 %v3406, -0.4829629
    %v3828 = vmul.f32 %v3407, -0.4829629
    %v3829 = vmul.f32 %v3408, -0.4829629
    %v3830 = vmul.f32 %v3409, -0.4829629
    %v3831 = vadd.f32 %v3771, %v3801
    %v3832 = vadd.f32 %v3772, %v3802
    %v3833 = vadd.f32 %v3773, %v3803
    %v3834 = vadd.f32 %v3774, %v3804
    %v3835 = vadd.f32 %v3775, %v3805
    %v3836 = vadd.f32 %v3776, %v3806
    %v3837 = vadd.f32 %v3777, %v3807
    %v3838 = vadd.f32 %v3778, %v3808
    %v3839 = vadd.f32 %v3779, %v3809
    %v3840 = vadd.f32 %v3780, %v3810
    %v3841 = vadd.f32 %v3781, %v3811
    %v3842 = vadd.f32 %v3782, %v3812
    %v3843 = vadd.f32 %v3783, %v3813
    %v3844 = vadd.f32 %v3784, %v3814
    %v3845 = vadd.f32 %v3785, %v3815
    %v3846 = vadd.f32 %v3786, %v3816
    %v3847 = vadd.f32 %v3787, %v3817
    %v3848 = vadd.f32 %v3788, %v3818
    %v3849 = vadd.f32 %v3789, %v3819
    %v3850 = vadd.f32 %v3790, %v3820
    %v3851 = vadd.f32 %v3791, %v3821
    %v3852 = vadd.f32 %v3792, %v3822
    %v3853 = vadd.f32 %v3793, %v3823
    %v3854 = vadd.f32 %v3794, %v3824
    %v3855 = vadd.f32 %v3795, %v3825
    %v3856 = vadd.f32 %v3796, %v3826
    %v3857 = vadd.f32 %v3797, %v3827
    %v3858 = vadd.f32 %v3798, %v3828
    %v3859 = vadd.f32 %v3799, %v3829
    %v3860 = vadd.f32 %v3800, %v3830
    %s3861 = scalar_lea.vmem [#allocation3], 720
    %3862 = vst [vmem:[%s3861] sm:$0x1f] %v3831
    %3863 = vst [vmem:[%s3861 + $0x8] sm:$0x1f] %v3832
    %3864 = vst [vmem:[%s3861 + $0x10] sm:$0x1f] %v3833
    %3865 = vst [vmem:[%s3861 + $0x18] sm:$0x1f] %v3834
    %3866 = vst [vmem:[%s3861 + $0x20] sm:$0x1f] %v3835
    %3867 = vst [vmem:[%s3861 + $0x28] sm:$0x1f] %v3836
    %3868 = vst [vmem:[%s3861 + $0x30] sm:$0x1f] %v3837
    %3869 = vst [vmem:[%s3861 + $0x38] sm:$0x1f] %v3838
    %3870 = vst [vmem:[%s3861 + $0x40] sm:$0x1f] %v3839
    %3871 = vst [vmem:[%s3861 + $0x48] sm:$0x1f] %v3840
    %3872 = vst [vmem:[%s3861 + $0x50] sm:$0x1f] %v3841
    %3873 = vst [vmem:[%s3861 + $0x58] sm:$0x1f] %v3842
    %3874 = vst [vmem:[%s3861 + $0x60] sm:$0x1f] %v3843
    %3875 = vst [vmem:[%s3861 + $0x68] sm:$0x1f] %v3844
    %3876 = vst [vmem:[%s3861 + $0x70] sm:$0x1f] %v3845
    %3877 = vst [vmem:[%s3861 + $0x78] sm:$0x1f] %v3846
    %3878 = vst [vmem:[%s3861 + $0x80] sm:$0x1f] %v3847
    %3879 = vst [vmem:[%s3861 + $0x88] sm:$0x1f] %v3848
    %3880 = vst [vmem:[%s3861 + $0x90] sm:$0x1f] %v3849
    %3881 = vst [vmem:[%s3861 + $0x98] sm:$0x1f] %v3850
    %3882 = vst [vmem:[%s3861 + $0xa0] sm:$0x1f] %v3851
    %3883 = vst [vmem:[%s3861 + $0xa8] sm:$0x1f] %v3852
    %3884 = vst [vmem:[%s3861 + $0xb0] sm:$0x1f] %v3853
    %3885 = vst [vmem:[%s3861 + $0xb8] sm:$0x1f] %v3854
    %3886 = vst [vmem:[%s3861 + $0xc0] sm:$0x1f] %v3855
    %3887 = vst [vmem:[%s3861 + $0xc8] sm:$0x1f] %v3856
    %3888 = vst [vmem:[%s3861 + $0xd0] sm:$0x1f] %v3857
    %3889 = vst [vmem:[%s3861 + $0xd8] sm:$0x1f] %v3858
    %3890 = vst [vmem:[%s3861 + $0xe0] sm:$0x1f] %v3859
    %3891 = vst [vmem:[%s3861 + $0xe8] sm:$0x1f] %v3860
    %s3892 = scalar_lea.vmem [#allocation4], 960
    %v3893 = vld [vmem:[%s3892] sm:$0x1f]
    %v3894 = vld [vmem:[%s3892 + $0x8] sm:$0x1f]
    %v3895 = vld [vmem:[%s3892 + $0x10] sm:$0x1f]
    %v3896 = vld [vmem:[%s3892 + $0x18] sm:$0x1f]
    %v3897 = vld [vmem:[%s3892 + $0x20] sm:$0x1f]
    %v3898 = vld [vmem:[%s3892 + $0x28] sm:$0x1f]
    %v3899 = vld [vmem:[%s3892 + $0x30] sm:$0x1f]
    %v3900 = vld [vmem:[%s3892 + $0x38] sm:$0x1f]
    %v3901 = vld [vmem:[%s3892 + $0x40] sm:$0x1f]
    %v3902 = vld [vmem:[%s3892 + $0x48] sm:$0x1f]
    %v3903 = vld [vmem:[%s3892 + $0x50] sm:$0x1f]
    %v3904 = vld [vmem:[%s3892 + $0x58] sm:$0x1f]
    %v3905 = vld [vmem:[%s3892 + $0x60] sm:$0x1f]
    %v3906 = vld [vmem:[%s3892 + $0x68] sm:$0x1f]
    %v3907 = vld [vmem:[%s3892 + $0x70] sm:$0x1f]
    %v3908 = vld [vmem:[%s3892 + $0x78] sm:$0x1f]
    %v3909 = vld [vmem:[%s3892 + $0x80] sm:$0x1f]
    %v3910 = vld [vmem:[%s3892 + $0x88] sm:$0x1f]
    %v3911 = vld [vmem:[%s3892 + $0x90] sm:$0x1f]
    %v3912 = vld [vmem:[%s3892 + $0x98] sm:$0x1f]
    %v3913 = vld [vmem:[%s3892 + $0xa0] sm:$0x1f]
    %v3914 = vld [vmem:[%s3892 + $0xa8] sm:$0x1f]
    %v3915 = vld [vmem:[%s3892 + $0xb0] sm:$0x1f]
    %v3916 = vld [vmem:[%s3892 + $0xb8] sm:$0x1f]
    %v3917 = vld [vmem:[%s3892 + $0xc0] sm:$0x1f]
    %v3918 = vld [vmem:[%s3892 + $0xc8] sm:$0x1f]
    %v3919 = vld [vmem:[%s3892 + $0xd0] sm:$0x1f]
    %v3920 = vld [vmem:[%s3892 + $0xd8] sm:$0x1f]
    %v3921 = vld [vmem:[%s3892 + $0xe0] sm:$0x1f]
    %v3922 = vld [vmem:[%s3892 + $0xe8] sm:$0x1f]
    %s3923 = scalar_lea.vmem [#allocation4], 1200
    %v3924 = vld [vmem:[%s3923] sm:$0x1f]
    %v3925 = vld [vmem:[%s3923 + $0x8] sm:$0x1f]
    %v3926 = vld [vmem:[%s3923 + $0x10] sm:$0x1f]
    %v3927 = vld [vmem:[%s3923 + $0x18] sm:$0x1f]
    %v3928 = vld [vmem:[%s3923 + $0x20] sm:$0x1f]
    %v3929 = vld [vmem:[%s3923 + $0x28] sm:$0x1f]
    %v3930 = vld [vmem:[%s3923 + $0x30] sm:$0x1f]
    %v3931 = vld [vmem:[%s3923 + $0x38] sm:$0x1f]
    %v3932 = vld [vmem:[%s3923 + $0x40] sm:$0x1f]
    %v3933 = vld [vmem:[%s3923 + $0x48] sm:$0x1f]
    %v3934 = vld [vmem:[%s3923 + $0x50] sm:$0x1f]
    %v3935 = vld [vmem:[%s3923 + $0x58] sm:$0x1f]
    %v3936 = vld [vmem:[%s3923 + $0x60] sm:$0x1f]
    %v3937 = vld [vmem:[%s3923 + $0x68] sm:$0x1f]
    %v3938 = vld [vmem:[%s3923 + $0x70] sm:$0x1f]
    %v3939 = vld [vmem:[%s3923 + $0x78] sm:$0x1f]
    %v3940 = vld [vmem:[%s3923 + $0x80] sm:$0x1f]
    %v3941 = vld [vmem:[%s3923 + $0x88] sm:$0x1f]
    %v3942 = vld [vmem:[%s3923 + $0x90] sm:$0x1f]
    %v3943 = vld [vmem:[%s3923 + $0x98] sm:$0x1f]
    %v3944 = vld [vmem:[%s3923 + $0xa0] sm:$0x1f]
    %v3945 = vld [vmem:[%s3923 + $0xa8] sm:$0x1f]
    %v3946 = vld [vmem:[%s3923 + $0xb0] sm:$0x1f]
    %v3947 = vld [vmem:[%s3923 + $0xb8] sm:$0x1f]
    %v3948 = vld [vmem:[%s3923 + $0xc0] sm:$0x1f]
    %v3949 = vld [vmem:[%s3923 + $0xc8] sm:$0x1f]
    %v3950 = vld [vmem:[%s3923 + $0xd0] sm:$0x1f]
    %v3951 = vld [vmem:[%s3923 + $0xd8] sm:$0x1f]
    %v3952 = vld [vmem:[%s3923 + $0xe0] sm:$0x1f]
    %v3953 = vld [vmem:[%s3923 + $0xe8] sm:$0x1f]
    %v3954 = vld [vmem:[%s3892 + $0x1] sm:$0x1f]
    %v3955 = vld [vmem:[%s3892 + $0x9] sm:$0x1f]
    %v3956 = vld [vmem:[%s3892 + $0x11] sm:$0x1f]
    %v3957 = vld [vmem:[%s3892 + $0x19] sm:$0x1f]
    %v3958 = vld [vmem:[%s3892 + $0x21] sm:$0x1f]
    %v3959 = vld [vmem:[%s3892 + $0x29] sm:$0x1f]
    %v3960 = vld [vmem:[%s3892 + $0x31] sm:$0x1f]
    %v3961 = vld [vmem:[%s3892 + $0x39] sm:$0x1f]
    %v3962 = vld [vmem:[%s3892 + $0x41] sm:$0x1f]
    %v3963 = vld [vmem:[%s3892 + $0x49] sm:$0x1f]
    %v3964 = vld [vmem:[%s3892 + $0x51] sm:$0x1f]
    %v3965 = vld [vmem:[%s3892 + $0x59] sm:$0x1f]
    %v3966 = vld [vmem:[%s3892 + $0x61] sm:$0x1f]
    %v3967 = vld [vmem:[%s3892 + $0x69] sm:$0x1f]
    %v3968 = vld [vmem:[%s3892 + $0x71] sm:$0x1f]
    %v3969 = vld [vmem:[%s3892 + $0x79] sm:$0x1f]
    %v3970 = vld [vmem:[%s3892 + $0x81] sm:$0x1f]
    %v3971 = vld [vmem:[%s3892 + $0x89] sm:$0x1f]
    %v3972 = vld [vmem:[%s3892 + $0x91] sm:$0x1f]
    %v3973 = vld [vmem:[%s3892 + $0x99] sm:$0x1f]
    %v3974 = vld [vmem:[%s3892 + $0xa1] sm:$0x1f]
    %v3975 = vld [vmem:[%s3892 + $0xa9] sm:$0x1f]
    %v3976 = vld [vmem:[%s3892 + $0xb1] sm:$0x1f]
    %v3977 = vld [vmem:[%s3892 + $0xb9] sm:$0x1f]
    %v3978 = vld [vmem:[%s3892 + $0xc1] sm:$0x1f]
    %v3979 = vld [vmem:[%s3892 + $0xc9] sm:$0x1f]
    %v3980 = vld [vmem:[%s3892 + $0xd1] sm:$0x1f]
    %v3981 = vld [vmem:[%s3892 + $0xd9] sm:$0x1f]
    %v3982 = vld [vmem:[%s3892 + $0xe1] sm:$0x1f]
    %v3983 = vld [vmem:[%s3892 + $0xe9] sm:$0x1f]
    %v3984 = vld [vmem:[%s3923 + $0x1] sm:$0x1f]
    %v3985 = vld [vmem:[%s3923 + $0x9] sm:$0x1f]
    %v3986 = vld [vmem:[%s3923 + $0x11] sm:$0x1f]
    %v3987 = vld [vmem:[%s3923 + $0x19] sm:$0x1f]
    %v3988 = vld [vmem:[%s3923 + $0x21] sm:$0x1f]
    %v3989 = vld [vmem:[%s3923 + $0x29] sm:$0x1f]
    %v3990 = vld [vmem:[%s3923 + $0x31] sm:$0x1f]
    %v3991 = vld [vmem:[%s3923 + $0x39] sm:$0x1f]
    %v3992 = vld [vmem:[%s3923 + $0x41] sm:$0x1f]
    %v3993 = vld [vmem:[%s3923 + $0x49] sm:$0x1f]
    %v3994 = vld [vmem:[%s3923 + $0x51] sm:$0x1f]
    %v3995 = vld [vmem:[%s3923 + $0x59] sm:$0x1f]
    %v3996 = vld [vmem:[%s3923 + $0x61] sm:$0x1f]
    %v3997 = vld [vmem:[%s3923 + $0x69] sm:$0x1f]
    %v3998 = vld [vmem:[%s3923 + $0x71] sm:$0x1f]
    %v3999 = vld [vmem:[%s3923 + $0x79] sm:$0x1f]
    %v4000 = vld [vmem:[%s3923 + $0x81] sm:$0x1f]
    %v4001 = vld [vmem:[%s3923 + $0x89] sm:$0x1f]
    %v4002 = vld [vmem:[%s3923 + $0x91] sm:$0x1f]
    %v4003 = vld [vmem:[%s3923 + $0x99] sm:$0x1f]
    %v4004 = vld [vmem:[%s3923 + $0xa1] sm:$0x1f]
    %v4005 = vld [vmem:[%s3923 + $0xa9] sm:$0x1f]
    %v4006 = vld [vmem:[%s3923 + $0xb1] sm:$0x1f]
    %v4007 = vld [vmem:[%s3923 + $0xb9] sm:$0x1f]
    %v4008 = vld [vmem:[%s3923 + $0xc1] sm:$0x1f]
    %v4009 = vld [vmem:[%s3923 + $0xc9] sm:$0x1f]
    %v4010 = vld [vmem:[%s3923 + $0xd1] sm:$0x1f]
    %v4011 = vld [vmem:[%s3923 + $0xd9] sm:$0x1f]
    %v4012 = vld [vmem:[%s3923 + $0xe1] sm:$0x1f]
    %v4013 = vld [vmem:[%s3923 + $0xe9] sm:$0x1f]
    %s4014 = scalar_lea.vmem [#allocation5], 192
    %v4015 = vld [vmem:[%s4014] sm:$0x1f]
    %v4016 = vld [vmem:[%s4014 + $0x8] sm:$0x1f]
    %v4017 = vld [vmem:[%s4014 + $0x10] sm:$0x1f]
    %v4018 = vld [vmem:[%s4014 + $0x18] sm:$0x1f]
    %v4019 = vld [vmem:[%s4014 + $0x20] sm:$0x1f]
    %v4020 = vld [vmem:[%s4014 + $0x28] sm:$0x1f]
    %s4021 = scalar_lea.vmem [#allocation5], 240
    %v4022 = vld [vmem:[%s4021] sm:$0x1f]
    %v4023 = vld [vmem:[%s4021 + $0x8] sm:$0x1f]
    %v4024 = vld [vmem:[%s4021 + $0x10] sm:$0x1f]
    %v4025 = vld [vmem:[%s4021 + $0x18] sm:$0x1f]
    %v4026 = vld [vmem:[%s4021 + $0x20] sm:$0x1f]
    %v4027 = vld [vmem:[%s4021 + $0x28] sm:$0x1f]
    %v4028 = vld [vmem:[%s4014 + $0x1] sm:$0x1f]
    %v4029 = vld [vmem:[%s4014 + $0x9] sm:$0x1f]
    %v4030 = vld [vmem:[%s4014 + $0x11] sm:$0x1f]
    %v4031 = vld [vmem:[%s4014 + $0x19] sm:$0x1f]
    %v4032 = vld [vmem:[%s4014 + $0x21] sm:$0x1f]
    %v4033 = vld [vmem:[%s4014 + $0x29] sm:$0x1f]
    %v4034 = vld [vmem:[%s4021 + $0x1] sm:$0x1f]
    %v4035 = vld [vmem:[%s4021 + $0x9] sm:$0x1f]
    %v4036 = vld [vmem:[%s4021 + $0x11] sm:$0x1f]
    %v4037 = vld [vmem:[%s4021 + $0x19] sm:$0x1f]
    %v4038 = vld [vmem:[%s4021 + $0x21] sm:$0x1f]
    %v4039 = vld [vmem:[%s4021 + $0x29] sm:$0x1f]
    %v4040 = vmul.f32 %v3893, 0.4829629
    %v4041 = vmul.f32 %v3894, 0.4829629
    %v4042 = vmul.f32 %v3895, 0.4829629
    %v4043 = vmul.f32 %v3896, 0.4829629
    %v4044 = vmul.f32 %v3897, 0.4829629
    %v4045 = vmul.f32 %v3898, 0.4829629
    %v4046 = vmul.f32 %v3899, 0.4829629
    %v4047 = vmul.f32 %v3900, 0.4829629
    %v4048 = vmul.f32 %v3901, 0.4829629
    %v4049 = vmul.f32 %v3902, 0.4829629
    %v4050 = vmul.f32 %v3903, 0.4829629
    %v4051 = vmul.f32 %v3904, 0.4829629
    %v4052 = vmul.f32 %v3905, 0.4829629
    %v4053 = vmul.f32 %v3906, 0.4829629
    %v4054 = vmul.f32 %v3907, 0.4829629
    %v4055 = vmul.f32 %v3908, 0.4829629
    %v4056 = vmul.f32 %v3909, 0.4829629
    %v4057 = vmul.f32 %v3910, 0.4829629
    %v4058 = vmul.f32 %v3911, 0.4829629
    %v4059 = vmul.f32 %v3912, 0.4829629
    %v4060 = vmul.f32 %v3913, 0.4829629
    %v4061 = vmul.f32 %v3914, 0.4829629
    %v4062 = vmul.f32 %v3915, 0.4829629
    %v4063 = vmul.f32 %v3916, 0.4829629
    %v4064 = vmul.f32 %v3917, 0.4829629
    %v4065 = vmul.f32 %v3918, 0.4829629
    %v4066 = vmul.f32 %v3919, 0.4829629
    %v4067 = vmul.f32 %v3920, 0.4829629
    %v4068 = vmul.f32 %v3921, 0.4829629
    %v4069 = vmul.f32 %v3922, 0.4829629
    %v4070 = vmul.f32 %v3924, 0.8365163
    %v4071 = vmul.f32 %v3925, 0.8365163
    %v4072 = vmul.f32 %v3926, 0.8365163
    %v4073 = vmul.f32 %v3927, 0.8365163
    %v4074 = vmul.f32 %v3928, 0.8365163
    %v4075 = vmul.f32 %v3929, 0.8365163
    %v4076 = vmul.f32 %v3930, 0.8365163
    %v4077 = vmul.f32 %v3931, 0.8365163
    %v4078 = vmul.f32 %v3932, 0.8365163
    %v4079 = vmul.f32 %v3933, 0.8365163
    %v4080 = vmul.f32 %v3934, 0.8365163
    %v4081 = vmul.f32 %v3935, 0.8365163
    %v4082 = vmul.f32 %v3936, 0.8365163
    %v4083 = vmul.f32 %v3937, 0.8365163
    %v4084 = vmul.f32 %v3938, 0.8365163
    %v4085 = vmul.f32 %v3939, 0.8365163
    %v4086 = vmul.f32 %v3940, 0.8365163
    %v4087 = vmul.f32 %v3941, 0.8365163
    %v4088 = vmul.f32 %v3942, 0.8365163
    %v4089 = vmul.f32 %v3943, 0.8365163
    %v4090 = vmul.f32 %v3944, 0.8365163
    %v4091 = vmul.f32 %v3945, 0.8365163
    %v4092 = vmul.f32 %v3946, 0.8365163
    %v4093 = vmul.f32 %v3947, 0.8365163
    %v4094 = vmul.f32 %v3948, 0.8365163
    %v4095 = vmul.f32 %v3949, 0.8365163
    %v4096 = vmul.f32 %v3950, 0.8365163
    %v4097 = vmul.f32 %v3951, 0.8365163
    %v4098 = vmul.f32 %v3952, 0.8365163
    %v4099 = vmul.f32 %v3953, 0.8365163
    %v4100 = vadd.f32 %v4040, %v4070
    %v4101 = vadd.f32 %v4041, %v4071
    %v4102 = vadd.f32 %v4042, %v4072
    %v4103 = vadd.f32 %v4043, %v4073
    %v4104 = vadd.f32 %v4044, %v4074
    %v4105 = vadd.f32 %v4045, %v4075
    %v4106 = vadd.f32 %v4046, %v4076
    %v4107 = vadd.f32 %v4047, %v4077
    %v4108 = vadd.f32 %v4048, %v4078
    %v4109 = vadd.f32 %v4049, %v4079
    %v4110 = vadd.f32 %v4050, %v4080
    %v4111 = vadd.f32 %v4051, %v4081
    %v4112 = vadd.f32 %v4052, %v4082
    %v4113 = vadd.f32 %v4053, %v4083
    %v4114 = vadd.f32 %v4054, %v4084
    %v4115 = vadd.f32 %v4055, %v4085
    %v4116 = vadd.f32 %v4056, %v4086
    %v4117 = vadd.f32 %v4057, %v4087
    %v4118 = vadd.f32 %v4058, %v4088
    %v4119 = vadd.f32 %v4059, %v4089
    %v4120 = vadd.f32 %v4060, %v4090
    %v4121 = vadd.f32 %v4061, %v4091
    %v4122 = vadd.f32 %v4062, %v4092
    %v4123 = vadd.f32 %v4063, %v4093
    %v4124 = vadd.f32 %v4064, %v4094
    %v4125 = vadd.f32 %v4065, %v4095
    %v4126 = vadd.f32 %v4066, %v4096
    %v4127 = vadd.f32 %v4067, %v4097
    %v4128 = vadd.f32 %v4068, %v4098
    %v4129 = vadd.f32 %v4069, %v4099
    %v4130 = vmul.f32 %v3954, 0.22414386
    %v4131 = vmul.f32 %v3955, 0.22414386
    %v4132 = vmul.f32 %v3956, 0.22414386
    %v4133 = vmul.f32 %v3957, 0.22414386
    %v4134 = vmul.f32 %v3958, 0.22414386
    %v4135 = vmul.f32 %v3959, 0.22414386
    %v4136 = vmul.f32 %v3960, 0.22414386
    %v4137 = vmul.f32 %v3961, 0.22414386
    %v4138 = vmul.f32 %v3962, 0.22414386
    %v4139 = vmul.f32 %v3963, 0.22414386
    %v4140 = vmul.f32 %v3964, 0.22414386
    %v4141 = vmul.f32 %v3965, 0.22414386
    %v4142 = vmul.f32 %v3966, 0.22414386
    %v4143 = vmul.f32 %v3967, 0.22414386
    %v4144 = vmul.f32 %v3968, 0.22414386
    %v4145 = vmul.f32 %v3969, 0.22414386
    %v4146 = vmul.f32 %v3970, 0.22414386
    %v4147 = vmul.f32 %v3971, 0.22414386
    %v4148 = vmul.f32 %v3972, 0.22414386
    %v4149 = vmul.f32 %v3973, 0.22414386
    %v4150 = vmul.f32 %v3974, 0.22414386
    %v4151 = vmul.f32 %v3975, 0.22414386
    %v4152 = vmul.f32 %v3976, 0.22414386
    %v4153 = vmul.f32 %v3977, 0.22414386
    %v4154 = vmul.f32 %v3978, 0.22414386
    %v4155 = vmul.f32 %v3979, 0.22414386
    %v4156 = vmul.f32 %v3980, 0.22414386
    %v4157 = vmul.f32 %v3981, 0.22414386
    %v4158 = vmul.f32 %v3982, 0.22414386
    %v4159 = vmul.f32 %v3983, 0.22414386
    %v4160 = vadd.f32 %v4100, %v4130
    %v4161 = vadd.f32 %v4101, %v4131
    %v4162 = vadd.f32 %v4102, %v4132
    %v4163 = vadd.f32 %v4103, %v4133
    %v4164 = vadd.f32 %v4104, %v4134
    %v4165 = vadd.f32 %v4105, %v4135
    %v4166 = vadd.f32 %v4106, %v4136
    %v4167 = vadd.f32 %v4107, %v4137
    %v4168 = vadd.f32 %v4108, %v4138
    %v4169 = vadd.f32 %v4109, %v4139
    %v4170 = vadd.f32 %v4110, %v4140
    %v4171 = vadd.f32 %v4111, %v4141
    %v4172 = vadd.f32 %v4112, %v4142
    %v4173 = vadd.f32 %v4113, %v4143
    %v4174 = vadd.f32 %v4114, %v4144
    %v4175 = vadd.f32 %v4115, %v4145
    %v4176 = vadd.f32 %v4116, %v4146
    %v4177 = vadd.f32 %v4117, %v4147
    %v4178 = vadd.f32 %v4118, %v4148
    %v4179 = vadd.f32 %v4119, %v4149
    %v4180 = vadd.f32 %v4120, %v4150
    %v4181 = vadd.f32 %v4121, %v4151
    %v4182 = vadd.f32 %v4122, %v4152
    %v4183 = vadd.f32 %v4123, %v4153
    %v4184 = vadd.f32 %v4124, %v4154
    %v4185 = vadd.f32 %v4125, %v4155
    %v4186 = vadd.f32 %v4126, %v4156
    %v4187 = vadd.f32 %v4127, %v4157
    %v4188 = vadd.f32 %v4128, %v4158
    %v4189 = vadd.f32 %v4129, %v4159
    %v4190 = vmul.f32 %v3984, -0.12940952
    %v4191 = vmul.f32 %v3985, -0.12940952
    %v4192 = vmul.f32 %v3986, -0.12940952
    %v4193 = vmul.f32 %v3987, -0.12940952
    %v4194 = vmul.f32 %v3988, -0.12940952
    %v4195 = vmul.f32 %v3989, -0.12940952
    %v4196 = vmul.f32 %v3990, -0.12940952
    %v4197 = vmul.f32 %v3991, -0.12940952
    %v4198 = vmul.f32 %v3992, -0.12940952
    %v4199 = vmul.f32 %v3993, -0.12940952
    %v4200 = vmul.f32 %v3994, -0.12940952
    %v4201 = vmul.f32 %v3995, -0.12940952
    %v4202 = vmul.f32 %v3996, -0.12940952
    %v4203 = vmul.f32 %v3997, -0.12940952
    %v4204 = vmul.f32 %v3998, -0.12940952
    %v4205 = vmul.f32 %v3999, -0.12940952
    %v4206 = vmul.f32 %v4000, -0.12940952
    %v4207 = vmul.f32 %v4001, -0.12940952
    %v4208 = vmul.f32 %v4002, -0.12940952
    %v4209 = vmul.f32 %v4003, -0.12940952
    %v4210 = vmul.f32 %v4004, -0.12940952
    %v4211 = vmul.f32 %v4005, -0.12940952
    %v4212 = vmul.f32 %v4006, -0.12940952
    %v4213 = vmul.f32 %v4007, -0.12940952
    %v4214 = vmul.f32 %v4008, -0.12940952
    %v4215 = vmul.f32 %v4009, -0.12940952
    %v4216 = vmul.f32 %v4010, -0.12940952
    %v4217 = vmul.f32 %v4011, -0.12940952
    %v4218 = vmul.f32 %v4012, -0.12940952
    %v4219 = vmul.f32 %v4013, -0.12940952
    %v4220 = vadd.f32 %v4160, %v4190
    %v4221 = vadd.f32 %v4161, %v4191
    %v4222 = vadd.f32 %v4162, %v4192
    %v4223 = vadd.f32 %v4163, %v4193
    %v4224 = vadd.f32 %v4164, %v4194
    %v4225 = vadd.f32 %v4165, %v4195
    %v4226 = vadd.f32 %v4166, %v4196
    %v4227 = vadd.f32 %v4167, %v4197
    %v4228 = vadd.f32 %v4168, %v4198
    %v4229 = vadd.f32 %v4169, %v4199
    %v4230 = vadd.f32 %v4170, %v4200
    %v4231 = vadd.f32 %v4171, %v4201
    %v4232 = vadd.f32 %v4172, %v4202
    %v4233 = vadd.f32 %v4173, %v4203
    %v4234 = vadd.f32 %v4174, %v4204
    %v4235 = vadd.f32 %v4175, %v4205
    %v4236 = vadd.f32 %v4176, %v4206
    %v4237 = vadd.f32 %v4177, %v4207
    %v4238 = vadd.f32 %v4178, %v4208
    %v4239 = vadd.f32 %v4179, %v4209
    %v4240 = vadd.f32 %v4180, %v4210
    %v4241 = vadd.f32 %v4181, %v4211
    %v4242 = vadd.f32 %v4182, %v4212
    %v4243 = vadd.f32 %v4183, %v4213
    %v4244 = vadd.f32 %v4184, %v4214
    %v4245 = vadd.f32 %v4185, %v4215
    %v4246 = vadd.f32 %v4186, %v4216
    %v4247 = vadd.f32 %v4187, %v4217
    %v4248 = vadd.f32 %v4188, %v4218
    %v4249 = vadd.f32 %v4189, %v4219
    %4250 = vst [vmem:[#allocation2] sm:$0x1f] %v4220
    %4251 = vst [vmem:[#allocation2 + $0x8] sm:$0x1f] %v4221
    %4252 = vst [vmem:[#allocation2 + $0x10] sm:$0x1f] %v4222
    %4253 = vst [vmem:[#allocation2 + $0x18] sm:$0x1f] %v4223
    %4254 = vst [vmem:[#allocation2 + $0x20] sm:$0x1f] %v4224
    %4255 = vst [vmem:[#allocation2 + $0x28] sm:$0x1f] %v4225
    %4256 = vst [vmem:[#allocation2 + $0x30] sm:$0x1f] %v4226
    %4257 = vst [vmem:[#allocation2 + $0x38] sm:$0x1f] %v4227
    %4258 = vst [vmem:[#allocation2 + $0x40] sm:$0x1f] %v4228
    %4259 = vst [vmem:[#allocation2 + $0x48] sm:$0x1f] %v4229
    %4260 = vst [vmem:[#allocation2 + $0x50] sm:$0x1f] %v4230
    %4261 = vst [vmem:[#allocation2 + $0x58] sm:$0x1f] %v4231
    %4262 = vst [vmem:[#allocation2 + $0x60] sm:$0x1f] %v4232
    %4263 = vst [vmem:[#allocation2 + $0x68] sm:$0x1f] %v4233
    %4264 = vst [vmem:[#allocation2 + $0x70] sm:$0x1f] %v4234
    %4265 = vst [vmem:[#allocation2 + $0x78] sm:$0x1f] %v4235
    %4266 = vst [vmem:[#allocation2 + $0x80] sm:$0x1f] %v4236
    %4267 = vst [vmem:[#allocation2 + $0x88] sm:$0x1f] %v4237
    %4268 = vst [vmem:[#allocation2 + $0x90] sm:$0x1f] %v4238
    %4269 = vst [vmem:[#allocation2 + $0x98] sm:$0x1f] %v4239
    %4270 = vst [vmem:[#allocation2 + $0xa0] sm:$0x1f] %v4240
    %4271 = vst [vmem:[#allocation2 + $0xa8] sm:$0x1f] %v4241
    %4272 = vst [vmem:[#allocation2 + $0xb0] sm:$0x1f] %v4242
    %4273 = vst [vmem:[#allocation2 + $0xb8] sm:$0x1f] %v4243
    %4274 = vst [vmem:[#allocation2 + $0xc0] sm:$0x1f] %v4244
    %4275 = vst [vmem:[#allocation2 + $0xc8] sm:$0x1f] %v4245
    %4276 = vst [vmem:[#allocation2 + $0xd0] sm:$0x1f] %v4246
    %4277 = vst [vmem:[#allocation2 + $0xd8] sm:$0x1f] %v4247
    %4278 = vst [vmem:[#allocation2 + $0xe0] sm:$0x1f] %v4248
    %4279 = vst [vmem:[#allocation2 + $0xe8] sm:$0x1f] %v4249
    %v4280 = vmul.f32 %v4015, 0.4829629
    %v4281 = vmul.f32 %v4016, 0.4829629
    %v4282 = vmul.f32 %v4017, 0.4829629
    %v4283 = vmul.f32 %v4018, 0.4829629
    %v4284 = vmul.f32 %v4019, 0.4829629
    %v4285 = vmul.f32 %v4020, 0.4829629
    %v4286 = vmul.f32 %v4022, 0.8365163
    %v4287 = vmul.f32 %v4023, 0.8365163
    %v4288 = vmul.f32 %v4024, 0.8365163
    %v4289 = vmul.f32 %v4025, 0.8365163
    %v4290 = vmul.f32 %v4026, 0.8365163
    %v4291 = vmul.f32 %v4027, 0.8365163
    %v4292 = vadd.f32 %v4280, %v4286
    %v4293 = vadd.f32 %v4281, %v4287
    %v4294 = vadd.f32 %v4282, %v4288
    %v4295 = vadd.f32 %v4283, %v4289
    %v4296 = vadd.f32 %v4284, %v4290
    %v4297 = vadd.f32 %v4285, %v4291
    %v4298 = vmul.f32 %v4028, 0.22414386
    %v4299 = vmul.f32 %v4029, 0.22414386
    %v4300 = vmul.f32 %v4030, 0.22414386
    %v4301 = vmul.f32 %v4031, 0.22414386
    %v4302 = vmul.f32 %v4032, 0.22414386
    %v4303 = vmul.f32 %v4033, 0.22414386
    %v4304 = vadd.f32 %v4292, %v4298
    %v4305 = vadd.f32 %v4293, %v4299
    %v4306 = vadd.f32 %v4294, %v4300
    %v4307 = vadd.f32 %v4295, %v4301
    %v4308 = vadd.f32 %v4296, %v4302
    %v4309 = vadd.f32 %v4297, %v4303
    %v4310 = vmul.f32 %v4034, -0.12940952
    %v4311 = vmul.f32 %v4035, -0.12940952
    %v4312 = vmul.f32 %v4036, -0.12940952
    %v4313 = vmul.f32 %v4037, -0.12940952
    %v4314 = vmul.f32 %v4038, -0.12940952
    %v4315 = vmul.f32 %v4039, -0.12940952
    %v4316 = vadd.f32 %v4304, %v4310
    %v4317 = vadd.f32 %v4305, %v4311
    %v4318 = vadd.f32 %v4306, %v4312
    %v4319 = vadd.f32 %v4307, %v4313
    %v4320 = vadd.f32 %v4308, %v4314
    %v4321 = vadd.f32 %v4309, %v4315
    %4322 = vst [vmem:[%s1660] sm:$0x1f] %v4316
    %4323 = vst [vmem:[%s1660 + $0x8] sm:$0x1f] %v4317
    %4324 = vst [vmem:[%s1660 + $0x10] sm:$0x1f] %v4318
    %4325 = vst [vmem:[%s1660 + $0x18] sm:$0x1f] %v4319
    %4326 = vst [vmem:[%s1660 + $0x20] sm:$0x1f] %v4320
    %4327 = vst [vmem:[%s1660 + $0x28] sm:$0x1f] %v4321
    %v4328 = vmul.f32 %v3893, -0.12940952
    %v4329 = vmul.f32 %v3894, -0.12940952
    %v4330 = vmul.f32 %v3895, -0.12940952
    %v4331 = vmul.f32 %v3896, -0.12940952
    %v4332 = vmul.f32 %v3897, -0.12940952
    %v4333 = vmul.f32 %v3898, -0.12940952
    %v4334 = vmul.f32 %v3899, -0.12940952
    %v4335 = vmul.f32 %v3900, -0.12940952
    %v4336 = vmul.f32 %v3901, -0.12940952
    %v4337 = vmul.f32 %v3902, -0.12940952
    %v4338 = vmul.f32 %v3903, -0.12940952
    %v4339 = vmul.f32 %v3904, -0.12940952
    %v4340 = vmul.f32 %v3905, -0.12940952
    %v4341 = vmul.f32 %v3906, -0.12940952
    %v4342 = vmul.f32 %v3907, -0.12940952
    %v4343 = vmul.f32 %v3908, -0.12940952
    %v4344 = vmul.f32 %v3909, -0.12940952
    %v4345 = vmul.f32 %v3910, -0.12940952
    %v4346 = vmul.f32 %v3911, -0.12940952
    %v4347 = vmul.f32 %v3912, -0.12940952
    %v4348 = vmul.f32 %v3913, -0.12940952
    %v4349 = vmul.f32 %v3914, -0.12940952
    %v4350 = vmul.f32 %v3915, -0.12940952
    %v4351 = vmul.f32 %v3916, -0.12940952
    %v4352 = vmul.f32 %v3917, -0.12940952
    %v4353 = vmul.f32 %v3918, -0.12940952
    %v4354 = vmul.f32 %v3919, -0.12940952
    %v4355 = vmul.f32 %v3920, -0.12940952
    %v4356 = vmul.f32 %v3921, -0.12940952
    %v4357 = vmul.f32 %v3922, -0.12940952
    %v4358 = vmul.f32 %v3924, -0.22414386
    %v4359 = vmul.f32 %v3925, -0.22414386
    %v4360 = vmul.f32 %v3926, -0.22414386
    %v4361 = vmul.f32 %v3927, -0.22414386
    %v4362 = vmul.f32 %v3928, -0.22414386
    %v4363 = vmul.f32 %v3929, -0.22414386
    %v4364 = vmul.f32 %v3930, -0.22414386
    %v4365 = vmul.f32 %v3931, -0.22414386
    %v4366 = vmul.f32 %v3932, -0.22414386
    %v4367 = vmul.f32 %v3933, -0.22414386
    %v4368 = vmul.f32 %v3934, -0.22414386
    %v4369 = vmul.f32 %v3935, -0.22414386
    %v4370 = vmul.f32 %v3936, -0.22414386
    %v4371 = vmul.f32 %v3937, -0.22414386
    %v4372 = vmul.f32 %v3938, -0.22414386
    %v4373 = vmul.f32 %v3939, -0.22414386
    %v4374 = vmul.f32 %v3940, -0.22414386
    %v4375 = vmul.f32 %v3941, -0.22414386
    %v4376 = vmul.f32 %v3942, -0.22414386
    %v4377 = vmul.f32 %v3943, -0.22414386
    %v4378 = vmul.f32 %v3944, -0.22414386
    %v4379 = vmul.f32 %v3945, -0.22414386
    %v4380 = vmul.f32 %v3946, -0.22414386
    %v4381 = vmul.f32 %v3947, -0.22414386
    %v4382 = vmul.f32 %v3948, -0.22414386
    %v4383 = vmul.f32 %v3949, -0.22414386
    %v4384 = vmul.f32 %v3950, -0.22414386
    %v4385 = vmul.f32 %v3951, -0.22414386
    %v4386 = vmul.f32 %v3952, -0.22414386
    %v4387 = vmul.f32 %v3953, -0.22414386
    %v4388 = vadd.f32 %v4328, %v4358
    %v4389 = vadd.f32 %v4329, %v4359
    %v4390 = vadd.f32 %v4330, %v4360
    %v4391 = vadd.f32 %v4331, %v4361
    %v4392 = vadd.f32 %v4332, %v4362
    %v4393 = vadd.f32 %v4333, %v4363
    %v4394 = vadd.f32 %v4334, %v4364
    %v4395 = vadd.f32 %v4335, %v4365
    %v4396 = vadd.f32 %v4336, %v4366
    %v4397 = vadd.f32 %v4337, %v4367
    %v4398 = vadd.f32 %v4338, %v4368
    %v4399 = vadd.f32 %v4339, %v4369
    %v4400 = vadd.f32 %v4340, %v4370
    %v4401 = vadd.f32 %v4341, %v4371
    %v4402 = vadd.f32 %v4342, %v4372
    %v4403 = vadd.f32 %v4343, %v4373
    %v4404 = vadd.f32 %v4344, %v4374
    %v4405 = vadd.f32 %v4345, %v4375
    %v4406 = vadd.f32 %v4346, %v4376
    %v4407 = vadd.f32 %v4347, %v4377
    %v4408 = vadd.f32 %v4348, %v4378
    %v4409 = vadd.f32 %v4349, %v4379
    %v4410 = vadd.f32 %v4350, %v4380
    %v4411 = vadd.f32 %v4351, %v4381
    %v4412 = vadd.f32 %v4352, %v4382
    %v4413 = vadd.f32 %v4353, %v4383
    %v4414 = vadd.f32 %v4354, %v4384
    %v4415 = vadd.f32 %v4355, %v4385
    %v4416 = vadd.f32 %v4356, %v4386
    %v4417 = vadd.f32 %v4357, %v4387
    %v4418 = vmul.f32 %v3954, 0.8365163
    %v4419 = vmul.f32 %v3955, 0.8365163
    %v4420 = vmul.f32 %v3956, 0.8365163
    %v4421 = vmul.f32 %v3957, 0.8365163
    %v4422 = vmul.f32 %v3958, 0.8365163
    %v4423 = vmul.f32 %v3959, 0.8365163
    %v4424 = vmul.f32 %v3960, 0.8365163
    %v4425 = vmul.f32 %v3961, 0.8365163
    %v4426 = vmul.f32 %v3962, 0.8365163
    %v4427 = vmul.f32 %v3963, 0.8365163
    %v4428 = vmul.f32 %v3964, 0.8365163
    %v4429 = vmul.f32 %v3965, 0.8365163
    %v4430 = vmul.f32 %v3966, 0.8365163
    %v4431 = vmul.f32 %v3967, 0.8365163
    %v4432 = vmul.f32 %v3968, 0.8365163
    %v4433 = vmul.f32 %v3969, 0.8365163
    %v4434 = vmul.f32 %v3970, 0.8365163
    %v4435 = vmul.f32 %v3971, 0.8365163
    %v4436 = vmul.f32 %v3972, 0.8365163
    %v4437 = vmul.f32 %v3973, 0.8365163
    %v4438 = vmul.f32 %v3974, 0.8365163
    %v4439 = vmul.f32 %v3975, 0.8365163
    %v4440 = vmul.f32 %v3976, 0.8365163
    %v4441 = vmul.f32 %v3977, 0.8365163
    %v4442 = vmul.f32 %v3978, 0.8365163
    %v4443 = vmul.f32 %v3979, 0.8365163
    %v4444 = vmul.f32 %v3980, 0.8365163
    %v4445 = vmul.f32 %v3981, 0.8365163
    %v4446 = vmul.f32 %v3982, 0.8365163
    %v4447 = vmul.f32 %v3983, 0.8365163
    %v4448 = vadd.f32 %v4388, %v4418
    %v4449 = vadd.f32 %v4389, %v4419
    %v4450 = vadd.f32 %v4390, %v4420
    %v4451 = vadd.f32 %v4391, %v4421
    %v4452 = vadd.f32 %v4392, %v4422
    %v4453 = vadd.f32 %v4393, %v4423
    %v4454 = vadd.f32 %v4394, %v4424
    %v4455 = vadd.f32 %v4395, %v4425
    %v4456 = vadd.f32 %v4396, %v4426
    %v4457 = vadd.f32 %v4397, %v4427
    %v4458 = vadd.f32 %v4398, %v4428
    %v4459 = vadd.f32 %v4399, %v4429
    %v4460 = vadd.f32 %v4400, %v4430
    %v4461 = vadd.f32 %v4401, %v4431
    %v4462 = vadd.f32 %v4402, %v4432
    %v4463 = vadd.f32 %v4403, %v4433
    %v4464 = vadd.f32 %v4404, %v4434
    %v4465 = vadd.f32 %v4405, %v4435
    %v4466 = vadd.f32 %v4406, %v4436
    %v4467 = vadd.f32 %v4407, %v4437
    %v4468 = vadd.f32 %v4408, %v4438
    %v4469 = vadd.f32 %v4409, %v4439
    %v4470 = vadd.f32 %v4410, %v4440
    %v4471 = vadd.f32 %v4411, %v4441
    %v4472 = vadd.f32 %v4412, %v4442
    %v4473 = vadd.f32 %v4413, %v4443
    %v4474 = vadd.f32 %v4414, %v4444
    %v4475 = vadd.f32 %v4415, %v4445
    %v4476 = vadd.f32 %v4416, %v4446
    %v4477 = vadd.f32 %v4417, %v4447
    %v4478 = vmul.f32 %v3984, -0.4829629
    %v4479 = vmul.f32 %v3985, -0.4829629
    %v4480 = vmul.f32 %v3986, -0.4829629
    %v4481 = vmul.f32 %v3987, -0.4829629
    %v4482 = vmul.f32 %v3988, -0.4829629
    %v4483 = vmul.f32 %v3989, -0.4829629
    %v4484 = vmul.f32 %v3990, -0.4829629
    %v4485 = vmul.f32 %v3991, -0.4829629
    %v4486 = vmul.f32 %v3992, -0.4829629
    %v4487 = vmul.f32 %v3993, -0.4829629
    %v4488 = vmul.f32 %v3994, -0.4829629
    %v4489 = vmul.f32 %v3995, -0.4829629
    %v4490 = vmul.f32 %v3996, -0.4829629
    %v4491 = vmul.f32 %v3997, -0.4829629
    %v4492 = vmul.f32 %v3998, -0.4829629
    %v4493 = vmul.f32 %v3999, -0.4829629
    %v4494 = vmul.f32 %v4000, -0.4829629
    %v4495 = vmul.f32 %v4001, -0.4829629
    %v4496 = vmul.f32 %v4002, -0.4829629
    %v4497 = vmul.f32 %v4003, -0.4829629
    %v4498 = vmul.f32 %v4004, -0.4829629
    %v4499 = vmul.f32 %v4005, -0.4829629
    %v4500 = vmul.f32 %v4006, -0.4829629
    %v4501 = vmul.f32 %v4007, -0.4829629
    %v4502 = vmul.f32 %v4008, -0.4829629
    %v4503 = vmul.f32 %v4009, -0.4829629
    %v4504 = vmul.f32 %v4010, -0.4829629
    %v4505 = vmul.f32 %v4011, -0.4829629
    %v4506 = vmul.f32 %v4012, -0.4829629
    %v4507 = vmul.f32 %v4013, -0.4829629
    %v4508 = vadd.f32 %v4448, %v4478
    %v4509 = vadd.f32 %v4449, %v4479
    %v4510 = vadd.f32 %v4450, %v4480
    %v4511 = vadd.f32 %v4451, %v4481
    %v4512 = vadd.f32 %v4452, %v4482
    %v4513 = vadd.f32 %v4453, %v4483
    %v4514 = vadd.f32 %v4454, %v4484
    %v4515 = vadd.f32 %v4455, %v4485
    %v4516 = vadd.f32 %v4456, %v4486
    %v4517 = vadd.f32 %v4457, %v4487
    %v4518 = vadd.f32 %v4458, %v4488
    %v4519 = vadd.f32 %v4459, %v4489
    %v4520 = vadd.f32 %v4460, %v4490
    %v4521 = vadd.f32 %v4461, %v4491
    %v4522 = vadd.f32 %v4462, %v4492
    %v4523 = vadd.f32 %v4463, %v4493
    %v4524 = vadd.f32 %v4464, %v4494
    %v4525 = vadd.f32 %v4465, %v4495
    %v4526 = vadd.f32 %v4466, %v4496
    %v4527 = vadd.f32 %v4467, %v4497
    %v4528 = vadd.f32 %v4468, %v4498
    %v4529 = vadd.f32 %v4469, %v4499
    %v4530 = vadd.f32 %v4470, %v4500
    %v4531 = vadd.f32 %v4471, %v4501
    %v4532 = vadd.f32 %v4472, %v4502
    %v4533 = vadd.f32 %v4473, %v4503
    %v4534 = vadd.f32 %v4474, %v4504
    %v4535 = vadd.f32 %v4475, %v4505
    %v4536 = vadd.f32 %v4476, %v4506
    %v4537 = vadd.f32 %v4477, %v4507
    %4538 = vst [vmem:[%s1877] sm:$0x1f] %v4508
    %4539 = vst [vmem:[%s1877 + $0x8] sm:$0x1f] %v4509
    %4540 = vst [vmem:[%s1877 + $0x10] sm:$0x1f] %v4510
    %4541 = vst [vmem:[%s1877 + $0x18] sm:$0x1f] %v4511
    %4542 = vst [vmem:[%s1877 + $0x20] sm:$0x1f] %v4512
    %4543 = vst [vmem:[%s1877 + $0x28] sm:$0x1f] %v4513
    %4544 = vst [vmem:[%s1877 + $0x30] sm:$0x1f] %v4514
    %4545 = vst [vmem:[%s1877 + $0x38] sm:$0x1f] %v4515
    %4546 = vst [vmem:[%s1877 + $0x40] sm:$0x1f] %v4516
    %4547 = vst [vmem:[%s1877 + $0x48] sm:$0x1f] %v4517
    %4548 = vst [vmem:[%s1877 + $0x50] sm:$0x1f] %v4518
    %4549 = vst [vmem:[%s1877 + $0x58] sm:$0x1f] %v4519
    %4550 = vst [vmem:[%s1877 + $0x60] sm:$0x1f] %v4520
    %4551 = vst [vmem:[%s1877 + $0x68] sm:$0x1f] %v4521
    %4552 = vst [vmem:[%s1877 + $0x70] sm:$0x1f] %v4522
    %4553 = vst [vmem:[%s1877 + $0x78] sm:$0x1f] %v4523
    %4554 = vst [vmem:[%s1877 + $0x80] sm:$0x1f] %v4524
    %4555 = vst [vmem:[%s1877 + $0x88] sm:$0x1f] %v4525
    %4556 = vst [vmem:[%s1877 + $0x90] sm:$0x1f] %v4526
    %4557 = vst [vmem:[%s1877 + $0x98] sm:$0x1f] %v4527
    %4558 = vst [vmem:[%s1877 + $0xa0] sm:$0x1f] %v4528
    %4559 = vst [vmem:[%s1877 + $0xa8] sm:$0x1f] %v4529
    %4560 = vst [vmem:[%s1877 + $0xb0] sm:$0x1f] %v4530
    %4561 = vst [vmem:[%s1877 + $0xb8] sm:$0x1f] %v4531
    %4562 = vst [vmem:[%s1877 + $0xc0] sm:$0x1f] %v4532
    %4563 = vst [vmem:[%s1877 + $0xc8] sm:$0x1f] %v4533
    %4564 = vst [vmem:[%s1877 + $0xd0] sm:$0x1f] %v4534
    %4565 = vst [vmem:[%s1877 + $0xd8] sm:$0x1f] %v4535
    %4566 = vst [vmem:[%s1877 + $0xe0] sm:$0x1f] %v4536
    %4567 = vst [vmem:[%s1877 + $0xe8] sm:$0x1f] %v4537
    %v4568 = vmul.f32 %v4015, -0.12940952
    %v4569 = vmul.f32 %v4016, -0.12940952
    %v4570 = vmul.f32 %v4017, -0.12940952
    %v4571 = vmul.f32 %v4018, -0.12940952
    %v4572 = vmul.f32 %v4019, -0.12940952
    %v4573 = vmul.f32 %v4020, -0.12940952
    %v4574 = vmul.f32 %v4022, -0.22414386
    %v4575 = vmul.f32 %v4023, -0.22414386
    %v4576 = vmul.f32 %v4024, -0.22414386
    %v4577 = vmul.f32 %v4025, -0.22414386
    %v4578 = vmul.f32 %v4026, -0.22414386
    %v4579 = vmul.f32 %v4027, -0.22414386
    %v4580 = vadd.f32 %v4568, %v4574
    %v4581 = vadd.f32 %v4569, %v4575
    %v4582 = vadd.f32 %v4570, %v4576
    %v4583 = vadd.f32 %v4571, %v4577
    %v4584 = vadd.f32 %v4572, %v4578
    %v4585 = vadd.f32 %v4573, %v4579
    %v4586 = vmul.f32 %v4028, 0.8365163
    %v4587 = vmul.f32 %v4029, 0.8365163
    %v4588 = vmul.f32 %v4030, 0.8365163
    %v4589 = vmul.f32 %v4031, 0.8365163
    %v4590 = vmul.f32 %v4032, 0.8365163
    %v4591 = vmul.f32 %v4033, 0.8365163
    %v4592 = vadd.f32 %v4580, %v4586
    %v4593 = vadd.f32 %v4581, %v4587
    %v4594 = vadd.f32 %v4582, %v4588
    %v4595 = vadd.f32 %v4583, %v4589
    %v4596 = vadd.f32 %v4584, %v4590
    %v4597 = vadd.f32 %v4585, %v4591
    %v4598 = vmul.f32 %v4034, -0.4829629
    %v4599 = vmul.f32 %v4035, -0.4829629
    %v4600 = vmul.f32 %v4036, -0.4829629
    %v4601 = vmul.f32 %v4037, -0.4829629
    %v4602 = vmul.f32 %v4038, -0.4829629
    %v4603 = vmul.f32 %v4039, -0.4829629
    %v4604 = vadd.f32 %v4592, %v4598
    %v4605 = vadd.f32 %v4593, %v4599
    %v4606 = vadd.f32 %v4594, %v4600
    %v4607 = vadd.f32 %v4595, %v4601
    %v4608 = vadd.f32 %v4596, %v4602
    %v4609 = vadd.f32 %v4597, %v4603
    %4610 = vst [vmem:[%s1950] sm:$0x1f] %v4604
    %4611 = vst [vmem:[%s1950 + $0x8] sm:$0x1f] %v4605
    %4612 = vst [vmem:[%s1950 + $0x10] sm:$0x1f] %v4606
    %4613 = vst [vmem:[%s1950 + $0x18] sm:$0x1f] %v4607
    %4614 = vst [vmem:[%s1950 + $0x20] sm:$0x1f] %v4608
    %4615 = vst [vmem:[%s1950 + $0x28] sm:$0x1f] %v4609
    %s4616 = scalar_lea.vmem [#allocation4], 1440
    %v4617 = vld [vmem:[%s4616] sm:$0x1f]
    %v4618 = vld [vmem:[%s4616 + $0x8] sm:$0x1f]
    %v4619 = vld [vmem:[%s4616 + $0x10] sm:$0x1f]
    %v4620 = vld [vmem:[%s4616 + $0x18] sm:$0x1f]
    %v4621 = vld [vmem:[%s4616 + $0x20] sm:$0x1f]
    %v4622 = vld [vmem:[%s4616 + $0x28] sm:$0x1f]
    %v4623 = vld [vmem:[%s4616 + $0x30] sm:$0x1f]
    %v4624 = vld [vmem:[%s4616 + $0x38] sm:$0x1f]
    %v4625 = vld [vmem:[%s4616 + $0x40] sm:$0x1f]
    %v4626 = vld [vmem:[%s4616 + $0x48] sm:$0x1f]
    %v4627 = vld [vmem:[%s4616 + $0x50] sm:$0x1f]
    %v4628 = vld [vmem:[%s4616 + $0x58] sm:$0x1f]
    %v4629 = vld [vmem:[%s4616 + $0x60] sm:$0x1f]
    %v4630 = vld [vmem:[%s4616 + $0x68] sm:$0x1f]
    %v4631 = vld [vmem:[%s4616 + $0x70] sm:$0x1f]
    %v4632 = vld [vmem:[%s4616 + $0x78] sm:$0x1f]
    %v4633 = vld [vmem:[%s4616 + $0x80] sm:$0x1f]
    %v4634 = vld [vmem:[%s4616 + $0x88] sm:$0x1f]
    %v4635 = vld [vmem:[%s4616 + $0x90] sm:$0x1f]
    %v4636 = vld [vmem:[%s4616 + $0x98] sm:$0x1f]
    %v4637 = vld [vmem:[%s4616 + $0xa0] sm:$0x1f]
    %v4638 = vld [vmem:[%s4616 + $0xa8] sm:$0x1f]
    %v4639 = vld [vmem:[%s4616 + $0xb0] sm:$0x1f]
    %v4640 = vld [vmem:[%s4616 + $0xb8] sm:$0x1f]
    %v4641 = vld [vmem:[%s4616 + $0xc0] sm:$0x1f]
    %v4642 = vld [vmem:[%s4616 + $0xc8] sm:$0x1f]
    %v4643 = vld [vmem:[%s4616 + $0xd0] sm:$0x1f]
    %v4644 = vld [vmem:[%s4616 + $0xd8] sm:$0x1f]
    %v4645 = vld [vmem:[%s4616 + $0xe0] sm:$0x1f]
    %v4646 = vld [vmem:[%s4616 + $0xe8] sm:$0x1f]
    %s4647 = scalar_lea.vmem [#allocation4], 1680
    %v4648 = vld [vmem:[%s4647] sm:$0x1f]
    %v4649 = vld [vmem:[%s4647 + $0x8] sm:$0x1f]
    %v4650 = vld [vmem:[%s4647 + $0x10] sm:$0x1f]
    %v4651 = vld [vmem:[%s4647 + $0x18] sm:$0x1f]
    %v4652 = vld [vmem:[%s4647 + $0x20] sm:$0x1f]
    %v4653 = vld [vmem:[%s4647 + $0x28] sm:$0x1f]
    %v4654 = vld [vmem:[%s4647 + $0x30] sm:$0x1f]
    %v4655 = vld [vmem:[%s4647 + $0x38] sm:$0x1f]
    %v4656 = vld [vmem:[%s4647 + $0x40] sm:$0x1f]
    %v4657 = vld [vmem:[%s4647 + $0x48] sm:$0x1f]
    %v4658 = vld [vmem:[%s4647 + $0x50] sm:$0x1f]
    %v4659 = vld [vmem:[%s4647 + $0x58] sm:$0x1f]
    %v4660 = vld [vmem:[%s4647 + $0x60] sm:$0x1f]
    %v4661 = vld [vmem:[%s4647 + $0x68] sm:$0x1f]
    %v4662 = vld [vmem:[%s4647 + $0x70] sm:$0x1f]
    %v4663 = vld [vmem:[%s4647 + $0x78] sm:$0x1f]
    %v4664 = vld [vmem:[%s4647 + $0x80] sm:$0x1f]
    %v4665 = vld [vmem:[%s4647 + $0x88] sm:$0x1f]
    %v4666 = vld [vmem:[%s4647 + $0x90] sm:$0x1f]
    %v4667 = vld [vmem:[%s4647 + $0x98] sm:$0x1f]
    %v4668 = vld [vmem:[%s4647 + $0xa0] sm:$0x1f]
    %v4669 = vld [vmem:[%s4647 + $0xa8] sm:$0x1f]
    %v4670 = vld [vmem:[%s4647 + $0xb0] sm:$0x1f]
    %v4671 = vld [vmem:[%s4647 + $0xb8] sm:$0x1f]
    %v4672 = vld [vmem:[%s4647 + $0xc0] sm:$0x1f]
    %v4673 = vld [vmem:[%s4647 + $0xc8] sm:$0x1f]
    %v4674 = vld [vmem:[%s4647 + $0xd0] sm:$0x1f]
    %v4675 = vld [vmem:[%s4647 + $0xd8] sm:$0x1f]
    %v4676 = vld [vmem:[%s4647 + $0xe0] sm:$0x1f]
    %v4677 = vld [vmem:[%s4647 + $0xe8] sm:$0x1f]
    %v4678 = vld [vmem:[%s4616 + $0x1] sm:$0x1f]
    %v4679 = vld [vmem:[%s4616 + $0x9] sm:$0x1f]
    %v4680 = vld [vmem:[%s4616 + $0x11] sm:$0x1f]
    %v4681 = vld [vmem:[%s4616 + $0x19] sm:$0x1f]
    %v4682 = vld [vmem:[%s4616 + $0x21] sm:$0x1f]
    %v4683 = vld [vmem:[%s4616 + $0x29] sm:$0x1f]
    %v4684 = vld [vmem:[%s4616 + $0x31] sm:$0x1f]
    %v4685 = vld [vmem:[%s4616 + $0x39] sm:$0x1f]
    %v4686 = vld [vmem:[%s4616 + $0x41] sm:$0x1f]
    %v4687 = vld [vmem:[%s4616 + $0x49] sm:$0x1f]
    %v4688 = vld [vmem:[%s4616 + $0x51] sm:$0x1f]
    %v4689 = vld [vmem:[%s4616 + $0x59] sm:$0x1f]
    %v4690 = vld [vmem:[%s4616 + $0x61] sm:$0x1f]
    %v4691 = vld [vmem:[%s4616 + $0x69] sm:$0x1f]
    %v4692 = vld [vmem:[%s4616 + $0x71] sm:$0x1f]
    %v4693 = vld [vmem:[%s4616 + $0x79] sm:$0x1f]
    %v4694 = vld [vmem:[%s4616 + $0x81] sm:$0x1f]
    %v4695 = vld [vmem:[%s4616 + $0x89] sm:$0x1f]
    %v4696 = vld [vmem:[%s4616 + $0x91] sm:$0x1f]
    %v4697 = vld [vmem:[%s4616 + $0x99] sm:$0x1f]
    %v4698 = vld [vmem:[%s4616 + $0xa1] sm:$0x1f]
    %v4699 = vld [vmem:[%s4616 + $0xa9] sm:$0x1f]
    %v4700 = vld [vmem:[%s4616 + $0xb1] sm:$0x1f]
    %v4701 = vld [vmem:[%s4616 + $0xb9] sm:$0x1f]
    %v4702 = vld [vmem:[%s4616 + $0xc1] sm:$0x1f]
    %v4703 = vld [vmem:[%s4616 + $0xc9] sm:$0x1f]
    %v4704 = vld [vmem:[%s4616 + $0xd1] sm:$0x1f]
    %v4705 = vld [vmem:[%s4616 + $0xd9] sm:$0x1f]
    %v4706 = vld [vmem:[%s4616 + $0xe1] sm:$0x1f]
    %v4707 = vld [vmem:[%s4616 + $0xe9] sm:$0x1f]
    %v4708 = vld [vmem:[%s4647 + $0x1] sm:$0x1f]
    %v4709 = vld [vmem:[%s4647 + $0x9] sm:$0x1f]
    %v4710 = vld [vmem:[%s4647 + $0x11] sm:$0x1f]
    %v4711 = vld [vmem:[%s4647 + $0x19] sm:$0x1f]
    %v4712 = vld [vmem:[%s4647 + $0x21] sm:$0x1f]
    %v4713 = vld [vmem:[%s4647 + $0x29] sm:$0x1f]
    %v4714 = vld [vmem:[%s4647 + $0x31] sm:$0x1f]
    %v4715 = vld [vmem:[%s4647 + $0x39] sm:$0x1f]
    %v4716 = vld [vmem:[%s4647 + $0x41] sm:$0x1f]
    %v4717 = vld [vmem:[%s4647 + $0x49] sm:$0x1f]
    %v4718 = vld [vmem:[%s4647 + $0x51] sm:$0x1f]
    %v4719 = vld [vmem:[%s4647 + $0x59] sm:$0x1f]
    %v4720 = vld [vmem:[%s4647 + $0x61] sm:$0x1f]
    %v4721 = vld [vmem:[%s4647 + $0x69] sm:$0x1f]
    %v4722 = vld [vmem:[%s4647 + $0x71] sm:$0x1f]
    %v4723 = vld [vmem:[%s4647 + $0x79] sm:$0x1f]
    %v4724 = vld [vmem:[%s4647 + $0x81] sm:$0x1f]
    %v4725 = vld [vmem:[%s4647 + $0x89] sm:$0x1f]
    %v4726 = vld [vmem:[%s4647 + $0x91] sm:$0x1f]
    %v4727 = vld [vmem:[%s4647 + $0x99] sm:$0x1f]
    %v4728 = vld [vmem:[%s4647 + $0xa1] sm:$0x1f]
    %v4729 = vld [vmem:[%s4647 + $0xa9] sm:$0x1f]
    %v4730 = vld [vmem:[%s4647 + $0xb1] sm:$0x1f]
    %v4731 = vld [vmem:[%s4647 + $0xb9] sm:$0x1f]
    %v4732 = vld [vmem:[%s4647 + $0xc1] sm:$0x1f]
    %v4733 = vld [vmem:[%s4647 + $0xc9] sm:$0x1f]
    %v4734 = vld [vmem:[%s4647 + $0xd1] sm:$0x1f]
    %v4735 = vld [vmem:[%s4647 + $0xd9] sm:$0x1f]
    %v4736 = vld [vmem:[%s4647 + $0xe1] sm:$0x1f]
    %v4737 = vld [vmem:[%s4647 + $0xe9] sm:$0x1f]
    %s4738 = scalar_lea.vmem [#allocation5], 288
    %v4739 = vld [vmem:[%s4738] sm:$0x1f]
    %v4740 = vld [vmem:[%s4738 + $0x8] sm:$0x1f]
    %v4741 = vld [vmem:[%s4738 + $0x10] sm:$0x1f]
    %v4742 = vld [vmem:[%s4738 + $0x18] sm:$0x1f]
    %v4743 = vld [vmem:[%s4738 + $0x20] sm:$0x1f]
    %v4744 = vld [vmem:[%s4738 + $0x28] sm:$0x1f]
    %s4745 = scalar_lea.vmem [#allocation5], 336
    %v4746 = vld [vmem:[%s4745] sm:$0x1f]
    %v4747 = vld [vmem:[%s4745 + $0x8] sm:$0x1f]
    %v4748 = vld [vmem:[%s4745 + $0x10] sm:$0x1f]
    %v4749 = vld [vmem:[%s4745 + $0x18] sm:$0x1f]
    %v4750 = vld [vmem:[%s4745 + $0x20] sm:$0x1f]
    %v4751 = vld [vmem:[%s4745 + $0x28] sm:$0x1f]
    %v4752 = vld [vmem:[%s4738 + $0x1] sm:$0x1f]
    %v4753 = vld [vmem:[%s4738 + $0x9] sm:$0x1f]
    %v4754 = vld [vmem:[%s4738 + $0x11] sm:$0x1f]
    %v4755 = vld [vmem:[%s4738 + $0x19] sm:$0x1f]
    %v4756 = vld [vmem:[%s4738 + $0x21] sm:$0x1f]
    %v4757 = vld [vmem:[%s4738 + $0x29] sm:$0x1f]
    %v4758 = vld [vmem:[%s4745 + $0x1] sm:$0x1f]
    %v4759 = vld [vmem:[%s4745 + $0x9] sm:$0x1f]
    %v4760 = vld [vmem:[%s4745 + $0x11] sm:$0x1f]
    %v4761 = vld [vmem:[%s4745 + $0x19] sm:$0x1f]
    %v4762 = vld [vmem:[%s4745 + $0x21] sm:$0x1f]
    %v4763 = vld [vmem:[%s4745 + $0x29] sm:$0x1f]
    %v4764 = vmul.f32 %v4617, 0.4829629
    %v4765 = vmul.f32 %v4618, 0.4829629
    %v4766 = vmul.f32 %v4619, 0.4829629
    %v4767 = vmul.f32 %v4620, 0.4829629
    %v4768 = vmul.f32 %v4621, 0.4829629
    %v4769 = vmul.f32 %v4622, 0.4829629
    %v4770 = vmul.f32 %v4623, 0.4829629
    %v4771 = vmul.f32 %v4624, 0.4829629
    %v4772 = vmul.f32 %v4625, 0.4829629
    %v4773 = vmul.f32 %v4626, 0.4829629
    %v4774 = vmul.f32 %v4627, 0.4829629
    %v4775 = vmul.f32 %v4628, 0.4829629
    %v4776 = vmul.f32 %v4629, 0.4829629
    %v4777 = vmul.f32 %v4630, 0.4829629
    %v4778 = vmul.f32 %v4631, 0.4829629
    %v4779 = vmul.f32 %v4632, 0.4829629
    %v4780 = vmul.f32 %v4633, 0.4829629
    %v4781 = vmul.f32 %v4634, 0.4829629
    %v4782 = vmul.f32 %v4635, 0.4829629
    %v4783 = vmul.f32 %v4636, 0.4829629
    %v4784 = vmul.f32 %v4637, 0.4829629
    %v4785 = vmul.f32 %v4638, 0.4829629
    %v4786 = vmul.f32 %v4639, 0.4829629
    %v4787 = vmul.f32 %v4640, 0.4829629
    %v4788 = vmul.f32 %v4641, 0.4829629
    %v4789 = vmul.f32 %v4642, 0.4829629
    %v4790 = vmul.f32 %v4643, 0.4829629
    %v4791 = vmul.f32 %v4644, 0.4829629
    %v4792 = vmul.f32 %v4645, 0.4829629
    %v4793 = vmul.f32 %v4646, 0.4829629
    %v4794 = vmul.f32 %v4648, 0.8365163
    %v4795 = vmul.f32 %v4649, 0.8365163
    %v4796 = vmul.f32 %v4650, 0.8365163
    %v4797 = vmul.f32 %v4651, 0.8365163
    %v4798 = vmul.f32 %v4652, 0.8365163
    %v4799 = vmul.f32 %v4653, 0.8365163
    %v4800 = vmul.f32 %v4654, 0.8365163
    %v4801 = vmul.f32 %v4655, 0.8365163
    %v4802 = vmul.f32 %v4656, 0.8365163
    %v4803 = vmul.f32 %v4657, 0.8365163
    %v4804 = vmul.f32 %v4658, 0.8365163
    %v4805 = vmul.f32 %v4659, 0.8365163
    %v4806 = vmul.f32 %v4660, 0.8365163
    %v4807 = vmul.f32 %v4661, 0.8365163
    %v4808 = vmul.f32 %v4662, 0.8365163
    %v4809 = vmul.f32 %v4663, 0.8365163
    %v4810 = vmul.f32 %v4664, 0.8365163
    %v4811 = vmul.f32 %v4665, 0.8365163
    %v4812 = vmul.f32 %v4666, 0.8365163
    %v4813 = vmul.f32 %v4667, 0.8365163
    %v4814 = vmul.f32 %v4668, 0.8365163
    %v4815 = vmul.f32 %v4669, 0.8365163
    %v4816 = vmul.f32 %v4670, 0.8365163
    %v4817 = vmul.f32 %v4671, 0.8365163
    %v4818 = vmul.f32 %v4672, 0.8365163
    %v4819 = vmul.f32 %v4673, 0.8365163
    %v4820 = vmul.f32 %v4674, 0.8365163
    %v4821 = vmul.f32 %v4675, 0.8365163
    %v4822 = vmul.f32 %v4676, 0.8365163
    %v4823 = vmul.f32 %v4677, 0.8365163
    %v4824 = vadd.f32 %v4764, %v4794
    %v4825 = vadd.f32 %v4765, %v4795
    %v4826 = vadd.f32 %v4766, %v4796
    %v4827 = vadd.f32 %v4767, %v4797
    %v4828 = vadd.f32 %v4768, %v4798
    %v4829 = vadd.f32 %v4769, %v4799
    %v4830 = vadd.f32 %v4770, %v4800
    %v4831 = vadd.f32 %v4771, %v4801
    %v4832 = vadd.f32 %v4772, %v4802
    %v4833 = vadd.f32 %v4773, %v4803
    %v4834 = vadd.f32 %v4774, %v4804
    %v4835 = vadd.f32 %v4775, %v4805
    %v4836 = vadd.f32 %v4776, %v4806
    %v4837 = vadd.f32 %v4777, %v4807
    %v4838 = vadd.f32 %v4778, %v4808
    %v4839 = vadd.f32 %v4779, %v4809
    %v4840 = vadd.f32 %v4780, %v4810
    %v4841 = vadd.f32 %v4781, %v4811
    %v4842 = vadd.f32 %v4782, %v4812
    %v4843 = vadd.f32 %v4783, %v4813
    %v4844 = vadd.f32 %v4784, %v4814
    %v4845 = vadd.f32 %v4785, %v4815
    %v4846 = vadd.f32 %v4786, %v4816
    %v4847 = vadd.f32 %v4787, %v4817
    %v4848 = vadd.f32 %v4788, %v4818
    %v4849 = vadd.f32 %v4789, %v4819
    %v4850 = vadd.f32 %v4790, %v4820
    %v4851 = vadd.f32 %v4791, %v4821
    %v4852 = vadd.f32 %v4792, %v4822
    %v4853 = vadd.f32 %v4793, %v4823
    %v4854 = vmul.f32 %v4678, 0.22414386
    %v4855 = vmul.f32 %v4679, 0.22414386
    %v4856 = vmul.f32 %v4680, 0.22414386
    %v4857 = vmul.f32 %v4681, 0.22414386
    %v4858 = vmul.f32 %v4682, 0.22414386
    %v4859 = vmul.f32 %v4683, 0.22414386
    %v4860 = vmul.f32 %v4684, 0.22414386
    %v4861 = vmul.f32 %v4685, 0.22414386
    %v4862 = vmul.f32 %v4686, 0.22414386
    %v4863 = vmul.f32 %v4687, 0.22414386
    %v4864 = vmul.f32 %v4688, 0.22414386
    %v4865 = vmul.f32 %v4689, 0.22414386
    %v4866 = vmul.f32 %v4690, 0.22414386
    %v4867 = vmul.f32 %v4691, 0.22414386
    %v4868 = vmul.f32 %v4692, 0.22414386
    %v4869 = vmul.f32 %v4693, 0.22414386
    %v4870 = vmul.f32 %v4694, 0.22414386
    %v4871 = vmul.f32 %v4695, 0.22414386
    %v4872 = vmul.f32 %v4696, 0.22414386
    %v4873 = vmul.f32 %v4697, 0.22414386
    %v4874 = vmul.f32 %v4698, 0.22414386
    %v4875 = vmul.f32 %v4699, 0.22414386
    %v4876 = vmul.f32 %v4700, 0.22414386
    %v4877 = vmul.f32 %v4701, 0.22414386
    %v4878 = vmul.f32 %v4702, 0.22414386
    %v4879 = vmul.f32 %v4703, 0.22414386
    %v4880 = vmul.f32 %v4704, 0.22414386
    %v4881 = vmul.f32 %v4705, 0.22414386
    %v4882 = vmul.f32 %v4706, 0.22414386
    %v4883 = vmul.f32 %v4707, 0.22414386
    %v4884 = vadd.f32 %v4824, %v4854
    %v4885 = vadd.f32 %v4825, %v4855
    %v4886 = vadd.f32 %v4826, %v4856
    %v4887 = vadd.f32 %v4827, %v4857
    %v4888 = vadd.f32 %v4828, %v4858
    %v4889 = vadd.f32 %v4829, %v4859
    %v4890 = vadd.f32 %v4830, %v4860
    %v4891 = vadd.f32 %v4831, %v4861
    %v4892 = vadd.f32 %v4832, %v4862
    %v4893 = vadd.f32 %v4833, %v4863
    %v4894 = vadd.f32 %v4834, %v4864
    %v4895 = vadd.f32 %v4835, %v4865
    %v4896 = vadd.f32 %v4836, %v4866
    %v4897 = vadd.f32 %v4837, %v4867
    %v4898 = vadd.f32 %v4838, %v4868
    %v4899 = vadd.f32 %v4839, %v4869
    %v4900 = vadd.f32 %v4840, %v4870
    %v4901 = vadd.f32 %v4841, %v4871
    %v4902 = vadd.f32 %v4842, %v4872
    %v4903 = vadd.f32 %v4843, %v4873
    %v4904 = vadd.f32 %v4844, %v4874
    %v4905 = vadd.f32 %v4845, %v4875
    %v4906 = vadd.f32 %v4846, %v4876
    %v4907 = vadd.f32 %v4847, %v4877
    %v4908 = vadd.f32 %v4848, %v4878
    %v4909 = vadd.f32 %v4849, %v4879
    %v4910 = vadd.f32 %v4850, %v4880
    %v4911 = vadd.f32 %v4851, %v4881
    %v4912 = vadd.f32 %v4852, %v4882
    %v4913 = vadd.f32 %v4853, %v4883
    %v4914 = vmul.f32 %v4708, -0.12940952
    %v4915 = vmul.f32 %v4709, -0.12940952
    %v4916 = vmul.f32 %v4710, -0.12940952
    %v4917 = vmul.f32 %v4711, -0.12940952
    %v4918 = vmul.f32 %v4712, -0.12940952
    %v4919 = vmul.f32 %v4713, -0.12940952
    %v4920 = vmul.f32 %v4714, -0.12940952
    %v4921 = vmul.f32 %v4715, -0.12940952
    %v4922 = vmul.f32 %v4716, -0.12940952
    %v4923 = vmul.f32 %v4717, -0.12940952
    %v4924 = vmul.f32 %v4718, -0.12940952
    %v4925 = vmul.f32 %v4719, -0.12940952
    %v4926 = vmul.f32 %v4720, -0.12940952
    %v4927 = vmul.f32 %v4721, -0.12940952
    %v4928 = vmul.f32 %v4722, -0.12940952
    %v4929 = vmul.f32 %v4723, -0.12940952
    %v4930 = vmul.f32 %v4724, -0.12940952
    %v4931 = vmul.f32 %v4725, -0.12940952
    %v4932 = vmul.f32 %v4726, -0.12940952
    %v4933 = vmul.f32 %v4727, -0.12940952
    %v4934 = vmul.f32 %v4728, -0.12940952
    %v4935 = vmul.f32 %v4729, -0.12940952
    %v4936 = vmul.f32 %v4730, -0.12940952
    %v4937 = vmul.f32 %v4731, -0.12940952
    %v4938 = vmul.f32 %v4732, -0.12940952
    %v4939 = vmul.f32 %v4733, -0.12940952
    %v4940 = vmul.f32 %v4734, -0.12940952
    %v4941 = vmul.f32 %v4735, -0.12940952
    %v4942 = vmul.f32 %v4736, -0.12940952
    %v4943 = vmul.f32 %v4737, -0.12940952
    %v4944 = vadd.f32 %v4884, %v4914
    %v4945 = vadd.f32 %v4885, %v4915
    %v4946 = vadd.f32 %v4886, %v4916
    %v4947 = vadd.f32 %v4887, %v4917
    %v4948 = vadd.f32 %v4888, %v4918
    %v4949 = vadd.f32 %v4889, %v4919
    %v4950 = vadd.f32 %v4890, %v4920
    %v4951 = vadd.f32 %v4891, %v4921
    %v4952 = vadd.f32 %v4892, %v4922
    %v4953 = vadd.f32 %v4893, %v4923
    %v4954 = vadd.f32 %v4894, %v4924
    %v4955 = vadd.f32 %v4895, %v4925
    %v4956 = vadd.f32 %v4896, %v4926
    %v4957 = vadd.f32 %v4897, %v4927
    %v4958 = vadd.f32 %v4898, %v4928
    %v4959 = vadd.f32 %v4899, %v4929
    %v4960 = vadd.f32 %v4900, %v4930
    %v4961 = vadd.f32 %v4901, %v4931
    %v4962 = vadd.f32 %v4902, %v4932
    %v4963 = vadd.f32 %v4903, %v4933
    %v4964 = vadd.f32 %v4904, %v4934
    %v4965 = vadd.f32 %v4905, %v4935
    %v4966 = vadd.f32 %v4906, %v4936
    %v4967 = vadd.f32 %v4907, %v4937
    %v4968 = vadd.f32 %v4908, %v4938
    %v4969 = vadd.f32 %v4909, %v4939
    %v4970 = vadd.f32 %v4910, %v4940
    %v4971 = vadd.f32 %v4911, %v4941
    %v4972 = vadd.f32 %v4912, %v4942
    %v4973 = vadd.f32 %v4913, %v4943
    %4974 = vst [vmem:[%s2315] sm:$0x1f] %v4944
    %4975 = vst [vmem:[%s2315 + $0x8] sm:$0x1f] %v4945
    %4976 = vst [vmem:[%s2315 + $0x10] sm:$0x1f] %v4946
    %4977 = vst [vmem:[%s2315 + $0x18] sm:$0x1f] %v4947
    %4978 = vst [vmem:[%s2315 + $0x20] sm:$0x1f] %v4948
    %4979 = vst [vmem:[%s2315 + $0x28] sm:$0x1f] %v4949
    %4980 = vst [vmem:[%s2315 + $0x30] sm:$0x1f] %v4950
    %4981 = vst [vmem:[%s2315 + $0x38] sm:$0x1f] %v4951
    %4982 = vst [vmem:[%s2315 + $0x40] sm:$0x1f] %v4952
    %4983 = vst [vmem:[%s2315 + $0x48] sm:$0x1f] %v4953
    %4984 = vst [vmem:[%s2315 + $0x50] sm:$0x1f] %v4954
    %4985 = vst [vmem:[%s2315 + $0x58] sm:$0x1f] %v4955
    %4986 = vst [vmem:[%s2315 + $0x60] sm:$0x1f] %v4956
    %4987 = vst [vmem:[%s2315 + $0x68] sm:$0x1f] %v4957
    %4988 = vst [vmem:[%s2315 + $0x70] sm:$0x1f] %v4958
    %4989 = vst [vmem:[%s2315 + $0x78] sm:$0x1f] %v4959
    %4990 = vst [vmem:[%s2315 + $0x80] sm:$0x1f] %v4960
    %4991 = vst [vmem:[%s2315 + $0x88] sm:$0x1f] %v4961
    %4992 = vst [vmem:[%s2315 + $0x90] sm:$0x1f] %v4962
    %4993 = vst [vmem:[%s2315 + $0x98] sm:$0x1f] %v4963
    %4994 = vst [vmem:[%s2315 + $0xa0] sm:$0x1f] %v4964
    %4995 = vst [vmem:[%s2315 + $0xa8] sm:$0x1f] %v4965
    %4996 = vst [vmem:[%s2315 + $0xb0] sm:$0x1f] %v4966
    %4997 = vst [vmem:[%s2315 + $0xb8] sm:$0x1f] %v4967
    %4998 = vst [vmem:[%s2315 + $0xc0] sm:$0x1f] %v4968
    %4999 = vst [vmem:[%s2315 + $0xc8] sm:$0x1f] %v4969
    %5000 = vst [vmem:[%s2315 + $0xd0] sm:$0x1f] %v4970
    %5001 = vst [vmem:[%s2315 + $0xd8] sm:$0x1f] %v4971
    %5002 = vst [vmem:[%s2315 + $0xe0] sm:$0x1f] %v4972
    %5003 = vst [vmem:[%s2315 + $0xe8] sm:$0x1f] %v4973
    %v5004 = vmul.f32 %v4739, 0.4829629
    %v5005 = vmul.f32 %v4740, 0.4829629
    %v5006 = vmul.f32 %v4741, 0.4829629
    %v5007 = vmul.f32 %v4742, 0.4829629
    %v5008 = vmul.f32 %v4743, 0.4829629
    %v5009 = vmul.f32 %v4744, 0.4829629
    %v5010 = vmul.f32 %v4746, 0.8365163
    %v5011 = vmul.f32 %v4747, 0.8365163
    %v5012 = vmul.f32 %v4748, 0.8365163
    %v5013 = vmul.f32 %v4749, 0.8365163
    %v5014 = vmul.f32 %v4750, 0.8365163
    %v5015 = vmul.f32 %v4751, 0.8365163
    %v5016 = vadd.f32 %v5004, %v5010
    %v5017 = vadd.f32 %v5005, %v5011
    %v5018 = vadd.f32 %v5006, %v5012
    %v5019 = vadd.f32 %v5007, %v5013
    %v5020 = vadd.f32 %v5008, %v5014
    %v5021 = vadd.f32 %v5009, %v5015
    %v5022 = vmul.f32 %v4752, 0.22414386
    %v5023 = vmul.f32 %v4753, 0.22414386
    %v5024 = vmul.f32 %v4754, 0.22414386
    %v5025 = vmul.f32 %v4755, 0.22414386
    %v5026 = vmul.f32 %v4756, 0.22414386
    %v5027 = vmul.f32 %v4757, 0.22414386
    %v5028 = vadd.f32 %v5016, %v5022
    %v5029 = vadd.f32 %v5017, %v5023
    %v5030 = vadd.f32 %v5018, %v5024
    %v5031 = vadd.f32 %v5019, %v5025
    %v5032 = vadd.f32 %v5020, %v5026
    %v5033 = vadd.f32 %v5021, %v5027
    %v5034 = vmul.f32 %v4758, -0.12940952
    %v5035 = vmul.f32 %v4759, -0.12940952
    %v5036 = vmul.f32 %v4760, -0.12940952
    %v5037 = vmul.f32 %v4761, -0.12940952
    %v5038 = vmul.f32 %v4762, -0.12940952
    %v5039 = vmul.f32 %v4763, -0.12940952
    %v5040 = vadd.f32 %v5028, %v5034
    %v5041 = vadd.f32 %v5029, %v5035
    %v5042 = vadd.f32 %v5030, %v5036
    %v5043 = vadd.f32 %v5031, %v5037
    %v5044 = vadd.f32 %v5032, %v5038
    %v5045 = vadd.f32 %v5033, %v5039
    %5046 = vst [vmem:[%s2388] sm:$0x1f] %v5040
    %5047 = vst [vmem:[%s2388 + $0x8] sm:$0x1f] %v5041
    %5048 = vst [vmem:[%s2388 + $0x10] sm:$0x1f] %v5042
    %5049 = vst [vmem:[%s2388 + $0x18] sm:$0x1f] %v5043
    %5050 = vst [vmem:[%s2388 + $0x20] sm:$0x1f] %v5044
    %5051 = vst [vmem:[%s2388 + $0x28] sm:$0x1f] %v5045
    %v5052 = vmul.f32 %v4617, -0.12940952
    %v5053 = vmul.f32 %v4618, -0.12940952
    %v5054 = vmul.f32 %v4619, -0.12940952
    %v5055 = vmul.f32 %v4620, -0.12940952
    %v5056 = vmul.f32 %v4621, -0.12940952
    %v5057 = vmul.f32 %v4622, -0.12940952
    %v5058 = vmul.f32 %v4623, -0.12940952
    %v5059 = vmul.f32 %v4624, -0.12940952
    %v5060 = vmul.f32 %v4625, -0.12940952
    %v5061 = vmul.f32 %v4626, -0.12940952
    %v5062 = vmul.f32 %v4627, -0.12940952
    %v5063 = vmul.f32 %v4628, -0.12940952
    %v5064 = vmul.f32 %v4629, -0.12940952
    %v5065 = vmul.f32 %v4630, -0.12940952
    %v5066 = vmul.f32 %v4631, -0.12940952
    %v5067 = vmul.f32 %v4632, -0.12940952
    %v5068 = vmul.f32 %v4633, -0.12940952
    %v5069 = vmul.f32 %v4634, -0.12940952
    %v5070 = vmul.f32 %v4635, -0.12940952
    %v5071 = vmul.f32 %v4636, -0.12940952
    %v5072 = vmul.f32 %v4637, -0.12940952
    %v5073 = vmul.f32 %v4638, -0.12940952
    %v5074 = vmul.f32 %v4639, -0.12940952
    %v5075 = vmul.f32 %v4640, -0.12940952
    %v5076 = vmul.f32 %v4641, -0.12940952
    %v5077 = vmul.f32 %v4642, -0.12940952
    %v5078 = vmul.f32 %v4643, -0.12940952
    %v5079 = vmul.f32 %v4644, -0.12940952
    %v5080 = vmul.f32 %v4645, -0.12940952
    %v5081 = vmul.f32 %v4646, -0.12940952
    %v5082 = vmul.f32 %v4648, -0.22414386
    %v5083 = vmul.f32 %v4649, -0.22414386
    %v5084 = vmul.f32 %v4650, -0.22414386
    %v5085 = vmul.f32 %v4651, -0.22414386
    %v5086 = vmul.f32 %v4652, -0.22414386
    %v5087 = vmul.f32 %v4653, -0.22414386
    %v5088 = vmul.f32 %v4654, -0.22414386
    %v5089 = vmul.f32 %v4655, -0.22414386
    %v5090 = vmul.f32 %v4656, -0.22414386
    %v5091 = vmul.f32 %v4657, -0.22414386
    %v5092 = vmul.f32 %v4658, -0.22414386
    %v5093 = vmul.f32 %v4659, -0.22414386
    %v5094 = vmul.f32 %v4660, -0.22414386
    %v5095 = vmul.f32 %v4661, -0.22414386
    %v5096 = vmul.f32 %v4662, -0.22414386
    %v5097 = vmul.f32 %v4663, -0.22414386
    %v5098 = vmul.f32 %v4664, -0.22414386
    %v5099 = vmul.f32 %v4665, -0.22414386
    %v5100 = vmul.f32 %v4666, -0.22414386
    %v5101 = vmul.f32 %v4667, -0.22414386
    %v5102 = vmul.f32 %v4668, -0.22414386
    %v5103 = vmul.f32 %v4669, -0.22414386
    %v5104 = vmul.f32 %v4670, -0.22414386
    %v5105 = vmul.f32 %v4671, -0.22414386
    %v5106 = vmul.f32 %v4672, -0.22414386
    %v5107 = vmul.f32 %v4673, -0.22414386
    %v5108 = vmul.f32 %v4674, -0.22414386
    %v5109 = vmul.f32 %v4675, -0.22414386
    %v5110 = vmul.f32 %v4676, -0.22414386
    %v5111 = vmul.f32 %v4677, -0.22414386
    %v5112 = vadd.f32 %v5052, %v5082
    %v5113 = vadd.f32 %v5053, %v5083
    %v5114 = vadd.f32 %v5054, %v5084
    %v5115 = vadd.f32 %v5055, %v5085
    %v5116 = vadd.f32 %v5056, %v5086
    %v5117 = vadd.f32 %v5057, %v5087
    %v5118 = vadd.f32 %v5058, %v5088
    %v5119 = vadd.f32 %v5059, %v5089
    %v5120 = vadd.f32 %v5060, %v5090
    %v5121 = vadd.f32 %v5061, %v5091
    %v5122 = vadd.f32 %v5062, %v5092
    %v5123 = vadd.f32 %v5063, %v5093
    %v5124 = vadd.f32 %v5064, %v5094
    %v5125 = vadd.f32 %v5065, %v5095
    %v5126 = vadd.f32 %v5066, %v5096
    %v5127 = vadd.f32 %v5067, %v5097
    %v5128 = vadd.f32 %v5068, %v5098
    %v5129 = vadd.f32 %v5069, %v5099
    %v5130 = vadd.f32 %v5070, %v5100
    %v5131 = vadd.f32 %v5071, %v5101
    %v5132 = vadd.f32 %v5072, %v5102
    %v5133 = vadd.f32 %v5073, %v5103
    %v5134 = vadd.f32 %v5074, %v5104
    %v5135 = vadd.f32 %v5075, %v5105
    %v5136 = vadd.f32 %v5076, %v5106
    %v5137 = vadd.f32 %v5077, %v5107
    %v5138 = vadd.f32 %v5078, %v5108
    %v5139 = vadd.f32 %v5079, %v5109
    %v5140 = vadd.f32 %v5080, %v5110
    %v5141 = vadd.f32 %v5081, %v5111
    %v5142 = vmul.f32 %v4678, 0.8365163
    %v5143 = vmul.f32 %v4679, 0.8365163
    %v5144 = vmul.f32 %v4680, 0.8365163
    %v5145 = vmul.f32 %v4681, 0.8365163
    %v5146 = vmul.f32 %v4682, 0.8365163
    %v5147 = vmul.f32 %v4683, 0.8365163
    %v5148 = vmul.f32 %v4684, 0.8365163
    %v5149 = vmul.f32 %v4685, 0.8365163
    %v5150 = vmul.f32 %v4686, 0.8365163
    %v5151 = vmul.f32 %v4687, 0.8365163
    %v5152 = vmul.f32 %v4688, 0.8365163
    %v5153 = vmul.f32 %v4689, 0.8365163
    %v5154 = vmul.f32 %v4690, 0.8365163
    %v5155 = vmul.f32 %v4691, 0.8365163
    %v5156 = vmul.f32 %v4692, 0.8365163
    %v5157 = vmul.f32 %v4693, 0.8365163
    %v5158 = vmul.f32 %v4694, 0.8365163
    %v5159 = vmul.f32 %v4695, 0.8365163
    %v5160 = vmul.f32 %v4696, 0.8365163
    %v5161 = vmul.f32 %v4697, 0.8365163
    %v5162 = vmul.f32 %v4698, 0.8365163
    %v5163 = vmul.f32 %v4699, 0.8365163
    %v5164 = vmul.f32 %v4700, 0.8365163
    %v5165 = vmul.f32 %v4701, 0.8365163
    %v5166 = vmul.f32 %v4702, 0.8365163
    %v5167 = vmul.f32 %v4703, 0.8365163
    %v5168 = vmul.f32 %v4704, 0.8365163
    %v5169 = vmul.f32 %v4705, 0.8365163
    %v5170 = vmul.f32 %v4706, 0.8365163
    %v5171 = vmul.f32 %v4707, 0.8365163
    %v5172 = vadd.f32 %v5112, %v5142
    %v5173 = vadd.f32 %v5113, %v5143
    %v5174 = vadd.f32 %v5114, %v5144
    %v5175 = vadd.f32 %v5115, %v5145
    %v5176 = vadd.f32 %v5116, %v5146
    %v5177 = vadd.f32 %v5117, %v5147
    %v5178 = vadd.f32 %v5118, %v5148
    %v5179 = vadd.f32 %v5119, %v5149
    %v5180 = vadd.f32 %v5120, %v5150
    %v5181 = vadd.f32 %v5121, %v5151
    %v5182 = vadd.f32 %v5122, %v5152
    %v5183 = vadd.f32 %v5123, %v5153
    %v5184 = vadd.f32 %v5124, %v5154
    %v5185 = vadd.f32 %v5125, %v5155
    %v5186 = vadd.f32 %v5126, %v5156
    %v5187 = vadd.f32 %v5127, %v5157
    %v5188 = vadd.f32 %v5128, %v5158
    %v5189 = vadd.f32 %v5129, %v5159
    %v5190 = vadd.f32 %v5130, %v5160
    %v5191 = vadd.f32 %v5131, %v5161
    %v5192 = vadd.f32 %v5132, %v5162
    %v5193 = vadd.f32 %v5133, %v5163
    %v5194 = vadd.f32 %v5134, %v5164
    %v5195 = vadd.f32 %v5135, %v5165
    %v5196 = vadd.f32 %v5136, %v5166
    %v5197 = vadd.f32 %v5137, %v5167
    %v5198 = vadd.f32 %v5138, %v5168
    %v5199 = vadd.f32 %v5139, %v5169
    %v5200 = vadd.f32 %v5140, %v5170
    %v5201 = vadd.f32 %v5141, %v5171
    %v5202 = vmul.f32 %v4708, -0.4829629
    %v5203 = vmul.f32 %v4709, -0.4829629
    %v5204 = vmul.f32 %v4710, -0.4829629
    %v5205 = vmul.f32 %v4711, -0.4829629
    %v5206 = vmul.f32 %v4712, -0.4829629
    %v5207 = vmul.f32 %v4713, -0.4829629
    %v5208 = vmul.f32 %v4714, -0.4829629
    %v5209 = vmul.f32 %v4715, -0.4829629
    %v5210 = vmul.f32 %v4716, -0.4829629
    %v5211 = vmul.f32 %v4717, -0.4829629
    %v5212 = vmul.f32 %v4718, -0.4829629
    %v5213 = vmul.f32 %v4719, -0.4829629
    %v5214 = vmul.f32 %v4720, -0.4829629
    %v5215 = vmul.f32 %v4721, -0.4829629
    %v5216 = vmul.f32 %v4722, -0.4829629
    %v5217 = vmul.f32 %v4723, -0.4829629
    %v5218 = vmul.f32 %v4724, -0.4829629
    %v5219 = vmul.f32 %v4725, -0.4829629
    %v5220 = vmul.f32 %v4726, -0.4829629
    %v5221 = vmul.f32 %v4727, -0.4829629
    %v5222 = vmul.f32 %v4728, -0.4829629
    %v5223 = vmul.f32 %v4729, -0.4829629
    %v5224 = vmul.f32 %v4730, -0.4829629
    %v5225 = vmul.f32 %v4731, -0.4829629
    %v5226 = vmul.f32 %v4732, -0.4829629
    %v5227 = vmul.f32 %v4733, -0.4829629
    %v5228 = vmul.f32 %v4734, -0.4829629
    %v5229 = vmul.f32 %v4735, -0.4829629
    %v5230 = vmul.f32 %v4736, -0.4829629
    %v5231 = vmul.f32 %v4737, -0.4829629
    %v5232 = vadd.f32 %v5172, %v5202
    %v5233 = vadd.f32 %v5173, %v5203
    %v5234 = vadd.f32 %v5174, %v5204
    %v5235 = vadd.f32 %v5175, %v5205
    %v5236 = vadd.f32 %v5176, %v5206
    %v5237 = vadd.f32 %v5177, %v5207
    %v5238 = vadd.f32 %v5178, %v5208
    %v5239 = vadd.f32 %v5179, %v5209
    %v5240 = vadd.f32 %v5180, %v5210
    %v5241 = vadd.f32 %v5181, %v5211
    %v5242 = vadd.f32 %v5182, %v5212
    %v5243 = vadd.f32 %v5183, %v5213
    %v5244 = vadd.f32 %v5184, %v5214
    %v5245 = vadd.f32 %v5185, %v5215
    %v5246 = vadd.f32 %v5186, %v5216
    %v5247 = vadd.f32 %v5187, %v5217
    %v5248 = vadd.f32 %v5188, %v5218
    %v5249 = vadd.f32 %v5189, %v5219
    %v5250 = vadd.f32 %v5190, %v5220
    %v5251 = vadd.f32 %v5191, %v5221
    %v5252 = vadd.f32 %v5192, %v5222
    %v5253 = vadd.f32 %v5193, %v5223
    %v5254 = vadd.f32 %v5194, %v5224
    %v5255 = vadd.f32 %v5195, %v5225
    %v5256 = vadd.f32 %v5196, %v5226
    %v5257 = vadd.f32 %v5197, %v5227
    %v5258 = vadd.f32 %v5198, %v5228
    %v5259 = vadd.f32 %v5199, %v5229
    %v5260 = vadd.f32 %v5200, %v5230
    %v5261 = vadd.f32 %v5201, %v5231
    %5262 = vst [vmem:[%s2605] sm:$0x1f] %v5232
    %5263 = vst [vmem:[%s2605 + $0x8] sm:$0x1f] %v5233
    %5264 = vst [vmem:[%s2605 + $0x10] sm:$0x1f] %v5234
    %5265 = vst [vmem:[%s2605 + $0x18] sm:$0x1f] %v5235
    %5266 = vst [vmem:[%s2605 + $0x20] sm:$0x1f] %v5236
    %5267 = vst [vmem:[%s2605 + $0x28] sm:$0x1f] %v5237
    %5268 = vst [vmem:[%s2605 + $0x30] sm:$0x1f] %v5238
    %5269 = vst [vmem:[%s2605 + $0x38] sm:$0x1f] %v5239
    %5270 = vst [vmem:[%s2605 + $0x40] sm:$0x1f] %v5240
    %5271 = vst [vmem:[%s2605 + $0x48] sm:$0x1f] %v5241
    %5272 = vst [vmem:[%s2605 + $0x50] sm:$0x1f] %v5242
    %5273 = vst [vmem:[%s2605 + $0x58] sm:$0x1f] %v5243
    %5274 = vst [vmem:[%s2605 + $0x60] sm:$0x1f] %v5244
    %5275 = vst [vmem:[%s2605 + $0x68] sm:$0x1f] %v5245
    %5276 = vst [vmem:[%s2605 + $0x70] sm:$0x1f] %v5246
    %5277 = vst [vmem:[%s2605 + $0x78] sm:$0x1f] %v5247
    %5278 = vst [vmem:[%s2605 + $0x80] sm:$0x1f] %v5248
    %5279 = vst [vmem:[%s2605 + $0x88] sm:$0x1f] %v5249
    %5280 = vst [vmem:[%s2605 + $0x90] sm:$0x1f] %v5250
    %5281 = vst [vmem:[%s2605 + $0x98] sm:$0x1f] %v5251
    %5282 = vst [vmem:[%s2605 + $0xa0] sm:$0x1f] %v5252
    %5283 = vst [vmem:[%s2605 + $0xa8] sm:$0x1f] %v5253
    %5284 = vst [vmem:[%s2605 + $0xb0] sm:$0x1f] %v5254
    %5285 = vst [vmem:[%s2605 + $0xb8] sm:$0x1f] %v5255
    %5286 = vst [vmem:[%s2605 + $0xc0] sm:$0x1f] %v5256
    %5287 = vst [vmem:[%s2605 + $0xc8] sm:$0x1f] %v5257
    %5288 = vst [vmem:[%s2605 + $0xd0] sm:$0x1f] %v5258
    %5289 = vst [vmem:[%s2605 + $0xd8] sm:$0x1f] %v5259
    %5290 = vst [vmem:[%s2605 + $0xe0] sm:$0x1f] %v5260
    %5291 = vst [vmem:[%s2605 + $0xe8] sm:$0x1f] %v5261
    %v5292 = vmul.f32 %v4739, -0.12940952
    %v5293 = vmul.f32 %v4740, -0.12940952
    %v5294 = vmul.f32 %v4741, -0.12940952
    %v5295 = vmul.f32 %v4742, -0.12940952
    %v5296 = vmul.f32 %v4743, -0.12940952
    %v5297 = vmul.f32 %v4744, -0.12940952
    %v5298 = vmul.f32 %v4746, -0.22414386
    %v5299 = vmul.f32 %v4747, -0.22414386
    %v5300 = vmul.f32 %v4748, -0.22414386
    %v5301 = vmul.f32 %v4749, -0.22414386
    %v5302 = vmul.f32 %v4750, -0.22414386
    %v5303 = vmul.f32 %v4751, -0.22414386
    %v5304 = vadd.f32 %v5292, %v5298
    %v5305 = vadd.f32 %v5293, %v5299
    %v5306 = vadd.f32 %v5294, %v5300
    %v5307 = vadd.f32 %v5295, %v5301
    %v5308 = vadd.f32 %v5296, %v5302
    %v5309 = vadd.f32 %v5297, %v5303
    %v5310 = vmul.f32 %v4752, 0.8365163
    %v5311 = vmul.f32 %v4753, 0.8365163
    %v5312 = vmul.f32 %v4754, 0.8365163
    %v5313 = vmul.f32 %v4755, 0.8365163
    %v5314 = vmul.f32 %v4756, 0.8365163
    %v5315 = vmul.f32 %v4757, 0.8365163
    %v5316 = vadd.f32 %v5304, %v5310
    %v5317 = vadd.f32 %v5305, %v5311
    %v5318 = vadd.f32 %v5306, %v5312
    %v5319 = vadd.f32 %v5307, %v5313
    %v5320 = vadd.f32 %v5308, %v5314
    %v5321 = vadd.f32 %v5309, %v5315
    %v5322 = vmul.f32 %v4758, -0.4829629
    %v5323 = vmul.f32 %v4759, -0.4829629
    %v5324 = vmul.f32 %v4760, -0.4829629
    %v5325 = vmul.f32 %v4761, -0.4829629
    %v5326 = vmul.f32 %v4762, -0.4829629
    %v5327 = vmul.f32 %v4763, -0.4829629
    %v5328 = vadd.f32 %v5316, %v5322
    %v5329 = vadd.f32 %v5317, %v5323
    %v5330 = vadd.f32 %v5318, %v5324
    %v5331 = vadd.f32 %v5319, %v5325
    %v5332 = vadd.f32 %v5320, %v5326
    %v5333 = vadd.f32 %v5321, %v5327
    %5334 = vst [vmem:[%s2678] sm:$0x1f] %v5328
    %5335 = vst [vmem:[%s2678 + $0x8] sm:$0x1f] %v5329
    %5336 = vst [vmem:[%s2678 + $0x10] sm:$0x1f] %v5330
    %5337 = vst [vmem:[%s2678 + $0x18] sm:$0x1f] %v5331
    %5338 = vst [vmem:[%s2678 + $0x20] sm:$0x1f] %v5332
    %5339 = vst [vmem:[%s2678 + $0x28] sm:$0x1f] %v5333
    %v5340 = vld [vmem:[#allocation2] sm:$0x1f]
    %v5341 = vld [vmem:[#allocation2 + $0x8] sm:$0x1f]
    %v5342 = vld [vmem:[#allocation2 + $0x10] sm:$0x1f]
    %v5343 = vld [vmem:[#allocation2 + $0x18] sm:$0x1f]
    %v5344 = vld [vmem:[#allocation2 + $0x20] sm:$0x1f]
    %v5345 = vld [vmem:[#allocation2 + $0x30] sm:$0x1f]
    %v5346 = vld [vmem:[#allocation2 + $0x38] sm:$0x1f]
    %v5347 = vld [vmem:[#allocation2 + $0x40] sm:$0x1f]
    %v5348 = vld [vmem:[#allocation2 + $0x48] sm:$0x1f]
    %v5349 = vld [vmem:[#allocation2 + $0x50] sm:$0x1f]
    %v5350 = vld [vmem:[#allocation2 + $0x60] sm:$0x1f]
    %v5351 = vld [vmem:[#allocation2 + $0x68] sm:$0x1f]
    %v5352 = vld [vmem:[#allocation2 + $0x70] sm:$0x1f]
    %v5353 = vld [vmem:[#allocation2 + $0x78] sm:$0x1f]
    %v5354 = vld [vmem:[#allocation2 + $0x80] sm:$0x1f]
    %v5355 = vld [vmem:[#allocation2 + $0x90] sm:$0x1f]
    %v5356 = vld [vmem:[#allocation2 + $0x98] sm:$0x1f]
    %v5357 = vld [vmem:[#allocation2 + $0xa0] sm:$0x1f]
    %v5358 = vld [vmem:[#allocation2 + $0xa8] sm:$0x1f]
    %v5359 = vld [vmem:[#allocation2 + $0xb0] sm:$0x1f]
    %v5360 = vld [vmem:[#allocation2 + $0xc0] sm:$0x1f]
    %v5361 = vld [vmem:[#allocation2 + $0xc8] sm:$0x1f]
    %v5362 = vld [vmem:[#allocation2 + $0xd0] sm:$0x1f]
    %v5363 = vld [vmem:[#allocation2 + $0xd8] sm:$0x1f]
    %v5364 = vld [vmem:[#allocation2 + $0xe0] sm:$0x1f]
    %v5365 = vld [vmem:[#allocation2 + $0xf0] sm:$0x1f]
    %v5366 = vld [vmem:[#allocation2 + $0xf8] sm:$0x1f]
    %v5367 = vld [vmem:[#allocation2 + $0x100] sm:$0x1f]
    %v5368 = vld [vmem:[#allocation2 + $0x108] sm:$0x1f]
    %v5369 = vld [vmem:[#allocation2 + $0x110] sm:$0x1f]
    %v5370 = vld [vmem:[%s2315] sm:$0x1f]
    %v5371 = vld [vmem:[%s2315 + $0x8] sm:$0x1f]
    %v5372 = vld [vmem:[%s2315 + $0x10] sm:$0x1f]
    %v5373 = vld [vmem:[%s2315 + $0x18] sm:$0x1f]
    %v5374 = vld [vmem:[%s2315 + $0x20] sm:$0x1f]
    %v5375 = vld [vmem:[%s2315 + $0x30] sm:$0x1f]
    %v5376 = vld [vmem:[%s2315 + $0x38] sm:$0x1f]
    %v5377 = vld [vmem:[%s2315 + $0x40] sm:$0x1f]
    %v5378 = vld [vmem:[%s2315 + $0x48] sm:$0x1f]
    %v5379 = vld [vmem:[%s2315 + $0x50] sm:$0x1f]
    %v5380 = vld [vmem:[%s2315 + $0x60] sm:$0x1f]
    %v5381 = vld [vmem:[%s2315 + $0x68] sm:$0x1f]
    %v5382 = vld [vmem:[%s2315 + $0x70] sm:$0x1f]
    %v5383 = vld [vmem:[%s2315 + $0x78] sm:$0x1f]
    %v5384 = vld [vmem:[%s2315 + $0x80] sm:$0x1f]
    %v5385 = vld [vmem:[%s2315 + $0x90] sm:$0x1f]
    %v5386 = vld [vmem:[%s2315 + $0x98] sm:$0x1f]
    %v5387 = vld [vmem:[%s2315 + $0xa0] sm:$0x1f]
    %v5388 = vld [vmem:[%s2315 + $0xa8] sm:$0x1f]
    %v5389 = vld [vmem:[%s2315 + $0xb0] sm:$0x1f]
    %v5390 = vld [vmem:[%s2315 + $0xc0] sm:$0x1f]
    %v5391 = vld [vmem:[%s2315 + $0xc8] sm:$0x1f]
    %v5392 = vld [vmem:[%s2315 + $0xd0] sm:$0x1f]
    %v5393 = vld [vmem:[%s2315 + $0xd8] sm:$0x1f]
    %v5394 = vld [vmem:[%s2315 + $0xe0] sm:$0x1f]
    %v5395 = vld [vmem:[%s2315 + $0xf0] sm:$0x1f]
    %v5396 = vld [vmem:[%s2315 + $0xf8] sm:$0x1f]
    %v5397 = vld [vmem:[%s2315 + $0x100] sm:$0x1f]
    %v5398 = vld [vmem:[%s2315 + $0x108] sm:$0x1f]
    %v5399 = vld [vmem:[%s2315 + $0x110] sm:$0x1f]
    %v5400 = vld [vmem:[%s2745] sm:$0x1f]
    %v5401 = vld [vmem:[%s2745 + $0x8] sm:$0x1f]
    %v5402 = vld [vmem:[%s2745 + $0x10] sm:$0x1f]
    %v5403 = vld [vmem:[%s2745 + $0x18] sm:$0x1f]
    %v5404 = vld [vmem:[%s2745 + $0x20] sm:$0x1f]
    %v5405 = vld [vmem:[%s2745 + $0x30] sm:$0x1f]
    %v5406 = vld [vmem:[%s2745 + $0x38] sm:$0x1f]
    %v5407 = vld [vmem:[%s2745 + $0x40] sm:$0x1f]
    %v5408 = vld [vmem:[%s2745 + $0x48] sm:$0x1f]
    %v5409 = vld [vmem:[%s2745 + $0x50] sm:$0x1f]
    %v5410 = vld [vmem:[%s2745 + $0x60] sm:$0x1f]
    %v5411 = vld [vmem:[%s2745 + $0x68] sm:$0x1f]
    %v5412 = vld [vmem:[%s2745 + $0x70] sm:$0x1f]
    %v5413 = vld [vmem:[%s2745 + $0x78] sm:$0x1f]
    %v5414 = vld [vmem:[%s2745 + $0x80] sm:$0x1f]
    %v5415 = vld [vmem:[%s2745 + $0x90] sm:$0x1f]
    %v5416 = vld [vmem:[%s2745 + $0x98] sm:$0x1f]
    %v5417 = vld [vmem:[%s2745 + $0xa0] sm:$0x1f]
    %v5418 = vld [vmem:[%s2745 + $0xa8] sm:$0x1f]
    %v5419 = vld [vmem:[%s2745 + $0xb0] sm:$0x1f]
    %v5420 = vld [vmem:[%s2745 + $0xc0] sm:$0x1f]
    %v5421 = vld [vmem:[%s2745 + $0xc8] sm:$0x1f]
    %v5422 = vld [vmem:[%s2745 + $0xd0] sm:$0x1f]
    %v5423 = vld [vmem:[%s2745 + $0xd8] sm:$0x1f]
    %v5424 = vld [vmem:[%s2745 + $0xe0] sm:$0x1f]
    %v5425 = vld [vmem:[%s2745 + $0xf0] sm:$0x1f]
    %v5426 = vld [vmem:[%s2745 + $0xf8] sm:$0x1f]
    %v5427 = vld [vmem:[%s2745 + $0x100] sm:$0x1f]
    %v5428 = vld [vmem:[%s2745 + $0x108] sm:$0x1f]
    %v5429 = vld [vmem:[%s2745 + $0x110] sm:$0x1f]
    %v5430 = vld [vmem:[%s2776] sm:$0x1f]
    %v5431 = vld [vmem:[%s2776 + $0x8] sm:$0x1f]
    %v5432 = vld [vmem:[%s2776 + $0x10] sm:$0x1f]
    %v5433 = vld [vmem:[%s2776 + $0x18] sm:$0x1f]
    %v5434 = vld [vmem:[%s2776 + $0x20] sm:$0x1f]
    %v5435 = vld [vmem:[%s2776 + $0x30] sm:$0x1f]
    %v5436 = vld [vmem:[%s2776 + $0x38] sm:$0x1f]
    %v5437 = vld [vmem:[%s2776 + $0x40] sm:$0x1f]
    %v5438 = vld [vmem:[%s2776 + $0x48] sm:$0x1f]
    %v5439 = vld [vmem:[%s2776 + $0x50] sm:$0x1f]
    %v5440 = vld [vmem:[%s2776 + $0x60] sm:$0x1f]
    %v5441 = vld [vmem:[%s2776 + $0x68] sm:$0x1f]
    %v5442 = vld [vmem:[%s2776 + $0x70] sm:$0x1f]
    %v5443 = vld [vmem:[%s2776 + $0x78] sm:$0x1f]
    %v5444 = vld [vmem:[%s2776 + $0x80] sm:$0x1f]
    %v5445 = vld [vmem:[%s2776 + $0x90] sm:$0x1f]
    %v5446 = vld [vmem:[%s2776 + $0x98] sm:$0x1f]
    %v5447 = vld [vmem:[%s2776 + $0xa0] sm:$0x1f]
    %v5448 = vld [vmem:[%s2776 + $0xa8] sm:$0x1f]
    %v5449 = vld [vmem:[%s2776 + $0xb0] sm:$0x1f]
    %v5450 = vld [vmem:[%s2776 + $0xc0] sm:$0x1f]
    %v5451 = vld [vmem:[%s2776 + $0xc8] sm:$0x1f]
    %v5452 = vld [vmem:[%s2776 + $0xd0] sm:$0x1f]
    %v5453 = vld [vmem:[%s2776 + $0xd8] sm:$0x1f]
    %v5454 = vld [vmem:[%s2776 + $0xe0] sm:$0x1f]
    %v5455 = vld [vmem:[%s2776 + $0xf0] sm:$0x1f]
    %v5456 = vld [vmem:[%s2776 + $0xf8] sm:$0x1f]
    %v5457 = vld [vmem:[%s2776 + $0x100] sm:$0x1f]
    %v5458 = vld [vmem:[%s2776 + $0x108] sm:$0x1f]
    %v5459 = vld [vmem:[%s2776 + $0x110] sm:$0x1f]
    %v5460 = vmul.f32 %v5340, 0.4829629
    %v5461 = vmul.f32 %v5341, 0.4829629
    %v5462 = vmul.f32 %v5342, 0.4829629
    %v5463 = vmul.f32 %v5343, 0.4829629
    %v5464 = vmul.f32 %v5344, 0.4829629
    %v5465 = vmul.f32 %v5345, 0.4829629
    %v5466 = vmul.f32 %v5346, 0.4829629
    %v5467 = vmul.f32 %v5347, 0.4829629
    %v5468 = vmul.f32 %v5348, 0.4829629
    %v5469 = vmul.f32 %v5349, 0.4829629
    %v5470 = vmul.f32 %v5350, 0.4829629
    %v5471 = vmul.f32 %v5351, 0.4829629
    %v5472 = vmul.f32 %v5352, 0.4829629
    %v5473 = vmul.f32 %v5353, 0.4829629
    %v5474 = vmul.f32 %v5354, 0.4829629
    %v5475 = vmul.f32 %v5355, 0.4829629
    %v5476 = vmul.f32 %v5356, 0.4829629
    %v5477 = vmul.f32 %v5357, 0.4829629
    %v5478 = vmul.f32 %v5358, 0.4829629
    %v5479 = vmul.f32 %v5359, 0.4829629
    %v5480 = vmul.f32 %v5360, 0.4829629
    %v5481 = vmul.f32 %v5361, 0.4829629
    %v5482 = vmul.f32 %v5362, 0.4829629
    %v5483 = vmul.f32 %v5363, 0.4829629
    %v5484 = vmul.f32 %v5364, 0.4829629
    %v5485 = vmul.f32 %v5365, 0.4829629
    %v5486 = vmul.f32 %v5366, 0.4829629
    %v5487 = vmul.f32 %v5367, 0.4829629
    %v5488 = vmul.f32 %v5368, 0.4829629
    %v5489 = vmul.f32 %v5369, 0.4829629
    %v5490 = vmul.f32 %v5370, 0.8365163
    %v5491 = vmul.f32 %v5371, 0.8365163
    %v5492 = vmul.f32 %v5372, 0.8365163
    %v5493 = vmul.f32 %v5373, 0.8365163
    %v5494 = vmul.f32 %v5374, 0.8365163
    %v5495 = vmul.f32 %v5375, 0.8365163
    %v5496 = vmul.f32 %v5376, 0.8365163
    %v5497 = vmul.f32 %v5377, 0.8365163
    %v5498 = vmul.f32 %v5378, 0.8365163
    %v5499 = vmul.f32 %v5379, 0.8365163
    %v5500 = vmul.f32 %v5380, 0.8365163
    %v5501 = vmul.f32 %v5381, 0.8365163
    %v5502 = vmul.f32 %v5382, 0.8365163
    %v5503 = vmul.f32 %v5383, 0.8365163
    %v5504 = vmul.f32 %v5384, 0.8365163
    %v5505 = vmul.f32 %v5385, 0.8365163
    %v5506 = vmul.f32 %v5386, 0.8365163
    %v5507 = vmul.f32 %v5387, 0.8365163
    %v5508 = vmul.f32 %v5388, 0.8365163
    %v5509 = vmul.f32 %v5389, 0.8365163
    %v5510 = vmul.f32 %v5390, 0.8365163
    %v5511 = vmul.f32 %v5391, 0.8365163
    %v5512 = vmul.f32 %v5392, 0.8365163
    %v5513 = vmul.f32 %v5393, 0.8365163
    %v5514 = vmul.f32 %v5394, 0.8365163
    %v5515 = vmul.f32 %v5395, 0.8365163
    %v5516 = vmul.f32 %v5396, 0.8365163
    %v5517 = vmul.f32 %v5397, 0.8365163
    %v5518 = vmul.f32 %v5398, 0.8365163
    %v5519 = vmul.f32 %v5399, 0.8365163
    %v5520 = vadd.f32 %v5460, %v5490
    %v5521 = vadd.f32 %v5461, %v5491
    %v5522 = vadd.f32 %v5462, %v5492
    %v5523 = vadd.f32 %v5463, %v5493
    %v5524 = vadd.f32 %v5464, %v5494
    %v5525 = vadd.f32 %v5465, %v5495
    %v5526 = vadd.f32 %v5466, %v5496
    %v5527 = vadd.f32 %v5467, %v5497
    %v5528 = vadd.f32 %v5468, %v5498
    %v5529 = vadd.f32 %v5469, %v5499
    %v5530 = vadd.f32 %v5470, %v5500
    %v5531 = vadd.f32 %v5471, %v5501
    %v5532 = vadd.f32 %v5472, %v5502
    %v5533 = vadd.f32 %v5473, %v5503
    %v5534 = vadd.f32 %v5474, %v5504
    %v5535 = vadd.f32 %v5475, %v5505
    %v5536 = vadd.f32 %v5476, %v5506
    %v5537 = vadd.f32 %v5477, %v5507
    %v5538 = vadd.f32 %v5478, %v5508
    %v5539 = vadd.f32 %v5479, %v5509
    %v5540 = vadd.f32 %v5480, %v5510
    %v5541 = vadd.f32 %v5481, %v5511
    %v5542 = vadd.f32 %v5482, %v5512
    %v5543 = vadd.f32 %v5483, %v5513
    %v5544 = vadd.f32 %v5484, %v5514
    %v5545 = vadd.f32 %v5485, %v5515
    %v5546 = vadd.f32 %v5486, %v5516
    %v5547 = vadd.f32 %v5487, %v5517
    %v5548 = vadd.f32 %v5488, %v5518
    %v5549 = vadd.f32 %v5489, %v5519
    %v5550 = vmul.f32 %v5400, 0.22414386
    %v5551 = vmul.f32 %v5401, 0.22414386
    %v5552 = vmul.f32 %v5402, 0.22414386
    %v5553 = vmul.f32 %v5403, 0.22414386
    %v5554 = vmul.f32 %v5404, 0.22414386
    %v5555 = vmul.f32 %v5405, 0.22414386
    %v5556 = vmul.f32 %v5406, 0.22414386
    %v5557 = vmul.f32 %v5407, 0.22414386
    %v5558 = vmul.f32 %v5408, 0.22414386
    %v5559 = vmul.f32 %v5409, 0.22414386
    %v5560 = vmul.f32 %v5410, 0.22414386
    %v5561 = vmul.f32 %v5411, 0.22414386
    %v5562 = vmul.f32 %v5412, 0.22414386
    %v5563 = vmul.f32 %v5413, 0.22414386
    %v5564 = vmul.f32 %v5414, 0.22414386
    %v5565 = vmul.f32 %v5415, 0.22414386
    %v5566 = vmul.f32 %v5416, 0.22414386
    %v5567 = vmul.f32 %v5417, 0.22414386
    %v5568 = vmul.f32 %v5418, 0.22414386
    %v5569 = vmul.f32 %v5419, 0.22414386
    %v5570 = vmul.f32 %v5420, 0.22414386
    %v5571 = vmul.f32 %v5421, 0.22414386
    %v5572 = vmul.f32 %v5422, 0.22414386
    %v5573 = vmul.f32 %v5423, 0.22414386
    %v5574 = vmul.f32 %v5424, 0.22414386
    %v5575 = vmul.f32 %v5425, 0.22414386
    %v5576 = vmul.f32 %v5426, 0.22414386
    %v5577 = vmul.f32 %v5427, 0.22414386
    %v5578 = vmul.f32 %v5428, 0.22414386
    %v5579 = vmul.f32 %v5429, 0.22414386
    %v5580 = vadd.f32 %v5520, %v5550
    %v5581 = vadd.f32 %v5521, %v5551
    %v5582 = vadd.f32 %v5522, %v5552
    %v5583 = vadd.f32 %v5523, %v5553
    %v5584 = vadd.f32 %v5524, %v5554
    %v5585 = vadd.f32 %v5525, %v5555
    %v5586 = vadd.f32 %v5526, %v5556
    %v5587 = vadd.f32 %v5527, %v5557
    %v5588 = vadd.f32 %v5528, %v5558
    %v5589 = vadd.f32 %v5529, %v5559
    %v5590 = vadd.f32 %v5530, %v5560
    %v5591 = vadd.f32 %v5531, %v5561
    %v5592 = vadd.f32 %v5532, %v5562
    %v5593 = vadd.f32 %v5533, %v5563
    %v5594 = vadd.f32 %v5534, %v5564
    %v5595 = vadd.f32 %v5535, %v5565
    %v5596 = vadd.f32 %v5536, %v5566
    %v5597 = vadd.f32 %v5537, %v5567
    %v5598 = vadd.f32 %v5538, %v5568
    %v5599 = vadd.f32 %v5539, %v5569
    %v5600 = vadd.f32 %v5540, %v5570
    %v5601 = vadd.f32 %v5541, %v5571
    %v5602 = vadd.f32 %v5542, %v5572
    %v5603 = vadd.f32 %v5543, %v5573
    %v5604 = vadd.f32 %v5544, %v5574
    %v5605 = vadd.f32 %v5545, %v5575
    %v5606 = vadd.f32 %v5546, %v5576
    %v5607 = vadd.f32 %v5547, %v5577
    %v5608 = vadd.f32 %v5548, %v5578
    %v5609 = vadd.f32 %v5549, %v5579
    %v5610 = vmul.f32 %v5430, -0.12940952
    %v5611 = vmul.f32 %v5431, -0.12940952
    %v5612 = vmul.f32 %v5432, -0.12940952
    %v5613 = vmul.f32 %v5433, -0.12940952
    %v5614 = vmul.f32 %v5434, -0.12940952
    %v5615 = vmul.f32 %v5435, -0.12940952
    %v5616 = vmul.f32 %v5436, -0.12940952
    %v5617 = vmul.f32 %v5437, -0.12940952
    %v5618 = vmul.f32 %v5438, -0.12940952
    %v5619 = vmul.f32 %v5439, -0.12940952
    %v5620 = vmul.f32 %v5440, -0.12940952
    %v5621 = vmul.f32 %v5441, -0.12940952
    %v5622 = vmul.f32 %v5442, -0.12940952
    %v5623 = vmul.f32 %v5443, -0.12940952
    %v5624 = vmul.f32 %v5444, -0.12940952
    %v5625 = vmul.f32 %v5445, -0.12940952
    %v5626 = vmul.f32 %v5446, -0.12940952
    %v5627 = vmul.f32 %v5447, -0.12940952
    %v5628 = vmul.f32 %v5448, -0.12940952
    %v5629 = vmul.f32 %v5449, -0.12940952
    %v5630 = vmul.f32 %v5450, -0.12940952
    %v5631 = vmul.f32 %v5451, -0.12940952
    %v5632 = vmul.f32 %v5452, -0.12940952
    %v5633 = vmul.f32 %v5453, -0.12940952
    %v5634 = vmul.f32 %v5454, -0.12940952
    %v5635 = vmul.f32 %v5455, -0.12940952
    %v5636 = vmul.f32 %v5456, -0.12940952
    %v5637 = vmul.f32 %v5457, -0.12940952
    %v5638 = vmul.f32 %v5458, -0.12940952
    %v5639 = vmul.f32 %v5459, -0.12940952
    %v5640 = vadd.f32 %v5580, %v5610
    %v5641 = vadd.f32 %v5581, %v5611
    %v5642 = vadd.f32 %v5582, %v5612
    %v5643 = vadd.f32 %v5583, %v5613
    %v5644 = vadd.f32 %v5584, %v5614
    %v5645 = vadd.f32 %v5585, %v5615
    %v5646 = vadd.f32 %v5586, %v5616
    %v5647 = vadd.f32 %v5587, %v5617
    %v5648 = vadd.f32 %v5588, %v5618
    %v5649 = vadd.f32 %v5589, %v5619
    %v5650 = vadd.f32 %v5590, %v5620
    %v5651 = vadd.f32 %v5591, %v5621
    %v5652 = vadd.f32 %v5592, %v5622
    %v5653 = vadd.f32 %v5593, %v5623
    %v5654 = vadd.f32 %v5594, %v5624
    %v5655 = vadd.f32 %v5595, %v5625
    %v5656 = vadd.f32 %v5596, %v5626
    %v5657 = vadd.f32 %v5597, %v5627
    %v5658 = vadd.f32 %v5598, %v5628
    %v5659 = vadd.f32 %v5599, %v5629
    %v5660 = vadd.f32 %v5600, %v5630
    %v5661 = vadd.f32 %v5601, %v5631
    %v5662 = vadd.f32 %v5602, %v5632
    %v5663 = vadd.f32 %v5603, %v5633
    %v5664 = vadd.f32 %v5604, %v5634
    %v5665 = vadd.f32 %v5605, %v5635
    %v5666 = vadd.f32 %v5606, %v5636
    %v5667 = vadd.f32 %v5607, %v5637
    %v5668 = vadd.f32 %v5608, %v5638
    %v5669 = vadd.f32 %v5609, %v5639
    %s5670 = scalar_lea.vmem [#allocation3], 960
    %5671 = vst [vmem:[%s5670] sm:$0x1f] %v5640
    %5672 = vst [vmem:[%s5670 + $0x8] sm:$0x1f] %v5641
    %5673 = vst [vmem:[%s5670 + $0x10] sm:$0x1f] %v5642
    %5674 = vst [vmem:[%s5670 + $0x18] sm:$0x1f] %v5643
    %5675 = vst [vmem:[%s5670 + $0x20] sm:$0x1f] %v5644
    %5676 = vst [vmem:[%s5670 + $0x28] sm:$0x1f] %v5645
    %5677 = vst [vmem:[%s5670 + $0x30] sm:$0x1f] %v5646
    %5678 = vst [vmem:[%s5670 + $0x38] sm:$0x1f] %v5647
    %5679 = vst [vmem:[%s5670 + $0x40] sm:$0x1f] %v5648
    %5680 = vst [vmem:[%s5670 + $0x48] sm:$0x1f] %v5649
    %5681 = vst [vmem:[%s5670 + $0x50] sm:$0x1f] %v5650
    %5682 = vst [vmem:[%s5670 + $0x58] sm:$0x1f] %v5651
    %5683 = vst [vmem:[%s5670 + $0x60] sm:$0x1f] %v5652
    %5684 = vst [vmem:[%s5670 + $0x68] sm:$0x1f] %v5653
    %5685 = vst [vmem:[%s5670 + $0x70] sm:$0x1f] %v5654
    %5686 = vst [vmem:[%s5670 + $0x78] sm:$0x1f] %v5655
    %5687 = vst [vmem:[%s5670 + $0x80] sm:$0x1f] %v5656
    %5688 = vst [vmem:[%s5670 + $0x88] sm:$0x1f] %v5657
    %5689 = vst [vmem:[%s5670 + $0x90] sm:$0x1f] %v5658
    %5690 = vst [vmem:[%s5670 + $0x98] sm:$0x1f] %v5659
    %5691 = vst [vmem:[%s5670 + $0xa0] sm:$0x1f] %v5660
    %5692 = vst [vmem:[%s5670 + $0xa8] sm:$0x1f] %v5661
    %5693 = vst [vmem:[%s5670 + $0xb0] sm:$0x1f] %v5662
    %5694 = vst [vmem:[%s5670 + $0xb8] sm:$0x1f] %v5663
    %5695 = vst [vmem:[%s5670 + $0xc0] sm:$0x1f] %v5664
    %5696 = vst [vmem:[%s5670 + $0xc8] sm:$0x1f] %v5665
    %5697 = vst [vmem:[%s5670 + $0xd0] sm:$0x1f] %v5666
    %5698 = vst [vmem:[%s5670 + $0xd8] sm:$0x1f] %v5667
    %5699 = vst [vmem:[%s5670 + $0xe0] sm:$0x1f] %v5668
    %5700 = vst [vmem:[%s5670 + $0xe8] sm:$0x1f] %v5669
    %v5701 = vmul.f32 %v5340, -0.12940952
    %v5702 = vmul.f32 %v5341, -0.12940952
    %v5703 = vmul.f32 %v5342, -0.12940952
    %v5704 = vmul.f32 %v5343, -0.12940952
    %v5705 = vmul.f32 %v5344, -0.12940952
    %v5706 = vmul.f32 %v5345, -0.12940952
    %v5707 = vmul.f32 %v5346, -0.12940952
    %v5708 = vmul.f32 %v5347, -0.12940952
    %v5709 = vmul.f32 %v5348, -0.12940952
    %v5710 = vmul.f32 %v5349, -0.12940952
    %v5711 = vmul.f32 %v5350, -0.12940952
    %v5712 = vmul.f32 %v5351, -0.12940952
    %v5713 = vmul.f32 %v5352, -0.12940952
    %v5714 = vmul.f32 %v5353, -0.12940952
    %v5715 = vmul.f32 %v5354, -0.12940952
    %v5716 = vmul.f32 %v5355, -0.12940952
    %v5717 = vmul.f32 %v5356, -0.12940952
    %v5718 = vmul.f32 %v5357, -0.12940952
    %v5719 = vmul.f32 %v5358, -0.12940952
    %v5720 = vmul.f32 %v5359, -0.12940952
    %v5721 = vmul.f32 %v5360, -0.12940952
    %v5722 = vmul.f32 %v5361, -0.12940952
    %v5723 = vmul.f32 %v5362, -0.12940952
    %v5724 = vmul.f32 %v5363, -0.12940952
    %v5725 = vmul.f32 %v5364, -0.12940952
    %v5726 = vmul.f32 %v5365, -0.12940952
    %v5727 = vmul.f32 %v5366, -0.12940952
    %v5728 = vmul.f32 %v5367, -0.12940952
    %v5729 = vmul.f32 %v5368, -0.12940952
    %v5730 = vmul.f32 %v5369, -0.12940952
    %v5731 = vmul.f32 %v5370, -0.22414386
    %v5732 = vmul.f32 %v5371, -0.22414386
    %v5733 = vmul.f32 %v5372, -0.22414386
    %v5734 = vmul.f32 %v5373, -0.22414386
    %v5735 = vmul.f32 %v5374, -0.22414386
    %v5736 = vmul.f32 %v5375, -0.22414386
    %v5737 = vmul.f32 %v5376, -0.22414386
    %v5738 = vmul.f32 %v5377, -0.22414386
    %v5739 = vmul.f32 %v5378, -0.22414386
    %v5740 = vmul.f32 %v5379, -0.22414386
    %v5741 = vmul.f32 %v5380, -0.22414386
    %v5742 = vmul.f32 %v5381, -0.22414386
    %v5743 = vmul.f32 %v5382, -0.22414386
    %v5744 = vmul.f32 %v5383, -0.22414386
    %v5745 = vmul.f32 %v5384, -0.22414386
    %v5746 = vmul.f32 %v5385, -0.22414386
    %v5747 = vmul.f32 %v5386, -0.22414386
    %v5748 = vmul.f32 %v5387, -0.22414386
    %v5749 = vmul.f32 %v5388, -0.22414386
    %v5750 = vmul.f32 %v5389, -0.22414386
    %v5751 = vmul.f32 %v5390, -0.22414386
    %v5752 = vmul.f32 %v5391, -0.22414386
    %v5753 = vmul.f32 %v5392, -0.22414386
    %v5754 = vmul.f32 %v5393, -0.22414386
    %v5755 = vmul.f32 %v5394, -0.22414386
    %v5756 = vmul.f32 %v5395, -0.22414386
    %v5757 = vmul.f32 %v5396, -0.22414386
    %v5758 = vmul.f32 %v5397, -0.22414386
    %v5759 = vmul.f32 %v5398, -0.22414386
    %v5760 = vmul.f32 %v5399, -0.22414386
    %v5761 = vadd.f32 %v5701, %v5731
    %v5762 = vadd.f32 %v5702, %v5732
    %v5763 = vadd.f32 %v5703, %v5733
    %v5764 = vadd.f32 %v5704, %v5734
    %v5765 = vadd.f32 %v5705, %v5735
    %v5766 = vadd.f32 %v5706, %v5736
    %v5767 = vadd.f32 %v5707, %v5737
    %v5768 = vadd.f32 %v5708, %v5738
    %v5769 = vadd.f32 %v5709, %v5739
    %v5770 = vadd.f32 %v5710, %v5740
    %v5771 = vadd.f32 %v5711, %v5741
    %v5772 = vadd.f32 %v5712, %v5742
    %v5773 = vadd.f32 %v5713, %v5743
    %v5774 = vadd.f32 %v5714, %v5744
    %v5775 = vadd.f32 %v5715, %v5745
    %v5776 = vadd.f32 %v5716, %v5746
    %v5777 = vadd.f32 %v5717, %v5747
    %v5778 = vadd.f32 %v5718, %v5748
    %v5779 = vadd.f32 %v5719, %v5749
    %v5780 = vadd.f32 %v5720, %v5750
    %v5781 = vadd.f32 %v5721, %v5751
    %v5782 = vadd.f32 %v5722, %v5752
    %v5783 = vadd.f32 %v5723, %v5753
    %v5784 = vadd.f32 %v5724, %v5754
    %v5785 = vadd.f32 %v5725, %v5755
    %v5786 = vadd.f32 %v5726, %v5756
    %v5787 = vadd.f32 %v5727, %v5757
    %v5788 = vadd.f32 %v5728, %v5758
    %v5789 = vadd.f32 %v5729, %v5759
    %v5790 = vadd.f32 %v5730, %v5760
    %v5791 = vmul.f32 %v5400, 0.8365163
    %v5792 = vmul.f32 %v5401, 0.8365163
    %v5793 = vmul.f32 %v5402, 0.8365163
    %v5794 = vmul.f32 %v5403, 0.8365163
    %v5795 = vmul.f32 %v5404, 0.8365163
    %v5796 = vmul.f32 %v5405, 0.8365163
    %v5797 = vmul.f32 %v5406, 0.8365163
    %v5798 = vmul.f32 %v5407, 0.8365163
    %v5799 = vmul.f32 %v5408, 0.8365163
    %v5800 = vmul.f32 %v5409, 0.8365163
    %v5801 = vmul.f32 %v5410, 0.8365163
    %v5802 = vmul.f32 %v5411, 0.8365163
    %v5803 = vmul.f32 %v5412, 0.8365163
    %v5804 = vmul.f32 %v5413, 0.8365163
    %v5805 = vmul.f32 %v5414, 0.8365163
    %v5806 = vmul.f32 %v5415, 0.8365163
    %v5807 = vmul.f32 %v5416, 0.8365163
    %v5808 = vmul.f32 %v5417, 0.8365163
    %v5809 = vmul.f32 %v5418, 0.8365163
    %v5810 = vmul.f32 %v5419, 0.8365163
    %v5811 = vmul.f32 %v5420, 0.8365163
    %v5812 = vmul.f32 %v5421, 0.8365163
    %v5813 = vmul.f32 %v5422, 0.8365163
    %v5814 = vmul.f32 %v5423, 0.8365163
    %v5815 = vmul.f32 %v5424, 0.8365163
    %v5816 = vmul.f32 %v5425, 0.8365163
    %v5817 = vmul.f32 %v5426, 0.8365163
    %v5818 = vmul.f32 %v5427, 0.8365163
    %v5819 = vmul.f32 %v5428, 0.8365163
    %v5820 = vmul.f32 %v5429, 0.8365163
    %v5821 = vadd.f32 %v5761, %v5791
    %v5822 = vadd.f32 %v5762, %v5792
    %v5823 = vadd.f32 %v5763, %v5793
    %v5824 = vadd.f32 %v5764, %v5794
    %v5825 = vadd.f32 %v5765, %v5795
    %v5826 = vadd.f32 %v5766, %v5796
    %v5827 = vadd.f32 %v5767, %v5797
    %v5828 = vadd.f32 %v5768, %v5798
    %v5829 = vadd.f32 %v5769, %v5799
    %v5830 = vadd.f32 %v5770, %v5800
    %v5831 = vadd.f32 %v5771, %v5801
    %v5832 = vadd.f32 %v5772, %v5802
    %v5833 = vadd.f32 %v5773, %v5803
    %v5834 = vadd.f32 %v5774, %v5804
    %v5835 = vadd.f32 %v5775, %v5805
    %v5836 = vadd.f32 %v5776, %v5806
    %v5837 = vadd.f32 %v5777, %v5807
    %v5838 = vadd.f32 %v5778, %v5808
    %v5839 = vadd.f32 %v5779, %v5809
    %v5840 = vadd.f32 %v5780, %v5810
    %v5841 = vadd.f32 %v5781, %v5811
    %v5842 = vadd.f32 %v5782, %v5812
    %v5843 = vadd.f32 %v5783, %v5813
    %v5844 = vadd.f32 %v5784, %v5814
    %v5845 = vadd.f32 %v5785, %v5815
    %v5846 = vadd.f32 %v5786, %v5816
    %v5847 = vadd.f32 %v5787, %v5817
    %v5848 = vadd.f32 %v5788, %v5818
    %v5849 = vadd.f32 %v5789, %v5819
    %v5850 = vadd.f32 %v5790, %v5820
    %v5851 = vmul.f32 %v5430, -0.4829629
    %v5852 = vmul.f32 %v5431, -0.4829629
    %v5853 = vmul.f32 %v5432, -0.4829629
    %v5854 = vmul.f32 %v5433, -0.4829629
    %v5855 = vmul.f32 %v5434, -0.4829629
    %v5856 = vmul.f32 %v5435, -0.4829629
    %v5857 = vmul.f32 %v5436, -0.4829629
    %v5858 = vmul.f32 %v5437, -0.4829629
    %v5859 = vmul.f32 %v5438, -0.4829629
    %v5860 = vmul.f32 %v5439, -0.4829629
    %v5861 = vmul.f32 %v5440, -0.4829629
    %v5862 = vmul.f32 %v5441, -0.4829629
    %v5863 = vmul.f32 %v5442, -0.4829629
    %v5864 = vmul.f32 %v5443, -0.4829629
    %v5865 = vmul.f32 %v5444, -0.4829629
    %v5866 = vmul.f32 %v5445, -0.4829629
    %v5867 = vmul.f32 %v5446, -0.4829629
    %v5868 = vmul.f32 %v5447, -0.4829629
    %v5869 = vmul.f32 %v5448, -0.4829629
    %v5870 = vmul.f32 %v5449, -0.4829629
    %v5871 = vmul.f32 %v5450, -0.4829629
    %v5872 = vmul.f32 %v5451, -0.4829629
    %v5873 = vmul.f32 %v5452, -0.4829629
    %v5874 = vmul.f32 %v5453, -0.4829629
    %v5875 = vmul.f32 %v5454, -0.4829629
    %v5876 = vmul.f32 %v5455, -0.4829629
    %v5877 = vmul.f32 %v5456, -0.4829629
    %v5878 = vmul.f32 %v5457, -0.4829629
    %v5879 = vmul.f32 %v5458, -0.4829629
    %v5880 = vmul.f32 %v5459, -0.4829629
    %v5881 = vadd.f32 %v5821, %v5851
    %v5882 = vadd.f32 %v5822, %v5852
    %v5883 = vadd.f32 %v5823, %v5853
    %v5884 = vadd.f32 %v5824, %v5854
    %v5885 = vadd.f32 %v5825, %v5855
    %v5886 = vadd.f32 %v5826, %v5856
    %v5887 = vadd.f32 %v5827, %v5857
    %v5888 = vadd.f32 %v5828, %v5858
    %v5889 = vadd.f32 %v5829, %v5859
    %v5890 = vadd.f32 %v5830, %v5860
    %v5891 = vadd.f32 %v5831, %v5861
    %v5892 = vadd.f32 %v5832, %v5862
    %v5893 = vadd.f32 %v5833, %v5863
    %v5894 = vadd.f32 %v5834, %v5864
    %v5895 = vadd.f32 %v5835, %v5865
    %v5896 = vadd.f32 %v5836, %v5866
    %v5897 = vadd.f32 %v5837, %v5867
    %v5898 = vadd.f32 %v5838, %v5868
    %v5899 = vadd.f32 %v5839, %v5869
    %v5900 = vadd.f32 %v5840, %v5870
    %v5901 = vadd.f32 %v5841, %v5871
    %v5902 = vadd.f32 %v5842, %v5872
    %v5903 = vadd.f32 %v5843, %v5873
    %v5904 = vadd.f32 %v5844, %v5874
    %v5905 = vadd.f32 %v5845, %v5875
    %v5906 = vadd.f32 %v5846, %v5876
    %v5907 = vadd.f32 %v5847, %v5877
    %v5908 = vadd.f32 %v5848, %v5878
    %v5909 = vadd.f32 %v5849, %v5879
    %v5910 = vadd.f32 %v5850, %v5880
    %s5911 = scalar_lea.vmem [#allocation3], 1440
    %5912 = vst [vmem:[%s5911] sm:$0x1f] %v5881
    %5913 = vst [vmem:[%s5911 + $0x8] sm:$0x1f] %v5882
    %5914 = vst [vmem:[%s5911 + $0x10] sm:$0x1f] %v5883
    %5915 = vst [vmem:[%s5911 + $0x18] sm:$0x1f] %v5884
    %5916 = vst [vmem:[%s5911 + $0x20] sm:$0x1f] %v5885
    %5917 = vst [vmem:[%s5911 + $0x28] sm:$0x1f] %v5886
    %5918 = vst [vmem:[%s5911 + $0x30] sm:$0x1f] %v5887
    %5919 = vst [vmem:[%s5911 + $0x38] sm:$0x1f] %v5888
    %5920 = vst [vmem:[%s5911 + $0x40] sm:$0x1f] %v5889
    %5921 = vst [vmem:[%s5911 + $0x48] sm:$0x1f] %v5890
    %5922 = vst [vmem:[%s5911 + $0x50] sm:$0x1f] %v5891
    %5923 = vst [vmem:[%s5911 + $0x58] sm:$0x1f] %v5892
    %5924 = vst [vmem:[%s5911 + $0x60] sm:$0x1f] %v5893
    %5925 = vst [vmem:[%s5911 + $0x68] sm:$0x1f] %v5894
    %5926 = vst [vmem:[%s5911 + $0x70] sm:$0x1f] %v5895
    %5927 = vst [vmem:[%s5911 + $0x78] sm:$0x1f] %v5896
    %5928 = vst [vmem:[%s5911 + $0x80] sm:$0x1f] %v5897
    %5929 = vst [vmem:[%s5911 + $0x88] sm:$0x1f] %v5898
    %5930 = vst [vmem:[%s5911 + $0x90] sm:$0x1f] %v5899
    %5931 = vst [vmem:[%s5911 + $0x98] sm:$0x1f] %v5900
    %5932 = vst [vmem:[%s5911 + $0xa0] sm:$0x1f] %v5901
    %5933 = vst [vmem:[%s5911 + $0xa8] sm:$0x1f] %v5902
    %5934 = vst [vmem:[%s5911 + $0xb0] sm:$0x1f] %v5903
    %5935 = vst [vmem:[%s5911 + $0xb8] sm:$0x1f] %v5904
    %5936 = vst [vmem:[%s5911 + $0xc0] sm:$0x1f] %v5905
    %5937 = vst [vmem:[%s5911 + $0xc8] sm:$0x1f] %v5906
    %5938 = vst [vmem:[%s5911 + $0xd0] sm:$0x1f] %v5907
    %5939 = vst [vmem:[%s5911 + $0xd8] sm:$0x1f] %v5908
    %5940 = vst [vmem:[%s5911 + $0xe0] sm:$0x1f] %v5909
    %5941 = vst [vmem:[%s5911 + $0xe8] sm:$0x1f] %v5910
    %v5942 = vld [vmem:[%s1877] sm:$0x1f]
    %v5943 = vld [vmem:[%s1877 + $0x8] sm:$0x1f]
    %v5944 = vld [vmem:[%s1877 + $0x10] sm:$0x1f]
    %v5945 = vld [vmem:[%s1877 + $0x18] sm:$0x1f]
    %v5946 = vld [vmem:[%s1877 + $0x20] sm:$0x1f]
    %v5947 = vld [vmem:[%s1877 + $0x30] sm:$0x1f]
    %v5948 = vld [vmem:[%s1877 + $0x38] sm:$0x1f]
    %v5949 = vld [vmem:[%s1877 + $0x40] sm:$0x1f]
    %v5950 = vld [vmem:[%s1877 + $0x48] sm:$0x1f]
    %v5951 = vld [vmem:[%s1877 + $0x50] sm:$0x1f]
    %v5952 = vld [vmem:[%s1877 + $0x60] sm:$0x1f]
    %v5953 = vld [vmem:[%s1877 + $0x68] sm:$0x1f]
    %v5954 = vld [vmem:[%s1877 + $0x70] sm:$0x1f]
    %v5955 = vld [vmem:[%s1877 + $0x78] sm:$0x1f]
    %v5956 = vld [vmem:[%s1877 + $0x80] sm:$0x1f]
    %v5957 = vld [vmem:[%s1877 + $0x90] sm:$0x1f]
    %v5958 = vld [vmem:[%s1877 + $0x98] sm:$0x1f]
    %v5959 = vld [vmem:[%s1877 + $0xa0] sm:$0x1f]
    %v5960 = vld [vmem:[%s1877 + $0xa8] sm:$0x1f]
    %v5961 = vld [vmem:[%s1877 + $0xb0] sm:$0x1f]
    %v5962 = vld [vmem:[%s1877 + $0xc0] sm:$0x1f]
    %v5963 = vld [vmem:[%s1877 + $0xc8] sm:$0x1f]
    %v5964 = vld [vmem:[%s1877 + $0xd0] sm:$0x1f]
    %v5965 = vld [vmem:[%s1877 + $0xd8] sm:$0x1f]
    %v5966 = vld [vmem:[%s1877 + $0xe0] sm:$0x1f]
    %v5967 = vld [vmem:[%s1877 + $0xf0] sm:$0x1f]
    %v5968 = vld [vmem:[%s1877 + $0xf8] sm:$0x1f]
    %v5969 = vld [vmem:[%s1877 + $0x100] sm:$0x1f]
    %v5970 = vld [vmem:[%s1877 + $0x108] sm:$0x1f]
    %v5971 = vld [vmem:[%s1877 + $0x110] sm:$0x1f]
    %v5972 = vld [vmem:[%s2605] sm:$0x1f]
    %v5973 = vld [vmem:[%s2605 + $0x8] sm:$0x1f]
    %v5974 = vld [vmem:[%s2605 + $0x10] sm:$0x1f]
    %v5975 = vld [vmem:[%s2605 + $0x18] sm:$0x1f]
    %v5976 = vld [vmem:[%s2605 + $0x20] sm:$0x1f]
    %v5977 = vld [vmem:[%s2605 + $0x30] sm:$0x1f]
    %v5978 = vld [vmem:[%s2605 + $0x38] sm:$0x1f]
    %v5979 = vld [vmem:[%s2605 + $0x40] sm:$0x1f]
    %v5980 = vld [vmem:[%s2605 + $0x48] sm:$0x1f]
    %v5981 = vld [vmem:[%s2605 + $0x50] sm:$0x1f]
    %v5982 = vld [vmem:[%s2605 + $0x60] sm:$0x1f]
    %v5983 = vld [vmem:[%s2605 + $0x68] sm:$0x1f]
    %v5984 = vld [vmem:[%s2605 + $0x70] sm:$0x1f]
    %v5985 = vld [vmem:[%s2605 + $0x78] sm:$0x1f]
    %v5986 = vld [vmem:[%s2605 + $0x80] sm:$0x1f]
    %v5987 = vld [vmem:[%s2605 + $0x90] sm:$0x1f]
    %v5988 = vld [vmem:[%s2605 + $0x98] sm:$0x1f]
    %v5989 = vld [vmem:[%s2605 + $0xa0] sm:$0x1f]
    %v5990 = vld [vmem:[%s2605 + $0xa8] sm:$0x1f]
    %v5991 = vld [vmem:[%s2605 + $0xb0] sm:$0x1f]
    %v5992 = vld [vmem:[%s2605 + $0xc0] sm:$0x1f]
    %v5993 = vld [vmem:[%s2605 + $0xc8] sm:$0x1f]
    %v5994 = vld [vmem:[%s2605 + $0xd0] sm:$0x1f]
    %v5995 = vld [vmem:[%s2605 + $0xd8] sm:$0x1f]
    %v5996 = vld [vmem:[%s2605 + $0xe0] sm:$0x1f]
    %v5997 = vld [vmem:[%s2605 + $0xf0] sm:$0x1f]
    %v5998 = vld [vmem:[%s2605 + $0xf8] sm:$0x1f]
    %v5999 = vld [vmem:[%s2605 + $0x100] sm:$0x1f]
    %v6000 = vld [vmem:[%s2605 + $0x108] sm:$0x1f]
    %v6001 = vld [vmem:[%s2605 + $0x110] sm:$0x1f]
    %v6002 = vld [vmem:[%s3348] sm:$0x1f]
    %v6003 = vld [vmem:[%s3348 + $0x8] sm:$0x1f]
    %v6004 = vld [vmem:[%s3348 + $0x10] sm:$0x1f]
    %v6005 = vld [vmem:[%s3348 + $0x18] sm:$0x1f]
    %v6006 = vld [vmem:[%s3348 + $0x20] sm:$0x1f]
    %v6007 = vld [vmem:[%s3348 + $0x30] sm:$0x1f]
    %v6008 = vld [vmem:[%s3348 + $0x38] sm:$0x1f]
    %v6009 = vld [vmem:[%s3348 + $0x40] sm:$0x1f]
    %v6010 = vld [vmem:[%s3348 + $0x48] sm:$0x1f]
    %v6011 = vld [vmem:[%s3348 + $0x50] sm:$0x1f]
    %v6012 = vld [vmem:[%s3348 + $0x60] sm:$0x1f]
    %v6013 = vld [vmem:[%s3348 + $0x68] sm:$0x1f]
    %v6014 = vld [vmem:[%s3348 + $0x70] sm:$0x1f]
    %v6015 = vld [vmem:[%s3348 + $0x78] sm:$0x1f]
    %v6016 = vld [vmem:[%s3348 + $0x80] sm:$0x1f]
    %v6017 = vld [vmem:[%s3348 + $0x90] sm:$0x1f]
    %v6018 = vld [vmem:[%s3348 + $0x98] sm:$0x1f]
    %v6019 = vld [vmem:[%s3348 + $0xa0] sm:$0x1f]
    %v6020 = vld [vmem:[%s3348 + $0xa8] sm:$0x1f]
    %v6021 = vld [vmem:[%s3348 + $0xb0] sm:$0x1f]
    %v6022 = vld [vmem:[%s3348 + $0xc0] sm:$0x1f]
    %v6023 = vld [vmem:[%s3348 + $0xc8] sm:$0x1f]
    %v6024 = vld [vmem:[%s3348 + $0xd0] sm:$0x1f]
    %v6025 = vld [vmem:[%s3348 + $0xd8] sm:$0x1f]
    %v6026 = vld [vmem:[%s3348 + $0xe0] sm:$0x1f]
    %v6027 = vld [vmem:[%s3348 + $0xf0] sm:$0x1f]
    %v6028 = vld [vmem:[%s3348 + $0xf8] sm:$0x1f]
    %v6029 = vld [vmem:[%s3348 + $0x100] sm:$0x1f]
    %v6030 = vld [vmem:[%s3348 + $0x108] sm:$0x1f]
    %v6031 = vld [vmem:[%s3348 + $0x110] sm:$0x1f]
    %v6032 = vld [vmem:[%s3379] sm:$0x1f]
    %v6033 = vld [vmem:[%s3379 + $0x8] sm:$0x1f]
    %v6034 = vld [vmem:[%s3379 + $0x10] sm:$0x1f]
    %v6035 = vld [vmem:[%s3379 + $0x18] sm:$0x1f]
    %v6036 = vld [vmem:[%s3379 + $0x20] sm:$0x1f]
    %v6037 = vld [vmem:[%s3379 + $0x30] sm:$0x1f]
    %v6038 = vld [vmem:[%s3379 + $0x38] sm:$0x1f]
    %v6039 = vld [vmem:[%s3379 + $0x40] sm:$0x1f]
    %v6040 = vld [vmem:[%s3379 + $0x48] sm:$0x1f]
    %v6041 = vld [vmem:[%s3379 + $0x50] sm:$0x1f]
    %v6042 = vld [vmem:[%s3379 + $0x60] sm:$0x1f]
    %v6043 = vld [vmem:[%s3379 + $0x68] sm:$0x1f]
    %v6044 = vld [vmem:[%s3379 + $0x70] sm:$0x1f]
    %v6045 = vld [vmem:[%s3379 + $0x78] sm:$0x1f]
    %v6046 = vld [vmem:[%s3379 + $0x80] sm:$0x1f]
    %v6047 = vld [vmem:[%s3379 + $0x90] sm:$0x1f]
    %v6048 = vld [vmem:[%s3379 + $0x98] sm:$0x1f]
    %v6049 = vld [vmem:[%s3379 + $0xa0] sm:$0x1f]
    %v6050 = vld [vmem:[%s3379 + $0xa8] sm:$0x1f]
    %v6051 = vld [vmem:[%s3379 + $0xb0] sm:$0x1f]
    %v6052 = vld [vmem:[%s3379 + $0xc0] sm:$0x1f]
    %v6053 = vld [vmem:[%s3379 + $0xc8] sm:$0x1f]
    %v6054 = vld [vmem:[%s3379 + $0xd0] sm:$0x1f]
    %v6055 = vld [vmem:[%s3379 + $0xd8] sm:$0x1f]
    %v6056 = vld [vmem:[%s3379 + $0xe0] sm:$0x1f]
    %v6057 = vld [vmem:[%s3379 + $0xf0] sm:$0x1f]
    %v6058 = vld [vmem:[%s3379 + $0xf8] sm:$0x1f]
    %v6059 = vld [vmem:[%s3379 + $0x100] sm:$0x1f]
    %v6060 = vld [vmem:[%s3379 + $0x108] sm:$0x1f]
    %v6061 = vld [vmem:[%s3379 + $0x110] sm:$0x1f]
    %v6062 = vmul.f32 %v5942, 0.4829629
    %v6063 = vmul.f32 %v5943, 0.4829629
    %v6064 = vmul.f32 %v5944, 0.4829629
    %v6065 = vmul.f32 %v5945, 0.4829629
    %v6066 = vmul.f32 %v5946, 0.4829629
    %v6067 = vmul.f32 %v5947, 0.4829629
    %v6068 = vmul.f32 %v5948, 0.4829629
    %v6069 = vmul.f32 %v5949, 0.4829629
    %v6070 = vmul.f32 %v5950, 0.4829629
    %v6071 = vmul.f32 %v5951, 0.4829629
    %v6072 = vmul.f32 %v5952, 0.4829629
    %v6073 = vmul.f32 %v5953, 0.4829629
    %v6074 = vmul.f32 %v5954, 0.4829629
    %v6075 = vmul.f32 %v5955, 0.4829629
    %v6076 = vmul.f32 %v5956, 0.4829629
    %v6077 = vmul.f32 %v5957, 0.4829629
    %v6078 = vmul.f32 %v5958, 0.4829629
    %v6079 = vmul.f32 %v5959, 0.4829629
    %v6080 = vmul.f32 %v5960, 0.4829629
    %v6081 = vmul.f32 %v5961, 0.4829629
    %v6082 = vmul.f32 %v5962, 0.4829629
    %v6083 = vmul.f32 %v5963, 0.4829629
    %v6084 = vmul.f32 %v5964, 0.4829629
    %v6085 = vmul.f32 %v5965, 0.4829629
    %v6086 = vmul.f32 %v5966, 0.4829629
    %v6087 = vmul.f32 %v5967, 0.4829629
    %v6088 = vmul.f32 %v5968, 0.4829629
    %v6089 = vmul.f32 %v5969, 0.4829629
    %v6090 = vmul.f32 %v5970, 0.4829629
    %v6091 = vmul.f32 %v5971, 0.4829629
    %v6092 = vmul.f32 %v5972, 0.8365163
    %v6093 = vmul.f32 %v5973, 0.8365163
    %v6094 = vmul.f32 %v5974, 0.8365163
    %v6095 = vmul.f32 %v5975, 0.8365163
    %v6096 = vmul.f32 %v5976, 0.8365163
    %v6097 = vmul.f32 %v5977, 0.8365163
    %v6098 = vmul.f32 %v5978, 0.8365163
    %v6099 = vmul.f32 %v5979, 0.8365163
    %v6100 = vmul.f32 %v5980, 0.8365163
    %v6101 = vmul.f32 %v5981, 0.8365163
    %v6102 = vmul.f32 %v5982, 0.8365163
    %v6103 = vmul.f32 %v5983, 0.8365163
    %v6104 = vmul.f32 %v5984, 0.8365163
    %v6105 = vmul.f32 %v5985, 0.8365163
    %v6106 = vmul.f32 %v5986, 0.8365163
    %v6107 = vmul.f32 %v5987, 0.8365163
    %v6108 = vmul.f32 %v5988, 0.8365163
    %v6109 = vmul.f32 %v5989, 0.8365163
    %v6110 = vmul.f32 %v5990, 0.8365163
    %v6111 = vmul.f32 %v5991, 0.8365163
    %v6112 = vmul.f32 %v5992, 0.8365163
    %v6113 = vmul.f32 %v5993, 0.8365163
    %v6114 = vmul.f32 %v5994, 0.8365163
    %v6115 = vmul.f32 %v5995, 0.8365163
    %v6116 = vmul.f32 %v5996, 0.8365163
    %v6117 = vmul.f32 %v5997, 0.8365163
    %v6118 = vmul.f32 %v5998, 0.8365163
    %v6119 = vmul.f32 %v5999, 0.8365163
    %v6120 = vmul.f32 %v6000, 0.8365163
    %v6121 = vmul.f32 %v6001, 0.8365163
    %v6122 = vadd.f32 %v6062, %v6092
    %v6123 = vadd.f32 %v6063, %v6093
    %v6124 = vadd.f32 %v6064, %v6094
    %v6125 = vadd.f32 %v6065, %v6095
    %v6126 = vadd.f32 %v6066, %v6096
    %v6127 = vadd.f32 %v6067, %v6097
    %v6128 = vadd.f32 %v6068, %v6098
    %v6129 = vadd.f32 %v6069, %v6099
    %v6130 = vadd.f32 %v6070, %v6100
    %v6131 = vadd.f32 %v6071, %v6101
    %v6132 = vadd.f32 %v6072, %v6102
    %v6133 = vadd.f32 %v6073, %v6103
    %v6134 = vadd.f32 %v6074, %v6104
    %v6135 = vadd.f32 %v6075, %v6105
    %v6136 = vadd.f32 %v6076, %v6106
    %v6137 = vadd.f32 %v6077, %v6107
    %v6138 = vadd.f32 %v6078, %v6108
    %v6139 = vadd.f32 %v6079, %v6109
    %v6140 = vadd.f32 %v6080, %v6110
    %v6141 = vadd.f32 %v6081, %v6111
    %v6142 = vadd.f32 %v6082, %v6112
    %v6143 = vadd.f32 %v6083, %v6113
    %v6144 = vadd.f32 %v6084, %v6114
    %v6145 = vadd.f32 %v6085, %v6115
    %v6146 = vadd.f32 %v6086, %v6116
    %v6147 = vadd.f32 %v6087, %v6117
    %v6148 = vadd.f32 %v6088, %v6118
    %v6149 = vadd.f32 %v6089, %v6119
    %v6150 = vadd.f32 %v6090, %v6120
    %v6151 = vadd.f32 %v6091, %v6121
    %v6152 = vmul.f32 %v6002, 0.22414386
    %v6153 = vmul.f32 %v6003, 0.22414386
    %v6154 = vmul.f32 %v6004, 0.22414386
    %v6155 = vmul.f32 %v6005, 0.22414386
    %v6156 = vmul.f32 %v6006, 0.22414386
    %v6157 = vmul.f32 %v6007, 0.22414386
    %v6158 = vmul.f32 %v6008, 0.22414386
    %v6159 = vmul.f32 %v6009, 0.22414386
    %v6160 = vmul.f32 %v6010, 0.22414386
    %v6161 = vmul.f32 %v6011, 0.22414386
    %v6162 = vmul.f32 %v6012, 0.22414386
    %v6163 = vmul.f32 %v6013, 0.22414386
    %v6164 = vmul.f32 %v6014, 0.22414386
    %v6165 = vmul.f32 %v6015, 0.22414386
    %v6166 = vmul.f32 %v6016, 0.22414386
    %v6167 = vmul.f32 %v6017, 0.22414386
    %v6168 = vmul.f32 %v6018, 0.22414386
    %v6169 = vmul.f32 %v6019, 0.22414386
    %v6170 = vmul.f32 %v6020, 0.22414386
    %v6171 = vmul.f32 %v6021, 0.22414386
    %v6172 = vmul.f32 %v6022, 0.22414386
    %v6173 = vmul.f32 %v6023, 0.22414386
    %v6174 = vmul.f32 %v6024, 0.22414386
    %v6175 = vmul.f32 %v6025, 0.22414386
    %v6176 = vmul.f32 %v6026, 0.22414386
    %v6177 = vmul.f32 %v6027, 0.22414386
    %v6178 = vmul.f32 %v6028, 0.22414386
    %v6179 = vmul.f32 %v6029, 0.22414386
    %v6180 = vmul.f32 %v6030, 0.22414386
    %v6181 = vmul.f32 %v6031, 0.22414386
    %v6182 = vadd.f32 %v6122, %v6152
    %v6183 = vadd.f32 %v6123, %v6153
    %v6184 = vadd.f32 %v6124, %v6154
    %v6185 = vadd.f32 %v6125, %v6155
    %v6186 = vadd.f32 %v6126, %v6156
    %v6187 = vadd.f32 %v6127, %v6157
    %v6188 = vadd.f32 %v6128, %v6158
    %v6189 = vadd.f32 %v6129, %v6159
    %v6190 = vadd.f32 %v6130, %v6160
    %v6191 = vadd.f32 %v6131, %v6161
    %v6192 = vadd.f32 %v6132, %v6162
    %v6193 = vadd.f32 %v6133, %v6163
    %v6194 = vadd.f32 %v6134, %v6164
    %v6195 = vadd.f32 %v6135, %v6165
    %v6196 = vadd.f32 %v6136, %v6166
    %v6197 = vadd.f32 %v6137, %v6167
    %v6198 = vadd.f32 %v6138, %v6168
    %v6199 = vadd.f32 %v6139, %v6169
    %v6200 = vadd.f32 %v6140, %v6170
    %v6201 = vadd.f32 %v6141, %v6171
    %v6202 = vadd.f32 %v6142, %v6172
    %v6203 = vadd.f32 %v6143, %v6173
    %v6204 = vadd.f32 %v6144, %v6174
    %v6205 = vadd.f32 %v6145, %v6175
    %v6206 = vadd.f32 %v6146, %v6176
    %v6207 = vadd.f32 %v6147, %v6177
    %v6208 = vadd.f32 %v6148, %v6178
    %v6209 = vadd.f32 %v6149, %v6179
    %v6210 = vadd.f32 %v6150, %v6180
    %v6211 = vadd.f32 %v6151, %v6181
    %v6212 = vmul.f32 %v6032, -0.12940952
    %v6213 = vmul.f32 %v6033, -0.12940952
    %v6214 = vmul.f32 %v6034, -0.12940952
    %v6215 = vmul.f32 %v6035, -0.12940952
    %v6216 = vmul.f32 %v6036, -0.12940952
    %v6217 = vmul.f32 %v6037, -0.12940952
    %v6218 = vmul.f32 %v6038, -0.12940952
    %v6219 = vmul.f32 %v6039, -0.12940952
    %v6220 = vmul.f32 %v6040, -0.12940952
    %v6221 = vmul.f32 %v6041, -0.12940952
    %v6222 = vmul.f32 %v6042, -0.12940952
    %v6223 = vmul.f32 %v6043, -0.12940952
    %v6224 = vmul.f32 %v6044, -0.12940952
    %v6225 = vmul.f32 %v6045, -0.12940952
    %v6226 = vmul.f32 %v6046, -0.12940952
    %v6227 = vmul.f32 %v6047, -0.12940952
    %v6228 = vmul.f32 %v6048, -0.12940952
    %v6229 = vmul.f32 %v6049, -0.12940952
    %v6230 = vmul.f32 %v6050, -0.12940952
    %v6231 = vmul.f32 %v6051, -0.12940952
    %v6232 = vmul.f32 %v6052, -0.12940952
    %v6233 = vmul.f32 %v6053, -0.12940952
    %v6234 = vmul.f32 %v6054, -0.12940952
    %v6235 = vmul.f32 %v6055, -0.12940952
    %v6236 = vmul.f32 %v6056, -0.12940952
    %v6237 = vmul.f32 %v6057, -0.12940952
    %v6238 = vmul.f32 %v6058, -0.12940952
    %v6239 = vmul.f32 %v6059, -0.12940952
    %v6240 = vmul.f32 %v6060, -0.12940952
    %v6241 = vmul.f32 %v6061, -0.12940952
    %v6242 = vadd.f32 %v6182, %v6212
    %v6243 = vadd.f32 %v6183, %v6213
    %v6244 = vadd.f32 %v6184, %v6214
    %v6245 = vadd.f32 %v6185, %v6215
    %v6246 = vadd.f32 %v6186, %v6216
    %v6247 = vadd.f32 %v6187, %v6217
    %v6248 = vadd.f32 %v6188, %v6218
    %v6249 = vadd.f32 %v6189, %v6219
    %v6250 = vadd.f32 %v6190, %v6220
    %v6251 = vadd.f32 %v6191, %v6221
    %v6252 = vadd.f32 %v6192, %v6222
    %v6253 = vadd.f32 %v6193, %v6223
    %v6254 = vadd.f32 %v6194, %v6224
    %v6255 = vadd.f32 %v6195, %v6225
    %v6256 = vadd.f32 %v6196, %v6226
    %v6257 = vadd.f32 %v6197, %v6227
    %v6258 = vadd.f32 %v6198, %v6228
    %v6259 = vadd.f32 %v6199, %v6229
    %v6260 = vadd.f32 %v6200, %v6230
    %v6261 = vadd.f32 %v6201, %v6231
    %v6262 = vadd.f32 %v6202, %v6232
    %v6263 = vadd.f32 %v6203, %v6233
    %v6264 = vadd.f32 %v6204, %v6234
    %v6265 = vadd.f32 %v6205, %v6235
    %v6266 = vadd.f32 %v6206, %v6236
    %v6267 = vadd.f32 %v6207, %v6237
    %v6268 = vadd.f32 %v6208, %v6238
    %v6269 = vadd.f32 %v6209, %v6239
    %v6270 = vadd.f32 %v6210, %v6240
    %v6271 = vadd.f32 %v6211, %v6241
    %s6272 = scalar_lea.vmem [#allocation3], 1200
    %6273 = vst [vmem:[%s6272] sm:$0x1f] %v6242
    %6274 = vst [vmem:[%s6272 + $0x8] sm:$0x1f] %v6243
    %6275 = vst [vmem:[%s6272 + $0x10] sm:$0x1f] %v6244
    %6276 = vst [vmem:[%s6272 + $0x18] sm:$0x1f] %v6245
    %6277 = vst [vmem:[%s6272 + $0x20] sm:$0x1f] %v6246
    %6278 = vst [vmem:[%s6272 + $0x28] sm:$0x1f] %v6247
    %6279 = vst [vmem:[%s6272 + $0x30] sm:$0x1f] %v6248
    %6280 = vst [vmem:[%s6272 + $0x38] sm:$0x1f] %v6249
    %6281 = vst [vmem:[%s6272 + $0x40] sm:$0x1f] %v6250
    %6282 = vst [vmem:[%s6272 + $0x48] sm:$0x1f] %v6251
    %6283 = vst [vmem:[%s6272 + $0x50] sm:$0x1f] %v6252
    %6284 = vst [vmem:[%s6272 + $0x58] sm:$0x1f] %v6253
    %6285 = vst [vmem:[%s6272 + $0x60] sm:$0x1f] %v6254
    %6286 = vst [vmem:[%s6272 + $0x68] sm:$0x1f] %v6255
    %6287 = vst [vmem:[%s6272 + $0x70] sm:$0x1f] %v6256
    %6288 = vst [vmem:[%s6272 + $0x78] sm:$0x1f] %v6257
    %6289 = vst [vmem:[%s6272 + $0x80] sm:$0x1f] %v6258
    %6290 = vst [vmem:[%s6272 + $0x88] sm:$0x1f] %v6259
    %6291 = vst [vmem:[%s6272 + $0x90] sm:$0x1f] %v6260
    %6292 = vst [vmem:[%s6272 + $0x98] sm:$0x1f] %v6261
    %6293 = vst [vmem:[%s6272 + $0xa0] sm:$0x1f] %v6262
    %6294 = vst [vmem:[%s6272 + $0xa8] sm:$0x1f] %v6263
    %6295 = vst [vmem:[%s6272 + $0xb0] sm:$0x1f] %v6264
    %6296 = vst [vmem:[%s6272 + $0xb8] sm:$0x1f] %v6265
    %6297 = vst [vmem:[%s6272 + $0xc0] sm:$0x1f] %v6266
    %6298 = vst [vmem:[%s6272 + $0xc8] sm:$0x1f] %v6267
    %6299 = vst [vmem:[%s6272 + $0xd0] sm:$0x1f] %v6268
    %6300 = vst [vmem:[%s6272 + $0xd8] sm:$0x1f] %v6269
    %6301 = vst [vmem:[%s6272 + $0xe0] sm:$0x1f] %v6270
    %6302 = vst [vmem:[%s6272 + $0xe8] sm:$0x1f] %v6271
    %v6303 = vmul.f32 %v5942, -0.12940952
    %v6304 = vmul.f32 %v5943, -0.12940952
    %v6305 = vmul.f32 %v5944, -0.12940952
    %v6306 = vmul.f32 %v5945, -0.12940952
    %v6307 = vmul.f32 %v5946, -0.12940952
    %v6308 = vmul.f32 %v5947, -0.12940952
    %v6309 = vmul.f32 %v5948, -0.12940952
    %v6310 = vmul.f32 %v5949, -0.12940952
    %v6311 = vmul.f32 %v5950, -0.12940952
    %v6312 = vmul.f32 %v5951, -0.12940952
    %v6313 = vmul.f32 %v5952, -0.12940952
    %v6314 = vmul.f32 %v5953, -0.12940952
    %v6315 = vmul.f32 %v5954, -0.12940952
    %v6316 = vmul.f32 %v5955, -0.12940952
    %v6317 = vmul.f32 %v5956, -0.12940952
    %v6318 = vmul.f32 %v5957, -0.12940952
    %v6319 = vmul.f32 %v5958, -0.12940952
    %v6320 = vmul.f32 %v5959, -0.12940952
    %v6321 = vmul.f32 %v5960, -0.12940952
    %v6322 = vmul.f32 %v5961, -0.12940952
    %v6323 = vmul.f32 %v5962, -0.12940952
    %v6324 = vmul.f32 %v5963, -0.12940952
    %v6325 = vmul.f32 %v5964, -0.12940952
    %v6326 = vmul.f32 %v5965, -0.12940952
    %v6327 = vmul.f32 %v5966, -0.12940952
    %v6328 = vmul.f32 %v5967, -0.12940952
    %v6329 = vmul.f32 %v5968, -0.12940952
    %v6330 = vmul.f32 %v5969, -0.12940952
    %v6331 = vmul.f32 %v5970, -0.12940952
    %v6332 = vmul.f32 %v5971, -0.12940952
    %v6333 = vmul.f32 %v5972, -0.22414386
    %v6334 = vmul.f32 %v5973, -0.22414386
    %v6335 = vmul.f32 %v5974, -0.22414386
    %v6336 = vmul.f32 %v5975, -0.22414386
    %v6337 = vmul.f32 %v5976, -0.22414386
    %v6338 = vmul.f32 %v5977, -0.22414386
    %v6339 = vmul.f32 %v5978, -0.22414386
    %v6340 = vmul.f32 %v5979, -0.22414386
    %v6341 = vmul.f32 %v5980, -0.22414386
    %v6342 = vmul.f32 %v5981, -0.22414386
    %v6343 = vmul.f32 %v5982, -0.22414386
    %v6344 = vmul.f32 %v5983, -0.22414386
    %v6345 = vmul.f32 %v5984, -0.22414386
    %v6346 = vmul.f32 %v5985, -0.22414386
    %v6347 = vmul.f32 %v5986, -0.22414386
    %v6348 = vmul.f32 %v5987, -0.22414386
    %v6349 = vmul.f32 %v5988, -0.22414386
    %v6350 = vmul.f32 %v5989, -0.22414386
    %v6351 = vmul.f32 %v5990, -0.22414386
    %v6352 = vmul.f32 %v5991, -0.22414386
    %v6353 = vmul.f32 %v5992, -0.22414386
    %v6354 = vmul.f32 %v5993, -0.22414386
    %v6355 = vmul.f32 %v5994, -0.22414386
    %v6356 = vmul.f32 %v5995, -0.22414386
    %v6357 = vmul.f32 %v5996, -0.22414386
    %v6358 = vmul.f32 %v5997, -0.22414386
    %v6359 = vmul.f32 %v5998, -0.22414386
    %v6360 = vmul.f32 %v5999, -0.22414386
    %v6361 = vmul.f32 %v6000, -0.22414386
    %v6362 = vmul.f32 %v6001, -0.22414386
    %v6363 = vadd.f32 %v6303, %v6333
    %v6364 = vadd.f32 %v6304, %v6334
    %v6365 = vadd.f32 %v6305, %v6335
    %v6366 = vadd.f32 %v6306, %v6336
    %v6367 = vadd.f32 %v6307, %v6337
    %v6368 = vadd.f32 %v6308, %v6338
    %v6369 = vadd.f32 %v6309, %v6339
    %v6370 = vadd.f32 %v6310, %v6340
    %v6371 = vadd.f32 %v6311, %v6341
    %v6372 = vadd.f32 %v6312, %v6342
    %v6373 = vadd.f32 %v6313, %v6343
    %v6374 = vadd.f32 %v6314, %v6344
    %v6375 = vadd.f32 %v6315, %v6345
    %v6376 = vadd.f32 %v6316, %v6346
    %v6377 = vadd.f32 %v6317, %v6347
    %v6378 = vadd.f32 %v6318, %v6348
    %v6379 = vadd.f32 %v6319, %v6349
    %v6380 = vadd.f32 %v6320, %v6350
    %v6381 = vadd.f32 %v6321, %v6351
    %v6382 = vadd.f32 %v6322, %v6352
    %v6383 = vadd.f32 %v6323, %v6353
    %v6384 = vadd.f32 %v6324, %v6354
    %v6385 = vadd.f32 %v6325, %v6355
    %v6386 = vadd.f32 %v6326, %v6356
    %v6387 = vadd.f32 %v6327, %v6357
    %v6388 = vadd.f32 %v6328, %v6358
    %v6389 = vadd.f32 %v6329, %v6359
    %v6390 = vadd.f32 %v6330, %v6360
    %v6391 = vadd.f32 %v6331, %v6361
    %v6392 = vadd.f32 %v6332, %v6362
    %v6393 = vmul.f32 %v6002, 0.8365163
    %v6394 = vmul.f32 %v6003, 0.8365163
    %v6395 = vmul.f32 %v6004, 0.8365163
    %v6396 = vmul.f32 %v6005, 0.8365163
    %v6397 = vmul.f32 %v6006, 0.8365163
    %v6398 = vmul.f32 %v6007, 0.8365163
    %v6399 = vmul.f32 %v6008, 0.8365163
    %v6400 = vmul.f32 %v6009, 0.8365163
    %v6401 = vmul.f32 %v6010, 0.8365163
    %v6402 = vmul.f32 %v6011, 0.8365163
    %v6403 = vmul.f32 %v6012, 0.8365163
    %v6404 = vmul.f32 %v6013, 0.8365163
    %v6405 = vmul.f32 %v6014, 0.8365163
    %v6406 = vmul.f32 %v6015, 0.8365163
    %v6407 = vmul.f32 %v6016, 0.8365163
    %v6408 = vmul.f32 %v6017, 0.8365163
    %v6409 = vmul.f32 %v6018, 0.8365163
    %v6410 = vmul.f32 %v6019, 0.8365163
    %v6411 = vmul.f32 %v6020, 0.8365163
    %v6412 = vmul.f32 %v6021, 0.8365163
    %v6413 = vmul.f32 %v6022, 0.8365163
    %v6414 = vmul.f32 %v6023, 0.8365163
    %v6415 = vmul.f32 %v6024, 0.8365163
    %v6416 = vmul.f32 %v6025, 0.8365163
    %v6417 = vmul.f32 %v6026, 0.8365163
    %v6418 = vmul.f32 %v6027, 0.8365163
    %v6419 = vmul.f32 %v6028, 0.8365163
    %v6420 = vmul.f32 %v6029, 0.8365163
    %v6421 = vmul.f32 %v6030, 0.8365163
    %v6422 = vmul.f32 %v6031, 0.8365163
    %v6423 = vadd.f32 %v6363, %v6393
    %v6424 = vadd.f32 %v6364, %v6394
    %v6425 = vadd.f32 %v6365, %v6395
    %v6426 = vadd.f32 %v6366, %v6396
    %v6427 = vadd.f32 %v6367, %v6397
    %v6428 = vadd.f32 %v6368, %v6398
    %v6429 = vadd.f32 %v6369, %v6399
    %v6430 = vadd.f32 %v6370, %v6400
    %v6431 = vadd.f32 %v6371, %v6401
    %v6432 = vadd.f32 %v6372, %v6402
    %v6433 = vadd.f32 %v6373, %v6403
    %v6434 = vadd.f32 %v6374, %v6404
    %v6435 = vadd.f32 %v6375, %v6405
    %v6436 = vadd.f32 %v6376, %v6406
    %v6437 = vadd.f32 %v6377, %v6407
    %v6438 = vadd.f32 %v6378, %v6408
    %v6439 = vadd.f32 %v6379, %v6409
    %v6440 = vadd.f32 %v6380, %v6410
    %v6441 = vadd.f32 %v6381, %v6411
    %v6442 = vadd.f32 %v6382, %v6412
    %v6443 = vadd.f32 %v6383, %v6413
    %v6444 = vadd.f32 %v6384, %v6414
    %v6445 = vadd.f32 %v6385, %v6415
    %v6446 = vadd.f32 %v6386, %v6416
    %v6447 = vadd.f32 %v6387, %v6417
    %v6448 = vadd.f32 %v6388, %v6418
    %v6449 = vadd.f32 %v6389, %v6419
    %v6450 = vadd.f32 %v6390, %v6420
    %v6451 = vadd.f32 %v6391, %v6421
    %v6452 = vadd.f32 %v6392, %v6422
    %v6453 = vmul.f32 %v6032, -0.4829629
    %v6454 = vmul.f32 %v6033, -0.4829629
    %v6455 = vmul.f32 %v6034, -0.4829629
    %v6456 = vmul.f32 %v6035, -0.4829629
    %v6457 = vmul.f32 %v6036, -0.4829629
    %v6458 = vmul.f32 %v6037, -0.4829629
    %v6459 = vmul.f32 %v6038, -0.4829629
    %v6460 = vmul.f32 %v6039, -0.4829629
    %v6461 = vmul.f32 %v6040, -0.4829629
    %v6462 = vmul.f32 %v6041, -0.4829629
    %v6463 = vmul.f32 %v6042, -0.4829629
    %v6464 = vmul.f32 %v6043, -0.4829629
    %v6465 = vmul.f32 %v6044, -0.4829629
    %v6466 = vmul.f32 %v6045, -0.4829629
    %v6467 = vmul.f32 %v6046, -0.4829629
    %v6468 = vmul.f32 %v6047, -0.4829629
    %v6469 = vmul.f32 %v6048, -0.4829629
    %v6470 = vmul.f32 %v6049, -0.4829629
    %v6471 = vmul.f32 %v6050, -0.4829629
    %v6472 = vmul.f32 %v6051, -0.4829629
    %v6473 = vmul.f32 %v6052, -0.4829629
    %v6474 = vmul.f32 %v6053, -0.4829629
    %v6475 = vmul.f32 %v6054, -0.4829629
    %v6476 = vmul.f32 %v6055, -0.4829629
    %v6477 = vmul.f32 %v6056, -0.4829629
    %v6478 = vmul.f32 %v6057, -0.4829629
    %v6479 = vmul.f32 %v6058, -0.4829629
    %v6480 = vmul.f32 %v6059, -0.4829629
    %v6481 = vmul.f32 %v6060, -0.4829629
    %v6482 = vmul.f32 %v6061, -0.4829629
    %v6483 = vadd.f32 %v6423, %v6453
    %v6484 = vadd.f32 %v6424, %v6454
    %v6485 = vadd.f32 %v6425, %v6455
    %v6486 = vadd.f32 %v6426, %v6456
    %v6487 = vadd.f32 %v6427, %v6457
    %v6488 = vadd.f32 %v6428, %v6458
    %v6489 = vadd.f32 %v6429, %v6459
    %v6490 = vadd.f32 %v6430, %v6460
    %v6491 = vadd.f32 %v6431, %v6461
    %v6492 = vadd.f32 %v6432, %v6462
    %v6493 = vadd.f32 %v6433, %v6463
    %v6494 = vadd.f32 %v6434, %v6464
    %v6495 = vadd.f32 %v6435, %v6465
    %v6496 = vadd.f32 %v6436, %v6466
    %v6497 = vadd.f32 %v6437, %v6467
    %v6498 = vadd.f32 %v6438, %v6468
    %v6499 = vadd.f32 %v6439, %v6469
    %v6500 = vadd.f32 %v6440, %v6470
    %v6501 = vadd.f32 %v6441, %v6471
    %v6502 = vadd.f32 %v6442, %v6472
    %v6503 = vadd.f32 %v6443, %v6473
    %v6504 = vadd.f32 %v6444, %v6474
    %v6505 = vadd.f32 %v6445, %v6475
    %v6506 = vadd.f32 %v6446, %v6476
    %v6507 = vadd.f32 %v6447, %v6477
    %v6508 = vadd.f32 %v6448, %v6478
    %v6509 = vadd.f32 %v6449, %v6479
    %v6510 = vadd.f32 %v6450, %v6480
    %v6511 = vadd.f32 %v6451, %v6481
    %v6512 = vadd.f32 %v6452, %v6482
    %s6513 = scalar_lea.vmem [#allocation3], 1680
    %6514 = vst [vmem:[%s6513] sm:$0x1f] %v6483
    %6515 = vst [vmem:[%s6513 + $0x8] sm:$0x1f] %v6484
    %6516 = vst [vmem:[%s6513 + $0x10] sm:$0x1f] %v6485
    %6517 = vst [vmem:[%s6513 + $0x18] sm:$0x1f] %v6486
    %6518 = vst [vmem:[%s6513 + $0x20] sm:$0x1f] %v6487
    %6519 = vst [vmem:[%s6513 + $0x28] sm:$0x1f] %v6488
    %6520 = vst [vmem:[%s6513 + $0x30] sm:$0x1f] %v6489
    %6521 = vst [vmem:[%s6513 + $0x38] sm:$0x1f] %v6490
    %6522 = vst [vmem:[%s6513 + $0x40] sm:$0x1f] %v6491
    %6523 = vst [vmem:[%s6513 + $0x48] sm:$0x1f] %v6492
    %6524 = vst [vmem:[%s6513 + $0x50] sm:$0x1f] %v6493
    %6525 = vst [vmem:[%s6513 + $0x58] sm:$0x1f] %v6494
    %6526 = vst [vmem:[%s6513 + $0x60] sm:$0x1f] %v6495
    %6527 = vst [vmem:[%s6513 + $0x68] sm:$0x1f] %v6496
    %6528 = vst [vmem:[%s6513 + $0x70] sm:$0x1f] %v6497
    %6529 = vst [vmem:[%s6513 + $0x78] sm:$0x1f] %v6498
    %6530 = vst [vmem:[%s6513 + $0x80] sm:$0x1f] %v6499
    %6531 = vst [vmem:[%s6513 + $0x88] sm:$0x1f] %v6500
    %6532 = vst [vmem:[%s6513 + $0x90] sm:$0x1f] %v6501
    %6533 = vst [vmem:[%s6513 + $0x98] sm:$0x1f] %v6502
    %6534 = vst [vmem:[%s6513 + $0xa0] sm:$0x1f] %v6503
    %6535 = vst [vmem:[%s6513 + $0xa8] sm:$0x1f] %v6504
    %6536 = vst [vmem:[%s6513 + $0xb0] sm:$0x1f] %v6505
    %6537 = vst [vmem:[%s6513 + $0xb8] sm:$0x1f] %v6506
    %6538 = vst [vmem:[%s6513 + $0xc0] sm:$0x1f] %v6507
    %6539 = vst [vmem:[%s6513 + $0xc8] sm:$0x1f] %v6508
    %6540 = vst [vmem:[%s6513 + $0xd0] sm:$0x1f] %v6509
    %6541 = vst [vmem:[%s6513 + $0xd8] sm:$0x1f] %v6510
    %6542 = vst [vmem:[%s6513 + $0xe0] sm:$0x1f] %v6511
    %6543 = vst [vmem:[%s6513 + $0xe8] sm:$0x1f] %v6512
    %v6544 = vld [vmem:[#allocation3] sm:$0x1f]
    %v6545 = vld [vmem:[#allocation3 + $0x8] sm:$0x1f]
    %v6546 = vld [vmem:[#allocation3 + $0x10] sm:$0x1f]
    %v6547 = vld [vmem:[#allocation3 + $0x18] sm:$0x1f]
    %v6548 = vld [vmem:[#allocation3 + $0x20] sm:$0x1f]
    %v6549 = vld [vmem:[#allocation3 + $0x28] sm:$0x1f]
    %v6550 = vld [vmem:[#allocation3 + $0x30] sm:$0x1f]
    %v6551 = vld [vmem:[#allocation3 + $0x38] sm:$0x1f]
    %v6552 = vld [vmem:[#allocation3 + $0x40] sm:$0x1f]
    %v6553 = vld [vmem:[#allocation3 + $0x48] sm:$0x1f]
    %v6554 = vld [vmem:[#allocation3 + $0x50] sm:$0x1f]
    %v6555 = vld [vmem:[#allocation3 + $0x58] sm:$0x1f]
    %v6556 = vld [vmem:[#allocation3 + $0x60] sm:$0x1f]
    %v6557 = vld [vmem:[#allocation3 + $0x68] sm:$0x1f]
    %v6558 = vld [vmem:[#allocation3 + $0x70] sm:$0x1f]
    %v6559 = vld [vmem:[#allocation3 + $0x78] sm:$0x1f]
    %v6560 = vld [vmem:[#allocation3 + $0x80] sm:$0x1f]
    %v6561 = vld [vmem:[#allocation3 + $0x88] sm:$0x1f]
    %v6562 = vld [vmem:[#allocation3 + $0x90] sm:$0x1f]
    %v6563 = vld [vmem:[#allocation3 + $0x98] sm:$0x1f]
    %v6564 = vld [vmem:[#allocation3 + $0xa0] sm:$0x1f]
    %v6565 = vld [vmem:[#allocation3 + $0xa8] sm:$0x1f]
    %v6566 = vld [vmem:[#allocation3 + $0xb0] sm:$0x1f]
    %v6567 = vld [vmem:[#allocation3 + $0xb8] sm:$0x1f]
    %v6568 = vld [vmem:[#allocation3 + $0xc0] sm:$0x1f]
    %v6569 = vld [vmem:[%s5670] sm:$0x1f]
    %v6570 = vld [vmem:[%s5670 + $0x8] sm:$0x1f]
    %v6571 = vld [vmem:[%s5670 + $0x10] sm:$0x1f]
    %v6572 = vld [vmem:[%s5670 + $0x18] sm:$0x1f]
    %v6573 = vld [vmem:[%s5670 + $0x20] sm:$0x1f]
    %v6574 = vld [vmem:[%s5670 + $0x28] sm:$0x1f]
    %v6575 = vld [vmem:[%s5670 + $0x30] sm:$0x1f]
    %v6576 = vld [vmem:[%s5670 + $0x38] sm:$0x1f]
    %v6577 = vld [vmem:[%s5670 + $0x40] sm:$0x1f]
    %v6578 = vld [vmem:[%s5670 + $0x48] sm:$0x1f]
    %v6579 = vld [vmem:[%s5670 + $0x50] sm:$0x1f]
    %v6580 = vld [vmem:[%s5670 + $0x58] sm:$0x1f]
    %v6581 = vld [vmem:[%s5670 + $0x60] sm:$0x1f]
    %v6582 = vld [vmem:[%s5670 + $0x68] sm:$0x1f]
    %v6583 = vld [vmem:[%s5670 + $0x70] sm:$0x1f]
    %v6584 = vld [vmem:[%s5670 + $0x78] sm:$0x1f]
    %v6585 = vld [vmem:[%s5670 + $0x80] sm:$0x1f]
    %v6586 = vld [vmem:[%s5670 + $0x88] sm:$0x1f]
    %v6587 = vld [vmem:[%s5670 + $0x90] sm:$0x1f]
    %v6588 = vld [vmem:[%s5670 + $0x98] sm:$0x1f]
    %v6589 = vld [vmem:[%s5670 + $0xa0] sm:$0x1f]
    %v6590 = vld [vmem:[%s5670 + $0xa8] sm:$0x1f]
    %v6591 = vld [vmem:[%s5670 + $0xb0] sm:$0x1f]
    %v6592 = vld [vmem:[%s5670 + $0xb8] sm:$0x1f]
    %v6593 = vld [vmem:[%s5670 + $0xc0] sm:$0x1f]
    %s6594 = scalar_lea.vmem [#allocation3], 40
    %v6595 = vld [vmem:[%s6594] sm:$0x1f]
    %v6596 = vld [vmem:[%s6594 + $0x8] sm:$0x1f]
    %v6597 = vld [vmem:[%s6594 + $0x10] sm:$0x1f]
    %v6598 = vld [vmem:[%s6594 + $0x18] sm:$0x1f]
    %v6599 = vld [vmem:[%s6594 + $0x20] sm:$0x1f]
    %v6600 = vld [vmem:[%s6594 + $0x28] sm:$0x1f]
    %v6601 = vld [vmem:[%s6594 + $0x30] sm:$0x1f]
    %v6602 = vld [vmem:[%s6594 + $0x38] sm:$0x1f]
    %v6603 = vld [vmem:[%s6594 + $0x40] sm:$0x1f]
    %v6604 = vld [vmem:[%s6594 + $0x48] sm:$0x1f]
    %v6605 = vld [vmem:[%s6594 + $0x50] sm:$0x1f]
    %v6606 = vld [vmem:[%s6594 + $0x58] sm:$0x1f]
    %v6607 = vld [vmem:[%s6594 + $0x60] sm:$0x1f]
    %v6608 = vld [vmem:[%s6594 + $0x68] sm:$0x1f]
    %v6609 = vld [vmem:[%s6594 + $0x70] sm:$0x1f]
    %v6610 = vld [vmem:[%s6594 + $0x78] sm:$0x1f]
    %v6611 = vld [vmem:[%s6594 + $0x80] sm:$0x1f]
    %v6612 = vld [vmem:[%s6594 + $0x88] sm:$0x1f]
    %v6613 = vld [vmem:[%s6594 + $0x90] sm:$0x1f]
    %v6614 = vld [vmem:[%s6594 + $0x98] sm:$0x1f]
    %v6615 = vld [vmem:[%s6594 + $0xa0] sm:$0x1f]
    %v6616 = vld [vmem:[%s6594 + $0xa8] sm:$0x1f]
    %v6617 = vld [vmem:[%s6594 + $0xb0] sm:$0x1f]
    %v6618 = vld [vmem:[%s6594 + $0xb8] sm:$0x1f]
    %v6619 = vld [vmem:[%s6594 + $0xc0] sm:$0x1f]
    %s6620 = scalar_lea.vmem [#allocation3], 1000
    %v6621 = vld [vmem:[%s6620] sm:$0x1f]
    %v6622 = vld [vmem:[%s6620 + $0x8] sm:$0x1f]
    %v6623 = vld [vmem:[%s6620 + $0x10] sm:$0x1f]
    %v6624 = vld [vmem:[%s6620 + $0x18] sm:$0x1f]
    %v6625 = vld [vmem:[%s6620 + $0x20] sm:$0x1f]
    %v6626 = vld [vmem:[%s6620 + $0x28] sm:$0x1f]
    %v6627 = vld [vmem:[%s6620 + $0x30] sm:$0x1f]
    %v6628 = vld [vmem:[%s6620 + $0x38] sm:$0x1f]
    %v6629 = vld [vmem:[%s6620 + $0x40] sm:$0x1f]
    %v6630 = vld [vmem:[%s6620 + $0x48] sm:$0x1f]
    %v6631 = vld [vmem:[%s6620 + $0x50] sm:$0x1f]
    %v6632 = vld [vmem:[%s6620 + $0x58] sm:$0x1f]
    %v6633 = vld [vmem:[%s6620 + $0x60] sm:$0x1f]
    %v6634 = vld [vmem:[%s6620 + $0x68] sm:$0x1f]
    %v6635 = vld [vmem:[%s6620 + $0x70] sm:$0x1f]
    %v6636 = vld [vmem:[%s6620 + $0x78] sm:$0x1f]
    %v6637 = vld [vmem:[%s6620 + $0x80] sm:$0x1f]
    %v6638 = vld [vmem:[%s6620 + $0x88] sm:$0x1f]
    %v6639 = vld [vmem:[%s6620 + $0x90] sm:$0x1f]
    %v6640 = vld [vmem:[%s6620 + $0x98] sm:$0x1f]
    %v6641 = vld [vmem:[%s6620 + $0xa0] sm:$0x1f]
    %v6642 = vld [vmem:[%s6620 + $0xa8] sm:$0x1f]
    %v6643 = vld [vmem:[%s6620 + $0xb0] sm:$0x1f]
    %v6644 = vld [vmem:[%s6620 + $0xb8] sm:$0x1f]
    %v6645 = vld [vmem:[%s6620 + $0xc0] sm:$0x1f]
    %v6646 = vmul.f32 %v6544, 0.4829629
    %v6647 = vmul.f32 %v6545, 0.4829629
    %v6648 = vmul.f32 %v6546, 0.4829629
    %v6649 = vmul.f32 %v6547, 0.4829629
    %v6650 = vmul.f32 %v6548, 0.4829629
    %v6651 = vmul.f32 %v6549, 0.4829629
    %v6652 = vmul.f32 %v6550, 0.4829629
    %v6653 = vmul.f32 %v6551, 0.4829629
    %v6654 = vmul.f32 %v6552, 0.4829629
    %v6655 = vmul.f32 %v6553, 0.4829629
    %v6656 = vmul.f32 %v6554, 0.4829629
    %v6657 = vmul.f32 %v6555, 0.4829629
    %v6658 = vmul.f32 %v6556, 0.4829629
    %v6659 = vmul.f32 %v6557, 0.4829629
    %v6660 = vmul.f32 %v6558, 0.4829629
    %v6661 = vmul.f32 %v6559, 0.4829629
    %v6662 = vmul.f32 %v6560, 0.4829629
    %v6663 = vmul.f32 %v6561, 0.4829629
    %v6664 = vmul.f32 %v6562, 0.4829629
    %v6665 = vmul.f32 %v6563, 0.4829629
    %v6666 = vmul.f32 %v6564, 0.4829629
    %v6667 = vmul.f32 %v6565, 0.4829629
    %v6668 = vmul.f32 %v6566, 0.4829629
    %v6669 = vmul.f32 %v6567, 0.4829629
    %v6670 = vmul.f32 %v6568, 0.4829629
    %v6671 = vmul.f32 %v6569, 0.8365163
    %v6672 = vmul.f32 %v6570, 0.8365163
    %v6673 = vmul.f32 %v6571, 0.8365163
    %v6674 = vmul.f32 %v6572, 0.8365163
    %v6675 = vmul.f32 %v6573, 0.8365163
    %v6676 = vmul.f32 %v6574, 0.8365163
    %v6677 = vmul.f32 %v6575, 0.8365163
    %v6678 = vmul.f32 %v6576, 0.8365163
    %v6679 = vmul.f32 %v6577, 0.8365163
    %v6680 = vmul.f32 %v6578, 0.8365163
    %v6681 = vmul.f32 %v6579, 0.8365163
    %v6682 = vmul.f32 %v6580, 0.8365163
    %v6683 = vmul.f32 %v6581, 0.8365163
    %v6684 = vmul.f32 %v6582, 0.8365163
    %v6685 = vmul.f32 %v6583, 0.8365163
    %v6686 = vmul.f32 %v6584, 0.8365163
    %v6687 = vmul.f32 %v6585, 0.8365163
    %v6688 = vmul.f32 %v6586, 0.8365163
    %v6689 = vmul.f32 %v6587, 0.8365163
    %v6690 = vmul.f32 %v6588, 0.8365163
    %v6691 = vmul.f32 %v6589, 0.8365163
    %v6692 = vmul.f32 %v6590, 0.8365163
    %v6693 = vmul.f32 %v6591, 0.8365163
    %v6694 = vmul.f32 %v6592, 0.8365163
    %v6695 = vmul.f32 %v6593, 0.8365163
    %v6696 = vadd.f32 %v6646, %v6671
    %v6697 = vadd.f32 %v6647, %v6672
    %v6698 = vadd.f32 %v6648, %v6673
    %v6699 = vadd.f32 %v6649, %v6674
    %v6700 = vadd.f32 %v6650, %v6675
    %v6701 = vadd.f32 %v6651, %v6676
    %v6702 = vadd.f32 %v6652, %v6677
    %v6703 = vadd.f32 %v6653, %v6678
    %v6704 = vadd.f32 %v6654, %v6679
    %v6705 = vadd.f32 %v6655, %v6680
    %v6706 = vadd.f32 %v6656, %v6681
    %v6707 = vadd.f32 %v6657, %v6682
    %v6708 = vadd.f32 %v6658, %v6683
    %v6709 = vadd.f32 %v6659, %v6684
    %v6710 = vadd.f32 %v6660, %v6685
    %v6711 = vadd.f32 %v6661, %v6686
    %v6712 = vadd.f32 %v6662, %v6687
    %v6713 = vadd.f32 %v6663, %v6688
    %v6714 = vadd.f32 %v6664, %v6689
    %v6715 = vadd.f32 %v6665, %v6690
    %v6716 = vadd.f32 %v6666, %v6691
    %v6717 = vadd.f32 %v6667, %v6692
    %v6718 = vadd.f32 %v6668, %v6693
    %v6719 = vadd.f32 %v6669, %v6694
    %v6720 = vadd.f32 %v6670, %v6695
    %v6721 = vmul.f32 %v6595, 0.22414386
    %v6722 = vmul.f32 %v6596, 0.22414386
    %v6723 = vmul.f32 %v6597, 0.22414386
    %v6724 = vmul.f32 %v6598, 0.22414386
    %v6725 = vmul.f32 %v6599, 0.22414386
    %v6726 = vmul.f32 %v6600, 0.22414386
    %v6727 = vmul.f32 %v6601, 0.22414386
    %v6728 = vmul.f32 %v6602, 0.22414386
    %v6729 = vmul.f32 %v6603, 0.22414386
    %v6730 = vmul.f32 %v6604, 0.22414386
    %v6731 = vmul.f32 %v6605, 0.22414386
    %v6732 = vmul.f32 %v6606, 0.22414386
    %v6733 = vmul.f32 %v6607, 0.22414386
    %v6734 = vmul.f32 %v6608, 0.22414386
    %v6735 = vmul.f32 %v6609, 0.22414386
    %v6736 = vmul.f32 %v6610, 0.22414386
    %v6737 = vmul.f32 %v6611, 0.22414386
    %v6738 = vmul.f32 %v6612, 0.22414386
    %v6739 = vmul.f32 %v6613, 0.22414386
    %v6740 = vmul.f32 %v6614, 0.22414386
    %v6741 = vmul.f32 %v6615, 0.22414386
    %v6742 = vmul.f32 %v6616, 0.22414386
    %v6743 = vmul.f32 %v6617, 0.22414386
    %v6744 = vmul.f32 %v6618, 0.22414386
    %v6745 = vmul.f32 %v6619, 0.22414386
    %v6746 = vadd.f32 %v6696, %v6721
    %v6747 = vadd.f32 %v6697, %v6722
    %v6748 = vadd.f32 %v6698, %v6723
    %v6749 = vadd.f32 %v6699, %v6724
    %v6750 = vadd.f32 %v6700, %v6725
    %v6751 = vadd.f32 %v6701, %v6726
    %v6752 = vadd.f32 %v6702, %v6727
    %v6753 = vadd.f32 %v6703, %v6728
    %v6754 = vadd.f32 %v6704, %v6729
    %v6755 = vadd.f32 %v6705, %v6730
    %v6756 = vadd.f32 %v6706, %v6731
    %v6757 = vadd.f32 %v6707, %v6732
    %v6758 = vadd.f32 %v6708, %v6733
    %v6759 = vadd.f32 %v6709, %v6734
    %v6760 = vadd.f32 %v6710, %v6735
    %v6761 = vadd.f32 %v6711, %v6736
    %v6762 = vadd.f32 %v6712, %v6737
    %v6763 = vadd.f32 %v6713, %v6738
    %v6764 = vadd.f32 %v6714, %v6739
    %v6765 = vadd.f32 %v6715, %v6740
    %v6766 = vadd.f32 %v6716, %v6741
    %v6767 = vadd.f32 %v6717, %v6742
    %v6768 = vadd.f32 %v6718, %v6743
    %v6769 = vadd.f32 %v6719, %v6744
    %v6770 = vadd.f32 %v6720, %v6745
    %v6771 = vmul.f32 %v6621, -0.12940952
    %v6772 = vmul.f32 %v6622, -0.12940952
    %v6773 = vmul.f32 %v6623, -0.12940952
    %v6774 = vmul.f32 %v6624, -0.12940952
    %v6775 = vmul.f32 %v6625, -0.12940952
    %v6776 = vmul.f32 %v6626, -0.12940952
    %v6777 = vmul.f32 %v6627, -0.12940952
    %v6778 = vmul.f32 %v6628, -0.12940952
    %v6779 = vmul.f32 %v6629, -0.12940952
    %v6780 = vmul.f32 %v6630, -0.12940952
    %v6781 = vmul.f32 %v6631, -0.12940952
    %v6782 = vmul.f32 %v6632, -0.12940952
    %v6783 = vmul.f32 %v6633, -0.12940952
    %v6784 = vmul.f32 %v6634, -0.12940952
    %v6785 = vmul.f32 %v6635, -0.12940952
    %v6786 = vmul.f32 %v6636, -0.12940952
    %v6787 = vmul.f32 %v6637, -0.12940952
    %v6788 = vmul.f32 %v6638, -0.12940952
    %v6789 = vmul.f32 %v6639, -0.12940952
    %v6790 = vmul.f32 %v6640, -0.12940952
    %v6791 = vmul.f32 %v6641, -0.12940952
    %v6792 = vmul.f32 %v6642, -0.12940952
    %v6793 = vmul.f32 %v6643, -0.12940952
    %v6794 = vmul.f32 %v6644, -0.12940952
    %v6795 = vmul.f32 %v6645, -0.12940952
    %v6796 = vadd.f32 %v6746, %v6771
    %v6797 = vadd.f32 %v6747, %v6772
    %v6798 = vadd.f32 %v6748, %v6773
    %v6799 = vadd.f32 %v6749, %v6774
    %v6800 = vadd.f32 %v6750, %v6775
    %v6801 = vadd.f32 %v6751, %v6776
    %v6802 = vadd.f32 %v6752, %v6777
    %v6803 = vadd.f32 %v6753, %v6778
    %v6804 = vadd.f32 %v6754, %v6779
    %v6805 = vadd.f32 %v6755, %v6780
    %v6806 = vadd.f32 %v6756, %v6781
    %v6807 = vadd.f32 %v6757, %v6782
    %v6808 = vadd.f32 %v6758, %v6783
    %v6809 = vadd.f32 %v6759, %v6784
    %v6810 = vadd.f32 %v6760, %v6785
    %v6811 = vadd.f32 %v6761, %v6786
    %v6812 = vadd.f32 %v6762, %v6787
    %v6813 = vadd.f32 %v6763, %v6788
    %v6814 = vadd.f32 %v6764, %v6789
    %v6815 = vadd.f32 %v6765, %v6790
    %v6816 = vadd.f32 %v6766, %v6791
    %v6817 = vadd.f32 %v6767, %v6792
    %v6818 = vadd.f32 %v6768, %v6793
    %v6819 = vadd.f32 %v6769, %v6794
    %v6820 = vadd.f32 %v6770, %v6795
    %6821 = vst [vmem:[%s2] sm:$0x1f] %v6796
    %6822 = vst [vmem:[%s2 + $0x8] sm:$0x1f] %v6797
    %6823 = vst [vmem:[%s2 + $0x10] sm:$0x1f] %v6798
    %6824 = vst [vmem:[%s2 + $0x18] sm:$0x1f] %v6799
    %6825 = vst [vmem:[%s2 + $0x20] sm:$0x1f] %v6800
    %6826 = vst [vmem:[%s2 + $0x28] sm:$0x1f] %v6801
    %6827 = vst [vmem:[%s2 + $0x30] sm:$0x1f] %v6802
    %6828 = vst [vmem:[%s2 + $0x38] sm:$0x1f] %v6803
    %6829 = vst [vmem:[%s2 + $0x40] sm:$0x1f] %v6804
    %6830 = vst [vmem:[%s2 + $0x48] sm:$0x1f] %v6805
    %6831 = vst [vmem:[%s2 + $0x50] sm:$0x1f] %v6806
    %6832 = vst [vmem:[%s2 + $0x58] sm:$0x1f] %v6807
    %6833 = vst [vmem:[%s2 + $0x60] sm:$0x1f] %v6808
    %6834 = vst [vmem:[%s2 + $0x68] sm:$0x1f] %v6809
    %6835 = vst [vmem:[%s2 + $0x70] sm:$0x1f] %v6810
    %6836 = vst [vmem:[%s2 + $0x78] sm:$0x1f] %v6811
    %6837 = vst [vmem:[%s2 + $0x80] sm:$0x1f] %v6812
    %6838 = vst [vmem:[%s2 + $0x88] sm:$0x1f] %v6813
    %6839 = vst [vmem:[%s2 + $0x90] sm:$0x1f] %v6814
    %6840 = vst [vmem:[%s2 + $0x98] sm:$0x1f] %v6815
    %6841 = vst [vmem:[%s2 + $0xa0] sm:$0x1f] %v6816
    %6842 = vst [vmem:[%s2 + $0xa8] sm:$0x1f] %v6817
    %6843 = vst [vmem:[%s2 + $0xb0] sm:$0x1f] %v6818
    %6844 = vst [vmem:[%s2 + $0xb8] sm:$0x1f] %v6819
    %6845 = vst [vmem:[%s2 + $0xc0] sm:$0x1f] %v6820
    %v6846 = vmul.f32 %v6544, -0.12940952
    %v6847 = vmul.f32 %v6545, -0.12940952
    %v6848 = vmul.f32 %v6546, -0.12940952
    %v6849 = vmul.f32 %v6547, -0.12940952
    %v6850 = vmul.f32 %v6548, -0.12940952
    %v6851 = vmul.f32 %v6549, -0.12940952
    %v6852 = vmul.f32 %v6550, -0.12940952
    %v6853 = vmul.f32 %v6551, -0.12940952
    %v6854 = vmul.f32 %v6552, -0.12940952
    %v6855 = vmul.f32 %v6553, -0.12940952
    %v6856 = vmul.f32 %v6554, -0.12940952
    %v6857 = vmul.f32 %v6555, -0.12940952
    %v6858 = vmul.f32 %v6556, -0.12940952
    %v6859 = vmul.f32 %v6557, -0.12940952
    %v6860 = vmul.f32 %v6558, -0.12940952
    %v6861 = vmul.f32 %v6559, -0.12940952
    %v6862 = vmul.f32 %v6560, -0.12940952
    %v6863 = vmul.f32 %v6561, -0.12940952
    %v6864 = vmul.f32 %v6562, -0.12940952
    %v6865 = vmul.f32 %v6563, -0.12940952
    %v6866 = vmul.f32 %v6564, -0.12940952
    %v6867 = vmul.f32 %v6565, -0.12940952
    %v6868 = vmul.f32 %v6566, -0.12940952
    %v6869 = vmul.f32 %v6567, -0.12940952
    %v6870 = vmul.f32 %v6568, -0.12940952
    %v6871 = vmul.f32 %v6569, -0.22414386
    %v6872 = vmul.f32 %v6570, -0.22414386
    %v6873 = vmul.f32 %v6571, -0.22414386
    %v6874 = vmul.f32 %v6572, -0.22414386
    %v6875 = vmul.f32 %v6573, -0.22414386
    %v6876 = vmul.f32 %v6574, -0.22414386
    %v6877 = vmul.f32 %v6575, -0.22414386
    %v6878 = vmul.f32 %v6576, -0.22414386
    %v6879 = vmul.f32 %v6577, -0.22414386
    %v6880 = vmul.f32 %v6578, -0.22414386
    %v6881 = vmul.f32 %v6579, -0.22414386
    %v6882 = vmul.f32 %v6580, -0.22414386
    %v6883 = vmul.f32 %v6581, -0.22414386
    %v6884 = vmul.f32 %v6582, -0.22414386
    %v6885 = vmul.f32 %v6583, -0.22414386
    %v6886 = vmul.f32 %v6584, -0.22414386
    %v6887 = vmul.f32 %v6585, -0.22414386
    %v6888 = vmul.f32 %v6586, -0.22414386
    %v6889 = vmul.f32 %v6587, -0.22414386
    %v6890 = vmul.f32 %v6588, -0.22414386
    %v6891 = vmul.f32 %v6589, -0.22414386
    %v6892 = vmul.f32 %v6590, -0.22414386
    %v6893 = vmul.f32 %v6591, -0.22414386
    %v6894 = vmul.f32 %v6592, -0.22414386
    %v6895 = vmul.f32 %v6593, -0.22414386
    %v6896 = vadd.f32 %v6846, %v6871
    %v6897 = vadd.f32 %v6847, %v6872
    %v6898 = vadd.f32 %v6848, %v6873
    %v6899 = vadd.f32 %v6849, %v6874
    %v6900 = vadd.f32 %v6850, %v6875
    %v6901 = vadd.f32 %v6851, %v6876
    %v6902 = vadd.f32 %v6852, %v6877
    %v6903 = vadd.f32 %v6853, %v6878
    %v6904 = vadd.f32 %v6854, %v6879
    %v6905 = vadd.f32 %v6855, %v6880
    %v6906 = vadd.f32 %v6856, %v6881
    %v6907 = vadd.f32 %v6857, %v6882
    %v6908 = vadd.f32 %v6858, %v6883
    %v6909 = vadd.f32 %v6859, %v6884
    %v6910 = vadd.f32 %v6860, %v6885
    %v6911 = vadd.f32 %v6861, %v6886
    %v6912 = vadd.f32 %v6862, %v6887
    %v6913 = vadd.f32 %v6863, %v6888
    %v6914 = vadd.f32 %v6864, %v6889
    %v6915 = vadd.f32 %v6865, %v6890
    %v6916 = vadd.f32 %v6866, %v6891
    %v6917 = vadd.f32 %v6867, %v6892
    %v6918 = vadd.f32 %v6868, %v6893
    %v6919 = vadd.f32 %v6869, %v6894
    %v6920 = vadd.f32 %v6870, %v6895
    %v6921 = vmul.f32 %v6595, 0.8365163
    %v6922 = vmul.f32 %v6596, 0.8365163
    %v6923 = vmul.f32 %v6597, 0.8365163
    %v6924 = vmul.f32 %v6598, 0.8365163
    %v6925 = vmul.f32 %v6599, 0.8365163
    %v6926 = vmul.f32 %v6600, 0.8365163
    %v6927 = vmul.f32 %v6601, 0.8365163
    %v6928 = vmul.f32 %v6602, 0.8365163
    %v6929 = vmul.f32 %v6603, 0.8365163
    %v6930 = vmul.f32 %v6604, 0.8365163
    %v6931 = vmul.f32 %v6605, 0.8365163
    %v6932 = vmul.f32 %v6606, 0.8365163
    %v6933 = vmul.f32 %v6607, 0.8365163
    %v6934 = vmul.f32 %v6608, 0.8365163
    %v6935 = vmul.f32 %v6609, 0.8365163
    %v6936 = vmul.f32 %v6610, 0.8365163
    %v6937 = vmul.f32 %v6611, 0.8365163
    %v6938 = vmul.f32 %v6612, 0.8365163
    %v6939 = vmul.f32 %v6613, 0.8365163
    %v6940 = vmul.f32 %v6614, 0.8365163
    %v6941 = vmul.f32 %v6615, 0.8365163
    %v6942 = vmul.f32 %v6616, 0.8365163
    %v6943 = vmul.f32 %v6617, 0.8365163
    %v6944 = vmul.f32 %v6618, 0.8365163
    %v6945 = vmul.f32 %v6619, 0.8365163
    %v6946 = vadd.f32 %v6896, %v6921
    %v6947 = vadd.f32 %v6897, %v6922
    %v6948 = vadd.f32 %v6898, %v6923
    %v6949 = vadd.f32 %v6899, %v6924
    %v6950 = vadd.f32 %v6900, %v6925
    %v6951 = vadd.f32 %v6901, %v6926
    %v6952 = vadd.f32 %v6902, %v6927
    %v6953 = vadd.f32 %v6903, %v6928
    %v6954 = vadd.f32 %v6904, %v6929
    %v6955 = vadd.f32 %v6905, %v6930
    %v6956 = vadd.f32 %v6906, %v6931
    %v6957 = vadd.f32 %v6907, %v6932
    %v6958 = vadd.f32 %v6908, %v6933
    %v6959 = vadd.f32 %v6909, %v6934
    %v6960 = vadd.f32 %v6910, %v6935
    %v6961 = vadd.f32 %v6911, %v6936
    %v6962 = vadd.f32 %v6912, %v6937
    %v6963 = vadd.f32 %v6913, %v6938
    %v6964 = vadd.f32 %v6914, %v6939
    %v6965 = vadd.f32 %v6915, %v6940
    %v6966 = vadd.f32 %v6916, %v6941
    %v6967 = vadd.f32 %v6917, %v6942
    %v6968 = vadd.f32 %v6918, %v6943
    %v6969 = vadd.f32 %v6919, %v6944
    %v6970 = vadd.f32 %v6920, %v6945
    %v6971 = vmul.f32 %v6621, -0.4829629
    %v6972 = vmul.f32 %v6622, -0.4829629
    %v6973 = vmul.f32 %v6623, -0.4829629
    %v6974 = vmul.f32 %v6624, -0.4829629
    %v6975 = vmul.f32 %v6625, -0.4829629
    %v6976 = vmul.f32 %v6626, -0.4829629
    %v6977 = vmul.f32 %v6627, -0.4829629
    %v6978 = vmul.f32 %v6628, -0.4829629
    %v6979 = vmul.f32 %v6629, -0.4829629
    %v6980 = vmul.f32 %v6630, -0.4829629
    %v6981 = vmul.f32 %v6631, -0.4829629
    %v6982 = vmul.f32 %v6632, -0.4829629
    %v6983 = vmul.f32 %v6633, -0.4829629
    %v6984 = vmul.f32 %v6634, -0.4829629
    %v6985 = vmul.f32 %v6635, -0.4829629
    %v6986 = vmul.f32 %v6636, -0.4829629
    %v6987 = vmul.f32 %v6637, -0.4829629
    %v6988 = vmul.f32 %v6638, -0.4829629
    %v6989 = vmul.f32 %v6639, -0.4829629
    %v6990 = vmul.f32 %v6640, -0.4829629
    %v6991 = vmul.f32 %v6641, -0.4829629
    %v6992 = vmul.f32 %v6642, -0.4829629
    %v6993 = vmul.f32 %v6643, -0.4829629
    %v6994 = vmul.f32 %v6644, -0.4829629
    %v6995 = vmul.f32 %v6645, -0.4829629
    %v6996 = vadd.f32 %v6946, %v6971
    %v6997 = vadd.f32 %v6947, %v6972
    %v6998 = vadd.f32 %v6948, %v6973
    %v6999 = vadd.f32 %v6949, %v6974
    %v7000 = vadd.f32 %v6950, %v6975
    %v7001 = vadd.f32 %v6951, %v6976
    %v7002 = vadd.f32 %v6952, %v6977
    %v7003 = vadd.f32 %v6953, %v6978
    %v7004 = vadd.f32 %v6954, %v6979
    %v7005 = vadd.f32 %v6955, %v6980
    %v7006 = vadd.f32 %v6956, %v6981
    %v7007 = vadd.f32 %v6957, %v6982
    %v7008 = vadd.f32 %v6958, %v6983
    %v7009 = vadd.f32 %v6959, %v6984
    %v7010 = vadd.f32 %v6960, %v6985
    %v7011 = vadd.f32 %v6961, %v6986
    %v7012 = vadd.f32 %v6962, %v6987
    %v7013 = vadd.f32 %v6963, %v6988
    %v7014 = vadd.f32 %v6964, %v6989
    %v7015 = vadd.f32 %v6965, %v6990
    %v7016 = vadd.f32 %v6966, %v6991
    %v7017 = vadd.f32 %v6967, %v6992
    %v7018 = vadd.f32 %v6968, %v6993
    %v7019 = vadd.f32 %v6969, %v6994
    %v7020 = vadd.f32 %v6970, %v6995
    %s7021 = scalar_lea.vmem %s2, 800
    %7022 = vst [vmem:[%s7021] sm:$0x1f] %v6996
    %7023 = vst [vmem:[%s7021 + $0x8] sm:$0x1f] %v6997
    %7024 = vst [vmem:[%s7021 + $0x10] sm:$0x1f] %v6998
    %7025 = vst [vmem:[%s7021 + $0x18] sm:$0x1f] %v6999
    %7026 = vst [vmem:[%s7021 + $0x20] sm:$0x1f] %v7000
    %7027 = vst [vmem:[%s7021 + $0x28] sm:$0x1f] %v7001
    %7028 = vst [vmem:[%s7021 + $0x30] sm:$0x1f] %v7002
    %7029 = vst [vmem:[%s7021 + $0x38] sm:$0x1f] %v7003
    %7030 = vst [vmem:[%s7021 + $0x40] sm:$0x1f] %v7004
    %7031 = vst [vmem:[%s7021 + $0x48] sm:$0x1f] %v7005
    %7032 = vst [vmem:[%s7021 + $0x50] sm:$0x1f] %v7006
    %7033 = vst [vmem:[%s7021 + $0x58] sm:$0x1f] %v7007
    %7034 = vst [vmem:[%s7021 + $0x60] sm:$0x1f] %v7008
    %7035 = vst [vmem:[%s7021 + $0x68] sm:$0x1f] %v7009
    %7036 = vst [vmem:[%s7021 + $0x70] sm:$0x1f] %v7010
    %7037 = vst [vmem:[%s7021 + $0x78] sm:$0x1f] %v7011
    %7038 = vst [vmem:[%s7021 + $0x80] sm:$0x1f] %v7012
    %7039 = vst [vmem:[%s7021 + $0x88] sm:$0x1f] %v7013
    %7040 = vst [vmem:[%s7021 + $0x90] sm:$0x1f] %v7014
    %7041 = vst [vmem:[%s7021 + $0x98] sm:$0x1f] %v7015
    %7042 = vst [vmem:[%s7021 + $0xa0] sm:$0x1f] %v7016
    %7043 = vst [vmem:[%s7021 + $0xa8] sm:$0x1f] %v7017
    %7044 = vst [vmem:[%s7021 + $0xb0] sm:$0x1f] %v7018
    %7045 = vst [vmem:[%s7021 + $0xb8] sm:$0x1f] %v7019
    %7046 = vst [vmem:[%s7021 + $0xc0] sm:$0x1f] %v7020
    %v7047 = vld [vmem:[%s3620] sm:$0x1f]
    %v7048 = vld [vmem:[%s3620 + $0x8] sm:$0x1f]
    %v7049 = vld [vmem:[%s3620 + $0x10] sm:$0x1f]
    %v7050 = vld [vmem:[%s3620 + $0x18] sm:$0x1f]
    %v7051 = vld [vmem:[%s3620 + $0x20] sm:$0x1f]
    %v7052 = vld [vmem:[%s3620 + $0x28] sm:$0x1f]
    %v7053 = vld [vmem:[%s3620 + $0x30] sm:$0x1f]
    %v7054 = vld [vmem:[%s3620 + $0x38] sm:$0x1f]
    %v7055 = vld [vmem:[%s3620 + $0x40] sm:$0x1f]
    %v7056 = vld [vmem:[%s3620 + $0x48] sm:$0x1f]
    %v7057 = vld [vmem:[%s3620 + $0x50] sm:$0x1f]
    %v7058 = vld [vmem:[%s3620 + $0x58] sm:$0x1f]
    %v7059 = vld [vmem:[%s3620 + $0x60] sm:$0x1f]
    %v7060 = vld [vmem:[%s3620 + $0x68] sm:$0x1f]
    %v7061 = vld [vmem:[%s3620 + $0x70] sm:$0x1f]
    %v7062 = vld [vmem:[%s3620 + $0x78] sm:$0x1f]
    %v7063 = vld [vmem:[%s3620 + $0x80] sm:$0x1f]
    %v7064 = vld [vmem:[%s3620 + $0x88] sm:$0x1f]
    %v7065 = vld [vmem:[%s3620 + $0x90] sm:$0x1f]
    %v7066 = vld [vmem:[%s3620 + $0x98] sm:$0x1f]
    %v7067 = vld [vmem:[%s3620 + $0xa0] sm:$0x1f]
    %v7068 = vld [vmem:[%s3620 + $0xa8] sm:$0x1f]
    %v7069 = vld [vmem:[%s3620 + $0xb0] sm:$0x1f]
    %v7070 = vld [vmem:[%s3620 + $0xb8] sm:$0x1f]
    %v7071 = vld [vmem:[%s3620 + $0xc0] sm:$0x1f]
    %v7072 = vld [vmem:[%s6272] sm:$0x1f]
    %v7073 = vld [vmem:[%s6272 + $0x8] sm:$0x1f]
    %v7074 = vld [vmem:[%s6272 + $0x10] sm:$0x1f]
    %v7075 = vld [vmem:[%s6272 + $0x18] sm:$0x1f]
    %v7076 = vld [vmem:[%s6272 + $0x20] sm:$0x1f]
    %v7077 = vld [vmem:[%s6272 + $0x28] sm:$0x1f]
    %v7078 = vld [vmem:[%s6272 + $0x30] sm:$0x1f]
    %v7079 = vld [vmem:[%s6272 + $0x38] sm:$0x1f]
    %v7080 = vld [vmem:[%s6272 + $0x40] sm:$0x1f]
    %v7081 = vld [vmem:[%s6272 + $0x48] sm:$0x1f]
    %v7082 = vld [vmem:[%s6272 + $0x50] sm:$0x1f]
    %v7083 = vld [vmem:[%s6272 + $0x58] sm:$0x1f]
    %v7084 = vld [vmem:[%s6272 + $0x60] sm:$0x1f]
    %v7085 = vld [vmem:[%s6272 + $0x68] sm:$0x1f]
    %v7086 = vld [vmem:[%s6272 + $0x70] sm:$0x1f]
    %v7087 = vld [vmem:[%s6272 + $0x78] sm:$0x1f]
    %v7088 = vld [vmem:[%s6272 + $0x80] sm:$0x1f]
    %v7089 = vld [vmem:[%s6272 + $0x88] sm:$0x1f]
    %v7090 = vld [vmem:[%s6272 + $0x90] sm:$0x1f]
    %v7091 = vld [vmem:[%s6272 + $0x98] sm:$0x1f]
    %v7092 = vld [vmem:[%s6272 + $0xa0] sm:$0x1f]
    %v7093 = vld [vmem:[%s6272 + $0xa8] sm:$0x1f]
    %v7094 = vld [vmem:[%s6272 + $0xb0] sm:$0x1f]
    %v7095 = vld [vmem:[%s6272 + $0xb8] sm:$0x1f]
    %v7096 = vld [vmem:[%s6272 + $0xc0] sm:$0x1f]
    %s7097 = scalar_lea.vmem [#allocation3], 280
    %v7098 = vld [vmem:[%s7097] sm:$0x1f]
    %v7099 = vld [vmem:[%s7097 + $0x8] sm:$0x1f]
    %v7100 = vld [vmem:[%s7097 + $0x10] sm:$0x1f]
    %v7101 = vld [vmem:[%s7097 + $0x18] sm:$0x1f]
    %v7102 = vld [vmem:[%s7097 + $0x20] sm:$0x1f]
    %v7103 = vld [vmem:[%s7097 + $0x28] sm:$0x1f]
    %v7104 = vld [vmem:[%s7097 + $0x30] sm:$0x1f]
    %v7105 = vld [vmem:[%s7097 + $0x38] sm:$0x1f]
    %v7106 = vld [vmem:[%s7097 + $0x40] sm:$0x1f]
    %v7107 = vld [vmem:[%s7097 + $0x48] sm:$0x1f]
    %v7108 = vld [vmem:[%s7097 + $0x50] sm:$0x1f]
    %v7109 = vld [vmem:[%s7097 + $0x58] sm:$0x1f]
    %v7110 = vld [vmem:[%s7097 + $0x60] sm:$0x1f]
    %v7111 = vld [vmem:[%s7097 + $0x68] sm:$0x1f]
    %v7112 = vld [vmem:[%s7097 + $0x70] sm:$0x1f]
    %v7113 = vld [vmem:[%s7097 + $0x78] sm:$0x1f]
    %v7114 = vld [vmem:[%s7097 + $0x80] sm:$0x1f]
    %v7115 = vld [vmem:[%s7097 + $0x88] sm:$0x1f]
    %v7116 = vld [vmem:[%s7097 + $0x90] sm:$0x1f]
    %v7117 = vld [vmem:[%s7097 + $0x98] sm:$0x1f]
    %v7118 = vld [vmem:[%s7097 + $0xa0] sm:$0x1f]
    %v7119 = vld [vmem:[%s7097 + $0xa8] sm:$0x1f]
    %v7120 = vld [vmem:[%s7097 + $0xb0] sm:$0x1f]
    %v7121 = vld [vmem:[%s7097 + $0xb8] sm:$0x1f]
    %v7122 = vld [vmem:[%s7097 + $0xc0] sm:$0x1f]
    %s7123 = scalar_lea.vmem [#allocation3], 1240
    %v7124 = vld [vmem:[%s7123] sm:$0x1f]
    %v7125 = vld [vmem:[%s7123 + $0x8] sm:$0x1f]
    %v7126 = vld [vmem:[%s7123 + $0x10] sm:$0x1f]
    %v7127 = vld [vmem:[%s7123 + $0x18] sm:$0x1f]
    %v7128 = vld [vmem:[%s7123 + $0x20] sm:$0x1f]
    %v7129 = vld [vmem:[%s7123 + $0x28] sm:$0x1f]
    %v7130 = vld [vmem:[%s7123 + $0x30] sm:$0x1f]
    %v7131 = vld [vmem:[%s7123 + $0x38] sm:$0x1f]
    %v7132 = vld [vmem:[%s7123 + $0x40] sm:$0x1f]
    %v7133 = vld [vmem:[%s7123 + $0x48] sm:$0x1f]
    %v7134 = vld [vmem:[%s7123 + $0x50] sm:$0x1f]
    %v7135 = vld [vmem:[%s7123 + $0x58] sm:$0x1f]
    %v7136 = vld [vmem:[%s7123 + $0x60] sm:$0x1f]
    %v7137 = vld [vmem:[%s7123 + $0x68] sm:$0x1f]
    %v7138 = vld [vmem:[%s7123 + $0x70] sm:$0x1f]
    %v7139 = vld [vmem:[%s7123 + $0x78] sm:$0x1f]
    %v7140 = vld [vmem:[%s7123 + $0x80] sm:$0x1f]
    %v7141 = vld [vmem:[%s7123 + $0x88] sm:$0x1f]
    %v7142 = vld [vmem:[%s7123 + $0x90] sm:$0x1f]
    %v7143 = vld [vmem:[%s7123 + $0x98] sm:$0x1f]
    %v7144 = vld [vmem:[%s7123 + $0xa0] sm:$0x1f]
    %v7145 = vld [vmem:[%s7123 + $0xa8] sm:$0x1f]
    %v7146 = vld [vmem:[%s7123 + $0xb0] sm:$0x1f]
    %v7147 = vld [vmem:[%s7123 + $0xb8] sm:$0x1f]
    %v7148 = vld [vmem:[%s7123 + $0xc0] sm:$0x1f]
    %v7149 = vmul.f32 %v7047, 0.4829629
    %v7150 = vmul.f32 %v7048, 0.4829629
    %v7151 = vmul.f32 %v7049, 0.4829629
    %v7152 = vmul.f32 %v7050, 0.4829629
    %v7153 = vmul.f32 %v7051, 0.4829629
    %v7154 = vmul.f32 %v7052, 0.4829629
    %v7155 = vmul.f32 %v7053, 0.4829629
    %v7156 = vmul.f32 %v7054, 0.4829629
    %v7157 = vmul.f32 %v7055, 0.4829629
    %v7158 = vmul.f32 %v7056, 0.4829629
    %v7159 = vmul.f32 %v7057, 0.4829629
    %v7160 = vmul.f32 %v7058, 0.4829629
    %v7161 = vmul.f32 %v7059, 0.4829629
    %v7162 = vmul.f32 %v7060, 0.4829629
    %v7163 = vmul.f32 %v7061, 0.4829629
    %v7164 = vmul.f32 %v7062, 0.4829629
    %v7165 = vmul.f32 %v7063, 0.4829629
    %v7166 = vmul.f32 %v7064, 0.4829629
    %v7167 = vmul.f32 %v7065, 0.4829629
    %v7168 = vmul.f32 %v7066, 0.4829629
    %v7169 = vmul.f32 %v7067, 0.4829629
    %v7170 = vmul.f32 %v7068, 0.4829629
    %v7171 = vmul.f32 %v7069, 0.4829629
    %v7172 = vmul.f32 %v7070, 0.4829629
    %v7173 = vmul.f32 %v7071, 0.4829629
    %v7174 = vmul.f32 %v7072, 0.8365163
    %v7175 = vmul.f32 %v7073, 0.8365163
    %v7176 = vmul.f32 %v7074, 0.8365163
    %v7177 = vmul.f32 %v7075, 0.8365163
    %v7178 = vmul.f32 %v7076, 0.8365163
    %v7179 = vmul.f32 %v7077, 0.8365163
    %v7180 = vmul.f32 %v7078, 0.8365163
    %v7181 = vmul.f32 %v7079, 0.8365163
    %v7182 = vmul.f32 %v7080, 0.8365163
    %v7183 = vmul.f32 %v7081, 0.8365163
    %v7184 = vmul.f32 %v7082, 0.8365163
    %v7185 = vmul.f32 %v7083, 0.8365163
    %v7186 = vmul.f32 %v7084, 0.8365163
    %v7187 = vmul.f32 %v7085, 0.8365163
    %v7188 = vmul.f32 %v7086, 0.8365163
    %v7189 = vmul.f32 %v7087, 0.8365163
    %v7190 = vmul.f32 %v7088, 0.8365163
    %v7191 = vmul.f32 %v7089, 0.8365163
    %v7192 = vmul.f32 %v7090, 0.8365163
    %v7193 = vmul.f32 %v7091, 0.8365163
    %v7194 = vmul.f32 %v7092, 0.8365163
    %v7195 = vmul.f32 %v7093, 0.8365163
    %v7196 = vmul.f32 %v7094, 0.8365163
    %v7197 = vmul.f32 %v7095, 0.8365163
    %v7198 = vmul.f32 %v7096, 0.8365163
    %v7199 = vadd.f32 %v7149, %v7174
    %v7200 = vadd.f32 %v7150, %v7175
    %v7201 = vadd.f32 %v7151, %v7176
    %v7202 = vadd.f32 %v7152, %v7177
    %v7203 = vadd.f32 %v7153, %v7178
    %v7204 = vadd.f32 %v7154, %v7179
    %v7205 = vadd.f32 %v7155, %v7180
    %v7206 = vadd.f32 %v7156, %v7181
    %v7207 = vadd.f32 %v7157, %v7182
    %v7208 = vadd.f32 %v7158, %v7183
    %v7209 = vadd.f32 %v7159, %v7184
    %v7210 = vadd.f32 %v7160, %v7185
    %v7211 = vadd.f32 %v7161, %v7186
    %v7212 = vadd.f32 %v7162, %v7187
    %v7213 = vadd.f32 %v7163, %v7188
    %v7214 = vadd.f32 %v7164, %v7189
    %v7215 = vadd.f32 %v7165, %v7190
    %v7216 = vadd.f32 %v7166, %v7191
    %v7217 = vadd.f32 %v7167, %v7192
    %v7218 = vadd.f32 %v7168, %v7193
    %v7219 = vadd.f32 %v7169, %v7194
    %v7220 = vadd.f32 %v7170, %v7195
    %v7221 = vadd.f32 %v7171, %v7196
    %v7222 = vadd.f32 %v7172, %v7197
    %v7223 = vadd.f32 %v7173, %v7198
    %v7224 = vmul.f32 %v7098, 0.22414386
    %v7225 = vmul.f32 %v7099, 0.22414386
    %v7226 = vmul.f32 %v7100, 0.22414386
    %v7227 = vmul.f32 %v7101, 0.22414386
    %v7228 = vmul.f32 %v7102, 0.22414386
    %v7229 = vmul.f32 %v7103, 0.22414386
    %v7230 = vmul.f32 %v7104, 0.22414386
    %v7231 = vmul.f32 %v7105, 0.22414386
    %v7232 = vmul.f32 %v7106, 0.22414386
    %v7233 = vmul.f32 %v7107, 0.22414386
    %v7234 = vmul.f32 %v7108, 0.22414386
    %v7235 = vmul.f32 %v7109, 0.22414386
    %v7236 = vmul.f32 %v7110, 0.22414386
    %v7237 = vmul.f32 %v7111, 0.22414386
    %v7238 = vmul.f32 %v7112, 0.22414386
    %v7239 = vmul.f32 %v7113, 0.22414386
    %v7240 = vmul.f32 %v7114, 0.22414386
    %v7241 = vmul.f32 %v7115, 0.22414386
    %v7242 = vmul.f32 %v7116, 0.22414386
    %v7243 = vmul.f32 %v7117, 0.22414386
    %v7244 = vmul.f32 %v7118, 0.22414386
    %v7245 = vmul.f32 %v7119, 0.22414386
    %v7246 = vmul.f32 %v7120, 0.22414386
    %v7247 = vmul.f32 %v7121, 0.22414386
    %v7248 = vmul.f32 %v7122, 0.22414386
    %v7249 = vadd.f32 %v7199, %v7224
    %v7250 = vadd.f32 %v7200, %v7225
    %v7251 = vadd.f32 %v7201, %v7226
    %v7252 = vadd.f32 %v7202, %v7227
    %v7253 = vadd.f32 %v7203, %v7228
    %v7254 = vadd.f32 %v7204, %v7229
    %v7255 = vadd.f32 %v7205, %v7230
    %v7256 = vadd.f32 %v7206, %v7231
    %v7257 = vadd.f32 %v7207, %v7232
    %v7258 = vadd.f32 %v7208, %v7233
    %v7259 = vadd.f32 %v7209, %v7234
    %v7260 = vadd.f32 %v7210, %v7235
    %v7261 = vadd.f32 %v7211, %v7236
    %v7262 = vadd.f32 %v7212, %v7237
    %v7263 = vadd.f32 %v7213, %v7238
    %v7264 = vadd.f32 %v7214, %v7239
    %v7265 = vadd.f32 %v7215, %v7240
    %v7266 = vadd.f32 %v7216, %v7241
    %v7267 = vadd.f32 %v7217, %v7242
    %v7268 = vadd.f32 %v7218, %v7243
    %v7269 = vadd.f32 %v7219, %v7244
    %v7270 = vadd.f32 %v7220, %v7245
    %v7271 = vadd.f32 %v7221, %v7246
    %v7272 = vadd.f32 %v7222, %v7247
    %v7273 = vadd.f32 %v7223, %v7248
    %v7274 = vmul.f32 %v7124, -0.12940952
    %v7275 = vmul.f32 %v7125, -0.12940952
    %v7276 = vmul.f32 %v7126, -0.12940952
    %v7277 = vmul.f32 %v7127, -0.12940952
    %v7278 = vmul.f32 %v7128, -0.12940952
    %v7279 = vmul.f32 %v7129, -0.12940952
    %v7280 = vmul.f32 %v7130, -0.12940952
    %v7281 = vmul.f32 %v7131, -0.12940952
    %v7282 = vmul.f32 %v7132, -0.12940952
    %v7283 = vmul.f32 %v7133, -0.12940952
    %v7284 = vmul.f32 %v7134, -0.12940952
    %v7285 = vmul.f32 %v7135, -0.12940952
    %v7286 = vmul.f32 %v7136, -0.12940952
    %v7287 = vmul.f32 %v7137, -0.12940952
    %v7288 = vmul.f32 %v7138, -0.12940952
    %v7289 = vmul.f32 %v7139, -0.12940952
    %v7290 = vmul.f32 %v7140, -0.12940952
    %v7291 = vmul.f32 %v7141, -0.12940952
    %v7292 = vmul.f32 %v7142, -0.12940952
    %v7293 = vmul.f32 %v7143, -0.12940952
    %v7294 = vmul.f32 %v7144, -0.12940952
    %v7295 = vmul.f32 %v7145, -0.12940952
    %v7296 = vmul.f32 %v7146, -0.12940952
    %v7297 = vmul.f32 %v7147, -0.12940952
    %v7298 = vmul.f32 %v7148, -0.12940952
    %v7299 = vadd.f32 %v7249, %v7274
    %v7300 = vadd.f32 %v7250, %v7275
    %v7301 = vadd.f32 %v7251, %v7276
    %v7302 = vadd.f32 %v7252, %v7277
    %v7303 = vadd.f32 %v7253, %v7278
    %v7304 = vadd.f32 %v7254, %v7279
    %v7305 = vadd.f32 %v7255, %v7280
    %v7306 = vadd.f32 %v7256, %v7281
    %v7307 = vadd.f32 %v7257, %v7282
    %v7308 = vadd.f32 %v7258, %v7283
    %v7309 = vadd.f32 %v7259, %v7284
    %v7310 = vadd.f32 %v7260, %v7285
    %v7311 = vadd.f32 %v7261, %v7286
    %v7312 = vadd.f32 %v7262, %v7287
    %v7313 = vadd.f32 %v7263, %v7288
    %v7314 = vadd.f32 %v7264, %v7289
    %v7315 = vadd.f32 %v7265, %v7290
    %v7316 = vadd.f32 %v7266, %v7291
    %v7317 = vadd.f32 %v7267, %v7292
    %v7318 = vadd.f32 %v7268, %v7293
    %v7319 = vadd.f32 %v7269, %v7294
    %v7320 = vadd.f32 %v7270, %v7295
    %v7321 = vadd.f32 %v7271, %v7296
    %v7322 = vadd.f32 %v7272, %v7297
    %v7323 = vadd.f32 %v7273, %v7298
    %s7324 = scalar_lea.vmem %s2, 200
    %7325 = vst [vmem:[%s7324] sm:$0x1f] %v7299
    %7326 = vst [vmem:[%s7324 + $0x8] sm:$0x1f] %v7300
    %7327 = vst [vmem:[%s7324 + $0x10] sm:$0x1f] %v7301
    %7328 = vst [vmem:[%s7324 + $0x18] sm:$0x1f] %v7302
    %7329 = vst [vmem:[%s7324 + $0x20] sm:$0x1f] %v7303
    %7330 = vst [vmem:[%s7324 + $0x28] sm:$0x1f] %v7304
    %7331 = vst [vmem:[%s7324 + $0x30] sm:$0x1f] %v7305
    %7332 = vst [vmem:[%s7324 + $0x38] sm:$0x1f] %v7306
    %7333 = vst [vmem:[%s7324 + $0x40] sm:$0x1f] %v7307
    %7334 = vst [vmem:[%s7324 + $0x48] sm:$0x1f] %v7308
    %7335 = vst [vmem:[%s7324 + $0x50] sm:$0x1f] %v7309
    %7336 = vst [vmem:[%s7324 + $0x58] sm:$0x1f] %v7310
    %7337 = vst [vmem:[%s7324 + $0x60] sm:$0x1f] %v7311
    %7338 = vst [vmem:[%s7324 + $0x68] sm:$0x1f] %v7312
    %7339 = vst [vmem:[%s7324 + $0x70] sm:$0x1f] %v7313
    %7340 = vst [vmem:[%s7324 + $0x78] sm:$0x1f] %v7314
    %7341 = vst [vmem:[%s7324 + $0x80] sm:$0x1f] %v7315
    %7342 = vst [vmem:[%s7324 + $0x88] sm:$0x1f] %v7316
    %7343 = vst [vmem:[%s7324 + $0x90] sm:$0x1f] %v7317
    %7344 = vst [vmem:[%s7324 + $0x98] sm:$0x1f] %v7318
    %7345 = vst [vmem:[%s7324 + $0xa0] sm:$0x1f] %v7319
    %7346 = vst [vmem:[%s7324 + $0xa8] sm:$0x1f] %v7320
    %7347 = vst [vmem:[%s7324 + $0xb0] sm:$0x1f] %v7321
    %7348 = vst [vmem:[%s7324 + $0xb8] sm:$0x1f] %v7322
    %7349 = vst [vmem:[%s7324 + $0xc0] sm:$0x1f] %v7323
    %v7350 = vmul.f32 %v7047, -0.12940952
    %v7351 = vmul.f32 %v7048, -0.12940952
    %v7352 = vmul.f32 %v7049, -0.12940952
    %v7353 = vmul.f32 %v7050, -0.12940952
    %v7354 = vmul.f32 %v7051, -0.12940952
    %v7355 = vmul.f32 %v7052, -0.12940952
    %v7356 = vmul.f32 %v7053, -0.12940952
    %v7357 = vmul.f32 %v7054, -0.12940952
    %v7358 = vmul.f32 %v7055, -0.12940952
    %v7359 = vmul.f32 %v7056, -0.12940952
    %v7360 = vmul.f32 %v7057, -0.12940952
    %v7361 = vmul.f32 %v7058, -0.12940952
    %v7362 = vmul.f32 %v7059, -0.12940952
    %v7363 = vmul.f32 %v7060, -0.12940952
    %v7364 = vmul.f32 %v7061, -0.12940952
    %v7365 = vmul.f32 %v7062, -0.12940952
    %v7366 = vmul.f32 %v7063, -0.12940952
    %v7367 = vmul.f32 %v7064, -0.12940952
    %v7368 = vmul.f32 %v7065, -0.12940952
    %v7369 = vmul.f32 %v7066, -0.12940952
    %v7370 = vmul.f32 %v7067, -0.12940952
    %v7371 = vmul.f32 %v7068, -0.12940952
    %v7372 = vmul.f32 %v7069, -0.12940952
    %v7373 = vmul.f32 %v7070, -0.12940952
    %v7374 = vmul.f32 %v7071, -0.12940952
    %v7375 = vmul.f32 %v7072, -0.22414386
    %v7376 = vmul.f32 %v7073, -0.22414386
    %v7377 = vmul.f32 %v7074, -0.22414386
    %v7378 = vmul.f32 %v7075, -0.22414386
    %v7379 = vmul.f32 %v7076, -0.22414386
    %v7380 = vmul.f32 %v7077, -0.22414386
    %v7381 = vmul.f32 %v7078, -0.22414386
    %v7382 = vmul.f32 %v7079, -0.22414386
    %v7383 = vmul.f32 %v7080, -0.22414386
    %v7384 = vmul.f32 %v7081, -0.22414386
    %v7385 = vmul.f32 %v7082, -0.22414386
    %v7386 = vmul.f32 %v7083, -0.22414386
    %v7387 = vmul.f32 %v7084, -0.22414386
    %v7388 = vmul.f32 %v7085, -0.22414386
    %v7389 = vmul.f32 %v7086, -0.22414386
    %v7390 = vmul.f32 %v7087, -0.22414386
    %v7391 = vmul.f32 %v7088, -0.22414386
    %v7392 = vmul.f32 %v7089, -0.22414386
    %v7393 = vmul.f32 %v7090, -0.22414386
    %v7394 = vmul.f32 %v7091, -0.22414386
    %v7395 = vmul.f32 %v7092, -0.22414386
    %v7396 = vmul.f32 %v7093, -0.22414386
    %v7397 = vmul.f32 %v7094, -0.22414386
    %v7398 = vmul.f32 %v7095, -0.22414386
    %v7399 = vmul.f32 %v7096, -0.22414386
    %v7400 = vadd.f32 %v7350, %v7375
    %v7401 = vadd.f32 %v7351, %v7376
    %v7402 = vadd.f32 %v7352, %v7377
    %v7403 = vadd.f32 %v7353, %v7378
    %v7404 = vadd.f32 %v7354, %v7379
    %v7405 = vadd.f32 %v7355, %v7380
    %v7406 = vadd.f32 %v7356, %v7381
    %v7407 = vadd.f32 %v7357, %v7382
    %v7408 = vadd.f32 %v7358, %v7383
    %v7409 = vadd.f32 %v7359, %v7384
    %v7410 = vadd.f32 %v7360, %v7385
    %v7411 = vadd.f32 %v7361, %v7386
    %v7412 = vadd.f32 %v7362, %v7387
    %v7413 = vadd.f32 %v7363, %v7388
    %v7414 = vadd.f32 %v7364, %v7389
    %v7415 = vadd.f32 %v7365, %v7390
    %v7416 = vadd.f32 %v7366, %v7391
    %v7417 = vadd.f32 %v7367, %v7392
    %v7418 = vadd.f32 %v7368, %v7393
    %v7419 = vadd.f32 %v7369, %v7394
    %v7420 = vadd.f32 %v7370, %v7395
    %v7421 = vadd.f32 %v7371, %v7396
    %v7422 = vadd.f32 %v7372, %v7397
    %v7423 = vadd.f32 %v7373, %v7398
    %v7424 = vadd.f32 %v7374, %v7399
    %v7425 = vmul.f32 %v7098, 0.8365163
    %v7426 = vmul.f32 %v7099, 0.8365163
    %v7427 = vmul.f32 %v7100, 0.8365163
    %v7428 = vmul.f32 %v7101, 0.8365163
    %v7429 = vmul.f32 %v7102, 0.8365163
    %v7430 = vmul.f32 %v7103, 0.8365163
    %v7431 = vmul.f32 %v7104, 0.8365163
    %v7432 = vmul.f32 %v7105, 0.8365163
    %v7433 = vmul.f32 %v7106, 0.8365163
    %v7434 = vmul.f32 %v7107, 0.8365163
    %v7435 = vmul.f32 %v7108, 0.8365163
    %v7436 = vmul.f32 %v7109, 0.8365163
    %v7437 = vmul.f32 %v7110, 0.8365163
    %v7438 = vmul.f32 %v7111, 0.8365163
    %v7439 = vmul.f32 %v7112, 0.8365163
    %v7440 = vmul.f32 %v7113, 0.8365163
    %v7441 = vmul.f32 %v7114, 0.8365163
    %v7442 = vmul.f32 %v7115, 0.8365163
    %v7443 = vmul.f32 %v7116, 0.8365163
    %v7444 = vmul.f32 %v7117, 0.8365163
    %v7445 = vmul.f32 %v7118, 0.8365163
    %v7446 = vmul.f32 %v7119, 0.8365163
    %v7447 = vmul.f32 %v7120, 0.8365163
    %v7448 = vmul.f32 %v7121, 0.8365163
    %v7449 = vmul.f32 %v7122, 0.8365163
    %v7450 = vadd.f32 %v7400, %v7425
    %v7451 = vadd.f32 %v7401, %v7426
    %v7452 = vadd.f32 %v7402, %v7427
    %v7453 = vadd.f32 %v7403, %v7428
    %v7454 = vadd.f32 %v7404, %v7429
    %v7455 = vadd.f32 %v7405, %v7430
    %v7456 = vadd.f32 %v7406, %v7431
    %v7457 = vadd.f32 %v7407, %v7432
    %v7458 = vadd.f32 %v7408, %v7433
    %v7459 = vadd.f32 %v7409, %v7434
    %v7460 = vadd.f32 %v7410, %v7435
    %v7461 = vadd.f32 %v7411, %v7436
    %v7462 = vadd.f32 %v7412, %v7437
    %v7463 = vadd.f32 %v7413, %v7438
    %v7464 = vadd.f32 %v7414, %v7439
    %v7465 = vadd.f32 %v7415, %v7440
    %v7466 = vadd.f32 %v7416, %v7441
    %v7467 = vadd.f32 %v7417, %v7442
    %v7468 = vadd.f32 %v7418, %v7443
    %v7469 = vadd.f32 %v7419, %v7444
    %v7470 = vadd.f32 %v7420, %v7445
    %v7471 = vadd.f32 %v7421, %v7446
    %v7472 = vadd.f32 %v7422, %v7447
    %v7473 = vadd.f32 %v7423, %v7448
    %v7474 = vadd.f32 %v7424, %v7449
    %v7475 = vmul.f32 %v7124, -0.4829629
    %v7476 = vmul.f32 %v7125, -0.4829629
    %v7477 = vmul.f32 %v7126, -0.4829629
    %v7478 = vmul.f32 %v7127, -0.4829629
    %v7479 = vmul.f32 %v7128, -0.4829629
    %v7480 = vmul.f32 %v7129, -0.4829629
    %v7481 = vmul.f32 %v7130, -0.4829629
    %v7482 = vmul.f32 %v7131, -0.4829629
    %v7483 = vmul.f32 %v7132, -0.4829629
    %v7484 = vmul.f32 %v7133, -0.4829629
    %v7485 = vmul.f32 %v7134, -0.4829629
    %v7486 = vmul.f32 %v7135, -0.4829629
    %v7487 = vmul.f32 %v7136, -0.4829629
    %v7488 = vmul.f32 %v7137, -0.4829629
    %v7489 = vmul.f32 %v7138, -0.4829629
    %v7490 = vmul.f32 %v7139, -0.4829629
    %v7491 = vmul.f32 %v7140, -0.4829629
    %v7492 = vmul.f32 %v7141, -0.4829629
    %v7493 = vmul.f32 %v7142, -0.4829629
    %v7494 = vmul.f32 %v7143, -0.4829629
    %v7495 = vmul.f32 %v7144, -0.4829629
    %v7496 = vmul.f32 %v7145, -0.4829629
    %v7497 = vmul.f32 %v7146, -0.4829629
    %v7498 = vmul.f32 %v7147, -0.4829629
    %v7499 = vmul.f32 %v7148, -0.4829629
    %v7500 = vadd.f32 %v7450, %v7475
    %v7501 = vadd.f32 %v7451, %v7476
    %v7502 = vadd.f32 %v7452, %v7477
    %v7503 = vadd.f32 %v7453, %v7478
    %v7504 = vadd.f32 %v7454, %v7479
    %v7505 = vadd.f32 %v7455, %v7480
    %v7506 = vadd.f32 %v7456, %v7481
    %v7507 = vadd.f32 %v7457, %v7482
    %v7508 = vadd.f32 %v7458, %v7483
    %v7509 = vadd.f32 %v7459, %v7484
    %v7510 = vadd.f32 %v7460, %v7485
    %v7511 = vadd.f32 %v7461, %v7486
    %v7512 = vadd.f32 %v7462, %v7487
    %v7513 = vadd.f32 %v7463, %v7488
    %v7514 = vadd.f32 %v7464, %v7489
    %v7515 = vadd.f32 %v7465, %v7490
    %v7516 = vadd.f32 %v7466, %v7491
    %v7517 = vadd.f32 %v7467, %v7492
    %v7518 = vadd.f32 %v7468, %v7493
    %v7519 = vadd.f32 %v7469, %v7494
    %v7520 = vadd.f32 %v7470, %v7495
    %v7521 = vadd.f32 %v7471, %v7496
    %v7522 = vadd.f32 %v7472, %v7497
    %v7523 = vadd.f32 %v7473, %v7498
    %v7524 = vadd.f32 %v7474, %v7499
    %s7525 = scalar_lea.vmem %s2, 1000
    %7526 = vst [vmem:[%s7525] sm:$0x1f] %v7500
    %7527 = vst [vmem:[%s7525 + $0x8] sm:$0x1f] %v7501
    %7528 = vst [vmem:[%s7525 + $0x10] sm:$0x1f] %v7502
    %7529 = vst [vmem:[%s7525 + $0x18] sm:$0x1f] %v7503
    %7530 = vst [vmem:[%s7525 + $0x20] sm:$0x1f] %v7504
    %7531 = vst [vmem:[%s7525 + $0x28] sm:$0x1f] %v7505
    %7532 = vst [vmem:[%s7525 + $0x30] sm:$0x1f] %v7506
    %7533 = vst [vmem:[%s7525 + $0x38] sm:$0x1f] %v7507
    %7534 = vst [vmem:[%s7525 + $0x40] sm:$0x1f] %v7508
    %7535 = vst [vmem:[%s7525 + $0x48] sm:$0x1f] %v7509
    %7536 = vst [vmem:[%s7525 + $0x50] sm:$0x1f] %v7510
    %7537 = vst [vmem:[%s7525 + $0x58] sm:$0x1f] %v7511
    %7538 = vst [vmem:[%s7525 + $0x60] sm:$0x1f] %v7512
    %7539 = vst [vmem:[%s7525 + $0x68] sm:$0x1f] %v7513
    %7540 = vst [vmem:[%s7525 + $0x70] sm:$0x1f] %v7514
    %7541 = vst [vmem:[%s7525 + $0x78] sm:$0x1f] %v7515
    %7542 = vst [vmem:[%s7525 + $0x80] sm:$0x1f] %v7516
    %7543 = vst [vmem:[%s7525 + $0x88] sm:$0x1f] %v7517
    %7544 = vst [vmem:[%s7525 + $0x90] sm:$0x1f] %v7518
    %7545 = vst [vmem:[%s7525 + $0x98] sm:$0x1f] %v7519
    %7546 = vst [vmem:[%s7525 + $0xa0] sm:$0x1f] %v7520
    %7547 = vst [vmem:[%s7525 + $0xa8] sm:$0x1f] %v7521
    %7548 = vst [vmem:[%s7525 + $0xb0] sm:$0x1f] %v7522
    %7549 = vst [vmem:[%s7525 + $0xb8] sm:$0x1f] %v7523
    %7550 = vst [vmem:[%s7525 + $0xc0] sm:$0x1f] %v7524
    %v7551 = vld [vmem:[%s3257] sm:$0x1f]
    %v7552 = vld [vmem:[%s3257 + $0x8] sm:$0x1f]
    %v7553 = vld [vmem:[%s3257 + $0x10] sm:$0x1f]
    %v7554 = vld [vmem:[%s3257 + $0x18] sm:$0x1f]
    %v7555 = vld [vmem:[%s3257 + $0x20] sm:$0x1f]
    %v7556 = vld [vmem:[%s3257 + $0x28] sm:$0x1f]
    %v7557 = vld [vmem:[%s3257 + $0x30] sm:$0x1f]
    %v7558 = vld [vmem:[%s3257 + $0x38] sm:$0x1f]
    %v7559 = vld [vmem:[%s3257 + $0x40] sm:$0x1f]
    %v7560 = vld [vmem:[%s3257 + $0x48] sm:$0x1f]
    %v7561 = vld [vmem:[%s3257 + $0x50] sm:$0x1f]
    %v7562 = vld [vmem:[%s3257 + $0x58] sm:$0x1f]
    %v7563 = vld [vmem:[%s3257 + $0x60] sm:$0x1f]
    %v7564 = vld [vmem:[%s3257 + $0x68] sm:$0x1f]
    %v7565 = vld [vmem:[%s3257 + $0x70] sm:$0x1f]
    %v7566 = vld [vmem:[%s3257 + $0x78] sm:$0x1f]
    %v7567 = vld [vmem:[%s3257 + $0x80] sm:$0x1f]
    %v7568 = vld [vmem:[%s3257 + $0x88] sm:$0x1f]
    %v7569 = vld [vmem:[%s3257 + $0x90] sm:$0x1f]
    %v7570 = vld [vmem:[%s3257 + $0x98] sm:$0x1f]
    %v7571 = vld [vmem:[%s3257 + $0xa0] sm:$0x1f]
    %v7572 = vld [vmem:[%s3257 + $0xa8] sm:$0x1f]
    %v7573 = vld [vmem:[%s3257 + $0xb0] sm:$0x1f]
    %v7574 = vld [vmem:[%s3257 + $0xb8] sm:$0x1f]
    %v7575 = vld [vmem:[%s3257 + $0xc0] sm:$0x1f]
    %v7576 = vld [vmem:[%s5911] sm:$0x1f]
    %v7577 = vld [vmem:[%s5911 + $0x8] sm:$0x1f]
    %v7578 = vld [vmem:[%s5911 + $0x10] sm:$0x1f]
    %v7579 = vld [vmem:[%s5911 + $0x18] sm:$0x1f]
    %v7580 = vld [vmem:[%s5911 + $0x20] sm:$0x1f]
    %v7581 = vld [vmem:[%s5911 + $0x28] sm:$0x1f]
    %v7582 = vld [vmem:[%s5911 + $0x30] sm:$0x1f]
    %v7583 = vld [vmem:[%s5911 + $0x38] sm:$0x1f]
    %v7584 = vld [vmem:[%s5911 + $0x40] sm:$0x1f]
    %v7585 = vld [vmem:[%s5911 + $0x48] sm:$0x1f]
    %v7586 = vld [vmem:[%s5911 + $0x50] sm:$0x1f]
    %v7587 = vld [vmem:[%s5911 + $0x58] sm:$0x1f]
    %v7588 = vld [vmem:[%s5911 + $0x60] sm:$0x1f]
    %v7589 = vld [vmem:[%s5911 + $0x68] sm:$0x1f]
    %v7590 = vld [vmem:[%s5911 + $0x70] sm:$0x1f]
    %v7591 = vld [vmem:[%s5911 + $0x78] sm:$0x1f]
    %v7592 = vld [vmem:[%s5911 + $0x80] sm:$0x1f]
    %v7593 = vld [vmem:[%s5911 + $0x88] sm:$0x1f]
    %v7594 = vld [vmem:[%s5911 + $0x90] sm:$0x1f]
    %v7595 = vld [vmem:[%s5911 + $0x98] sm:$0x1f]
    %v7596 = vld [vmem:[%s5911 + $0xa0] sm:$0x1f]
    %v7597 = vld [vmem:[%s5911 + $0xa8] sm:$0x1f]
    %v7598 = vld [vmem:[%s5911 + $0xb0] sm:$0x1f]
    %v7599 = vld [vmem:[%s5911 + $0xb8] sm:$0x1f]
    %v7600 = vld [vmem:[%s5911 + $0xc0] sm:$0x1f]
    %s7601 = scalar_lea.vmem [#allocation3], 520
    %v7602 = vld [vmem:[%s7601] sm:$0x1f]
    %v7603 = vld [vmem:[%s7601 + $0x8] sm:$0x1f]
    %v7604 = vld [vmem:[%s7601 + $0x10] sm:$0x1f]
    %v7605 = vld [vmem:[%s7601 + $0x18] sm:$0x1f]
    %v7606 = vld [vmem:[%s7601 + $0x20] sm:$0x1f]
    %v7607 = vld [vmem:[%s7601 + $0x28] sm:$0x1f]
    %v7608 = vld [vmem:[%s7601 + $0x30] sm:$0x1f]
    %v7609 = vld [vmem:[%s7601 + $0x38] sm:$0x1f]
    %v7610 = vld [vmem:[%s7601 + $0x40] sm:$0x1f]
    %v7611 = vld [vmem:[%s7601 + $0x48] sm:$0x1f]
    %v7612 = vld [vmem:[%s7601 + $0x50] sm:$0x1f]
    %v7613 = vld [vmem:[%s7601 + $0x58] sm:$0x1f]
    %v7614 = vld [vmem:[%s7601 + $0x60] sm:$0x1f]
    %v7615 = vld [vmem:[%s7601 + $0x68] sm:$0x1f]
    %v7616 = vld [vmem:[%s7601 + $0x70] sm:$0x1f]
    %v7617 = vld [vmem:[%s7601 + $0x78] sm:$0x1f]
    %v7618 = vld [vmem:[%s7601 + $0x80] sm:$0x1f]
    %v7619 = vld [vmem:[%s7601 + $0x88] sm:$0x1f]
    %v7620 = vld [vmem:[%s7601 + $0x90] sm:$0x1f]
    %v7621 = vld [vmem:[%s7601 + $0x98] sm:$0x1f]
    %v7622 = vld [vmem:[%s7601 + $0xa0] sm:$0x1f]
    %v7623 = vld [vmem:[%s7601 + $0xa8] sm:$0x1f]
    %v7624 = vld [vmem:[%s7601 + $0xb0] sm:$0x1f]
    %v7625 = vld [vmem:[%s7601 + $0xb8] sm:$0x1f]
    %v7626 = vld [vmem:[%s7601 + $0xc0] sm:$0x1f]
    %s7627 = scalar_lea.vmem [#allocation3], 1480
    %v7628 = vld [vmem:[%s7627] sm:$0x1f]
    %v7629 = vld [vmem:[%s7627 + $0x8] sm:$0x1f]
    %v7630 = vld [vmem:[%s7627 + $0x10] sm:$0x1f]
    %v7631 = vld [vmem:[%s7627 + $0x18] sm:$0x1f]
    %v7632 = vld [vmem:[%s7627 + $0x20] sm:$0x1f]
    %v7633 = vld [vmem:[%s7627 + $0x28] sm:$0x1f]
    %v7634 = vld [vmem:[%s7627 + $0x30] sm:$0x1f]
    %v7635 = vld [vmem:[%s7627 + $0x38] sm:$0x1f]
    %v7636 = vld [vmem:[%s7627 + $0x40] sm:$0x1f]
    %v7637 = vld [vmem:[%s7627 + $0x48] sm:$0x1f]
    %v7638 = vld [vmem:[%s7627 + $0x50] sm:$0x1f]
    %v7639 = vld [vmem:[%s7627 + $0x58] sm:$0x1f]
    %v7640 = vld [vmem:[%s7627 + $0x60] sm:$0x1f]
    %v7641 = vld [vmem:[%s7627 + $0x68] sm:$0x1f]
    %v7642 = vld [vmem:[%s7627 + $0x70] sm:$0x1f]
    %v7643 = vld [vmem:[%s7627 + $0x78] sm:$0x1f]
    %v7644 = vld [vmem:[%s7627 + $0x80] sm:$0x1f]
    %v7645 = vld [vmem:[%s7627 + $0x88] sm:$0x1f]
    %v7646 = vld [vmem:[%s7627 + $0x90] sm:$0x1f]
    %v7647 = vld [vmem:[%s7627 + $0x98] sm:$0x1f]
    %v7648 = vld [vmem:[%s7627 + $0xa0] sm:$0x1f]
    %v7649 = vld [vmem:[%s7627 + $0xa8] sm:$0x1f]
    %v7650 = vld [vmem:[%s7627 + $0xb0] sm:$0x1f]
    %v7651 = vld [vmem:[%s7627 + $0xb8] sm:$0x1f]
    %v7652 = vld [vmem:[%s7627 + $0xc0] sm:$0x1f]
    %v7653 = vmul.f32 %v7551, 0.4829629
    %v7654 = vmul.f32 %v7552, 0.4829629
    %v7655 = vmul.f32 %v7553, 0.4829629
    %v7656 = vmul.f32 %v7554, 0.4829629
    %v7657 = vmul.f32 %v7555, 0.4829629
    %v7658 = vmul.f32 %v7556, 0.4829629
    %v7659 = vmul.f32 %v7557, 0.4829629
    %v7660 = vmul.f32 %v7558, 0.4829629
    %v7661 = vmul.f32 %v7559, 0.4829629
    %v7662 = vmul.f32 %v7560, 0.4829629
    %v7663 = vmul.f32 %v7561, 0.4829629
    %v7664 = vmul.f32 %v7562, 0.4829629
    %v7665 = vmul.f32 %v7563, 0.4829629
    %v7666 = vmul.f32 %v7564, 0.4829629
    %v7667 = vmul.f32 %v7565, 0.4829629
    %v7668 = vmul.f32 %v7566, 0.4829629
    %v7669 = vmul.f32 %v7567, 0.4829629
    %v7670 = vmul.f32 %v7568, 0.4829629
    %v7671 = vmul.f32 %v7569, 0.4829629
    %v7672 = vmul.f32 %v7570, 0.4829629
    %v7673 = vmul.f32 %v7571, 0.4829629
    %v7674 = vmul.f32 %v7572, 0.4829629
    %v7675 = vmul.f32 %v7573, 0.4829629
    %v7676 = vmul.f32 %v7574, 0.4829629
    %v7677 = vmul.f32 %v7575, 0.4829629
    %v7678 = vmul.f32 %v7576, 0.8365163
    %v7679 = vmul.f32 %v7577, 0.8365163
    %v7680 = vmul.f32 %v7578, 0.8365163
    %v7681 = vmul.f32 %v7579, 0.8365163
    %v7682 = vmul.f32 %v7580, 0.8365163
    %v7683 = vmul.f32 %v7581, 0.8365163
    %v7684 = vmul.f32 %v7582, 0.8365163
    %v7685 = vmul.f32 %v7583, 0.8365163
    %v7686 = vmul.f32 %v7584, 0.8365163
    %v7687 = vmul.f32 %v7585, 0.8365163
    %v7688 = vmul.f32 %v7586, 0.8365163
    %v7689 = vmul.f32 %v7587, 0.8365163
    %v7690 = vmul.f32 %v7588, 0.8365163
    %v7691 = vmul.f32 %v7589, 0.8365163
    %v7692 = vmul.f32 %v7590, 0.8365163
    %v7693 = vmul.f32 %v7591, 0.8365163
    %v7694 = vmul.f32 %v7592, 0.8365163
    %v7695 = vmul.f32 %v7593, 0.8365163
    %v7696 = vmul.f32 %v7594, 0.8365163
    %v7697 = vmul.f32 %v7595, 0.8365163
    %v7698 = vmul.f32 %v7596, 0.8365163
    %v7699 = vmul.f32 %v7597, 0.8365163
    %v7700 = vmul.f32 %v7598, 0.8365163
    %v7701 = vmul.f32 %v7599, 0.8365163
    %v7702 = vmul.f32 %v7600, 0.8365163
    %v7703 = vadd.f32 %v7653, %v7678
    %v7704 = vadd.f32 %v7654, %v7679
    %v7705 = vadd.f32 %v7655, %v7680
    %v7706 = vadd.f32 %v7656, %v7681
    %v7707 = vadd.f32 %v7657, %v7682
    %v7708 = vadd.f32 %v7658, %v7683
    %v7709 = vadd.f32 %v7659, %v7684
    %v7710 = vadd.f32 %v7660, %v7685
    %v7711 = vadd.f32 %v7661, %v7686
    %v7712 = vadd.f32 %v7662, %v7687
    %v7713 = vadd.f32 %v7663, %v7688
    %v7714 = vadd.f32 %v7664, %v7689
    %v7715 = vadd.f32 %v7665, %v7690
    %v7716 = vadd.f32 %v7666, %v7691
    %v7717 = vadd.f32 %v7667, %v7692
    %v7718 = vadd.f32 %v7668, %v7693
    %v7719 = vadd.f32 %v7669, %v7694
    %v7720 = vadd.f32 %v7670, %v7695
    %v7721 = vadd.f32 %v7671, %v7696
    %v7722 = vadd.f32 %v7672, %v7697
    %v7723 = vadd.f32 %v7673, %v7698
    %v7724 = vadd.f32 %v7674, %v7699
    %v7725 = vadd.f32 %v7675, %v7700
    %v7726 = vadd.f32 %v7676, %v7701
    %v7727 = vadd.f32 %v7677, %v7702
    %v7728 = vmul.f32 %v7602, 0.22414386
    %v7729 = vmul.f32 %v7603, 0.22414386
    %v7730 = vmul.f32 %v7604, 0.22414386
    %v7731 = vmul.f32 %v7605, 0.22414386
    %v7732 = vmul.f32 %v7606, 0.22414386
    %v7733 = vmul.f32 %v7607, 0.22414386
    %v7734 = vmul.f32 %v7608, 0.22414386
    %v7735 = vmul.f32 %v7609, 0.22414386
    %v7736 = vmul.f32 %v7610, 0.22414386
    %v7737 = vmul.f32 %v7611, 0.22414386
    %v7738 = vmul.f32 %v7612, 0.22414386
    %v7739 = vmul.f32 %v7613, 0.22414386
    %v7740 = vmul.f32 %v7614, 0.22414386
    %v7741 = vmul.f32 %v7615, 0.22414386
    %v7742 = vmul.f32 %v7616, 0.22414386
    %v7743 = vmul.f32 %v7617, 0.22414386
    %v7744 = vmul.f32 %v7618, 0.22414386
    %v7745 = vmul.f32 %v7619, 0.22414386
    %v7746 = vmul.f32 %v7620, 0.22414386
    %v7747 = vmul.f32 %v7621, 0.22414386
    %v7748 = vmul.f32 %v7622, 0.22414386
    %v7749 = vmul.f32 %v7623, 0.22414386
    %v7750 = vmul.f32 %v7624, 0.22414386
    %v7751 = vmul.f32 %v7625, 0.22414386
    %v7752 = vmul.f32 %v7626, 0.22414386
    %v7753 = vadd.f32 %v7703, %v7728
    %v7754 = vadd.f32 %v7704, %v7729
    %v7755 = vadd.f32 %v7705, %v7730
    %v7756 = vadd.f32 %v7706, %v7731
    %v7757 = vadd.f32 %v7707, %v7732
    %v7758 = vadd.f32 %v7708, %v7733
    %v7759 = vadd.f32 %v7709, %v7734
    %v7760 = vadd.f32 %v7710, %v7735
    %v7761 = vadd.f32 %v7711, %v7736
    %v7762 = vadd.f32 %v7712, %v7737
    %v7763 = vadd.f32 %v7713, %v7738
    %v7764 = vadd.f32 %v7714, %v7739
    %v7765 = vadd.f32 %v7715, %v7740
    %v7766 = vadd.f32 %v7716, %v7741
    %v7767 = vadd.f32 %v7717, %v7742
    %v7768 = vadd.f32 %v7718, %v7743
    %v7769 = vadd.f32 %v7719, %v7744
    %v7770 = vadd.f32 %v7720, %v7745
    %v7771 = vadd.f32 %v7721, %v7746
    %v7772 = vadd.f32 %v7722, %v7747
    %v7773 = vadd.f32 %v7723, %v7748
    %v7774 = vadd.f32 %v7724, %v7749
    %v7775 = vadd.f32 %v7725, %v7750
    %v7776 = vadd.f32 %v7726, %v7751
    %v7777 = vadd.f32 %v7727, %v7752
    %v7778 = vmul.f32 %v7628, -0.12940952
    %v7779 = vmul.f32 %v7629, -0.12940952
    %v7780 = vmul.f32 %v7630, -0.12940952
    %v7781 = vmul.f32 %v7631, -0.12940952
    %v7782 = vmul.f32 %v7632, -0.12940952
    %v7783 = vmul.f32 %v7633, -0.12940952
    %v7784 = vmul.f32 %v7634, -0.12940952
    %v7785 = vmul.f32 %v7635, -0.12940952
    %v7786 = vmul.f32 %v7636, -0.12940952
    %v7787 = vmul.f32 %v7637, -0.12940952
    %v7788 = vmul.f32 %v7638, -0.12940952
    %v7789 = vmul.f32 %v7639, -0.12940952
    %v7790 = vmul.f32 %v7640, -0.12940952
    %v7791 = vmul.f32 %v7641, -0.12940952
    %v7792 = vmul.f32 %v7642, -0.12940952
    %v7793 = vmul.f32 %v7643, -0.12940952
    %v7794 = vmul.f32 %v7644, -0.12940952
    %v7795 = vmul.f32 %v7645, -0.12940952
    %v7796 = vmul.f32 %v7646, -0.12940952
    %v7797 = vmul.f32 %v7647, -0.12940952
    %v7798 = vmul.f32 %v7648, -0.12940952
    %v7799 = vmul.f32 %v7649, -0.12940952
    %v7800 = vmul.f32 %v7650, -0.12940952
    %v7801 = vmul.f32 %v7651, -0.12940952
    %v7802 = vmul.f32 %v7652, -0.12940952
    %v7803 = vadd.f32 %v7753, %v7778
    %v7804 = vadd.f32 %v7754, %v7779
    %v7805 = vadd.f32 %v7755, %v7780
    %v7806 = vadd.f32 %v7756, %v7781
    %v7807 = vadd.f32 %v7757, %v7782
    %v7808 = vadd.f32 %v7758, %v7783
    %v7809 = vadd.f32 %v7759, %v7784
    %v7810 = vadd.f32 %v7760, %v7785
    %v7811 = vadd.f32 %v7761, %v7786
    %v7812 = vadd.f32 %v7762, %v7787
    %v7813 = vadd.f32 %v7763, %v7788
    %v7814 = vadd.f32 %v7764, %v7789
    %v7815 = vadd.f32 %v7765, %v7790
    %v7816 = vadd.f32 %v7766, %v7791
    %v7817 = vadd.f32 %v7767, %v7792
    %v7818 = vadd.f32 %v7768, %v7793
    %v7819 = vadd.f32 %v7769, %v7794
    %v7820 = vadd.f32 %v7770, %v7795
    %v7821 = vadd.f32 %v7771, %v7796
    %v7822 = vadd.f32 %v7772, %v7797
    %v7823 = vadd.f32 %v7773, %v7798
    %v7824 = vadd.f32 %v7774, %v7799
    %v7825 = vadd.f32 %v7775, %v7800
    %v7826 = vadd.f32 %v7776, %v7801
    %v7827 = vadd.f32 %v7777, %v7802
    %s7828 = scalar_lea.vmem %s2, 400
    %7829 = vst [vmem:[%s7828] sm:$0x1f] %v7803
    %7830 = vst [vmem:[%s7828 + $0x8] sm:$0x1f] %v7804
    %7831 = vst [vmem:[%s7828 + $0x10] sm:$0x1f] %v7805
    %7832 = vst [vmem:[%s7828 + $0x18] sm:$0x1f] %v7806
    %7833 = vst [vmem:[%s7828 + $0x20] sm:$0x1f] %v7807
    %7834 = vst [vmem:[%s7828 + $0x28] sm:$0x1f] %v7808
    %7835 = vst [vmem:[%s7828 + $0x30] sm:$0x1f] %v7809
    %7836 = vst [vmem:[%s7828 + $0x38] sm:$0x1f] %v7810
    %7837 = vst [vmem:[%s7828 + $0x40] sm:$0x1f] %v7811
    %7838 = vst [vmem:[%s7828 + $0x48] sm:$0x1f] %v7812
    %7839 = vst [vmem:[%s7828 + $0x50] sm:$0x1f] %v7813
    %7840 = vst [vmem:[%s7828 + $0x58] sm:$0x1f] %v7814
    %7841 = vst [vmem:[%s7828 + $0x60] sm:$0x1f] %v7815
    %7842 = vst [vmem:[%s7828 + $0x68] sm:$0x1f] %v7816
    %7843 = vst [vmem:[%s7828 + $0x70] sm:$0x1f] %v7817
    %7844 = vst [vmem:[%s7828 + $0x78] sm:$0x1f] %v7818
    %7845 = vst [vmem:[%s7828 + $0x80] sm:$0x1f] %v7819
    %7846 = vst [vmem:[%s7828 + $0x88] sm:$0x1f] %v7820
    %7847 = vst [vmem:[%s7828 + $0x90] sm:$0x1f] %v7821
    %7848 = vst [vmem:[%s7828 + $0x98] sm:$0x1f] %v7822
    %7849 = vst [vmem:[%s7828 + $0xa0] sm:$0x1f] %v7823
    %7850 = vst [vmem:[%s7828 + $0xa8] sm:$0x1f] %v7824
    %7851 = vst [vmem:[%s7828 + $0xb0] sm:$0x1f] %v7825
    %7852 = vst [vmem:[%s7828 + $0xb8] sm:$0x1f] %v7826
    %7853 = vst [vmem:[%s7828 + $0xc0] sm:$0x1f] %v7827
    %v7854 = vmul.f32 %v7551, -0.12940952
    %v7855 = vmul.f32 %v7552, -0.12940952
    %v7856 = vmul.f32 %v7553, -0.12940952
    %v7857 = vmul.f32 %v7554, -0.12940952
    %v7858 = vmul.f32 %v7555, -0.12940952
    %v7859 = vmul.f32 %v7556, -0.12940952
    %v7860 = vmul.f32 %v7557, -0.12940952
    %v7861 = vmul.f32 %v7558, -0.12940952
    %v7862 = vmul.f32 %v7559, -0.12940952
    %v7863 = vmul.f32 %v7560, -0.12940952
    %v7864 = vmul.f32 %v7561, -0.12940952
    %v7865 = vmul.f32 %v7562, -0.12940952
    %v7866 = vmul.f32 %v7563, -0.12940952
    %v7867 = vmul.f32 %v7564, -0.12940952
    %v7868 = vmul.f32 %v7565, -0.12940952
    %v7869 = vmul.f32 %v7566, -0.12940952
    %v7870 = vmul.f32 %v7567, -0.12940952
    %v7871 = vmul.f32 %v7568, -0.12940952
    %v7872 = vmul.f32 %v7569, -0.12940952
    %v7873 = vmul.f32 %v7570, -0.12940952
    %v7874 = vmul.f32 %v7571, -0.12940952
    %v7875 = vmul.f32 %v7572, -0.12940952
    %v7876 = vmul.f32 %v7573, -0.12940952
    %v7877 = vmul.f32 %v7574, -0.12940952
    %v7878 = vmul.f32 %v7575, -0.12940952
    %v7879 = vmul.f32 %v7576, -0.22414386
    %v7880 = vmul.f32 %v7577, -0.22414386
    %v7881 = vmul.f32 %v7578, -0.22414386
    %v7882 = vmul.f32 %v7579, -0.22414386
    %v7883 = vmul.f32 %v7580, -0.22414386
    %v7884 = vmul.f32 %v7581, -0.22414386
    %v7885 = vmul.f32 %v7582, -0.22414386
    %v7886 = vmul.f32 %v7583, -0.22414386
    %v7887 = vmul.f32 %v7584, -0.22414386
    %v7888 = vmul.f32 %v7585, -0.22414386
    %v7889 = vmul.f32 %v7586, -0.22414386
    %v7890 = vmul.f32 %v7587, -0.22414386
    %v7891 = vmul.f32 %v7588, -0.22414386
    %v7892 = vmul.f32 %v7589, -0.22414386
    %v7893 = vmul.f32 %v7590, -0.22414386
    %v7894 = vmul.f32 %v7591, -0.22414386
    %v7895 = vmul.f32 %v7592, -0.22414386
    %v7896 = vmul.f32 %v7593, -0.22414386
    %v7897 = vmul.f32 %v7594, -0.22414386
    %v7898 = vmul.f32 %v7595, -0.22414386
    %v7899 = vmul.f32 %v7596, -0.22414386
    %v7900 = vmul.f32 %v7597, -0.22414386
    %v7901 = vmul.f32 %v7598, -0.22414386
    %v7902 = vmul.f32 %v7599, -0.22414386
    %v7903 = vmul.f32 %v7600, -0.22414386
    %v7904 = vadd.f32 %v7854, %v7879
    %v7905 = vadd.f32 %v7855, %v7880
    %v7906 = vadd.f32 %v7856, %v7881
    %v7907 = vadd.f32 %v7857, %v7882
    %v7908 = vadd.f32 %v7858, %v7883
    %v7909 = vadd.f32 %v7859, %v7884
    %v7910 = vadd.f32 %v7860, %v7885
    %v7911 = vadd.f32 %v7861, %v7886
    %v7912 = vadd.f32 %v7862, %v7887
    %v7913 = vadd.f32 %v7863, %v7888
    %v7914 = vadd.f32 %v7864, %v7889
    %v7915 = vadd.f32 %v7865, %v7890
    %v7916 = vadd.f32 %v7866, %v7891
    %v7917 = vadd.f32 %v7867, %v7892
    %v7918 = vadd.f32 %v7868, %v7893
    %v7919 = vadd.f32 %v7869, %v7894
    %v7920 = vadd.f32 %v7870, %v7895
    %v7921 = vadd.f32 %v7871, %v7896
    %v7922 = vadd.f32 %v7872, %v7897
    %v7923 = vadd.f32 %v7873, %v7898
    %v7924 = vadd.f32 %v7874, %v7899
    %v7925 = vadd.f32 %v7875, %v7900
    %v7926 = vadd.f32 %v7876, %v7901
    %v7927 = vadd.f32 %v7877, %v7902
    %v7928 = vadd.f32 %v7878, %v7903
    %v7929 = vmul.f32 %v7602, 0.8365163
    %v7930 = vmul.f32 %v7603, 0.8365163
    %v7931 = vmul.f32 %v7604, 0.8365163
    %v7932 = vmul.f32 %v7605, 0.8365163
    %v7933 = vmul.f32 %v7606, 0.8365163
    %v7934 = vmul.f32 %v7607, 0.8365163
    %v7935 = vmul.f32 %v7608, 0.8365163
    %v7936 = vmul.f32 %v7609, 0.8365163
    %v7937 = vmul.f32 %v7610, 0.8365163
    %v7938 = vmul.f32 %v7611, 0.8365163
    %v7939 = vmul.f32 %v7612, 0.8365163
    %v7940 = vmul.f32 %v7613, 0.8365163
    %v7941 = vmul.f32 %v7614, 0.8365163
    %v7942 = vmul.f32 %v7615, 0.8365163
    %v7943 = vmul.f32 %v7616, 0.8365163
    %v7944 = vmul.f32 %v7617, 0.8365163
    %v7945 = vmul.f32 %v7618, 0.8365163
    %v7946 = vmul.f32 %v7619, 0.8365163
    %v7947 = vmul.f32 %v7620, 0.8365163
    %v7948 = vmul.f32 %v7621, 0.8365163
    %v7949 = vmul.f32 %v7622, 0.8365163
    %v7950 = vmul.f32 %v7623, 0.8365163
    %v7951 = vmul.f32 %v7624, 0.8365163
    %v7952 = vmul.f32 %v7625, 0.8365163
    %v7953 = vmul.f32 %v7626, 0.8365163
    %v7954 = vadd.f32 %v7904, %v7929
    %v7955 = vadd.f32 %v7905, %v7930
    %v7956 = vadd.f32 %v7906, %v7931
    %v7957 = vadd.f32 %v7907, %v7932
    %v7958 = vadd.f32 %v7908, %v7933
    %v7959 = vadd.f32 %v7909, %v7934
    %v7960 = vadd.f32 %v7910, %v7935
    %v7961 = vadd.f32 %v7911, %v7936
    %v7962 = vadd.f32 %v7912, %v7937
    %v7963 = vadd.f32 %v7913, %v7938
    %v7964 = vadd.f32 %v7914, %v7939
    %v7965 = vadd.f32 %v7915, %v7940
    %v7966 = vadd.f32 %v7916, %v7941
    %v7967 = vadd.f32 %v7917, %v7942
    %v7968 = vadd.f32 %v7918, %v7943
    %v7969 = vadd.f32 %v7919, %v7944
    %v7970 = vadd.f32 %v7920, %v7945
    %v7971 = vadd.f32 %v7921, %v7946
    %v7972 = vadd.f32 %v7922, %v7947
    %v7973 = vadd.f32 %v7923, %v7948
    %v7974 = vadd.f32 %v7924, %v7949
    %v7975 = vadd.f32 %v7925, %v7950
    %v7976 = vadd.f32 %v7926, %v7951
    %v7977 = vadd.f32 %v7927, %v7952
    %v7978 = vadd.f32 %v7928, %v7953
    %v7979 = vmul.f32 %v7628, -0.4829629
    %v7980 = vmul.f32 %v7629, -0.4829629
    %v7981 = vmul.f32 %v7630, -0.4829629
    %v7982 = vmul.f32 %v7631, -0.4829629
    %v7983 = vmul.f32 %v7632, -0.4829629
    %v7984 = vmul.f32 %v7633, -0.4829629
    %v7985 = vmul.f32 %v7634, -0.4829629
    %v7986 = vmul.f32 %v7635, -0.4829629
    %v7987 = vmul.f32 %v7636, -0.4829629
    %v7988 = vmul.f32 %v7637, -0.4829629
    %v7989 = vmul.f32 %v7638, -0.4829629
    %v7990 = vmul.f32 %v7639, -0.4829629
    %v7991 = vmul.f32 %v7640, -0.4829629
    %v7992 = vmul.f32 %v7641, -0.4829629
    %v7993 = vmul.f32 %v7642, -0.4829629
    %v7994 = vmul.f32 %v7643, -0.4829629
    %v7995 = vmul.f32 %v7644, -0.4829629
    %v7996 = vmul.f32 %v7645, -0.4829629
    %v7997 = vmul.f32 %v7646, -0.4829629
    %v7998 = vmul.f32 %v7647, -0.4829629
    %v7999 = vmul.f32 %v7648, -0.4829629
    %v8000 = vmul.f32 %v7649, -0.4829629
    %v8001 = vmul.f32 %v7650, -0.4829629
    %v8002 = vmul.f32 %v7651, -0.4829629
    %v8003 = vmul.f32 %v7652, -0.4829629
    %v8004 = vadd.f32 %v7954, %v7979
    %v8005 = vadd.f32 %v7955, %v7980
    %v8006 = vadd.f32 %v7956, %v7981
    %v8007 = vadd.f32 %v7957, %v7982
    %v8008 = vadd.f32 %v7958, %v7983
    %v8009 = vadd.f32 %v7959, %v7984
    %v8010 = vadd.f32 %v7960, %v7985
    %v8011 = vadd.f32 %v7961, %v7986
    %v8012 = vadd.f32 %v7962, %v7987
    %v8013 = vadd.f32 %v7963, %v7988
    %v8014 = vadd.f32 %v7964, %v7989
    %v8015 = vadd.f32 %v7965, %v7990
    %v8016 = vadd.f32 %v7966, %v7991
    %v8017 = vadd.f32 %v7967, %v7992
    %v8018 = vadd.f32 %v7968, %v7993
    %v8019 = vadd.f32 %v7969, %v7994
    %v8020 = vadd.f32 %v7970, %v7995
    %v8021 = vadd.f32 %v7971, %v7996
    %v8022 = vadd.f32 %v7972, %v7997
    %v8023 = vadd.f32 %v7973, %v7998
    %v8024 = vadd.f32 %v7974, %v7999
    %v8025 = vadd.f32 %v7975, %v8000
    %v8026 = vadd.f32 %v7976, %v8001
    %v8027 = vadd.f32 %v7977, %v8002
    %v8028 = vadd.f32 %v7978, %v8003
    %s8029 = scalar_lea.vmem %s2, 1200
    %8030 = vst [vmem:[%s8029] sm:$0x1f] %v8004
    %8031 = vst [vmem:[%s8029 + $0x8] sm:$0x1f] %v8005
    %8032 = vst [vmem:[%s8029 + $0x10] sm:$0x1f] %v8006
    %8033 = vst [vmem:[%s8029 + $0x18] sm:$0x1f] %v8007
    %8034 = vst [vmem:[%s8029 + $0x20] sm:$0x1f] %v8008
    %8035 = vst [vmem:[%s8029 + $0x28] sm:$0x1f] %v8009
    %8036 = vst [vmem:[%s8029 + $0x30] sm:$0x1f] %v8010
    %8037 = vst [vmem:[%s8029 + $0x38] sm:$0x1f] %v8011
    %8038 = vst [vmem:[%s8029 + $0x40] sm:$0x1f] %v8012
    %8039 = vst [vmem:[%s8029 + $0x48] sm:$0x1f] %v8013
    %8040 = vst [vmem:[%s8029 + $0x50] sm:$0x1f] %v8014
    %8041 = vst [vmem:[%s8029 + $0x58] sm:$0x1f] %v8015
    %8042 = vst [vmem:[%s8029 + $0x60] sm:$0x1f] %v8016
    %8043 = vst [vmem:[%s8029 + $0x68] sm:$0x1f] %v8017
    %8044 = vst [vmem:[%s8029 + $0x70] sm:$0x1f] %v8018
    %8045 = vst [vmem:[%s8029 + $0x78] sm:$0x1f] %v8019
    %8046 = vst [vmem:[%s8029 + $0x80] sm:$0x1f] %v8020
    %8047 = vst [vmem:[%s8029 + $0x88] sm:$0x1f] %v8021
    %8048 = vst [vmem:[%s8029 + $0x90] sm:$0x1f] %v8022
    %8049 = vst [vmem:[%s8029 + $0x98] sm:$0x1f] %v8023
    %8050 = vst [vmem:[%s8029 + $0xa0] sm:$0x1f] %v8024
    %8051 = vst [vmem:[%s8029 + $0xa8] sm:$0x1f] %v8025
    %8052 = vst [vmem:[%s8029 + $0xb0] sm:$0x1f] %v8026
    %8053 = vst [vmem:[%s8029 + $0xb8] sm:$0x1f] %v8027
    %8054 = vst [vmem:[%s8029 + $0xc0] sm:$0x1f] %v8028
    %v8055 = vld [vmem:[%s3861] sm:$0x1f]
    %v8056 = vld [vmem:[%s3861 + $0x8] sm:$0x1f]
    %v8057 = vld [vmem:[%s3861 + $0x10] sm:$0x1f]
    %v8058 = vld [vmem:[%s3861 + $0x18] sm:$0x1f]
    %v8059 = vld [vmem:[%s3861 + $0x20] sm:$0x1f]
    %v8060 = vld [vmem:[%s3861 + $0x28] sm:$0x1f]
    %v8061 = vld [vmem:[%s3861 + $0x30] sm:$0x1f]
    %v8062 = vld [vmem:[%s3861 + $0x38] sm:$0x1f]
    %v8063 = vld [vmem:[%s3861 + $0x40] sm:$0x1f]
    %v8064 = vld [vmem:[%s3861 + $0x48] sm:$0x1f]
    %v8065 = vld [vmem:[%s3861 + $0x50] sm:$0x1f]
    %v8066 = vld [vmem:[%s3861 + $0x58] sm:$0x1f]
    %v8067 = vld [vmem:[%s3861 + $0x60] sm:$0x1f]
    %v8068 = vld [vmem:[%s3861 + $0x68] sm:$0x1f]
    %v8069 = vld [vmem:[%s3861 + $0x70] sm:$0x1f]
    %v8070 = vld [vmem:[%s3861 + $0x78] sm:$0x1f]
    %v8071 = vld [vmem:[%s3861 + $0x80] sm:$0x1f]
    %v8072 = vld [vmem:[%s3861 + $0x88] sm:$0x1f]
    %v8073 = vld [vmem:[%s3861 + $0x90] sm:$0x1f]
    %v8074 = vld [vmem:[%s3861 + $0x98] sm:$0x1f]
    %v8075 = vld [vmem:[%s3861 + $0xa0] sm:$0x1f]
    %v8076 = vld [vmem:[%s3861 + $0xa8] sm:$0x1f]
    %v8077 = vld [vmem:[%s3861 + $0xb0] sm:$0x1f]
    %v8078 = vld [vmem:[%s3861 + $0xb8] sm:$0x1f]
    %v8079 = vld [vmem:[%s3861 + $0xc0] sm:$0x1f]
    %v8080 = vld [vmem:[%s6513] sm:$0x1f]
    %v8081 = vld [vmem:[%s6513 + $0x8] sm:$0x1f]
    %v8082 = vld [vmem:[%s6513 + $0x10] sm:$0x1f]
    %v8083 = vld [vmem:[%s6513 + $0x18] sm:$0x1f]
    %v8084 = vld [vmem:[%s6513 + $0x20] sm:$0x1f]
    %v8085 = vld [vmem:[%s6513 + $0x28] sm:$0x1f]
    %v8086 = vld [vmem:[%s6513 + $0x30] sm:$0x1f]
    %v8087 = vld [vmem:[%s6513 + $0x38] sm:$0x1f]
    %v8088 = vld [vmem:[%s6513 + $0x40] sm:$0x1f]
    %v8089 = vld [vmem:[%s6513 + $0x48] sm:$0x1f]
    %v8090 = vld [vmem:[%s6513 + $0x50] sm:$0x1f]
    %v8091 = vld [vmem:[%s6513 + $0x58] sm:$0x1f]
    %v8092 = vld [vmem:[%s6513 + $0x60] sm:$0x1f]
    %v8093 = vld [vmem:[%s6513 + $0x68] sm:$0x1f]
    %v8094 = vld [vmem:[%s6513 + $0x70] sm:$0x1f]
    %v8095 = vld [vmem:[%s6513 + $0x78] sm:$0x1f]
    %v8096 = vld [vmem:[%s6513 + $0x80] sm:$0x1f]
    %v8097 = vld [vmem:[%s6513 + $0x88] sm:$0x1f]
    %v8098 = vld [vmem:[%s6513 + $0x90] sm:$0x1f]
    %v8099 = vld [vmem:[%s6513 + $0x98] sm:$0x1f]
    %v8100 = vld [vmem:[%s6513 + $0xa0] sm:$0x1f]
    %v8101 = vld [vmem:[%s6513 + $0xa8] sm:$0x1f]
    %v8102 = vld [vmem:[%s6513 + $0xb0] sm:$0x1f]
    %v8103 = vld [vmem:[%s6513 + $0xb8] sm:$0x1f]
    %v8104 = vld [vmem:[%s6513 + $0xc0] sm:$0x1f]
    %s8105 = scalar_lea.vmem [#allocation3], 760
    %v8106 = vld [vmem:[%s8105] sm:$0x1f]
    %v8107 = vld [vmem:[%s8105 + $0x8] sm:$0x1f]
    %v8108 = vld [vmem:[%s8105 + $0x10] sm:$0x1f]
    %v8109 = vld [vmem:[%s8105 + $0x18] sm:$0x1f]
    %v8110 = vld [vmem:[%s8105 + $0x20] sm:$0x1f]
    %v8111 = vld [vmem:[%s8105 + $0x28] sm:$0x1f]
    %v8112 = vld [vmem:[%s8105 + $0x30] sm:$0x1f]
    %v8113 = vld [vmem:[%s8105 + $0x38] sm:$0x1f]
    %v8114 = vld [vmem:[%s8105 + $0x40] sm:$0x1f]
    %v8115 = vld [vmem:[%s8105 + $0x48] sm:$0x1f]
    %v8116 = vld [vmem:[%s8105 + $0x50] sm:$0x1f]
    %v8117 = vld [vmem:[%s8105 + $0x58] sm:$0x1f]
    %v8118 = vld [vmem:[%s8105 + $0x60] sm:$0x1f]
    %v8119 = vld [vmem:[%s8105 + $0x68] sm:$0x1f]
    %v8120 = vld [vmem:[%s8105 + $0x70] sm:$0x1f]
    %v8121 = vld [vmem:[%s8105 + $0x78] sm:$0x1f]
    %v8122 = vld [vmem:[%s8105 + $0x80] sm:$0x1f]
    %v8123 = vld [vmem:[%s8105 + $0x88] sm:$0x1f]
    %v8124 = vld [vmem:[%s8105 + $0x90] sm:$0x1f]
    %v8125 = vld [vmem:[%s8105 + $0x98] sm:$0x1f]
    %v8126 = vld [vmem:[%s8105 + $0xa0] sm:$0x1f]
    %v8127 = vld [vmem:[%s8105 + $0xa8] sm:$0x1f]
    %v8128 = vld [vmem:[%s8105 + $0xb0] sm:$0x1f]
    %v8129 = vld [vmem:[%s8105 + $0xb8] sm:$0x1f]
    %v8130 = vld [vmem:[%s8105 + $0xc0] sm:$0x1f]
    %s8131 = scalar_lea.vmem [#allocation3], 1720
    %v8132 = vld [vmem:[%s8131] sm:$0x1f]
    %v8133 = vld [vmem:[%s8131 + $0x8] sm:$0x1f]
    %v8134 = vld [vmem:[%s8131 + $0x10] sm:$0x1f]
    %v8135 = vld [vmem:[%s8131 + $0x18] sm:$0x1f]
    %v8136 = vld [vmem:[%s8131 + $0x20] sm:$0x1f]
    %v8137 = vld [vmem:[%s8131 + $0x28] sm:$0x1f]
    %v8138 = vld [vmem:[%s8131 + $0x30] sm:$0x1f]
    %v8139 = vld [vmem:[%s8131 + $0x38] sm:$0x1f]
    %v8140 = vld [vmem:[%s8131 + $0x40] sm:$0x1f]
    %v8141 = vld [vmem:[%s8131 + $0x48] sm:$0x1f]
    %v8142 = vld [vmem:[%s8131 + $0x50] sm:$0x1f]
    %v8143 = vld [vmem:[%s8131 + $0x58] sm:$0x1f]
    %v8144 = vld [vmem:[%s8131 + $0x60] sm:$0x1f]
    %v8145 = vld [vmem:[%s8131 + $0x68] sm:$0x1f]
    %v8146 = vld [vmem:[%s8131 + $0x70] sm:$0x1f]
    %v8147 = vld [vmem:[%s8131 + $0x78] sm:$0x1f]
    %v8148 = vld [vmem:[%s8131 + $0x80] sm:$0x1f]
    %v8149 = vld [vmem:[%s8131 + $0x88] sm:$0x1f]
    %v8150 = vld [vmem:[%s8131 + $0x90] sm:$0x1f]
    %v8151 = vld [vmem:[%s8131 + $0x98] sm:$0x1f]
    %v8152 = vld [vmem:[%s8131 + $0xa0] sm:$0x1f]
    %v8153 = vld [vmem:[%s8131 + $0xa8] sm:$0x1f]
    %v8154 = vld [vmem:[%s8131 + $0xb0] sm:$0x1f]
    %v8155 = vld [vmem:[%s8131 + $0xb8] sm:$0x1f]
    %v8156 = vld [vmem:[%s8131 + $0xc0] sm:$0x1f]
    %v8157 = vmul.f32 %v8055, 0.4829629
    %v8158 = vmul.f32 %v8056, 0.4829629
    %v8159 = vmul.f32 %v8057, 0.4829629
    %v8160 = vmul.f32 %v8058, 0.4829629
    %v8161 = vmul.f32 %v8059, 0.4829629
    %v8162 = vmul.f32 %v8060, 0.4829629
    %v8163 = vmul.f32 %v8061, 0.4829629
    %v8164 = vmul.f32 %v8062, 0.4829629
    %v8165 = vmul.f32 %v8063, 0.4829629
    %v8166 = vmul.f32 %v8064, 0.4829629
    %v8167 = vmul.f32 %v8065, 0.4829629
    %v8168 = vmul.f32 %v8066, 0.4829629
    %v8169 = vmul.f32 %v8067, 0.4829629
    %v8170 = vmul.f32 %v8068, 0.4829629
    %v8171 = vmul.f32 %v8069, 0.4829629
    %v8172 = vmul.f32 %v8070, 0.4829629
    %v8173 = vmul.f32 %v8071, 0.4829629
    %v8174 = vmul.f32 %v8072, 0.4829629
    %v8175 = vmul.f32 %v8073, 0.4829629
    %v8176 = vmul.f32 %v8074, 0.4829629
    %v8177 = vmul.f32 %v8075, 0.4829629
    %v8178 = vmul.f32 %v8076, 0.4829629
    %v8179 = vmul.f32 %v8077, 0.4829629
    %v8180 = vmul.f32 %v8078, 0.4829629
    %v8181 = vmul.f32 %v8079, 0.4829629
    %v8182 = vmul.f32 %v8080, 0.8365163
    %v8183 = vmul.f32 %v8081, 0.8365163
    %v8184 = vmul.f32 %v8082, 0.8365163
    %v8185 = vmul.f32 %v8083, 0.8365163
    %v8186 = vmul.f32 %v8084, 0.8365163
    %v8187 = vmul.f32 %v8085, 0.8365163
    %v8188 = vmul.f32 %v8086, 0.8365163
    %v8189 = vmul.f32 %v8087, 0.8365163
    %v8190 = vmul.f32 %v8088, 0.8365163
    %v8191 = vmul.f32 %v8089, 0.8365163
    %v8192 = vmul.f32 %v8090, 0.8365163
    %v8193 = vmul.f32 %v8091, 0.8365163
    %v8194 = vmul.f32 %v8092, 0.8365163
    %v8195 = vmul.f32 %v8093, 0.8365163
    %v8196 = vmul.f32 %v8094, 0.8365163
    %v8197 = vmul.f32 %v8095, 0.8365163
    %v8198 = vmul.f32 %v8096, 0.8365163
    %v8199 = vmul.f32 %v8097, 0.8365163
    %v8200 = vmul.f32 %v8098, 0.8365163
    %v8201 = vmul.f32 %v8099, 0.8365163
    %v8202 = vmul.f32 %v8100, 0.8365163
    %v8203 = vmul.f32 %v8101, 0.8365163
    %v8204 = vmul.f32 %v8102, 0.8365163
    %v8205 = vmul.f32 %v8103, 0.8365163
    %v8206 = vmul.f32 %v8104, 0.8365163
    %v8207 = vadd.f32 %v8157, %v8182
    %v8208 = vadd.f32 %v8158, %v8183
    %v8209 = vadd.f32 %v8159, %v8184
    %v8210 = vadd.f32 %v8160, %v8185
    %v8211 = vadd.f32 %v8161, %v8186
    %v8212 = vadd.f32 %v8162, %v8187
    %v8213 = vadd.f32 %v8163, %v8188
    %v8214 = vadd.f32 %v8164, %v8189
    %v8215 = vadd.f32 %v8165, %v8190
    %v8216 = vadd.f32 %v8166, %v8191
    %v8217 = vadd.f32 %v8167, %v8192
    %v8218 = vadd.f32 %v8168, %v8193
    %v8219 = vadd.f32 %v8169, %v8194
    %v8220 = vadd.f32 %v8170, %v8195
    %v8221 = vadd.f32 %v8171, %v8196
    %v8222 = vadd.f32 %v8172, %v8197
    %v8223 = vadd.f32 %v8173, %v8198
    %v8224 = vadd.f32 %v8174, %v8199
    %v8225 = vadd.f32 %v8175, %v8200
    %v8226 = vadd.f32 %v8176, %v8201
    %v8227 = vadd.f32 %v8177, %v8202
    %v8228 = vadd.f32 %v8178, %v8203
    %v8229 = vadd.f32 %v8179, %v8204
    %v8230 = vadd.f32 %v8180, %v8205
    %v8231 = vadd.f32 %v8181, %v8206
    %v8232 = vmul.f32 %v8106, 0.22414386
    %v8233 = vmul.f32 %v8107, 0.22414386
    %v8234 = vmul.f32 %v8108, 0.22414386
    %v8235 = vmul.f32 %v8109, 0.22414386
    %v8236 = vmul.f32 %v8110, 0.22414386
    %v8237 = vmul.f32 %v8111, 0.22414386
    %v8238 = vmul.f32 %v8112, 0.22414386
    %v8239 = vmul.f32 %v8113, 0.22414386
    %v8240 = vmul.f32 %v8114, 0.22414386
    %v8241 = vmul.f32 %v8115, 0.22414386
    %v8242 = vmul.f32 %v8116, 0.22414386
    %v8243 = vmul.f32 %v8117, 0.22414386
    %v8244 = vmul.f32 %v8118, 0.22414386
    %v8245 = vmul.f32 %v8119, 0.22414386
    %v8246 = vmul.f32 %v8120, 0.22414386
    %v8247 = vmul.f32 %v8121, 0.22414386
    %v8248 = vmul.f32 %v8122, 0.22414386
    %v8249 = vmul.f32 %v8123, 0.22414386
    %v8250 = vmul.f32 %v8124, 0.22414386
    %v8251 = vmul.f32 %v8125, 0.22414386
    %v8252 = vmul.f32 %v8126, 0.22414386
    %v8253 = vmul.f32 %v8127, 0.22414386
    %v8254 = vmul.f32 %v8128, 0.22414386
    %v8255 = vmul.f32 %v8129, 0.22414386
    %v8256 = vmul.f32 %v8130, 0.22414386
    %v8257 = vadd.f32 %v8207, %v8232
    %v8258 = vadd.f32 %v8208, %v8233
    %v8259 = vadd.f32 %v8209, %v8234
    %v8260 = vadd.f32 %v8210, %v8235
    %v8261 = vadd.f32 %v8211, %v8236
    %v8262 = vadd.f32 %v8212, %v8237
    %v8263 = vadd.f32 %v8213, %v8238
    %v8264 = vadd.f32 %v8214, %v8239
    %v8265 = vadd.f32 %v8215, %v8240
    %v8266 = vadd.f32 %v8216, %v8241
    %v8267 = vadd.f32 %v8217, %v8242
    %v8268 = vadd.f32 %v8218, %v8243
    %v8269 = vadd.f32 %v8219, %v8244
    %v8270 = vadd.f32 %v8220, %v8245
    %v8271 = vadd.f32 %v8221, %v8246
    %v8272 = vadd.f32 %v8222, %v8247
    %v8273 = vadd.f32 %v8223, %v8248
    %v8274 = vadd.f32 %v8224, %v8249
    %v8275 = vadd.f32 %v8225, %v8250
    %v8276 = vadd.f32 %v8226, %v8251
    %v8277 = vadd.f32 %v8227, %v8252
    %v8278 = vadd.f32 %v8228, %v8253
    %v8279 = vadd.f32 %v8229, %v8254
    %v8280 = vadd.f32 %v8230, %v8255
    %v8281 = vadd.f32 %v8231, %v8256
    %v8282 = vmul.f32 %v8132, -0.12940952
    %v8283 = vmul.f32 %v8133, -0.12940952
    %v8284 = vmul.f32 %v8134, -0.12940952
    %v8285 = vmul.f32 %v8135, -0.12940952
    %v8286 = vmul.f32 %v8136, -0.12940952
    %v8287 = vmul.f32 %v8137, -0.12940952
    %v8288 = vmul.f32 %v8138, -0.12940952
    %v8289 = vmul.f32 %v8139, -0.12940952
    %v8290 = vmul.f32 %v8140, -0.12940952
    %v8291 = vmul.f32 %v8141, -0.12940952
    %v8292 = vmul.f32 %v8142, -0.12940952
    %v8293 = vmul.f32 %v8143, -0.12940952
    %v8294 = vmul.f32 %v8144, -0.12940952
    %v8295 = vmul.f32 %v8145, -0.12940952
    %v8296 = vmul.f32 %v8146, -0.12940952
    %v8297 = vmul.f32 %v8147, -0.12940952
    %v8298 = vmul.f32 %v8148, -0.12940952
    %v8299 = vmul.f32 %v8149, -0.12940952
    %v8300 = vmul.f32 %v8150, -0.12940952
    %v8301 = vmul.f32 %v8151, -0.12940952
    %v8302 = vmul.f32 %v8152, -0.12940952
    %v8303 = vmul.f32 %v8153, -0.12940952
    %v8304 = vmul.f32 %v8154, -0.12940952
    %v8305 = vmul.f32 %v8155, -0.12940952
    %v8306 = vmul.f32 %v8156, -0.12940952
    %v8307 = vadd.f32 %v8257, %v8282
    %v8308 = vadd.f32 %v8258, %v8283
    %v8309 = vadd.f32 %v8259, %v8284
    %v8310 = vadd.f32 %v8260, %v8285
    %v8311 = vadd.f32 %v8261, %v8286
    %v8312 = vadd.f32 %v8262, %v8287
    %v8313 = vadd.f32 %v8263, %v8288
    %v8314 = vadd.f32 %v8264, %v8289
    %v8315 = vadd.f32 %v8265, %v8290
    %v8316 = vadd.f32 %v8266, %v8291
    %v8317 = vadd.f32 %v8267, %v8292
    %v8318 = vadd.f32 %v8268, %v8293
    %v8319 = vadd.f32 %v8269, %v8294
    %v8320 = vadd.f32 %v8270, %v8295
    %v8321 = vadd.f32 %v8271, %v8296
    %v8322 = vadd.f32 %v8272, %v8297
    %v8323 = vadd.f32 %v8273, %v8298
    %v8324 = vadd.f32 %v8274, %v8299
    %v8325 = vadd.f32 %v8275, %v8300
    %v8326 = vadd.f32 %v8276, %v8301
    %v8327 = vadd.f32 %v8277, %v8302
    %v8328 = vadd.f32 %v8278, %v8303
    %v8329 = vadd.f32 %v8279, %v8304
    %v8330 = vadd.f32 %v8280, %v8305
    %v8331 = vadd.f32 %v8281, %v8306
    %s8332 = scalar_lea.vmem %s2, 600
    %8333 = vst [vmem:[%s8332] sm:$0x1f] %v8307
    %8334 = vst [vmem:[%s8332 + $0x8] sm:$0x1f] %v8308
    %8335 = vst [vmem:[%s8332 + $0x10] sm:$0x1f] %v8309
    %8336 = vst [vmem:[%s8332 + $0x18] sm:$0x1f] %v8310
    %8337 = vst [vmem:[%s8332 + $0x20] sm:$0x1f] %v8311
    %8338 = vst [vmem:[%s8332 + $0x28] sm:$0x1f] %v8312
    %8339 = vst [vmem:[%s8332 + $0x30] sm:$0x1f] %v8313
    %8340 = vst [vmem:[%s8332 + $0x38] sm:$0x1f] %v8314
    %8341 = vst [vmem:[%s8332 + $0x40] sm:$0x1f] %v8315
    %8342 = vst [vmem:[%s8332 + $0x48] sm:$0x1f] %v8316
    %8343 = vst [vmem:[%s8332 + $0x50] sm:$0x1f] %v8317
    %8344 = vst [vmem:[%s8332 + $0x58] sm:$0x1f] %v8318
    %8345 = vst [vmem:[%s8332 + $0x60] sm:$0x1f] %v8319
    %8346 = vst [vmem:[%s8332 + $0x68] sm:$0x1f] %v8320
    %8347 = vst [vmem:[%s8332 + $0x70] sm:$0x1f] %v8321
    %8348 = vst [vmem:[%s8332 + $0x78] sm:$0x1f] %v8322
    %8349 = vst [vmem:[%s8332 + $0x80] sm:$0x1f] %v8323
    %8350 = vst [vmem:[%s8332 + $0x88] sm:$0x1f] %v8324
    %8351 = vst [vmem:[%s8332 + $0x90] sm:$0x1f] %v8325
    %8352 = vst [vmem:[%s8332 + $0x98] sm:$0x1f] %v8326
    %8353 = vst [vmem:[%s8332 + $0xa0] sm:$0x1f] %v8327
    %8354 = vst [vmem:[%s8332 + $0xa8] sm:$0x1f] %v8328
    %8355 = vst [vmem:[%s8332 + $0xb0] sm:$0x1f] %v8329
    %8356 = vst [vmem:[%s8332 + $0xb8] sm:$0x1f] %v8330
    %8357 = vst [vmem:[%s8332 + $0xc0] sm:$0x1f] %v8331
    %v8358 = vmul.f32 %v8055, -0.12940952
    %v8359 = vmul.f32 %v8056, -0.12940952
    %v8360 = vmul.f32 %v8057, -0.12940952
    %v8361 = vmul.f32 %v8058, -0.12940952
    %v8362 = vmul.f32 %v8059, -0.12940952
    %v8363 = vmul.f32 %v8060, -0.12940952
    %v8364 = vmul.f32 %v8061, -0.12940952
    %v8365 = vmul.f32 %v8062, -0.12940952
    %v8366 = vmul.f32 %v8063, -0.12940952
    %v8367 = vmul.f32 %v8064, -0.12940952
    %v8368 = vmul.f32 %v8065, -0.12940952
    %v8369 = vmul.f32 %v8066, -0.12940952
    %v8370 = vmul.f32 %v8067, -0.12940952
    %v8371 = vmul.f32 %v8068, -0.12940952
    %v8372 = vmul.f32 %v8069, -0.12940952
    %v8373 = vmul.f32 %v8070, -0.12940952
    %v8374 = vmul.f32 %v8071, -0.12940952
    %v8375 = vmul.f32 %v8072, -0.12940952
    %v8376 = vmul.f32 %v8073, -0.12940952
    %v8377 = vmul.f32 %v8074, -0.12940952
    %v8378 = vmul.f32 %v8075, -0.12940952
    %v8379 = vmul.f32 %v8076, -0.12940952
    %v8380 = vmul.f32 %v8077, -0.12940952
    %v8381 = vmul.f32 %v8078, -0.12940952
    %v8382 = vmul.f32 %v8079, -0.12940952
    %v8383 = vmul.f32 %v8080, -0.22414386
    %v8384 = vmul.f32 %v8081, -0.22414386
    %v8385 = vmul.f32 %v8082, -0.22414386
    %v8386 = vmul.f32 %v8083, -0.22414386
    %v8387 = vmul.f32 %v8084, -0.22414386
    %v8388 = vmul.f32 %v8085, -0.22414386
    %v8389 = vmul.f32 %v8086, -0.22414386
    %v8390 = vmul.f32 %v8087, -0.22414386
    %v8391 = vmul.f32 %v8088, -0.22414386
    %v8392 = vmul.f32 %v8089, -0.22414386
    %v8393 = vmul.f32 %v8090, -0.22414386
    %v8394 = vmul.f32 %v8091, -0.22414386
    %v8395 = vmul.f32 %v8092, -0.22414386
    %v8396 = vmul.f32 %v8093, -0.22414386
    %v8397 = vmul.f32 %v8094, -0.22414386
    %v8398 = vmul.f32 %v8095, -0.22414386
    %v8399 = vmul.f32 %v8096, -0.22414386
    %v8400 = vmul.f32 %v8097, -0.22414386
    %v8401 = vmul.f32 %v8098, -0.22414386
    %v8402 = vmul.f32 %v8099, -0.22414386
    %v8403 = vmul.f32 %v8100, -0.22414386
    %v8404 = vmul.f32 %v8101, -0.22414386
    %v8405 = vmul.f32 %v8102, -0.22414386
    %v8406 = vmul.f32 %v8103, -0.22414386
    %v8407 = vmul.f32 %v8104, -0.22414386
    %v8408 = vadd.f32 %v8358, %v8383
    %v8409 = vadd.f32 %v8359, %v8384
    %v8410 = vadd.f32 %v8360, %v8385
    %v8411 = vadd.f32 %v8361, %v8386
    %v8412 = vadd.f32 %v8362, %v8387
    %v8413 = vadd.f32 %v8363, %v8388
    %v8414 = vadd.f32 %v8364, %v8389
    %v8415 = vadd.f32 %v8365, %v8390
    %v8416 = vadd.f32 %v8366, %v8391
    %v8417 = vadd.f32 %v8367, %v8392
    %v8418 = vadd.f32 %v8368, %v8393
    %v8419 = vadd.f32 %v8369, %v8394
    %v8420 = vadd.f32 %v8370, %v8395
    %v8421 = vadd.f32 %v8371, %v8396
    %v8422 = vadd.f32 %v8372, %v8397
    %v8423 = vadd.f32 %v8373, %v8398
    %v8424 = vadd.f32 %v8374, %v8399
    %v8425 = vadd.f32 %v8375, %v8400
    %v8426 = vadd.f32 %v8376, %v8401
    %v8427 = vadd.f32 %v8377, %v8402
    %v8428 = vadd.f32 %v8378, %v8403
    %v8429 = vadd.f32 %v8379, %v8404
    %v8430 = vadd.f32 %v8380, %v8405
    %v8431 = vadd.f32 %v8381, %v8406
    %v8432 = vadd.f32 %v8382, %v8407
    %v8433 = vmul.f32 %v8106, 0.8365163
    %v8434 = vmul.f32 %v8107, 0.8365163
    %v8435 = vmul.f32 %v8108, 0.8365163
    %v8436 = vmul.f32 %v8109, 0.8365163
    %v8437 = vmul.f32 %v8110, 0.8365163
    %v8438 = vmul.f32 %v8111, 0.8365163
    %v8439 = vmul.f32 %v8112, 0.8365163
    %v8440 = vmul.f32 %v8113, 0.8365163
    %v8441 = vmul.f32 %v8114, 0.8365163
    %v8442 = vmul.f32 %v8115, 0.8365163
    %v8443 = vmul.f32 %v8116, 0.8365163
    %v8444 = vmul.f32 %v8117, 0.8365163
    %v8445 = vmul.f32 %v8118, 0.8365163
    %v8446 = vmul.f32 %v8119, 0.8365163
    %v8447 = vmul.f32 %v8120, 0.8365163
    %v8448 = vmul.f32 %v8121, 0.8365163
    %v8449 = vmul.f32 %v8122, 0.8365163
    %v8450 = vmul.f32 %v8123, 0.8365163
    %v8451 = vmul.f32 %v8124, 0.8365163
    %v8452 = vmul.f32 %v8125, 0.8365163
    %v8453 = vmul.f32 %v8126, 0.8365163
    %v8454 = vmul.f32 %v8127, 0.8365163
    %v8455 = vmul.f32 %v8128, 0.8365163
    %v8456 = vmul.f32 %v8129, 0.8365163
    %v8457 = vmul.f32 %v8130, 0.8365163
    %v8458 = vadd.f32 %v8408, %v8433
    %v8459 = vadd.f32 %v8409, %v8434
    %v8460 = vadd.f32 %v8410, %v8435
    %v8461 = vadd.f32 %v8411, %v8436
    %v8462 = vadd.f32 %v8412, %v8437
    %v8463 = vadd.f32 %v8413, %v8438
    %v8464 = vadd.f32 %v8414, %v8439
    %v8465 = vadd.f32 %v8415, %v8440
    %v8466 = vadd.f32 %v8416, %v8441
    %v8467 = vadd.f32 %v8417, %v8442
    %v8468 = vadd.f32 %v8418, %v8443
    %v8469 = vadd.f32 %v8419, %v8444
    %v8470 = vadd.f32 %v8420, %v8445
    %v8471 = vadd.f32 %v8421, %v8446
    %v8472 = vadd.f32 %v8422, %v8447
    %v8473 = vadd.f32 %v8423, %v8448
    %v8474 = vadd.f32 %v8424, %v8449
    %v8475 = vadd.f32 %v8425, %v8450
    %v8476 = vadd.f32 %v8426, %v8451
    %v8477 = vadd.f32 %v8427, %v8452
    %v8478 = vadd.f32 %v8428, %v8453
    %v8479 = vadd.f32 %v8429, %v8454
    %v8480 = vadd.f32 %v8430, %v8455
    %v8481 = vadd.f32 %v8431, %v8456
    %v8482 = vadd.f32 %v8432, %v8457
    %v8483 = vmul.f32 %v8132, -0.4829629
    %v8484 = vmul.f32 %v8133, -0.4829629
    %v8485 = vmul.f32 %v8134, -0.4829629
    %v8486 = vmul.f32 %v8135, -0.4829629
    %v8487 = vmul.f32 %v8136, -0.4829629
    %v8488 = vmul.f32 %v8137, -0.4829629
    %v8489 = vmul.f32 %v8138, -0.4829629
    %v8490 = vmul.f32 %v8139, -0.4829629
    %v8491 = vmul.f32 %v8140, -0.4829629
    %v8492 = vmul.f32 %v8141, -0.4829629
    %v8493 = vmul.f32 %v8142, -0.4829629
    %v8494 = vmul.f32 %v8143, -0.4829629
    %v8495 = vmul.f32 %v8144, -0.4829629
    %v8496 = vmul.f32 %v8145, -0.4829629
    %v8497 = vmul.f32 %v8146, -0.4829629
    %v8498 = vmul.f32 %v8147, -0.4829629
    %v8499 = vmul.f32 %v8148, -0.4829629
    %v8500 = vmul.f32 %v8149, -0.4829629
    %v8501 = vmul.f32 %v8150, -0.4829629
    %v8502 = vmul.f32 %v8151, -0.4829629
    %v8503 = vmul.f32 %v8152, -0.4829629
    %v8504 = vmul.f32 %v8153, -0.4829629
    %v8505 = vmul.f32 %v8154, -0.4829629
    %v8506 = vmul.f32 %v8155, -0.4829629
    %v8507 = vmul.f32 %v8156, -0.4829629
    %v8508 = vadd.f32 %v8458, %v8483
    %v8509 = vadd.f32 %v8459, %v8484
    %v8510 = vadd.f32 %v8460, %v8485
    %v8511 = vadd.f32 %v8461, %v8486
    %v8512 = vadd.f32 %v8462, %v8487
    %v8513 = vadd.f32 %v8463, %v8488
    %v8514 = vadd.f32 %v8464, %v8489
    %v8515 = vadd.f32 %v8465, %v8490
    %v8516 = vadd.f32 %v8466, %v8491
    %v8517 = vadd.f32 %v8467, %v8492
    %v8518 = vadd.f32 %v8468, %v8493
    %v8519 = vadd.f32 %v8469, %v8494
    %v8520 = vadd.f32 %v8470, %v8495
    %v8521 = vadd.f32 %v8471, %v8496
    %v8522 = vadd.f32 %v8472, %v8497
    %v8523 = vadd.f32 %v8473, %v8498
    %v8524 = vadd.f32 %v8474, %v8499
    %v8525 = vadd.f32 %v8475, %v8500
    %v8526 = vadd.f32 %v8476, %v8501
    %v8527 = vadd.f32 %v8477, %v8502
    %v8528 = vadd.f32 %v8478, %v8503
    %v8529 = vadd.f32 %v8479, %v8504
    %v8530 = vadd.f32 %v8480, %v8505
    %v8531 = vadd.f32 %v8481, %v8506
    %v8532 = vadd.f32 %v8482, %v8507
    %s8533 = scalar_lea.vmem %s2, 1400
    %8534 = vst [vmem:[%s8533] sm:$0x1f] %v8508
    %8535 = vst [vmem:[%s8533 + $0x8] sm:$0x1f] %v8509
    %8536 = vst [vmem:[%s8533 + $0x10] sm:$0x1f] %v8510
    %8537 = vst [vmem:[%s8533 + $0x18] sm:$0x1f] %v8511
    %8538 = vst [vmem:[%s8533 + $0x20] sm:$0x1f] %v8512
    %8539 = vst [vmem:[%s8533 + $0x28] sm:$0x1f] %v8513
    %8540 = vst [vmem:[%s8533 + $0x30] sm:$0x1f] %v8514
    %8541 = vst [vmem:[%s8533 + $0x38] sm:$0x1f] %v8515
    %8542 = vst [vmem:[%s8533 + $0x40] sm:$0x1f] %v8516
    %8543 = vst [vmem:[%s8533 + $0x48] sm:$0x1f] %v8517
    %8544 = vst [vmem:[%s8533 + $0x50] sm:$0x1f] %v8518
    %8545 = vst [vmem:[%s8533 + $0x58] sm:$0x1f] %v8519
    %8546 = vst [vmem:[%s8533 + $0x60] sm:$0x1f] %v8520
    %8547 = vst [vmem:[%s8533 + $0x68] sm:$0x1f] %v8521
    %8548 = vst [vmem:[%s8533 + $0x70] sm:$0x1f] %v8522
    %8549 = vst [vmem:[%s8533 + $0x78] sm:$0x1f] %v8523
    %8550 = vst [vmem:[%s8533 + $0x80] sm:$0x1f] %v8524
    %8551 = vst [vmem:[%s8533 + $0x88] sm:$0x1f] %v8525
    %8552 = vst [vmem:[%s8533 + $0x90] sm:$0x1f] %v8526
    %8553 = vst [vmem:[%s8533 + $0x98] sm:$0x1f] %v8527
    %8554 = vst [vmem:[%s8533 + $0xa0] sm:$0x1f] %v8528
    %8555 = vst [vmem:[%s8533 + $0xa8] sm:$0x1f] %v8529
    %8556 = vst [vmem:[%s8533 + $0xb0] sm:$0x1f] %v8530
    %8557 = vst [vmem:[%s8533 + $0xb8] sm:$0x1f] %v8531
    %8558 = vst [vmem:[%s8533 + $0xc0] sm:$0x1f] %v8532
    // Predicated region
    $region86: #{tpu_custom_call.1} parent=1 // pred_check
      _
    $region87: #{tpu_custom_call.1} parent=1 // pred_check_branch
      %8560 = sbr.rel (0) target = $region89
    $region88: #{tpu_custom_call.1} parent=1 // pred_region
      _
    $region89: #{tpu_custom_call.1} parent=1 // pred_fallthru
      _
    // Predicated region
    $region90: #{tpu_custom_call.1} parent=1 // pred_check
      _
    $region91: #{tpu_custom_call.1} parent=1 // pred_check_branch
      %8562 = sbr.rel (0) target = $region93
    $region92: #{tpu_custom_call.1} parent=1 // pred_region
      _
    $region93: #{tpu_custom_call.1} parent=1 // pred_fallthru
      _

</llo_original>
